<compile_context>
chip_gen: v6e
topology: v6e:2x2x1
jax: 0.10.0
libtpu: 0.0.40
codegen_flags: <defaults>
</compile_context>

<pallas_src>
import functools

import jax
import jax.numpy as jnp
from jax.experimental import pallas as pl
from jax.experimental.pallas import tpu as pltpu


def attention_kernel(x_ref, wq_ref, wk_ref, wv_ref, wo_ref, bo_ref, o_ref, *,
                     heads, dim_head):
    # x_ref:  (Bt, n, dim)        block of Bt (b,p) slices
    # wq/wk/wv_ref: (dim, inner)  pre-split to_qkv weights (wq pre-scaled)
    # wo_ref: (heads, d, dim)     to_out[0] weight, split per head
    # bo_ref: (1, dim)            to_out[0] bias
    # o_ref:  (Bt, n, dim)
    bt, n, dim = x_ref.shape
    m = bt * n
    x = x_ref[...].reshape(m, dim)          # leading-dim merge: layout-free
    cdt = x.dtype                           # matmul operand dtype (f32 or bf16)

    # Big-M projections: (Bt*n, dim) @ (dim, inner), f32 accumulation.
    q = jnp.dot(x, wq_ref[...], preferred_element_type=jnp.float32)
    k = jnp.dot(x, wk_ref[...], preferred_element_type=jnp.float32)
    v = jnp.dot(x, wv_ref[...], preferred_element_type=jnp.float32)

    acc = jnp.zeros((m, dim), jnp.float32)
    for h in range(heads):                  # static, small; each iter batched over Bt
        sl = slice(h * dim_head, (h + 1) * dim_head)
        qh = q[:, sl].astype(cdt).reshape(bt, n, dim_head)
        kh = k[:, sl].astype(cdt).reshape(bt, n, dim_head)
        vh = v[:, sl].astype(cdt).reshape(bt, n, dim_head)

        # Scores for all Bt patches of this head at once (scale already in wq).
        s = jnp.einsum('bnd,bmd->bnm', qh, kh,
                       preferred_element_type=jnp.float32)       # (Bt, n, n) f32
        s = s - jnp.max(s, axis=-1, keepdims=True)               # stable softmax
        e = jnp.exp(s)
        attn = e * pl.reciprocal(jnp.sum(e, axis=-1, keepdims=True), approx=True)

        oh = jnp.einsum('bnm,bmd->bnd', attn.astype(cdt), vh,
                        preferred_element_type=jnp.float32)      # (Bt, n, d)

        # Fold this head directly into the output projection: no concatenate.
        acc = acc + jnp.dot(oh.reshape(m, dim_head).astype(cdt), wo_ref[h],
                            preferred_element_type=jnp.float32)

    y = acc + bo_ref[...].astype(jnp.float32)                    # (Bt*n, dim)
    o_ref[...] = y.reshape(bt, n, dim).astype(o_ref.dtype)
    # TODO(synk): nn.Dropout is identity in eval mode; training-mode dropout not implemented.


def _choose_block_b(B, n, *, target_rows=256, max_rows=4096):
    """Pick Bt: divides B (no ragged last block), >=2 grid steps when possible
    (v7x megacore), Bt*n >= target_rows for big projection matmuls, and capped
    so the per-step working set stays far below VMEM on every generation."""
    divisors = [d for d in range(1, B + 1) if B % d == 0]
    prefer = [d for d in divisors if B // d >= 2] or divisors
    ok = [d for d in prefer if d * n <= max_rows] or [prefer[0]]
    for d in ok:
        if d * n >= target_rows:
            return d
    return ok[-1]


def mobilevit_attention(x, w_qkv, w_out, b_out, *, heads, dim_head, block_b=None):
    b, p, n, dim = x.shape
    inner = heads * dim_head
    assert w_qkv.shape == (dim, 3 * inner)
    assert w_out.shape == (inner, dim)
    assert b_out.shape == (dim,)
    B = b * p
    xf = x.reshape(B, n, dim)

    scale = float(dim_head) ** -0.5
    wdt = x.dtype
    # Pre-split qkv weights (no sub-128-lane slicing of fused qkv in-kernel)
    # and fold the softmax scale into the Q projection weight.
    w_q = (w_qkv[:, 0 * inner:1 * inner] * scale).astype(wdt)
    w_k = w_qkv[:, 1 * inner:2 * inner].astype(wdt)
    w_v = w_qkv[:, 2 * inner:3 * inner].astype(wdt)
    # Output projection split per head -> kernel accumulates out_h @ w_out_h.
    w_o = w_out.reshape(heads, dim_head, dim).astype(wdt)
    b_o = b_out.reshape(1, dim).astype(jnp.float32)

    if block_b is None:
        block_b = _choose_block_b(B, n)
    assert B % block_b == 0, "block_b must divide b*p"
    grid = (B // block_b,)

    kernel = functools.partial(attention_kernel, heads=heads, dim_head=dim_head)
    out = pl.pallas_call(
        kernel,
        out_shape=jax.ShapeDtypeStruct((B, n, dim), x.dtype),
        grid=grid,
        in_specs=[
            pl.BlockSpec((block_b, n, dim), lambda i: (i, 0, 0)),
            pl.BlockSpec((dim, inner), lambda i: (0, 0)),
            pl.BlockSpec((dim, inner), lambda i: (0, 0)),
            pl.BlockSpec((dim, inner), lambda i: (0, 0)),
            pl.BlockSpec((heads, dim_head, dim), lambda i: (0, 0, 0)),
            pl.BlockSpec((1, dim), lambda i: (0, 0)),
        ],
        out_specs=pl.BlockSpec((block_b, n, dim), lambda i: (i, 0, 0)),
        compiler_params=pltpu.CompilerParams(
            dimension_semantics=("parallel",),
            vmem_limit_bytes=32 * 1024 * 1024),
    )(xf, w_q, w_k, w_v, w_o, b_o)
    return out.reshape(b, p, n, dim)


def reference_attention(x, w_qkv, w_out, b_out, *, heads, dim_head):
    """Pure-JAX reference matching the PyTorch forward."""
    b, p, n, dim = x.shape
    inner = heads * dim_head
    scale = float(dim_head) ** -0.5
    qkv = jnp.einsum('bpnd,de->bpne', x, w_qkv)
    q, k, v = jnp.split(qkv, 3, axis=-1)
    def split_heads(t):  # b p n (h d) -> b p h n d
        return t.reshape(b, p, n, heads, dim_head).transpose(0, 1, 3, 2, 4)
    q, k, v = map(split_heads, (q, k, v))
    dots = jnp.einsum('bphnd,bphmd->bphnm', q, k) * scale
    attn = jax.nn.softmax(dots, axis=-1)
    out = jnp.einsum('bphnm,bphmd->bphnd', attn, v)
    out = out.transpose(0, 1, 3, 2, 4).reshape(b, p, n, inner)
    return jnp.einsum('bpne,ed->bpnd', out, w_out) + b_out


if __name__ == "__main__":
    # Small shapes consistent with MobileViT attention over unfolded patches:
    # p = patch area (2x2), n = number of spatial positions per patch slot.
    b, p, n = 2, 4, 64         # batch, patch-area, tokens
    dim = 32
    heads, dim_head = 4, 8     # inner_dim = 32 -> project_out is True
    inner = heads * dim_head

    key = jax.random.PRNGKey(0)
    kx, kq, kw, kb = jax.random.split(key, 4)
    x = jax.random.normal(kx, (b, p, n, dim), dtype=jnp.float32)
    w_qkv = jax.random.normal(kq, (dim, 3 * inner), dtype=jnp.float32) * 0.05
    w_out = jax.random.normal(kw, (inner, dim), dtype=jnp.float32) * 0.05
    b_out = jax.random.normal(kb, (dim,), dtype=jnp.float32) * 0.05

    y = mobilevit_attention(x, w_qkv, w_out, b_out, heads=heads, dim_head=dim_head)
    y = jax.block_until_ready(y)

    y_ref = reference_attention(x, w_qkv, w_out, b_out, heads=heads, dim_head=dim_head)
    assert y.shape == (b, p, n, dim)
    err = jnp.max(jnp.abs(y - y_ref))
    # Tolerance accounts for the approximate (EUP vrcp) softmax reciprocal.
    assert jnp.allclose(y, y_ref, atol=2e-3, rtol=2e-3), f"max abs err {err}"
    print("KERNEL_OK")
</pallas_src>

<mosaic_0001>
module attributes {stable_mosaic.version = 11 : i64} {
  func.func @attention_kernel(%arg0: i32, %arg1: memref<4x64x32xf32, #tpu.memory_space<vmem>>, %arg2: memref<32x32xf32, #tpu.memory_space<vmem>>, %arg3: memref<32x32xf32, #tpu.memory_space<vmem>>, %arg4: memref<32x32xf32, #tpu.memory_space<vmem>>, %arg5: memref<4x8x32xf32, #tpu.memory_space<vmem>>, %arg6: memref<1x32xf32, #tpu.memory_space<vmem>>, %arg7: memref<4x64x32xf32, #tpu.memory_space<vmem>>) attributes {dimension_semantics = [#tpu.dimension_semantics<parallel>], iteration_bounds = array<i64: 2>, scalar_prefetch = 0 : i64, scratch_operands = 0 : i64, tpu.core_type = #tpu.core_type<tc>, window_params = [{transform_indices = @transform_0, window_bounds = array<i64: 4, 64, 32>}, {pipeline_mode = #tpu.pipeline_mode<synchronous>, transform_indices = @transform_1, window_bounds = array<i64: 32, 32>}, {pipeline_mode = #tpu.pipeline_mode<synchronous>, transform_indices = @transform_2, window_bounds = array<i64: 32, 32>}, {pipeline_mode = #tpu.pipeline_mode<synchronous>, transform_indices = @transform_3, window_bounds = array<i64: 32, 32>}, {pipeline_mode = #tpu.pipeline_mode<synchronous>, transform_indices = @transform_4, window_bounds = array<i64: 4, 8, 32>}, {pipeline_mode = #tpu.pipeline_mode<synchronous>, transform_indices = @transform_5, window_bounds = array<i64: 1, 32>}, {transform_indices = @transform_6, window_bounds = array<i64: 4, 64, 32>}]} {
    %c0 = arith.constant 0 : index
    %c0_0 = arith.constant 0 : index
    %c0_1 = arith.constant 0 : index
    %0 = vector.load %arg1[%c0, %c0_0, %c0_1] : memref<4x64x32xf32, #tpu.memory_space<vmem>>, vector<4x64x32xf32>
    %1 = vector.shape_cast %0 : vector<4x64x32xf32> to vector<256x32xf32>
    %c0_2 = arith.constant 0 : index
    %c0_3 = arith.constant 0 : index
    %2 = vector.load %arg2[%c0_2, %c0_3] : memref<32x32xf32, #tpu.memory_space<vmem>>, vector<32x32xf32>
    %cst = arith.constant dense<0.000000e+00> : vector<256x32xf32>
    %3 = tpu.matmul %1, %2, %cst {dimension_numbers = #tpu.dot_dimension_numbers<[1], [0], [0], [1], [0, 0, 1, 1], [], []>} : vector<256x32xf32>, vector<32x32xf32>, vector<256x32xf32> -> vector<256x32xf32>
    %c0_4 = arith.constant 0 : index
    %c0_5 = arith.constant 0 : index
    %4 = vector.load %arg3[%c0_4, %c0_5] : memref<32x32xf32, #tpu.memory_space<vmem>>, vector<32x32xf32>
    %cst_6 = arith.constant dense<0.000000e+00> : vector<256x32xf32>
    %5 = tpu.matmul %1, %4, %cst_6 {dimension_numbers = #tpu.dot_dimension_numbers<[1], [0], [0], [1], [0, 0, 1, 1], [], []>} : vector<256x32xf32>, vector<32x32xf32>, vector<256x32xf32> -> vector<256x32xf32>
    %c0_7 = arith.constant 0 : index
    %c0_8 = arith.constant 0 : index
    %6 = vector.load %arg4[%c0_7, %c0_8] : memref<32x32xf32, #tpu.memory_space<vmem>>, vector<32x32xf32>
    %cst_9 = arith.constant dense<0.000000e+00> : vector<256x32xf32>
    %7 = tpu.matmul %1, %6, %cst_9 {dimension_numbers = #tpu.dot_dimension_numbers<[1], [0], [0], [1], [0, 0, 1, 1], [], []>} : vector<256x32xf32>, vector<32x32xf32>, vector<256x32xf32> -> vector<256x32xf32>
    %cst_10 = arith.constant 0.000000e+00 : f32
    %8 = vector.broadcast %cst_10 : f32 to vector<256x32xf32>
    %9 = vector.extract_strided_slice %3 {offsets = [0, 0], sizes = [256, 8], strides = [1, 1]} : vector<256x32xf32> to vector<256x8xf32>
    %10 = vector.shape_cast %9 : vector<256x8xf32> to vector<4x64x8xf32>
    %11 = vector.extract_strided_slice %5 {offsets = [0, 0], sizes = [256, 8], strides = [1, 1]} : vector<256x32xf32> to vector<256x8xf32>
    %12 = vector.shape_cast %11 : vector<256x8xf32> to vector<4x64x8xf32>
    %13 = vector.extract_strided_slice %7 {offsets = [0, 0], sizes = [256, 8], strides = [1, 1]} : vector<256x32xf32> to vector<256x8xf32>
    %14 = vector.shape_cast %13 : vector<256x8xf32> to vector<4x64x8xf32>
    "tpu.trace_start"() <{level = 10 : i32, message = "bnd,bmd->bnm"}> : () -> ()
    %cst_11 = arith.constant dense<0.000000e+00> : vector<4x64x64xf32>
    %15 = tpu.matmul %10, %12, %cst_11 {dimension_numbers = #tpu.dot_dimension_numbers<[2], [2], [1], [1], [0, 0, 0, 1, 1, 1], [0], [0]>} : vector<4x64x8xf32>, vector<4x64x8xf32>, vector<4x64x64xf32> -> vector<4x64x64xf32>
    "tpu.trace_stop"() : () -> ()
    %cst_12 = arith.constant dense<0xFF800000> : vector<4x64xf32>
    %16 = vector.multi_reduction <maximumf>, %15, %cst_12 [2] : vector<4x64x64xf32> to vector<4x64xf32>
    %17 = vector.shape_cast %16 : vector<4x64xf32> to vector<4x64x1xf32>
    %18 = vector.broadcast %17 : vector<4x64x1xf32> to vector<4x64x64xf32>
    %19 = arith.subf %15, %18 : vector<4x64x64xf32>
    %20 = math.exp %19 : vector<4x64x64xf32>
    %cst_13 = arith.constant dense<0.000000e+00> : vector<4x64xf32>
    %21 = vector.multi_reduction <add>, %20, %cst_13 [2] : vector<4x64x64xf32> to vector<4x64xf32>
    %22 = vector.shape_cast %21 : vector<4x64xf32> to vector<4x64x1xf32>
    %23 = tpu.reciprocal %22 {approx = true} : vector<4x64x1xf32> -> vector<4x64x1xf32>
    %24 = vector.broadcast %23 : vector<4x64x1xf32> to vector<4x64x64xf32>
    %25 = arith.mulf %20, %24 : vector<4x64x64xf32>
    "tpu.trace_start"() <{level = 10 : i32, message = "bnm,bmd->bnd"}> : () -> ()
    %cst_14 = arith.constant dense<0.000000e+00> : vector<4x64x8xf32>
    %26 = tpu.matmul %25, %14, %cst_14 {dimension_numbers = #tpu.dot_dimension_numbers<[2], [1], [1], [2], [0, 0, 0, 1, 1, 2], [0], [0]>} : vector<4x64x64xf32>, vector<4x64x8xf32>, vector<4x64x8xf32> -> vector<4x64x8xf32>
    "tpu.trace_stop"() : () -> ()
    %27 = vector.shape_cast %26 : vector<4x64x8xf32> to vector<256x8xf32>
    %c0_15 = arith.constant 0 : index
    %c0_16 = arith.constant 0 : index
    %c0_17 = arith.constant 0 : index
    %28 = vector.load %arg5[%c0_15, %c0_16, %c0_17] : memref<4x8x32xf32, #tpu.memory_space<vmem>>, vector<1x8x32xf32>
    %29 = vector.shape_cast %28 : vector<1x8x32xf32> to vector<8x32xf32>
    %cst_18 = arith.constant dense<0.000000e+00> : vector<256x32xf32>
    %30 = tpu.matmul %27, %29, %cst_18 {dimension_numbers = #tpu.dot_dimension_numbers<[1], [0], [0], [1], [0, 0, 1, 1], [], []>} : vector<256x8xf32>, vector<8x32xf32>, vector<256x32xf32> -> vector<256x32xf32>
    %31 = arith.addf %8, %30 : vector<256x32xf32>
    %32 = vector.extract_strided_slice %3 {offsets = [0, 8], sizes = [256, 8], strides = [1, 1]} : vector<256x32xf32> to vector<256x8xf32>
    %33 = vector.shape_cast %32 : vector<256x8xf32> to vector<4x64x8xf32>
    %34 = vector.extract_strided_slice %5 {offsets = [0, 8], sizes = [256, 8], strides = [1, 1]} : vector<256x32xf32> to vector<256x8xf32>
    %35 = vector.shape_cast %34 : vector<256x8xf32> to vector<4x64x8xf32>
    %36 = vector.extract_strided_slice %7 {offsets = [0, 8], sizes = [256, 8], strides = [1, 1]} : vector<256x32xf32> to vector<256x8xf32>
    %37 = vector.shape_cast %36 : vector<256x8xf32> to vector<4x64x8xf32>
    "tpu.trace_start"() <{level = 10 : i32, message = "bnd,bmd->bnm"}> : () -> ()
    %cst_19 = arith.constant dense<0.000000e+00> : vector<4x64x64xf32>
    %38 = tpu.matmul %33, %35, %cst_19 {dimension_numbers = #tpu.dot_dimension_numbers<[2], [2], [1], [1], [0, 0, 0, 1, 1, 1], [0], [0]>} : vector<4x64x8xf32>, vector<4x64x8xf32>, vector<4x64x64xf32> -> vector<4x64x64xf32>
    "tpu.trace_stop"() : () -> ()
    %cst_20 = arith.constant dense<0xFF800000> : vector<4x64xf32>
    %39 = vector.multi_reduction <maximumf>, %38, %cst_20 [2] : vector<4x64x64xf32> to vector<4x64xf32>
    %40 = vector.shape_cast %39 : vector<4x64xf32> to vector<4x64x1xf32>
    %41 = vector.broadcast %40 : vector<4x64x1xf32> to vector<4x64x64xf32>
    %42 = arith.subf %38, %41 : vector<4x64x64xf32>
    %43 = math.exp %42 : vector<4x64x64xf32>
    %cst_21 = arith.constant dense<0.000000e+00> : vector<4x64xf32>
    %44 = vector.multi_reduction <add>, %43, %cst_21 [2] : vector<4x64x64xf32> to vector<4x64xf32>
    %45 = vector.shape_cast %44 : vector<4x64xf32> to vector<4x64x1xf32>
    %46 = tpu.reciprocal %45 {approx = true} : vector<4x64x1xf32> -> vector<4x64x1xf32>
    %47 = vector.broadcast %46 : vector<4x64x1xf32> to vector<4x64x64xf32>
    %48 = arith.mulf %43, %47 : vector<4x64x64xf32>
    "tpu.trace_start"() <{level = 10 : i32, message = "bnm,bmd->bnd"}> : () -> ()
    %cst_22 = arith.constant dense<0.000000e+00> : vector<4x64x8xf32>
    %49 = tpu.matmul %48, %37, %cst_22 {dimension_numbers = #tpu.dot_dimension_numbers<[2], [1], [1], [2], [0, 0, 0, 1, 1, 2], [0], [0]>} : vector<4x64x64xf32>, vector<4x64x8xf32>, vector<4x64x8xf32> -> vector<4x64x8xf32>
    "tpu.trace_stop"() : () -> ()
    %50 = vector.shape_cast %49 : vector<4x64x8xf32> to vector<256x8xf32>
    %c1 = arith.constant 1 : index
    %c0_23 = arith.constant 0 : index
    %c0_24 = arith.constant 0 : index
    %51 = vector.load %arg5[%c1, %c0_23, %c0_24] : memref<4x8x32xf32, #tpu.memory_space<vmem>>, vector<1x8x32xf32>
    %52 = vector.shape_cast %51 : vector<1x8x32xf32> to vector<8x32xf32>
    %cst_25 = arith.constant dense<0.000000e+00> : vector<256x32xf32>
    %53 = tpu.matmul %50, %52, %cst_25 {dimension_numbers = #tpu.dot_dimension_numbers<[1], [0], [0], [1], [0, 0, 1, 1], [], []>} : vector<256x8xf32>, vector<8x32xf32>, vector<256x32xf32> -> vector<256x32xf32>
    %54 = arith.addf %31, %53 : vector<256x32xf32>
    %55 = vector.extract_strided_slice %3 {offsets = [0, 16], sizes = [256, 8], strides = [1, 1]} : vector<256x32xf32> to vector<256x8xf32>
    %56 = vector.shape_cast %55 : vector<256x8xf32> to vector<4x64x8xf32>
    %57 = vector.extract_strided_slice %5 {offsets = [0, 16], sizes = [256, 8], strides = [1, 1]} : vector<256x32xf32> to vector<256x8xf32>
    %58 = vector.shape_cast %57 : vector<256x8xf32> to vector<4x64x8xf32>
    %59 = vector.extract_strided_slice %7 {offsets = [0, 16], sizes = [256, 8], strides = [1, 1]} : vector<256x32xf32> to vector<256x8xf32>
    %60 = vector.shape_cast %59 : vector<256x8xf32> to vector<4x64x8xf32>
    "tpu.trace_start"() <{level = 10 : i32, message = "bnd,bmd->bnm"}> : () -> ()
    %cst_26 = arith.constant dense<0.000000e+00> : vector<4x64x64xf32>
    %61 = tpu.matmul %56, %58, %cst_26 {dimension_numbers = #tpu.dot_dimension_numbers<[2], [2], [1], [1], [0, 0, 0, 1, 1, 1], [0], [0]>} : vector<4x64x8xf32>, vector<4x64x8xf32>, vector<4x64x64xf32> -> vector<4x64x64xf32>
    "tpu.trace_stop"() : () -> ()
    %cst_27 = arith.constant dense<0xFF800000> : vector<4x64xf32>
    %62 = vector.multi_reduction <maximumf>, %61, %cst_27 [2] : vector<4x64x64xf32> to vector<4x64xf32>
    %63 = vector.shape_cast %62 : vector<4x64xf32> to vector<4x64x1xf32>
    %64 = vector.broadcast %63 : vector<4x64x1xf32> to vector<4x64x64xf32>
    %65 = arith.subf %61, %64 : vector<4x64x64xf32>
    %66 = math.exp %65 : vector<4x64x64xf32>
    %cst_28 = arith.constant dense<0.000000e+00> : vector<4x64xf32>
    %67 = vector.multi_reduction <add>, %66, %cst_28 [2] : vector<4x64x64xf32> to vector<4x64xf32>
    %68 = vector.shape_cast %67 : vector<4x64xf32> to vector<4x64x1xf32>
    %69 = tpu.reciprocal %68 {approx = true} : vector<4x64x1xf32> -> vector<4x64x1xf32>
    %70 = vector.broadcast %69 : vector<4x64x1xf32> to vector<4x64x64xf32>
    %71 = arith.mulf %66, %70 : vector<4x64x64xf32>
    "tpu.trace_start"() <{level = 10 : i32, message = "bnm,bmd->bnd"}> : () -> ()
    %cst_29 = arith.constant dense<0.000000e+00> : vector<4x64x8xf32>
    %72 = tpu.matmul %71, %60, %cst_29 {dimension_numbers = #tpu.dot_dimension_numbers<[2], [1], [1], [2], [0, 0, 0, 1, 1, 2], [0], [0]>} : vector<4x64x64xf32>, vector<4x64x8xf32>, vector<4x64x8xf32> -> vector<4x64x8xf32>
    "tpu.trace_stop"() : () -> ()
    %73 = vector.shape_cast %72 : vector<4x64x8xf32> to vector<256x8xf32>
    %c2 = arith.constant 2 : index
    %c0_30 = arith.constant 0 : index
    %c0_31 = arith.constant 0 : index
    %74 = vector.load %arg5[%c2, %c0_30, %c0_31] : memref<4x8x32xf32, #tpu.memory_space<vmem>>, vector<1x8x32xf32>
    %75 = vector.shape_cast %74 : vector<1x8x32xf32> to vector<8x32xf32>
    %cst_32 = arith.constant dense<0.000000e+00> : vector<256x32xf32>
    %76 = tpu.matmul %73, %75, %cst_32 {dimension_numbers = #tpu.dot_dimension_numbers<[1], [0], [0], [1], [0, 0, 1, 1], [], []>} : vector<256x8xf32>, vector<8x32xf32>, vector<256x32xf32> -> vector<256x32xf32>
    %77 = arith.addf %54, %76 : vector<256x32xf32>
    %78 = vector.extract_strided_slice %3 {offsets = [0, 24], sizes = [256, 8], strides = [1, 1]} : vector<256x32xf32> to vector<256x8xf32>
    %79 = vector.shape_cast %78 : vector<256x8xf32> to vector<4x64x8xf32>
    %80 = vector.extract_strided_slice %5 {offsets = [0, 24], sizes = [256, 8], strides = [1, 1]} : vector<256x32xf32> to vector<256x8xf32>
    %81 = vector.shape_cast %80 : vector<256x8xf32> to vector<4x64x8xf32>
    %82 = vector.extract_strided_slice %7 {offsets = [0, 24], sizes = [256, 8], strides = [1, 1]} : vector<256x32xf32> to vector<256x8xf32>
    %83 = vector.shape_cast %82 : vector<256x8xf32> to vector<4x64x8xf32>
    "tpu.trace_start"() <{level = 10 : i32, message = "bnd,bmd->bnm"}> : () -> ()
    %cst_33 = arith.constant dense<0.000000e+00> : vector<4x64x64xf32>
    %84 = tpu.matmul %79, %81, %cst_33 {dimension_numbers = #tpu.dot_dimension_numbers<[2], [2], [1], [1], [0, 0, 0, 1, 1, 1], [0], [0]>} : vector<4x64x8xf32>, vector<4x64x8xf32>, vector<4x64x64xf32> -> vector<4x64x64xf32>
    "tpu.trace_stop"() : () -> ()
    %cst_34 = arith.constant dense<0xFF800000> : vector<4x64xf32>
    %85 = vector.multi_reduction <maximumf>, %84, %cst_34 [2] : vector<4x64x64xf32> to vector<4x64xf32>
    %86 = vector.shape_cast %85 : vector<4x64xf32> to vector<4x64x1xf32>
    %87 = vector.broadcast %86 : vector<4x64x1xf32> to vector<4x64x64xf32>
    %88 = arith.subf %84, %87 : vector<4x64x64xf32>
    %89 = math.exp %88 : vector<4x64x64xf32>
    %cst_35 = arith.constant dense<0.000000e+00> : vector<4x64xf32>
    %90 = vector.multi_reduction <add>, %89, %cst_35 [2] : vector<4x64x64xf32> to vector<4x64xf32>
    %91 = vector.shape_cast %90 : vector<4x64xf32> to vector<4x64x1xf32>
    %92 = tpu.reciprocal %91 {approx = true} : vector<4x64x1xf32> -> vector<4x64x1xf32>
    %93 = vector.broadcast %92 : vector<4x64x1xf32> to vector<4x64x64xf32>
    %94 = arith.mulf %89, %93 : vector<4x64x64xf32>
    "tpu.trace_start"() <{level = 10 : i32, message = "bnm,bmd->bnd"}> : () -> ()
    %cst_36 = arith.constant dense<0.000000e+00> : vector<4x64x8xf32>
    %95 = tpu.matmul %94, %83, %cst_36 {dimension_numbers = #tpu.dot_dimension_numbers<[2], [1], [1], [2], [0, 0, 0, 1, 1, 2], [0], [0]>} : vector<4x64x64xf32>, vector<4x64x8xf32>, vector<4x64x8xf32> -> vector<4x64x8xf32>
    "tpu.trace_stop"() : () -> ()
    %96 = vector.shape_cast %95 : vector<4x64x8xf32> to vector<256x8xf32>
    %c3 = arith.constant 3 : index
    %c0_37 = arith.constant 0 : index
    %c0_38 = arith.constant 0 : index
    %97 = vector.load %arg5[%c3, %c0_37, %c0_38] : memref<4x8x32xf32, #tpu.memory_space<vmem>>, vector<1x8x32xf32>
    %98 = vector.shape_cast %97 : vector<1x8x32xf32> to vector<8x32xf32>
    %cst_39 = arith.constant dense<0.000000e+00> : vector<256x32xf32>
    %99 = tpu.matmul %96, %98, %cst_39 {dimension_numbers = #tpu.dot_dimension_numbers<[1], [0], [0], [1], [0, 0, 1, 1], [], []>} : vector<256x8xf32>, vector<8x32xf32>, vector<256x32xf32> -> vector<256x32xf32>
    %100 = arith.addf %77, %99 : vector<256x32xf32>
    %c0_40 = arith.constant 0 : index
    %c0_41 = arith.constant 0 : index
    %101 = vector.load %arg6[%c0_40, %c0_41] : memref<1x32xf32, #tpu.memory_space<vmem>>, vector<1x32xf32>
    %102 = vector.broadcast %101 : vector<1x32xf32> to vector<256x32xf32>
    %103 = arith.addf %100, %102 : vector<256x32xf32>
    %104 = vector.shape_cast %103 : vector<256x32xf32> to vector<4x64x32xf32>
    %c0_42 = arith.constant 0 : index
    %c0_43 = arith.constant 0 : index
    %c0_44 = arith.constant 0 : index
    %105 = vector.load %arg7[%c0_42, %c0_43, %c0_44] : memref<4x64x32xf32, #tpu.memory_space<vmem>>, vector<4x64x32xf32>
    tpu.vector_store %arg7[%c0_42, %c0_43, %c0_44], %104 {strides = array<i32>} : memref<4x64x32xf32, #tpu.memory_space<vmem>>, vector<4x64x32xf32>,
    return
  }
  func.func @transform_0(%arg0: i32) -> (i32, i32, i32) {
    %c0_i32 = arith.constant 0 : i32
    %c0_i32_0 = arith.constant 0 : i32
    %c0_i32_1 = arith.constant 0 : i32
    return %arg0, %c0_i32, %c0_i32_0 : i32, i32, i32
  }
  func.func @transform_1(%arg0: i32) -> (i32, i32) {
    %c0_i32 = arith.constant 0 : i32
    %c0_i32_0 = arith.constant 0 : i32
    %c0_i32_1 = arith.constant 0 : i32
    return %c0_i32, %c0_i32_0 : i32, i32
  }
  func.func @transform_2(%arg0: i32) -> (i32, i32) {
    %c0_i32 = arith.constant 0 : i32
    %c0_i32_0 = arith.constant 0 : i32
    %c0_i32_1 = arith.constant 0 : i32
    return %c0_i32, %c0_i32_0 : i32, i32
  }
  func.func @transform_3(%arg0: i32) -> (i32, i32) {
    %c0_i32 = arith.constant 0 : i32
    %c0_i32_0 = arith.constant 0 : i32
    %c0_i32_1 = arith.constant 0 : i32
    return %c0_i32, %c0_i32_0 : i32, i32
  }
  func.func @transform_4(%arg0: i32) -> (i32, i32, i32) {
    %c0_i32 = arith.constant 0 : i32
    %c0_i32_0 = arith.constant 0 : i32
    %c0_i32_1 = arith.constant 0 : i32
    %c0_i32_2 = arith.constant 0 : i32
    return %c0_i32, %c0_i32_0, %c0_i32_1 : i32, i32, i32
  }
  func.func @transform_5(%arg0: i32) -> (i32, i32) {
    %c0_i32 = arith.constant 0 : i32
    %c0_i32_0 = arith.constant 0 : i32
    %c0_i32_1 = arith.constant 0 : i32
    return %c0_i32, %c0_i32_0 : i32, i32
  }
  func.func @transform_6(%arg0: i32) -> (i32, i32, i32) {
    %c0_i32 = arith.constant 0 : i32
    %c0_i32_0 = arith.constant 0 : i32
    %c0_i32_1 = arith.constant 0 : i32
    return %arg0, %c0_i32, %c0_i32_0 : i32, i32, i32
  }
}

</mosaic_0001>

<llo_original>
// kernel: tpu_custom_call.1
$region0: #{tpu_custom_call.1}
  #allocation0 [shape = 'u32[]', space=smem, size = 0x4, offset = 0x4, fixed_abs, tag = 'smem constant byte address 0x4 - core index']
  #allocation1 [shape = 'u32[144,128]{1,0:T(1,128)}', space=vmem, size = 0x12000, scoped, tag = 'internal scratch']
  %s0 = inlined_call_operand.vmem [shape: f32[8,64,32], index: 0, kind: input, shape index: {}]
  %s1 = inlined_call_operand.vmem [shape: f32[32,32], index: 1, kind: input, shape index: {}]
  %s2 = inlined_call_operand.vmem [shape: f32[32,32], index: 2, kind: input, shape index: {}]
  %s3 = inlined_call_operand.vmem [shape: f32[32,32], index: 3, kind: input, shape index: {}]
  %s4 = inlined_call_operand.vmem [shape: f32[4,8,32], index: 4, kind: input, shape index: {}]
  %s5 = inlined_call_operand.vmem [shape: f32[1,32], index: 5, kind: input, shape index: {}]
  %s6 = inlined_call_operand.vmem [shape: f32[8,64,32], index: 6, kind: output, shape index: {}]
  %s7 = sld [smem:[#allocation0]]
  $region57: #{tpu_custom_call.1} parent=0
    _
  %s9 = ssub.s32 1, %s7
  %s10 = scalar_select 0, %s9, %s7
  loop: start=0, step=1, limit=4
  $region2: #{tpu_custom_call.1} parent=0 // loop_pre_header
    _
  $region3: #{tpu_custom_call.1} parent=0 // loop_header
    %s12 = sphi 0, %s16
    %p13 = scmp.ge.s32.totalorder %s12, 4
    %s22 = sphi 0, %s24
    %s25 = sphi 0, %s22
    %s26 = sphi 0, %s25
    %s42 = sphi 0, %s26
    %s46 = sphi 0, %s46
    %s48 = sphi 0, %s46
    %s49 = sphi 0, %s48
    %s63 = sphi 0, %s49
    %s67 = sphi 0, %s67
    %s69 = sphi 0, %s67
    %s70 = sphi 0, %s69
    %s84 = sphi 0, %s70
    %s88 = sphi 0, %s88
    %s90 = sphi 0, %s88
    %s91 = sphi 0, %s90
    %s105 = sphi 0, %s91
    %s109 = sphi 0, %s109
    %s111 = sphi 0, %s109
    %s112 = sphi 0, %s111
    %s126 = sphi 0, %s112
    %s130 = sphi 0, %s130
    %s132 = sphi 0, %s130
    %s133 = sphi 0, %s132
    %s147 = sphi 0, %s133
    %s153 = sphi 0, %s155
    %s156 = sphi 0, %s153
    %s157 = sphi 0, %s156
    %s173 = sphi 0, %s157
  $region4: #{tpu_custom_call.1} parent=0 // loop_header_branch
    %15 = sbr.rel (%p13) target = $region8
  $region5: #{tpu_custom_call.1} parent=0 // loop_body
    %s17 = ssub.s32 %s12, 1
    %s18 = ssub.s32 %s12, 2
    %s19 = sadd.s32 %s12, 1
    %s20 = ssub.s32 %s12, %s19
    %p21 = scmp.eq.s32.totalorder %s20, 0
    %s23 = sadd.s32 %s22, 1
    %s24 = scalar_select %p21, %s22, %s23
    %p27 = pneg %p21
    %p28 = scmp.eq.s32.totalorder %s12, 1
    %p29 = por %p27, %p28
    %p30 = scmp.ne.s32.totalorder %s22, %s25
    %p31 = scmp.eq.s32.totalorder %s12, 0
    %p32 = por %p30, %p31
    %p33 = scmp.ne.s32.totalorder %s22, %s25
    %p34 = scmp.eq.s32.totalorder %s17, 1
    %p35 = por %p33, %p34
    %p36 = scmp.ne.s32.totalorder %s25, %s26
    %p37 = scmp.eq.s32.totalorder %s17, 0
    %p38 = por %p36, %p37
    %p39 = scmp.ne.s32.totalorder %s25, %s26
    %p40 = scmp.eq.s32.totalorder %s18, 1
    %p41 = por %p39, %p40
    %p43 = scmp.ne.s32.totalorder %s26, %s42
    %p44 = scmp.eq.s32.totalorder %s18, 0
    %p45 = por %p43, %p44
    %s47 = sadd.s32 %s46, 1
    %p50 = scmp.eq.s32.totalorder %s12, 1
    %p51 = scmp.ne.s32.totalorder %s46, %s48
    %p52 = scmp.eq.s32.totalorder %s12, 0
    %p53 = por %p51, %p52
    %p54 = scmp.ne.s32.totalorder %s46, %s48
    %p55 = scmp.eq.s32.totalorder %s17, 1
    %p56 = por %p54, %p55
    %p57 = scmp.ne.s32.totalorder %s48, %s49
    %p58 = scmp.eq.s32.totalorder %s17, 0
    %p59 = por %p57, %p58
    %p60 = scmp.ne.s32.totalorder %s48, %s49
    %p61 = scmp.eq.s32.totalorder %s18, 1
    %p62 = por %p60, %p61
    %p64 = scmp.ne.s32.totalorder %s49, %s63
    %p65 = scmp.eq.s32.totalorder %s18, 0
    %p66 = por %p64, %p65
    %s68 = sadd.s32 %s67, 1
    %p71 = scmp.eq.s32.totalorder %s12, 1
    %p72 = scmp.ne.s32.totalorder %s67, %s69
    %p73 = scmp.eq.s32.totalorder %s12, 0
    %p74 = por %p72, %p73
    %p75 = scmp.ne.s32.totalorder %s67, %s69
    %p76 = scmp.eq.s32.totalorder %s17, 1
    %p77 = por %p75, %p76
    %p78 = scmp.ne.s32.totalorder %s69, %s70
    %p79 = scmp.eq.s32.totalorder %s17, 0
    %p80 = por %p78, %p79
    %p81 = scmp.ne.s32.totalorder %s69, %s70
    %p82 = scmp.eq.s32.totalorder %s18, 1
    %p83 = por %p81, %p82
    %p85 = scmp.ne.s32.totalorder %s70, %s84
    %p86 = scmp.eq.s32.totalorder %s18, 0
    %p87 = por %p85, %p86
    %s89 = sadd.s32 %s88, 1
    %p92 = scmp.eq.s32.totalorder %s12, 1
    %p93 = scmp.ne.s32.totalorder %s88, %s90
    %p94 = scmp.eq.s32.totalorder %s12, 0
    %p95 = por %p93, %p94
    %p96 = scmp.ne.s32.totalorder %s88, %s90
    %p97 = scmp.eq.s32.totalorder %s17, 1
    %p98 = por %p96, %p97
    %p99 = scmp.ne.s32.totalorder %s90, %s91
    %p100 = scmp.eq.s32.totalorder %s17, 0
    %p101 = por %p99, %p100
    %p102 = scmp.ne.s32.totalorder %s90, %s91
    %p103 = scmp.eq.s32.totalorder %s18, 1
    %p104 = por %p102, %p103
    %p106 = scmp.ne.s32.totalorder %s91, %s105
    %p107 = scmp.eq.s32.totalorder %s18, 0
    %p108 = por %p106, %p107
    %s110 = sadd.s32 %s109, 1
    %p113 = scmp.eq.s32.totalorder %s12, 1
    %p114 = scmp.ne.s32.totalorder %s109, %s111
    %p115 = scmp.eq.s32.totalorder %s12, 0
    %p116 = por %p114, %p115
    %p117 = scmp.ne.s32.totalorder %s109, %s111
    %p118 = scmp.eq.s32.totalorder %s17, 1
    %p119 = por %p117, %p118
    %p120 = scmp.ne.s32.totalorder %s111, %s112
    %p121 = scmp.eq.s32.totalorder %s17, 0
    %p122 = por %p120, %p121
    %p123 = scmp.ne.s32.totalorder %s111, %s112
    %p124 = scmp.eq.s32.totalorder %s18, 1
    %p125 = por %p123, %p124
    %p127 = scmp.ne.s32.totalorder %s112, %s126
    %p128 = scmp.eq.s32.totalorder %s18, 0
    %p129 = por %p127, %p128
    %s131 = sadd.s32 %s130, 1
    %p134 = scmp.eq.s32.totalorder %s12, 1
    %p135 = scmp.ne.s32.totalorder %s130, %s132
    %p136 = scmp.eq.s32.totalorder %s12, 0
    %p137 = por %p135, %p136
    %p138 = scmp.ne.s32.totalorder %s130, %s132
    %p139 = scmp.eq.s32.totalorder %s17, 1
    %p140 = por %p138, %p139
    %p141 = scmp.ne.s32.totalorder %s132, %s133
    %p142 = scmp.eq.s32.totalorder %s17, 0
    %p143 = por %p141, %p142
    %p144 = scmp.ne.s32.totalorder %s132, %s133
    %p145 = scmp.eq.s32.totalorder %s18, 1
    %p146 = por %p144, %p145
    %p148 = scmp.ne.s32.totalorder %s133, %s147
    %p149 = scmp.eq.s32.totalorder %s18, 0
    %p150 = por %p148, %p149
    %s151 = ssub.s32 %s12, %s19
    %p152 = scmp.eq.s32.totalorder %s151, 0
    %s154 = sadd.s32 %s153, 1
    %s155 = scalar_select %p152, %s153, %s154
    %p158 = pneg %p152
    %p159 = scmp.eq.s32.totalorder %s12, 1
    %p160 = por %p158, %p159
    %p161 = scmp.ne.s32.totalorder %s153, %s156
    %p162 = scmp.eq.s32.totalorder %s12, 0
    %p163 = por %p161, %p162
    %p164 = scmp.ne.s32.totalorder %s153, %s156
    %p165 = scmp.eq.s32.totalorder %s17, 1
    %p166 = por %p164, %p165
    %p167 = scmp.ne.s32.totalorder %s156, %s157
    %p168 = scmp.eq.s32.totalorder %s17, 0
    %p169 = por %p167, %p168
    %p170 = scmp.ne.s32.totalorder %s156, %s157
    %p171 = scmp.eq.s32.totalorder %s18, 1
    %p172 = por %p170, %p171
    %p174 = scmp.ne.s32.totalorder %s157, %s173
    %p175 = scmp.eq.s32.totalorder %s18, 0
    %p176 = por %p174, %p175
    %p177 = scmp.le.s32.totalorder 1, %s12
    %p178 = scmp.lt.s32.totalorder %s12, 3
    %p179 = pnand %p177, %p178
    %p180 = pneg %p179
    // Predicated region
    $region9: #{tpu_custom_call.1} parent=5 // pred_check
      _
    $region10: #{tpu_custom_call.1} parent=5 // pred_check_branch
      %182 = sbr.rel (%p179) target = $region12
    $region11: #{tpu_custom_call.1} parent=5 // pred_region
      %s183 = ssub.s32 %s12, 1
      // Predicated region
      $region13: #{tpu_custom_call.1} parent=11 // pred_check
        %p184 = pneg %p59
      $region14: #{tpu_custom_call.1} parent=11 // pred_check_branch
        %186 = sbr.rel (%p184) target = $region16
      $region15: #{tpu_custom_call.1} parent=11 // pred_region
        _
      $region16: #{tpu_custom_call.1} parent=11 // pred_fallthru
        _
      // Predicated region
      $region17: #{tpu_custom_call.1} parent=11 // pred_check
        %p187 = pneg %p80
      $region18: #{tpu_custom_call.1} parent=11 // pred_check_branch
        %189 = sbr.rel (%p187) target = $region20
      $region19: #{tpu_custom_call.1} parent=11 // pred_region
        _
      $region20: #{tpu_custom_call.1} parent=11 // pred_fallthru
        _
      // Predicated region
      $region21: #{tpu_custom_call.1} parent=11 // pred_check
        %p190 = pneg %p101
      $region22: #{tpu_custom_call.1} parent=11 // pred_check_branch
        %192 = sbr.rel (%p190) target = $region24
      $region23: #{tpu_custom_call.1} parent=11 // pred_region
        _
      $region24: #{tpu_custom_call.1} parent=11 // pred_fallthru
        _
      // Predicated region
      $region25: #{tpu_custom_call.1} parent=11 // pred_check
        %p193 = pneg %p122
      $region26: #{tpu_custom_call.1} parent=11 // pred_check_branch
        %195 = sbr.rel (%p193) target = $region28
      $region27: #{tpu_custom_call.1} parent=11 // pred_region
        _
      $region28: #{tpu_custom_call.1} parent=11 // pred_fallthru
        _
      // Predicated region
      $region29: #{tpu_custom_call.1} parent=11 // pred_check
        %p196 = pneg %p143
      $region30: #{tpu_custom_call.1} parent=11 // pred_check_branch
        %198 = sbr.rel (%p196) target = $region32
      $region31: #{tpu_custom_call.1} parent=11 // pred_region
        _
      $region32: #{tpu_custom_call.1} parent=11 // pred_fallthru
        _
    $region12: #{tpu_custom_call.1} parent=5 // pred_fallthru
      _
    %p199 = scmp.lt.s32.totalorder %s12, 2
    // Predicated region
    $region33: #{tpu_custom_call.1} parent=5 // pred_check
      %p200 = pneg %p199
    $region34: #{tpu_custom_call.1} parent=5 // pred_check_branch
      %202 = sbr.rel (%p200) target = $region36
    $region35: #{tpu_custom_call.1} parent=5 // pred_region
      // Predicated region
      $region37: #{tpu_custom_call.1} parent=35 // pred_check
        %p203 = pneg %p32
      $region38: #{tpu_custom_call.1} parent=35 // pred_check_branch
        %205 = sbr.rel (%p203) target = $region40
      $region39: #{tpu_custom_call.1} parent=35 // pred_region
        %s206 = smul.u32 4, %s12
        %p207 = scmp.lt.s32.totalorder %s206, 7
        %s208 = scalar_select %p207, %s206, 7
        %s209 = smul.addr %s208, 8
        %s210 = smul.addr %s209, 8
        %s211 = scalar_lea.vmem %s0, %s210
        %s212 = smul.u32 4, %s12
      $region40: #{tpu_custom_call.1} parent=35 // pred_fallthru
        _
    $region36: #{tpu_custom_call.1} parent=5 // pred_fallthru
      _
    %p213 = scmp.le.s32.totalorder 1, %s12
    %p214 = scmp.lt.s32.totalorder %s12, 3
    %p215 = pnand %p213, %p214
    %p216 = pneg %p215
    // Predicated region
    $region41: #{tpu_custom_call.1} parent=5 // pred_check
      _
    $region42: #{tpu_custom_call.1} parent=5 // pred_check_branch
      %218 = sbr.rel (%p215) target = $region44
    $region43: #{tpu_custom_call.1} parent=5 // pred_region
      %s219 = ssub.s32 %s12, 1
      %s220 = smul.u32 4, %s17
      %p221 = scmp.lt.s32.totalorder %s220, 7
      %s222 = scalar_select %p221, %s220, 7
      %s223 = smul.addr %s222, 8
      %s224 = smul.addr %s223, 8
      %s225 = scalar_lea.vmem %s0, %s224
      %p226 = pneg %p38
      %p227 = pneg %p35
      %p228 = pneg %p59
      %p229 = pneg %p56
      %p230 = pneg %p80
      %p231 = pneg %p77
      %p232 = pneg %p101
      %p233 = pneg %p98
      %p234 = pneg %p122
      %p235 = pneg %p119
      %p236 = pneg %p143
      %p237 = pneg %p140
      %p238 = pneg %p169
      %p239 = pneg %p166
      %s240 = smul.u32 4, %s17
      %p241 = scmp.lt.s32.totalorder %s240, 7
      %s242 = scalar_select %p241, %s240, 7
      %s243 = smul.addr %s242, 8
      %s244 = smul.addr %s243, 8
      %s245 = scalar_lea.vmem %s6, %s244
      %s246 = smul.u32 4, %s17
      %p247 = scmp.lt.s32.totalorder %s246, 7
      %s248 = scalar_select %p247, %s246, 7
      %s249 = smul.addr %s248, 8
      %s250 = smul.addr %s249, 8
      %s251 = scalar_lea.vmem %s0, %s250
      %s252 = smul.u32 4, %s17
      %s253 = smul.u32 4, %s17
      %p254 = scmp.lt.s32.totalorder %s253, 7
      %s255 = scalar_select %p254, %s253, 7
      %s256 = smul.addr %s255, 8
      %s257 = smul.addr %s256, 8
      %s258 = scalar_lea.vmem %s6, %s257
      %s259 = smul.u32 4, %s17
      %v260 = vld [vmem:[%s251] sm:$0xff]
      %v261 = vld [vmem:[%s251 + $0x8] sm:$0xff]
      %v262 = vld [vmem:[%s251 + $0x10] sm:$0xff]
      %v263 = vld [vmem:[%s251 + $0x18] sm:$0xff]
      %v264 = vld [vmem:[%s251 + $0x20] sm:$0xff]
      %v265 = vld [vmem:[%s251 + $0x28] sm:$0xff]
      %v266 = vld [vmem:[%s251 + $0x30] sm:$0xff]
      %v267 = vld [vmem:[%s251 + $0x38] sm:$0xff]
      %v268 = vld [vmem:[%s251 + $0x40] sm:$0xff]
      %v269 = vld [vmem:[%s251 + $0x48] sm:$0xff]
      %v270 = vld [vmem:[%s251 + $0x50] sm:$0xff]
      %v271 = vld [vmem:[%s251 + $0x58] sm:$0xff]
      %v272 = vld [vmem:[%s251 + $0x60] sm:$0xff]
      %v273 = vld [vmem:[%s251 + $0x68] sm:$0xff]
      %v274 = vld [vmem:[%s251 + $0x70] sm:$0xff]
      %v275 = vld [vmem:[%s251 + $0x78] sm:$0xff]
      %v276 = vld [vmem:[%s251 + $0x80] sm:$0xff]
      %v277 = vld [vmem:[%s251 + $0x88] sm:$0xff]
      %v278 = vld [vmem:[%s251 + $0x90] sm:$0xff]
      %v279 = vld [vmem:[%s251 + $0x98] sm:$0xff]
      %v280 = vld [vmem:[%s251 + $0xa0] sm:$0xff]
      %v281 = vld [vmem:[%s251 + $0xa8] sm:$0xff]
      %v282 = vld [vmem:[%s251 + $0xb0] sm:$0xff]
      %v283 = vld [vmem:[%s251 + $0xb8] sm:$0xff]
      %v284 = vld [vmem:[%s251 + $0xc0] sm:$0xff]
      %v285 = vld [vmem:[%s251 + $0xc8] sm:$0xff]
      %v286 = vld [vmem:[%s251 + $0xd0] sm:$0xff]
      %v287 = vld [vmem:[%s251 + $0xd8] sm:$0xff]
      %v288 = vld [vmem:[%s251 + $0xe0] sm:$0xff]
      %v289 = vld [vmem:[%s251 + $0xe8] sm:$0xff]
      %v290 = vld [vmem:[%s251 + $0xf0] sm:$0xff]
      %v291 = vld [vmem:[%s251 + $0xf8] sm:$0xff]
      %v292 = vld [vmem:[%s1] sm:$0xff]
      %v293 = vld [vmem:[%s1 + $0x8] sm:$0xff]
      %v294 = vld [vmem:[%s1 + $0x10] sm:$0xff]
      %v295 = vld [vmem:[%s1 + $0x18] sm:$0xff]
      %vm296 = vcmask 261120
      %v298 = vsel %vm296, %v260, 0
      %v301 = vsel %vm296, %v261, 0
      %v304 = vsel %vm296, %v262, 0
      %v307 = vsel %vm296, %v263, 0
      %v310 = vsel %vm296, %v264, 0
      %v313 = vsel %vm296, %v265, 0
      %v316 = vsel %vm296, %v266, 0
      %v319 = vsel %vm296, %v267, 0
      %v322 = vsel %vm296, %v268, 0
      %v325 = vsel %vm296, %v269, 0
      %v328 = vsel %vm296, %v270, 0
      %v331 = vsel %vm296, %v271, 0
      %v334 = vsel %vm296, %v272, 0
      %v337 = vsel %vm296, %v273, 0
      %v340 = vsel %vm296, %v274, 0
      %v343 = vsel %vm296, %v275, 0
      %v346 = vsel %vm296, %v276, 0
      %v349 = vsel %vm296, %v277, 0
      %v352 = vsel %vm296, %v278, 0
      %v355 = vsel %vm296, %v279, 0
      %v358 = vsel %vm296, %v280, 0
      %v361 = vsel %vm296, %v281, 0
      %v364 = vsel %vm296, %v282, 0
      %v367 = vsel %vm296, %v283, 0
      %v370 = vsel %vm296, %v284, 0
      %v373 = vsel %vm296, %v285, 0
      %v376 = vsel %vm296, %v286, 0
      %v379 = vsel %vm296, %v287, 0
      %v382 = vsel %vm296, %v288, 0
      %v385 = vsel %vm296, %v289, 0
      %v388 = vsel %vm296, %v290, 0
      %v391 = vsel %vm296, %v291, 0
      %393 = vmatprep.subr.mxu0 0.0
      %394 = vmatpush1.msra.mxu0 0.0
      %395 = vmatprep.subr.mxu0 0.0
      %396 = vmatpush1.msra.mxu0 0.0
      %397 = vmatprep.subr.mxu0 0.0
      %398 = vmatpush1.msra.mxu0 0.0
      %399 = vmatprep.subr.mxu0 0.0
      %400 = vmatpush1.msra.mxu0 0.0
      %401 = vmatprep.subr.mxu0 0.0
      %402 = vmatpush1.msra.mxu0 0.0
      %403 = vmatprep.subr.mxu0 0.0
      %404 = vmatpush1.msra.mxu0 0.0
      %405 = vmatprep.subr.mxu0 0.0
      %406 = vmatpush1.msra.mxu0 0.0
      %407 = vmatprep.subr.mxu0 0.0
      %408 = vmatpush1.msra.mxu0 0.0
      %409 = vmatprep.subr.mxu0 0.0
      %410 = vmatpush1.msra.mxu0 0.0
      %411 = vmatprep.subr.mxu0 0.0
      %412 = vmatpush1.msra.mxu0 0.0
      %413 = vmatprep.subr.mxu0 0.0
      %414 = vmatpush1.msra.mxu0 0.0
      %415 = vmatprep.subr.mxu0 0.0
      %416 = vmatpush1.msra.mxu0 0.0
      %417 = vmatprep.subr.mxu0 0.0
      %418 = vmatpush1.msra.mxu0 %v295
      %419 = vmatprep.subr.mxu0 0.0
      %420 = vmatpush1.msra.mxu0 %v294
      %421 = vmatprep.subr.mxu0 0.0
      %422 = vmatpush1.msra.mxu0 %v293
      %423 = vmatprep.subr.mxu0 0.0
      %424 = vmatpush1.msra.mxu0 %v292
      %425 = vmatprep.subr.mxu0 0.0
      %426 = vmatpush2.msra.mxu0 0.0
      %427 = vmatprep.subr.mxu0 0.0
      %428 = vmatpush2.msra.mxu0 0.0
      %429 = vmatprep.subr.mxu0 0.0
      %430 = vmatpush2.msra.mxu0 0.0
      %431 = vmatprep.subr.mxu0 0.0
      %432 = vmatpush2.msra.mxu0 0.0
      %433 = vmatprep.subr.mxu0 0.0
      %434 = vmatpush2.msra.mxu0 0.0
      %435 = vmatprep.subr.mxu0 0.0
      %436 = vmatpush2.msra.mxu0 0.0
      %437 = vmatprep.subr.mxu0 0.0
      %438 = vmatpush2.msra.mxu0 0.0
      %439 = vmatprep.subr.mxu0 0.0
      %440 = vmatpush2.msra.mxu0 0.0
      %441 = vmatprep.subr.mxu0 0.0
      %442 = vmatpush2.msra.mxu0 0.0
      %443 = vmatprep.subr.mxu0 0.0
      %444 = vmatpush2.msra.mxu0 0.0
      %445 = vmatprep.subr.mxu0 0.0
      %446 = vmatpush2.msra.mxu0 0.0
      %447 = vmatprep.subr.mxu0 0.0
      %448 = vmatpush2.msra.mxu0 0.0
      %449 = vmatprep.subr.mxu0 0.0
      %450 = vmatpush2.msra.mxu0 0.0
      %451 = vmatprep.subr.mxu0 0.0
      %452 = vmatpush2.msra.mxu0 0.0
      %453 = vmatprep.subr.mxu0 0.0
      %454 = vmatpush2.msra.mxu0 0.0
      %455 = vmatprep.subr.mxu0 0.0
      %456 = vmatpush2.msra.mxu0 0.0
      %457 = vmatprep.mubr.f32.mxu0 0.0
      %458 = vmatmul.mubr.f32.gmra.mxu0 %v298
      %v459 = vpop.f32.mrf.mxu0
      %v460 = vadd.f32 0.0, %v459
      %v461 = vpop.f32.mrf.mxu0
      %462 = vmatprep.mubr.f32.mxu0 0.0
      %463 = vmatmul.mubr.f32.gmra.mxu0 %v301
      %v464 = vpop.f32.mrf.mxu0
      %v465 = vadd.f32 0.0, %v464
      %v466 = vpop.f32.mrf.mxu0
      %467 = vmatprep.mubr.f32.mxu0 0.0
      %468 = vmatmul.mubr.f32.gmra.mxu0 %v304
      %v469 = vpop.f32.mrf.mxu0
      %v470 = vadd.f32 0.0, %v469
      %v471 = vpop.f32.mrf.mxu0
      %472 = vmatprep.mubr.f32.mxu0 0.0
      %473 = vmatmul.mubr.f32.gmra.mxu0 %v307
      %v474 = vpop.f32.mrf.mxu0
      %v475 = vadd.f32 0.0, %v474
      %v476 = vpop.f32.mrf.mxu0
      %477 = vmatprep.mubr.f32.mxu0 0.0
      %478 = vmatmul.mubr.f32.gmra.mxu0 %v310
      %v479 = vpop.f32.mrf.mxu0
      %v480 = vadd.f32 0.0, %v479
      %v481 = vpop.f32.mrf.mxu0
      %482 = vmatprep.mubr.f32.mxu0 0.0
      %483 = vmatmul.mubr.f32.gmra.mxu0 %v313
      %v484 = vpop.f32.mrf.mxu0
      %v485 = vadd.f32 0.0, %v484
      %v486 = vpop.f32.mrf.mxu0
      %487 = vmatprep.mubr.f32.mxu0 0.0
      %488 = vmatmul.mubr.f32.gmra.mxu0 %v316
      %v489 = vpop.f32.mrf.mxu0
      %v490 = vadd.f32 0.0, %v489
      %v491 = vpop.f32.mrf.mxu0
      %492 = vmatprep.mubr.f32.mxu0 0.0
      %493 = vmatmul.mubr.f32.gmra.mxu0 %v319
      %v494 = vpop.f32.mrf.mxu0
      %v495 = vadd.f32 0.0, %v494
      %v496 = vpop.f32.mrf.mxu0
      %497 = vmatprep.mubr.f32.mxu0 0.0
      %498 = vmatmul.mubr.f32.gmra.mxu0 %v322
      %v499 = vpop.f32.mrf.mxu0
      %v500 = vadd.f32 0.0, %v499
      %v501 = vpop.f32.mrf.mxu0
      %502 = vmatprep.mubr.f32.mxu0 0.0
      %503 = vmatmul.mubr.f32.gmra.mxu0 %v325
      %v504 = vpop.f32.mrf.mxu0
      %v505 = vadd.f32 0.0, %v504
      %v506 = vpop.f32.mrf.mxu0
      %507 = vmatprep.mubr.f32.mxu0 0.0
      %508 = vmatmul.mubr.f32.gmra.mxu0 %v328
      %v509 = vpop.f32.mrf.mxu0
      %v510 = vadd.f32 0.0, %v509
      %v511 = vpop.f32.mrf.mxu0
      %512 = vmatprep.mubr.f32.mxu0 0.0
      %513 = vmatmul.mubr.f32.gmra.mxu0 %v331
      %v514 = vpop.f32.mrf.mxu0
      %v515 = vadd.f32 0.0, %v514
      %v516 = vpop.f32.mrf.mxu0
      %517 = vmatprep.mubr.f32.mxu0 0.0
      %518 = vmatmul.mubr.f32.gmra.mxu0 %v334
      %v519 = vpop.f32.mrf.mxu0
      %v520 = vadd.f32 0.0, %v519
      %v521 = vpop.f32.mrf.mxu0
      %522 = vmatprep.mubr.f32.mxu0 0.0
      %523 = vmatmul.mubr.f32.gmra.mxu0 %v337
      %v524 = vpop.f32.mrf.mxu0
      %v525 = vadd.f32 0.0, %v524
      %v526 = vpop.f32.mrf.mxu0
      %527 = vmatprep.mubr.f32.mxu0 0.0
      %528 = vmatmul.mubr.f32.gmra.mxu0 %v340
      %v529 = vpop.f32.mrf.mxu0
      %v530 = vadd.f32 0.0, %v529
      %v531 = vpop.f32.mrf.mxu0
      %532 = vmatprep.mubr.f32.mxu0 0.0
      %533 = vmatmul.mubr.f32.gmra.mxu0 %v343
      %v534 = vpop.f32.mrf.mxu0
      %v535 = vadd.f32 0.0, %v534
      %v536 = vpop.f32.mrf.mxu0
      %537 = vmatprep.mubr.f32.mxu0 0.0
      %538 = vmatmul.mubr.f32.gmra.mxu0 %v346
      %v539 = vpop.f32.mrf.mxu0
      %v540 = vadd.f32 0.0, %v539
      %v541 = vpop.f32.mrf.mxu0
      %542 = vmatprep.mubr.f32.mxu0 0.0
      %543 = vmatmul.mubr.f32.gmra.mxu0 %v349
      %v544 = vpop.f32.mrf.mxu0
      %v545 = vadd.f32 0.0, %v544
      %v546 = vpop.f32.mrf.mxu0
      %547 = vmatprep.mubr.f32.mxu0 0.0
      %548 = vmatmul.mubr.f32.gmra.mxu0 %v352
      %v549 = vpop.f32.mrf.mxu0
      %v550 = vadd.f32 0.0, %v549
      %v551 = vpop.f32.mrf.mxu0
      %552 = vmatprep.mubr.f32.mxu0 0.0
      %553 = vmatmul.mubr.f32.gmra.mxu0 %v355
      %v554 = vpop.f32.mrf.mxu0
      %v555 = vadd.f32 0.0, %v554
      %v556 = vpop.f32.mrf.mxu0
      %557 = vmatprep.mubr.f32.mxu0 0.0
      %558 = vmatmul.mubr.f32.gmra.mxu0 %v358
      %v559 = vpop.f32.mrf.mxu0
      %v560 = vadd.f32 0.0, %v559
      %v561 = vpop.f32.mrf.mxu0
      %562 = vmatprep.mubr.f32.mxu0 0.0
      %563 = vmatmul.mubr.f32.gmra.mxu0 %v361
      %v564 = vpop.f32.mrf.mxu0
      %v565 = vadd.f32 0.0, %v564
      %v566 = vpop.f32.mrf.mxu0
      %567 = vmatprep.mubr.f32.mxu0 0.0
      %568 = vmatmul.mubr.f32.gmra.mxu0 %v364
      %v569 = vpop.f32.mrf.mxu0
      %v570 = vadd.f32 0.0, %v569
      %v571 = vpop.f32.mrf.mxu0
      %572 = vmatprep.mubr.f32.mxu0 0.0
      %573 = vmatmul.mubr.f32.gmra.mxu0 %v367
      %v574 = vpop.f32.mrf.mxu0
      %v575 = vadd.f32 0.0, %v574
      %v576 = vpop.f32.mrf.mxu0
      %577 = vmatprep.mubr.f32.mxu0 0.0
      %578 = vmatmul.mubr.f32.gmra.mxu0 %v370
      %v579 = vpop.f32.mrf.mxu0
      %v580 = vadd.f32 0.0, %v579
      %v581 = vpop.f32.mrf.mxu0
      %582 = vmatprep.mubr.f32.mxu0 0.0
      %583 = vmatmul.mubr.f32.gmra.mxu0 %v373
      %v584 = vpop.f32.mrf.mxu0
      %v585 = vadd.f32 0.0, %v584
      %v586 = vpop.f32.mrf.mxu0
      %587 = vmatprep.mubr.f32.mxu0 0.0
      %588 = vmatmul.mubr.f32.gmra.mxu0 %v376
      %v589 = vpop.f32.mrf.mxu0
      %v590 = vadd.f32 0.0, %v589
      %v591 = vpop.f32.mrf.mxu0
      %592 = vmatprep.mubr.f32.mxu0 0.0
      %593 = vmatmul.mubr.f32.gmra.mxu0 %v379
      %v594 = vpop.f32.mrf.mxu0
      %v595 = vadd.f32 0.0, %v594
      %v596 = vpop.f32.mrf.mxu0
      %597 = vmatprep.mubr.f32.mxu0 0.0
      %598 = vmatmul.mubr.f32.gmra.mxu0 %v382
      %v599 = vpop.f32.mrf.mxu0
      %v600 = vadd.f32 0.0, %v599
      %v601 = vpop.f32.mrf.mxu0
      %602 = vmatprep.mubr.f32.mxu0 0.0
      %603 = vmatmul.mubr.f32.gmra.mxu0 %v385
      %v604 = vpop.f32.mrf.mxu0
      %v605 = vadd.f32 0.0, %v604
      %v606 = vpop.f32.mrf.mxu0
      %607 = vmatprep.mubr.f32.mxu0 0.0
      %608 = vmatmul.mubr.f32.gmra.mxu0 %v388
      %v609 = vpop.f32.mrf.mxu0
      %v610 = vadd.f32 0.0, %v609
      %v611 = vpop.f32.mrf.mxu0
      %612 = vmatprep.mubr.f32.mxu0 0.0
      %613 = vmatmul.mubr.f32.gmra.mxu0 %v391
      %v614 = vpop.f32.mrf.mxu0
      %v615 = vadd.f32 0.0, %v614
      %v616 = vpop.f32.mrf.mxu0
      %617 = vdwg.mxu0
      %v618 = vld [vmem:[%s2] sm:$0xff]
      %v619 = vld [vmem:[%s2 + $0x8] sm:$0xff]
      %v620 = vld [vmem:[%s2 + $0x10] sm:$0xff]
      %v621 = vld [vmem:[%s2 + $0x18] sm:$0xff]
      %622 = vmatprep.subr.mxu0 0.0
      %623 = vmatpush1.msra.mxu0 0.0
      %624 = vmatprep.subr.mxu0 0.0
      %625 = vmatpush1.msra.mxu0 0.0
      %626 = vmatprep.subr.mxu0 0.0
      %627 = vmatpush1.msra.mxu0 0.0
      %628 = vmatprep.subr.mxu0 0.0
      %629 = vmatpush1.msra.mxu0 0.0
      %630 = vmatprep.subr.mxu0 0.0
      %631 = vmatpush1.msra.mxu0 0.0
      %632 = vmatprep.subr.mxu0 0.0
      %633 = vmatpush1.msra.mxu0 0.0
      %634 = vmatprep.subr.mxu0 0.0
      %635 = vmatpush1.msra.mxu0 0.0
      %636 = vmatprep.subr.mxu0 0.0
      %637 = vmatpush1.msra.mxu0 0.0
      %638 = vmatprep.subr.mxu0 0.0
      %639 = vmatpush1.msra.mxu0 0.0
      %640 = vmatprep.subr.mxu0 0.0
      %641 = vmatpush1.msra.mxu0 0.0
      %642 = vmatprep.subr.mxu0 0.0
      %643 = vmatpush1.msra.mxu0 0.0
      %644 = vmatprep.subr.mxu0 0.0
      %645 = vmatpush1.msra.mxu0 0.0
      %646 = vmatprep.subr.mxu0 0.0
      %647 = vmatpush1.msra.mxu0 %v621
      %648 = vmatprep.subr.mxu0 0.0
      %649 = vmatpush1.msra.mxu0 %v620
      %650 = vmatprep.subr.mxu0 0.0
      %651 = vmatpush1.msra.mxu0 %v619
      %652 = vmatprep.subr.mxu0 0.0
      %653 = vmatpush1.msra.mxu0 %v618
      %654 = vmatprep.subr.mxu0 0.0
      %655 = vmatpush2.msra.mxu0 0.0
      %656 = vmatprep.subr.mxu0 0.0
      %657 = vmatpush2.msra.mxu0 0.0
      %658 = vmatprep.subr.mxu0 0.0
      %659 = vmatpush2.msra.mxu0 0.0
      %660 = vmatprep.subr.mxu0 0.0
      %661 = vmatpush2.msra.mxu0 0.0
      %662 = vmatprep.subr.mxu0 0.0
      %663 = vmatpush2.msra.mxu0 0.0
      %664 = vmatprep.subr.mxu0 0.0
      %665 = vmatpush2.msra.mxu0 0.0
      %666 = vmatprep.subr.mxu0 0.0
      %667 = vmatpush2.msra.mxu0 0.0
      %668 = vmatprep.subr.mxu0 0.0
      %669 = vmatpush2.msra.mxu0 0.0
      %670 = vmatprep.subr.mxu0 0.0
      %671 = vmatpush2.msra.mxu0 0.0
      %672 = vmatprep.subr.mxu0 0.0
      %673 = vmatpush2.msra.mxu0 0.0
      %674 = vmatprep.subr.mxu0 0.0
      %675 = vmatpush2.msra.mxu0 0.0
      %676 = vmatprep.subr.mxu0 0.0
      %677 = vmatpush2.msra.mxu0 0.0
      %678 = vmatprep.subr.mxu0 0.0
      %679 = vmatpush2.msra.mxu0 0.0
      %680 = vmatprep.subr.mxu0 0.0
      %681 = vmatpush2.msra.mxu0 0.0
      %682 = vmatprep.subr.mxu0 0.0
      %683 = vmatpush2.msra.mxu0 0.0
      %684 = vmatprep.subr.mxu0 0.0
      %685 = vmatpush2.msra.mxu0 0.0
      %686 = vmatprep.mubr.f32.mxu0 0.0
      %687 = vmatmul.mubr.f32.gmra.mxu0 %v298
      %v688 = vpop.f32.mrf.mxu0
      %v689 = vadd.f32 0.0, %v688
      %v690 = vpop.f32.mrf.mxu0
      %691 = vmatprep.mubr.f32.mxu0 0.0
      %692 = vmatmul.mubr.f32.gmra.mxu0 %v301
      %v693 = vpop.f32.mrf.mxu0
      %v694 = vadd.f32 0.0, %v693
      %v695 = vpop.f32.mrf.mxu0
      %696 = vmatprep.mubr.f32.mxu0 0.0
      %697 = vmatmul.mubr.f32.gmra.mxu0 %v304
      %v698 = vpop.f32.mrf.mxu0
      %v699 = vadd.f32 0.0, %v698
      %v700 = vpop.f32.mrf.mxu0
      %701 = vmatprep.mubr.f32.mxu0 0.0
      %702 = vmatmul.mubr.f32.gmra.mxu0 %v307
      %v703 = vpop.f32.mrf.mxu0
      %v704 = vadd.f32 0.0, %v703
      %v705 = vpop.f32.mrf.mxu0
      %706 = vmatprep.mubr.f32.mxu0 0.0
      %707 = vmatmul.mubr.f32.gmra.mxu0 %v310
      %v708 = vpop.f32.mrf.mxu0
      %v709 = vadd.f32 0.0, %v708
      %v710 = vpop.f32.mrf.mxu0
      %711 = vmatprep.mubr.f32.mxu0 0.0
      %712 = vmatmul.mubr.f32.gmra.mxu0 %v313
      %v713 = vpop.f32.mrf.mxu0
      %v714 = vadd.f32 0.0, %v713
      %v715 = vpop.f32.mrf.mxu0
      %716 = vmatprep.mubr.f32.mxu0 0.0
      %717 = vmatmul.mubr.f32.gmra.mxu0 %v316
      %v718 = vpop.f32.mrf.mxu0
      %v719 = vadd.f32 0.0, %v718
      %v720 = vpop.f32.mrf.mxu0
      %721 = vmatprep.mubr.f32.mxu0 0.0
      %722 = vmatmul.mubr.f32.gmra.mxu0 %v319
      %v723 = vpop.f32.mrf.mxu0
      %v724 = vadd.f32 0.0, %v723
      %v725 = vpop.f32.mrf.mxu0
      %726 = vmatprep.mubr.f32.mxu0 0.0
      %727 = vmatmul.mubr.f32.gmra.mxu0 %v322
      %v728 = vpop.f32.mrf.mxu0
      %v729 = vadd.f32 0.0, %v728
      %v730 = vpop.f32.mrf.mxu0
      %731 = vmatprep.mubr.f32.mxu0 0.0
      %732 = vmatmul.mubr.f32.gmra.mxu0 %v325
      %v733 = vpop.f32.mrf.mxu0
      %v734 = vadd.f32 0.0, %v733
      %v735 = vpop.f32.mrf.mxu0
      %736 = vmatprep.mubr.f32.mxu0 0.0
      %737 = vmatmul.mubr.f32.gmra.mxu0 %v328
      %v738 = vpop.f32.mrf.mxu0
      %v739 = vadd.f32 0.0, %v738
      %v740 = vpop.f32.mrf.mxu0
      %741 = vmatprep.mubr.f32.mxu0 0.0
      %742 = vmatmul.mubr.f32.gmra.mxu0 %v331
      %v743 = vpop.f32.mrf.mxu0
      %v744 = vadd.f32 0.0, %v743
      %v745 = vpop.f32.mrf.mxu0
      %746 = vmatprep.mubr.f32.mxu0 0.0
      %747 = vmatmul.mubr.f32.gmra.mxu0 %v334
      %v748 = vpop.f32.mrf.mxu0
      %v749 = vadd.f32 0.0, %v748
      %v750 = vpop.f32.mrf.mxu0
      %751 = vmatprep.mubr.f32.mxu0 0.0
      %752 = vmatmul.mubr.f32.gmra.mxu0 %v337
      %v753 = vpop.f32.mrf.mxu0
      %v754 = vadd.f32 0.0, %v753
      %v755 = vpop.f32.mrf.mxu0
      %756 = vmatprep.mubr.f32.mxu0 0.0
      %757 = vmatmul.mubr.f32.gmra.mxu0 %v340
      %v758 = vpop.f32.mrf.mxu0
      %v759 = vadd.f32 0.0, %v758
      %v760 = vpop.f32.mrf.mxu0
      %761 = vmatprep.mubr.f32.mxu0 0.0
      %762 = vmatmul.mubr.f32.gmra.mxu0 %v343
      %v763 = vpop.f32.mrf.mxu0
      %v764 = vadd.f32 0.0, %v763
      %v765 = vpop.f32.mrf.mxu0
      %766 = vmatprep.mubr.f32.mxu0 0.0
      %767 = vmatmul.mubr.f32.gmra.mxu0 %v346
      %v768 = vpop.f32.mrf.mxu0
      %v769 = vadd.f32 0.0, %v768
      %v770 = vpop.f32.mrf.mxu0
      %771 = vmatprep.mubr.f32.mxu0 0.0
      %772 = vmatmul.mubr.f32.gmra.mxu0 %v349
      %v773 = vpop.f32.mrf.mxu0
      %v774 = vadd.f32 0.0, %v773
      %v775 = vpop.f32.mrf.mxu0
      %776 = vmatprep.mubr.f32.mxu0 0.0
      %777 = vmatmul.mubr.f32.gmra.mxu0 %v352
      %v778 = vpop.f32.mrf.mxu0
      %v779 = vadd.f32 0.0, %v778
      %v780 = vpop.f32.mrf.mxu0
      %781 = vmatprep.mubr.f32.mxu0 0.0
      %782 = vmatmul.mubr.f32.gmra.mxu0 %v355
      %v783 = vpop.f32.mrf.mxu0
      %v784 = vadd.f32 0.0, %v783
      %v785 = vpop.f32.mrf.mxu0
      %786 = vmatprep.mubr.f32.mxu0 0.0
      %787 = vmatmul.mubr.f32.gmra.mxu0 %v358
      %v788 = vpop.f32.mrf.mxu0
      %v789 = vadd.f32 0.0, %v788
      %v790 = vpop.f32.mrf.mxu0
      %791 = vmatprep.mubr.f32.mxu0 0.0
      %792 = vmatmul.mubr.f32.gmra.mxu0 %v361
      %v793 = vpop.f32.mrf.mxu0
      %v794 = vadd.f32 0.0, %v793
      %v795 = vpop.f32.mrf.mxu0
      %796 = vmatprep.mubr.f32.mxu0 0.0
      %797 = vmatmul.mubr.f32.gmra.mxu0 %v364
      %v798 = vpop.f32.mrf.mxu0
      %v799 = vadd.f32 0.0, %v798
      %v800 = vpop.f32.mrf.mxu0
      %801 = vmatprep.mubr.f32.mxu0 0.0
      %802 = vmatmul.mubr.f32.gmra.mxu0 %v367
      %v803 = vpop.f32.mrf.mxu0
      %v804 = vadd.f32 0.0, %v803
      %v805 = vpop.f32.mrf.mxu0
      %806 = vmatprep.mubr.f32.mxu0 0.0
      %807 = vmatmul.mubr.f32.gmra.mxu0 %v370
      %v808 = vpop.f32.mrf.mxu0
      %v809 = vadd.f32 0.0, %v808
      %v810 = vpop.f32.mrf.mxu0
      %811 = vmatprep.mubr.f32.mxu0 0.0
      %812 = vmatmul.mubr.f32.gmra.mxu0 %v373
      %v813 = vpop.f32.mrf.mxu0
      %v814 = vadd.f32 0.0, %v813
      %v815 = vpop.f32.mrf.mxu0
      %816 = vmatprep.mubr.f32.mxu0 0.0
      %817 = vmatmul.mubr.f32.gmra.mxu0 %v376
      %v818 = vpop.f32.mrf.mxu0
      %v819 = vadd.f32 0.0, %v818
      %v820 = vpop.f32.mrf.mxu0
      %821 = vmatprep.mubr.f32.mxu0 0.0
      %822 = vmatmul.mubr.f32.gmra.mxu0 %v379
      %v823 = vpop.f32.mrf.mxu0
      %v824 = vadd.f32 0.0, %v823
      %v825 = vpop.f32.mrf.mxu0
      %826 = vmatprep.mubr.f32.mxu0 0.0
      %827 = vmatmul.mubr.f32.gmra.mxu0 %v382
      %v828 = vpop.f32.mrf.mxu0
      %v829 = vadd.f32 0.0, %v828
      %v830 = vpop.f32.mrf.mxu0
      %831 = vmatprep.mubr.f32.mxu0 0.0
      %832 = vmatmul.mubr.f32.gmra.mxu0 %v385
      %v833 = vpop.f32.mrf.mxu0
      %v834 = vadd.f32 0.0, %v833
      %v835 = vpop.f32.mrf.mxu0
      %836 = vmatprep.mubr.f32.mxu0 0.0
      %837 = vmatmul.mubr.f32.gmra.mxu0 %v388
      %v838 = vpop.f32.mrf.mxu0
      %v839 = vadd.f32 0.0, %v838
      %v840 = vpop.f32.mrf.mxu0
      %841 = vmatprep.mubr.f32.mxu0 0.0
      %842 = vmatmul.mubr.f32.gmra.mxu0 %v391
      %v843 = vpop.f32.mrf.mxu0
      %v844 = vadd.f32 0.0, %v843
      %v845 = vpop.f32.mrf.mxu0
      %846 = vdwg.mxu0
      %v847 = vld [vmem:[%s3] sm:$0xff]
      %v848 = vld [vmem:[%s3 + $0x8] sm:$0xff]
      %v849 = vld [vmem:[%s3 + $0x10] sm:$0xff]
      %v850 = vld [vmem:[%s3 + $0x18] sm:$0xff]
      %851 = vmatprep.subr.mxu0 0.0
      %852 = vmatpush1.msra.mxu0 0.0
      %853 = vmatprep.subr.mxu0 0.0
      %854 = vmatpush1.msra.mxu0 0.0
      %855 = vmatprep.subr.mxu0 0.0
      %856 = vmatpush1.msra.mxu0 0.0
      %857 = vmatprep.subr.mxu0 0.0
      %858 = vmatpush1.msra.mxu0 0.0
      %859 = vmatprep.subr.mxu0 0.0
      %860 = vmatpush1.msra.mxu0 0.0
      %861 = vmatprep.subr.mxu0 0.0
      %862 = vmatpush1.msra.mxu0 0.0
      %863 = vmatprep.subr.mxu0 0.0
      %864 = vmatpush1.msra.mxu0 0.0
      %865 = vmatprep.subr.mxu0 0.0
      %866 = vmatpush1.msra.mxu0 0.0
      %867 = vmatprep.subr.mxu0 0.0
      %868 = vmatpush1.msra.mxu0 0.0
      %869 = vmatprep.subr.mxu0 0.0
      %870 = vmatpush1.msra.mxu0 0.0
      %871 = vmatprep.subr.mxu0 0.0
      %872 = vmatpush1.msra.mxu0 0.0
      %873 = vmatprep.subr.mxu0 0.0
      %874 = vmatpush1.msra.mxu0 0.0
      %875 = vmatprep.subr.mxu0 0.0
      %876 = vmatpush1.msra.mxu0 %v850
      %877 = vmatprep.subr.mxu0 0.0
      %878 = vmatpush1.msra.mxu0 %v849
      %879 = vmatprep.subr.mxu0 0.0
      %880 = vmatpush1.msra.mxu0 %v848
      %881 = vmatprep.subr.mxu0 0.0
      %882 = vmatpush1.msra.mxu0 %v847
      %883 = vmatprep.subr.mxu0 0.0
      %884 = vmatpush2.msra.mxu0 0.0
      %885 = vmatprep.subr.mxu0 0.0
      %886 = vmatpush2.msra.mxu0 0.0
      %887 = vmatprep.subr.mxu0 0.0
      %888 = vmatpush2.msra.mxu0 0.0
      %889 = vmatprep.subr.mxu0 0.0
      %890 = vmatpush2.msra.mxu0 0.0
      %891 = vmatprep.subr.mxu0 0.0
      %892 = vmatpush2.msra.mxu0 0.0
      %893 = vmatprep.subr.mxu0 0.0
      %894 = vmatpush2.msra.mxu0 0.0
      %895 = vmatprep.subr.mxu0 0.0
      %896 = vmatpush2.msra.mxu0 0.0
      %897 = vmatprep.subr.mxu0 0.0
      %898 = vmatpush2.msra.mxu0 0.0
      %899 = vmatprep.subr.mxu0 0.0
      %900 = vmatpush2.msra.mxu0 0.0
      %901 = vmatprep.subr.mxu0 0.0
      %902 = vmatpush2.msra.mxu0 0.0
      %903 = vmatprep.subr.mxu0 0.0
      %904 = vmatpush2.msra.mxu0 0.0
      %905 = vmatprep.subr.mxu0 0.0
      %906 = vmatpush2.msra.mxu0 0.0
      %907 = vmatprep.subr.mxu0 0.0
      %908 = vmatpush2.msra.mxu0 0.0
      %909 = vmatprep.subr.mxu0 0.0
      %910 = vmatpush2.msra.mxu0 0.0
      %911 = vmatprep.subr.mxu0 0.0
      %912 = vmatpush2.msra.mxu0 0.0
      %913 = vmatprep.subr.mxu0 0.0
      %914 = vmatpush2.msra.mxu0 0.0
      %915 = vmatprep.mubr.f32.mxu0 0.0
      %916 = vmatmul.mubr.f32.gmra.mxu0 %v298
      %v917 = vpop.f32.mrf.mxu0
      %v918 = vadd.f32 0.0, %v917
      %v919 = vpop.f32.mrf.mxu0
      %920 = vmatprep.mubr.f32.mxu0 0.0
      %921 = vmatmul.mubr.f32.gmra.mxu0 %v301
      %v922 = vpop.f32.mrf.mxu0
      %v923 = vadd.f32 0.0, %v922
      %v924 = vpop.f32.mrf.mxu0
      %925 = vmatprep.mubr.f32.mxu0 0.0
      %926 = vmatmul.mubr.f32.gmra.mxu0 %v304
      %v927 = vpop.f32.mrf.mxu0
      %v928 = vadd.f32 0.0, %v927
      %v929 = vpop.f32.mrf.mxu0
      %930 = vmatprep.mubr.f32.mxu0 0.0
      %931 = vmatmul.mubr.f32.gmra.mxu0 %v307
      %v932 = vpop.f32.mrf.mxu0
      %v933 = vadd.f32 0.0, %v932
      %v934 = vpop.f32.mrf.mxu0
      %935 = vmatprep.mubr.f32.mxu0 0.0
      %936 = vmatmul.mubr.f32.gmra.mxu0 %v310
      %v937 = vpop.f32.mrf.mxu0
      %v938 = vadd.f32 0.0, %v937
      %v939 = vpop.f32.mrf.mxu0
      %940 = vmatprep.mubr.f32.mxu0 0.0
      %941 = vmatmul.mubr.f32.gmra.mxu0 %v313
      %v942 = vpop.f32.mrf.mxu0
      %v943 = vadd.f32 0.0, %v942
      %v944 = vpop.f32.mrf.mxu0
      %945 = vmatprep.mubr.f32.mxu0 0.0
      %946 = vmatmul.mubr.f32.gmra.mxu0 %v316
      %v947 = vpop.f32.mrf.mxu0
      %v948 = vadd.f32 0.0, %v947
      %v949 = vpop.f32.mrf.mxu0
      %950 = vmatprep.mubr.f32.mxu0 0.0
      %951 = vmatmul.mubr.f32.gmra.mxu0 %v319
      %v952 = vpop.f32.mrf.mxu0
      %v953 = vadd.f32 0.0, %v952
      %v954 = vpop.f32.mrf.mxu0
      %955 = vmatprep.mubr.f32.mxu0 0.0
      %956 = vmatmul.mubr.f32.gmra.mxu0 %v322
      %v957 = vpop.f32.mrf.mxu0
      %v958 = vadd.f32 0.0, %v957
      %v959 = vpop.f32.mrf.mxu0
      %960 = vmatprep.mubr.f32.mxu0 0.0
      %961 = vmatmul.mubr.f32.gmra.mxu0 %v325
      %v962 = vpop.f32.mrf.mxu0
      %v963 = vadd.f32 0.0, %v962
      %v964 = vpop.f32.mrf.mxu0
      %965 = vmatprep.mubr.f32.mxu0 0.0
      %966 = vmatmul.mubr.f32.gmra.mxu0 %v328
      %v967 = vpop.f32.mrf.mxu0
      %v968 = vadd.f32 0.0, %v967
      %v969 = vpop.f32.mrf.mxu0
      %970 = vmatprep.mubr.f32.mxu0 0.0
      %971 = vmatmul.mubr.f32.gmra.mxu0 %v331
      %v972 = vpop.f32.mrf.mxu0
      %v973 = vadd.f32 0.0, %v972
      %v974 = vpop.f32.mrf.mxu0
      %975 = vmatprep.mubr.f32.mxu0 0.0
      %976 = vmatmul.mubr.f32.gmra.mxu0 %v334
      %v977 = vpop.f32.mrf.mxu0
      %v978 = vadd.f32 0.0, %v977
      %v979 = vpop.f32.mrf.mxu0
      %980 = vmatprep.mubr.f32.mxu0 0.0
      %981 = vmatmul.mubr.f32.gmra.mxu0 %v337
      %v982 = vpop.f32.mrf.mxu0
      %v983 = vadd.f32 0.0, %v982
      %v984 = vpop.f32.mrf.mxu0
      %985 = vmatprep.mubr.f32.mxu0 0.0
      %986 = vmatmul.mubr.f32.gmra.mxu0 %v340
      %v987 = vpop.f32.mrf.mxu0
      %v988 = vadd.f32 0.0, %v987
      %v989 = vpop.f32.mrf.mxu0
      %990 = vmatprep.mubr.f32.mxu0 0.0
      %991 = vmatmul.mubr.f32.gmra.mxu0 %v343
      %v992 = vpop.f32.mrf.mxu0
      %v993 = vadd.f32 0.0, %v992
      %v994 = vpop.f32.mrf.mxu0
      %995 = vmatprep.mubr.f32.mxu0 0.0
      %996 = vmatmul.mubr.f32.gmra.mxu0 %v346
      %v997 = vpop.f32.mrf.mxu0
      %v998 = vadd.f32 0.0, %v997
      %v999 = vpop.f32.mrf.mxu0
      %1000 = vmatprep.mubr.f32.mxu0 0.0
      %1001 = vmatmul.mubr.f32.gmra.mxu0 %v349
      %v1002 = vpop.f32.mrf.mxu0
      %v1003 = vadd.f32 0.0, %v1002
      %v1004 = vpop.f32.mrf.mxu0
      %1005 = vmatprep.mubr.f32.mxu0 0.0
      %1006 = vmatmul.mubr.f32.gmra.mxu0 %v352
      %v1007 = vpop.f32.mrf.mxu0
      %v1008 = vadd.f32 0.0, %v1007
      %v1009 = vpop.f32.mrf.mxu0
      %1010 = vmatprep.mubr.f32.mxu0 0.0
      %1011 = vmatmul.mubr.f32.gmra.mxu0 %v355
      %v1012 = vpop.f32.mrf.mxu0
      %v1013 = vadd.f32 0.0, %v1012
      %v1014 = vpop.f32.mrf.mxu0
      %1015 = vmatprep.mubr.f32.mxu0 0.0
      %1016 = vmatmul.mubr.f32.gmra.mxu0 %v358
      %v1017 = vpop.f32.mrf.mxu0
      %v1018 = vadd.f32 0.0, %v1017
      %v1019 = vpop.f32.mrf.mxu0
      %1020 = vmatprep.mubr.f32.mxu0 0.0
      %1021 = vmatmul.mubr.f32.gmra.mxu0 %v361
      %v1022 = vpop.f32.mrf.mxu0
      %v1023 = vadd.f32 0.0, %v1022
      %v1024 = vpop.f32.mrf.mxu0
      %1025 = vmatprep.mubr.f32.mxu0 0.0
      %1026 = vmatmul.mubr.f32.gmra.mxu0 %v364
      %v1027 = vpop.f32.mrf.mxu0
      %v1028 = vadd.f32 0.0, %v1027
      %v1029 = vpop.f32.mrf.mxu0
      %1030 = vmatprep.mubr.f32.mxu0 0.0
      %1031 = vmatmul.mubr.f32.gmra.mxu0 %v367
      %v1032 = vpop.f32.mrf.mxu0
      %v1033 = vadd.f32 0.0, %v1032
      %v1034 = vpop.f32.mrf.mxu0
      %1035 = vmatprep.mubr.f32.mxu0 0.0
      %1036 = vmatmul.mubr.f32.gmra.mxu0 %v370
      %v1037 = vpop.f32.mrf.mxu0
      %v1038 = vadd.f32 0.0, %v1037
      %v1039 = vpop.f32.mrf.mxu0
      %1040 = vmatprep.mubr.f32.mxu0 0.0
      %1041 = vmatmul.mubr.f32.gmra.mxu0 %v373
      %v1042 = vpop.f32.mrf.mxu0
      %v1043 = vadd.f32 0.0, %v1042
      %v1044 = vpop.f32.mrf.mxu0
      %1045 = vmatprep.mubr.f32.mxu0 0.0
      %1046 = vmatmul.mubr.f32.gmra.mxu0 %v376
      %v1047 = vpop.f32.mrf.mxu0
      %v1048 = vadd.f32 0.0, %v1047
      %v1049 = vpop.f32.mrf.mxu0
      %1050 = vmatprep.mubr.f32.mxu0 0.0
      %1051 = vmatmul.mubr.f32.gmra.mxu0 %v379
      %v1052 = vpop.f32.mrf.mxu0
      %v1053 = vadd.f32 0.0, %v1052
      %v1054 = vpop.f32.mrf.mxu0
      %1055 = vmatprep.mubr.f32.mxu0 0.0
      %1056 = vmatmul.mubr.f32.gmra.mxu0 %v382
      %v1057 = vpop.f32.mrf.mxu0
      %v1058 = vadd.f32 0.0, %v1057
      %v1059 = vpop.f32.mrf.mxu0
      %1060 = vmatprep.mubr.f32.mxu0 0.0
      %1061 = vmatmul.mubr.f32.gmra.mxu0 %v385
      %v1062 = vpop.f32.mrf.mxu0
      %v1063 = vadd.f32 0.0, %v1062
      %v1064 = vpop.f32.mrf.mxu0
      %1065 = vmatprep.mubr.f32.mxu0 0.0
      %1066 = vmatmul.mubr.f32.gmra.mxu0 %v388
      %v1067 = vpop.f32.mrf.mxu0
      %v1068 = vadd.f32 0.0, %v1067
      %v1069 = vpop.f32.mrf.mxu0
      %1070 = vmatprep.mubr.f32.mxu0 0.0
      %1071 = vmatmul.mubr.f32.gmra.mxu0 %v391
      %v1072 = vpop.f32.mrf.mxu0
      %v1073 = vadd.f32 0.0, %v1072
      %v1074 = vpop.f32.mrf.mxu0
      %1075 = vdwg.mxu0
      %vm1076 = vcmask 64512
      %v1078 = vsel %vm1076, %v460, 0
      %v1081 = vsel %vm1076, %v465, 0
      %v1084 = vsel %vm1076, %v470, 0
      %v1087 = vsel %vm1076, %v475, 0
      %v1090 = vsel %vm1076, %v480, 0
      %v1093 = vsel %vm1076, %v485, 0
      %v1096 = vsel %vm1076, %v490, 0
      %v1099 = vsel %vm1076, %v495, 0
      %v1102 = vsel %vm1076, %v689, 0
      %v1105 = vsel %vm1076, %v694, 0
      %v1108 = vsel %vm1076, %v699, 0
      %v1111 = vsel %vm1076, %v704, 0
      %v1114 = vsel %vm1076, %v709, 0
      %v1117 = vsel %vm1076, %v714, 0
      %v1120 = vsel %vm1076, %v719, 0
      %v1123 = vsel %vm1076, %v724, 0
      %1125 = vmatprep.subr.mxu0 0.0
      %1126 = vmatpush1.xpose.msra.mxu0 0.0
      %1127 = vmatprep.subr.mxu0 0.0
      %1128 = vmatpush1.xpose.msra.mxu0 0.0
      %1129 = vmatprep.subr.mxu0 0.0
      %1130 = vmatpush1.xpose.msra.mxu0 0.0
      %1131 = vmatprep.subr.mxu0 0.0
      %1132 = vmatpush1.xpose.msra.mxu0 0.0
      %1133 = vmatprep.subr.mxu0 0.0
      %1134 = vmatpush1.xpose.msra.mxu0 0.0
      %1135 = vmatprep.subr.mxu0 0.0
      %1136 = vmatpush1.xpose.msra.mxu0 0.0
      %1137 = vmatprep.subr.mxu0 0.0
      %1138 = vmatpush1.xpose.msra.mxu0 0.0
      %1139 = vmatprep.subr.mxu0 0.0
      %1140 = vmatpush1.xpose.msra.mxu0 0.0
      %1141 = vmatprep.subr.mxu0 0.0
      %1142 = vmatpush1.xpose.msra.mxu0 %v1123
      %1143 = vmatprep.subr.mxu0 0.0
      %1144 = vmatpush1.xpose.msra.mxu0 %v1120
      %1145 = vmatprep.subr.mxu0 0.0
      %1146 = vmatpush1.xpose.msra.mxu0 %v1117
      %1147 = vmatprep.subr.mxu0 0.0
      %1148 = vmatpush1.xpose.msra.mxu0 %v1114
      %1149 = vmatprep.subr.mxu0 0.0
      %1150 = vmatpush1.xpose.msra.mxu0 %v1111
      %1151 = vmatprep.subr.mxu0 0.0
      %1152 = vmatpush1.xpose.msra.mxu0 %v1108
      %1153 = vmatprep.subr.mxu0 0.0
      %1154 = vmatpush1.xpose.msra.mxu0 %v1105
      %1155 = vmatprep.subr.mxu0 0.0
      %1156 = vmatpush1.xpose.msra.mxu0 %v1102
      %1157 = vmatprep.subr.mxu0 0.0
      %1158 = vmatpush2.xpose.msra.mxu0 0.0
      %1159 = vmatprep.subr.mxu0 0.0
      %1160 = vmatpush2.xpose.msra.mxu0 0.0
      %1161 = vmatprep.subr.mxu0 0.0
      %1162 = vmatpush2.xpose.msra.mxu0 0.0
      %1163 = vmatprep.subr.mxu0 0.0
      %1164 = vmatpush2.xpose.msra.mxu0 0.0
      %1165 = vmatprep.subr.mxu0 0.0
      %1166 = vmatpush2.xpose.msra.mxu0 0.0
      %1167 = vmatprep.subr.mxu0 0.0
      %1168 = vmatpush2.xpose.msra.mxu0 0.0
      %1169 = vmatprep.subr.mxu0 0.0
      %1170 = vmatpush2.xpose.msra.mxu0 0.0
      %1171 = vmatprep.subr.mxu0 0.0
      %1172 = vmatpush2.xpose.msra.mxu0 0.0
      %1173 = vmatprep.subr.mxu0 0.0
      %1174 = vmatpush2.xpose.msra.mxu0 0.0
      %1175 = vmatprep.subr.mxu0 0.0
      %1176 = vmatpush2.xpose.msra.mxu0 0.0
      %1177 = vmatprep.subr.mxu0 0.0
      %1178 = vmatpush2.xpose.msra.mxu0 0.0
      %1179 = vmatprep.subr.mxu0 0.0
      %1180 = vmatpush2.xpose.msra.mxu0 0.0
      %1181 = vmatprep.subr.mxu0 0.0
      %1182 = vmatpush2.xpose.msra.mxu0 0.0
      %1183 = vmatprep.subr.mxu0 0.0
      %1184 = vmatpush2.xpose.msra.mxu0 0.0
      %1185 = vmatprep.subr.mxu0 0.0
      %1186 = vmatpush2.xpose.msra.mxu0 0.0
      %1187 = vmatprep.subr.mxu0 0.0
      %1188 = vmatpush2.xpose.msra.mxu0 0.0
      %1189 = vmatprep.mubr.f32.mxu0 0.0
      %1190 = vmatmul.mubr.f32.gmra.mxu0 %v1078
      %v1191 = vpop.f32.mrf.mxu0
      %v1192 = vadd.f32 0.0, %v1191
      %v1193 = vpop.f32.mrf.mxu0
      %1194 = vmatprep.mubr.f32.mxu0 0.0
      %1195 = vmatmul.mubr.f32.gmra.mxu0 %v1081
      %v1196 = vpop.f32.mrf.mxu0
      %v1197 = vadd.f32 0.0, %v1196
      %v1198 = vpop.f32.mrf.mxu0
      %1199 = vmatprep.mubr.f32.mxu0 0.0
      %1200 = vmatmul.mubr.f32.gmra.mxu0 %v1084
      %v1201 = vpop.f32.mrf.mxu0
      %v1202 = vadd.f32 0.0, %v1201
      %v1203 = vpop.f32.mrf.mxu0
      %1204 = vmatprep.mubr.f32.mxu0 0.0
      %1205 = vmatmul.mubr.f32.gmra.mxu0 %v1087
      %v1206 = vpop.f32.mrf.mxu0
      %v1207 = vadd.f32 0.0, %v1206
      %v1208 = vpop.f32.mrf.mxu0
      %1209 = vmatprep.mubr.f32.mxu0 0.0
      %1210 = vmatmul.mubr.f32.gmra.mxu0 %v1090
      %v1211 = vpop.f32.mrf.mxu0
      %v1212 = vadd.f32 0.0, %v1211
      %v1213 = vpop.f32.mrf.mxu0
      %1214 = vmatprep.mubr.f32.mxu0 0.0
      %1215 = vmatmul.mubr.f32.gmra.mxu0 %v1093
      %v1216 = vpop.f32.mrf.mxu0
      %v1217 = vadd.f32 0.0, %v1216
      %v1218 = vpop.f32.mrf.mxu0
      %1219 = vmatprep.mubr.f32.mxu0 0.0
      %1220 = vmatmul.mubr.f32.gmra.mxu0 %v1096
      %v1221 = vpop.f32.mrf.mxu0
      %v1222 = vadd.f32 0.0, %v1221
      %v1223 = vpop.f32.mrf.mxu0
      %1224 = vmatprep.mubr.f32.mxu0 0.0
      %1225 = vmatmul.mubr.f32.gmra.mxu0 %v1099
      %v1226 = vpop.f32.mrf.mxu0
      %v1227 = vadd.f32 0.0, %v1226
      %v1228 = vpop.f32.mrf.mxu0
      %1229 = vdwg.mxu0
      %v1231 = vsel %vm1076, %v500, 0
      %v1234 = vsel %vm1076, %v505, 0
      %v1237 = vsel %vm1076, %v510, 0
      %v1240 = vsel %vm1076, %v515, 0
      %v1243 = vsel %vm1076, %v520, 0
      %v1246 = vsel %vm1076, %v525, 0
      %v1249 = vsel %vm1076, %v530, 0
      %v1252 = vsel %vm1076, %v535, 0
      %v1255 = vsel %vm1076, %v729, 0
      %v1258 = vsel %vm1076, %v734, 0
      %v1261 = vsel %vm1076, %v739, 0
      %v1264 = vsel %vm1076, %v744, 0
      %v1267 = vsel %vm1076, %v749, 0
      %v1270 = vsel %vm1076, %v754, 0
      %v1273 = vsel %vm1076, %v759, 0
      %v1276 = vsel %vm1076, %v764, 0
      %1278 = vmatprep.subr.mxu0 0.0
      %1279 = vmatpush1.xpose.msra.mxu0 0.0
      %1280 = vmatprep.subr.mxu0 0.0
      %1281 = vmatpush1.xpose.msra.mxu0 0.0
      %1282 = vmatprep.subr.mxu0 0.0
      %1283 = vmatpush1.xpose.msra.mxu0 0.0
      %1284 = vmatprep.subr.mxu0 0.0
      %1285 = vmatpush1.xpose.msra.mxu0 0.0
      %1286 = vmatprep.subr.mxu0 0.0
      %1287 = vmatpush1.xpose.msra.mxu0 0.0
      %1288 = vmatprep.subr.mxu0 0.0
      %1289 = vmatpush1.xpose.msra.mxu0 0.0
      %1290 = vmatprep.subr.mxu0 0.0
      %1291 = vmatpush1.xpose.msra.mxu0 0.0
      %1292 = vmatprep.subr.mxu0 0.0
      %1293 = vmatpush1.xpose.msra.mxu0 0.0
      %1294 = vmatprep.subr.mxu0 0.0
      %1295 = vmatpush1.xpose.msra.mxu0 %v1276
      %1296 = vmatprep.subr.mxu0 0.0
      %1297 = vmatpush1.xpose.msra.mxu0 %v1273
      %1298 = vmatprep.subr.mxu0 0.0
      %1299 = vmatpush1.xpose.msra.mxu0 %v1270
      %1300 = vmatprep.subr.mxu0 0.0
      %1301 = vmatpush1.xpose.msra.mxu0 %v1267
      %1302 = vmatprep.subr.mxu0 0.0
      %1303 = vmatpush1.xpose.msra.mxu0 %v1264
      %1304 = vmatprep.subr.mxu0 0.0
      %1305 = vmatpush1.xpose.msra.mxu0 %v1261
      %1306 = vmatprep.subr.mxu0 0.0
      %1307 = vmatpush1.xpose.msra.mxu0 %v1258
      %1308 = vmatprep.subr.mxu0 0.0
      %1309 = vmatpush1.xpose.msra.mxu0 %v1255
      %1310 = vmatprep.subr.mxu0 0.0
      %1311 = vmatpush2.xpose.msra.mxu0 0.0
      %1312 = vmatprep.subr.mxu0 0.0
      %1313 = vmatpush2.xpose.msra.mxu0 0.0
      %1314 = vmatprep.subr.mxu0 0.0
      %1315 = vmatpush2.xpose.msra.mxu0 0.0
      %1316 = vmatprep.subr.mxu0 0.0
      %1317 = vmatpush2.xpose.msra.mxu0 0.0
      %1318 = vmatprep.subr.mxu0 0.0
      %1319 = vmatpush2.xpose.msra.mxu0 0.0
      %1320 = vmatprep.subr.mxu0 0.0
      %1321 = vmatpush2.xpose.msra.mxu0 0.0
      %1322 = vmatprep.subr.mxu0 0.0
      %1323 = vmatpush2.xpose.msra.mxu0 0.0
      %1324 = vmatprep.subr.mxu0 0.0
      %1325 = vmatpush2.xpose.msra.mxu0 0.0
      %1326 = vmatprep.subr.mxu0 0.0
      %1327 = vmatpush2.xpose.msra.mxu0 0.0
      %1328 = vmatprep.subr.mxu0 0.0
      %1329 = vmatpush2.xpose.msra.mxu0 0.0
      %1330 = vmatprep.subr.mxu0 0.0
      %1331 = vmatpush2.xpose.msra.mxu0 0.0
      %1332 = vmatprep.subr.mxu0 0.0
      %1333 = vmatpush2.xpose.msra.mxu0 0.0
      %1334 = vmatprep.subr.mxu0 0.0
      %1335 = vmatpush2.xpose.msra.mxu0 0.0
      %1336 = vmatprep.subr.mxu0 0.0
      %1337 = vmatpush2.xpose.msra.mxu0 0.0
      %1338 = vmatprep.subr.mxu0 0.0
      %1339 = vmatpush2.xpose.msra.mxu0 0.0
      %1340 = vmatprep.subr.mxu0 0.0
      %1341 = vmatpush2.xpose.msra.mxu0 0.0
      %1342 = vmatprep.mubr.f32.mxu0 0.0
      %1343 = vmatmul.mubr.f32.gmra.mxu0 %v1231
      %v1344 = vpop.f32.mrf.mxu0
      %v1345 = vadd.f32 0.0, %v1344
      %v1346 = vpop.f32.mrf.mxu0
      %1347 = vmatprep.mubr.f32.mxu0 0.0
      %1348 = vmatmul.mubr.f32.gmra.mxu0 %v1234
      %v1349 = vpop.f32.mrf.mxu0
      %v1350 = vadd.f32 0.0, %v1349
      %v1351 = vpop.f32.mrf.mxu0
      %1352 = vmatprep.mubr.f32.mxu0 0.0
      %1353 = vmatmul.mubr.f32.gmra.mxu0 %v1237
      %v1354 = vpop.f32.mrf.mxu0
      %v1355 = vadd.f32 0.0, %v1354
      %v1356 = vpop.f32.mrf.mxu0
      %1357 = vmatprep.mubr.f32.mxu0 0.0
      %1358 = vmatmul.mubr.f32.gmra.mxu0 %v1240
      %v1359 = vpop.f32.mrf.mxu0
      %v1360 = vadd.f32 0.0, %v1359
      %v1361 = vpop.f32.mrf.mxu0
      %1362 = vmatprep.mubr.f32.mxu0 0.0
      %1363 = vmatmul.mubr.f32.gmra.mxu0 %v1243
      %v1364 = vpop.f32.mrf.mxu0
      %v1365 = vadd.f32 0.0, %v1364
      %v1366 = vpop.f32.mrf.mxu0
      %1367 = vmatprep.mubr.f32.mxu0 0.0
      %1368 = vmatmul.mubr.f32.gmra.mxu0 %v1246
      %v1369 = vpop.f32.mrf.mxu0
      %v1370 = vadd.f32 0.0, %v1369
      %v1371 = vpop.f32.mrf.mxu0
      %1372 = vmatprep.mubr.f32.mxu0 0.0
      %1373 = vmatmul.mubr.f32.gmra.mxu0 %v1249
      %v1374 = vpop.f32.mrf.mxu0
      %v1375 = vadd.f32 0.0, %v1374
      %v1376 = vpop.f32.mrf.mxu0
      %1377 = vmatprep.mubr.f32.mxu0 0.0
      %1378 = vmatmul.mubr.f32.gmra.mxu0 %v1252
      %v1379 = vpop.f32.mrf.mxu0
      %v1380 = vadd.f32 0.0, %v1379
      %v1381 = vpop.f32.mrf.mxu0
      %1382 = vdwg.mxu0
      %v1384 = vsel %vm1076, %v540, 0
      %v1387 = vsel %vm1076, %v545, 0
      %v1390 = vsel %vm1076, %v550, 0
      %v1393 = vsel %vm1076, %v555, 0
      %v1396 = vsel %vm1076, %v560, 0
      %v1399 = vsel %vm1076, %v565, 0
      %v1402 = vsel %vm1076, %v570, 0
      %v1405 = vsel %vm1076, %v575, 0
      %v1408 = vsel %vm1076, %v769, 0
      %v1411 = vsel %vm1076, %v774, 0
      %v1414 = vsel %vm1076, %v779, 0
      %v1417 = vsel %vm1076, %v784, 0
      %v1420 = vsel %vm1076, %v789, 0
      %v1423 = vsel %vm1076, %v794, 0
      %v1426 = vsel %vm1076, %v799, 0
      %v1429 = vsel %vm1076, %v804, 0
      %1431 = vmatprep.subr.mxu0 0.0
      %1432 = vmatpush1.xpose.msra.mxu0 0.0
      %1433 = vmatprep.subr.mxu0 0.0
      %1434 = vmatpush1.xpose.msra.mxu0 0.0
      %1435 = vmatprep.subr.mxu0 0.0
      %1436 = vmatpush1.xpose.msra.mxu0 0.0
      %1437 = vmatprep.subr.mxu0 0.0
      %1438 = vmatpush1.xpose.msra.mxu0 0.0
      %1439 = vmatprep.subr.mxu0 0.0
      %1440 = vmatpush1.xpose.msra.mxu0 0.0
      %1441 = vmatprep.subr.mxu0 0.0
      %1442 = vmatpush1.xpose.msra.mxu0 0.0
      %1443 = vmatprep.subr.mxu0 0.0
      %1444 = vmatpush1.xpose.msra.mxu0 0.0
      %1445 = vmatprep.subr.mxu0 0.0
      %1446 = vmatpush1.xpose.msra.mxu0 0.0
      %1447 = vmatprep.subr.mxu0 0.0
      %1448 = vmatpush1.xpose.msra.mxu0 %v1429
      %1449 = vmatprep.subr.mxu0 0.0
      %1450 = vmatpush1.xpose.msra.mxu0 %v1426
      %1451 = vmatprep.subr.mxu0 0.0
      %1452 = vmatpush1.xpose.msra.mxu0 %v1423
      %1453 = vmatprep.subr.mxu0 0.0
      %1454 = vmatpush1.xpose.msra.mxu0 %v1420
      %1455 = vmatprep.subr.mxu0 0.0
      %1456 = vmatpush1.xpose.msra.mxu0 %v1417
      %1457 = vmatprep.subr.mxu0 0.0
      %1458 = vmatpush1.xpose.msra.mxu0 %v1414
      %1459 = vmatprep.subr.mxu0 0.0
      %1460 = vmatpush1.xpose.msra.mxu0 %v1411
      %1461 = vmatprep.subr.mxu0 0.0
      %1462 = vmatpush1.xpose.msra.mxu0 %v1408
      %1463 = vmatprep.subr.mxu0 0.0
      %1464 = vmatpush2.xpose.msra.mxu0 0.0
      %1465 = vmatprep.subr.mxu0 0.0
      %1466 = vmatpush2.xpose.msra.mxu0 0.0
      %1467 = vmatprep.subr.mxu0 0.0
      %1468 = vmatpush2.xpose.msra.mxu0 0.0
      %1469 = vmatprep.subr.mxu0 0.0
      %1470 = vmatpush2.xpose.msra.mxu0 0.0
      %1471 = vmatprep.subr.mxu0 0.0
      %1472 = vmatpush2.xpose.msra.mxu0 0.0
      %1473 = vmatprep.subr.mxu0 0.0
      %1474 = vmatpush2.xpose.msra.mxu0 0.0
      %1475 = vmatprep.subr.mxu0 0.0
      %1476 = vmatpush2.xpose.msra.mxu0 0.0
      %1477 = vmatprep.subr.mxu0 0.0
      %1478 = vmatpush2.xpose.msra.mxu0 0.0
      %1479 = vmatprep.subr.mxu0 0.0
      %1480 = vmatpush2.xpose.msra.mxu0 0.0
      %1481 = vmatprep.subr.mxu0 0.0
      %1482 = vmatpush2.xpose.msra.mxu0 0.0
      %1483 = vmatprep.subr.mxu0 0.0
      %1484 = vmatpush2.xpose.msra.mxu0 0.0
      %1485 = vmatprep.subr.mxu0 0.0
      %1486 = vmatpush2.xpose.msra.mxu0 0.0
      %1487 = vmatprep.subr.mxu0 0.0
      %1488 = vmatpush2.xpose.msra.mxu0 0.0
      %1489 = vmatprep.subr.mxu0 0.0
      %1490 = vmatpush2.xpose.msra.mxu0 0.0
      %1491 = vmatprep.subr.mxu0 0.0
      %1492 = vmatpush2.xpose.msra.mxu0 0.0
      %1493 = vmatprep.subr.mxu0 0.0
      %1494 = vmatpush2.xpose.msra.mxu0 0.0
      %1495 = vmatprep.mubr.f32.mxu0 0.0
      %1496 = vmatmul.mubr.f32.gmra.mxu0 %v1384
      %v1497 = vpop.f32.mrf.mxu0
      %v1498 = vadd.f32 0.0, %v1497
      %v1499 = vpop.f32.mrf.mxu0
      %1500 = vmatprep.mubr.f32.mxu0 0.0
      %1501 = vmatmul.mubr.f32.gmra.mxu0 %v1387
      %v1502 = vpop.f32.mrf.mxu0
      %v1503 = vadd.f32 0.0, %v1502
      %v1504 = vpop.f32.mrf.mxu0
      %1505 = vmatprep.mubr.f32.mxu0 0.0
      %1506 = vmatmul.mubr.f32.gmra.mxu0 %v1390
      %v1507 = vpop.f32.mrf.mxu0
      %v1508 = vadd.f32 0.0, %v1507
      %v1509 = vpop.f32.mrf.mxu0
      %1510 = vmatprep.mubr.f32.mxu0 0.0
      %1511 = vmatmul.mubr.f32.gmra.mxu0 %v1393
      %v1512 = vpop.f32.mrf.mxu0
      %v1513 = vadd.f32 0.0, %v1512
      %v1514 = vpop.f32.mrf.mxu0
      %1515 = vmatprep.mubr.f32.mxu0 0.0
      %1516 = vmatmul.mubr.f32.gmra.mxu0 %v1396
      %v1517 = vpop.f32.mrf.mxu0
      %v1518 = vadd.f32 0.0, %v1517
      %v1519 = vpop.f32.mrf.mxu0
      %1520 = vmatprep.mubr.f32.mxu0 0.0
      %1521 = vmatmul.mubr.f32.gmra.mxu0 %v1399
      %v1522 = vpop.f32.mrf.mxu0
      %v1523 = vadd.f32 0.0, %v1522
      %v1524 = vpop.f32.mrf.mxu0
      %1525 = vmatprep.mubr.f32.mxu0 0.0
      %1526 = vmatmul.mubr.f32.gmra.mxu0 %v1402
      %v1527 = vpop.f32.mrf.mxu0
      %v1528 = vadd.f32 0.0, %v1527
      %v1529 = vpop.f32.mrf.mxu0
      %1530 = vmatprep.mubr.f32.mxu0 0.0
      %1531 = vmatmul.mubr.f32.gmra.mxu0 %v1405
      %v1532 = vpop.f32.mrf.mxu0
      %v1533 = vadd.f32 0.0, %v1532
      %v1534 = vpop.f32.mrf.mxu0
      %1535 = vdwg.mxu0
      %v1537 = vsel %vm1076, %v580, 0
      %v1540 = vsel %vm1076, %v585, 0
      %v1543 = vsel %vm1076, %v590, 0
      %v1546 = vsel %vm1076, %v595, 0
      %v1549 = vsel %vm1076, %v600, 0
      %v1552 = vsel %vm1076, %v605, 0
      %v1555 = vsel %vm1076, %v610, 0
      %v1558 = vsel %vm1076, %v615, 0
      %v1561 = vsel %vm1076, %v809, 0
      %v1564 = vsel %vm1076, %v814, 0
      %v1567 = vsel %vm1076, %v819, 0
      %v1570 = vsel %vm1076, %v824, 0
      %v1573 = vsel %vm1076, %v829, 0
      %v1576 = vsel %vm1076, %v834, 0
      %v1579 = vsel %vm1076, %v839, 0
      %v1582 = vsel %vm1076, %v844, 0
      %1584 = vmatprep.subr.mxu0 0.0
      %1585 = vmatpush1.xpose.msra.mxu0 0.0
      %1586 = vmatprep.subr.mxu0 0.0
      %1587 = vmatpush1.xpose.msra.mxu0 0.0
      %1588 = vmatprep.subr.mxu0 0.0
      %1589 = vmatpush1.xpose.msra.mxu0 0.0
      %1590 = vmatprep.subr.mxu0 0.0
      %1591 = vmatpush1.xpose.msra.mxu0 0.0
      %1592 = vmatprep.subr.mxu0 0.0
      %1593 = vmatpush1.xpose.msra.mxu0 0.0
      %1594 = vmatprep.subr.mxu0 0.0
      %1595 = vmatpush1.xpose.msra.mxu0 0.0
      %1596 = vmatprep.subr.mxu0 0.0
      %1597 = vmatpush1.xpose.msra.mxu0 0.0
      %1598 = vmatprep.subr.mxu0 0.0
      %1599 = vmatpush1.xpose.msra.mxu0 0.0
      %1600 = vmatprep.subr.mxu0 0.0
      %1601 = vmatpush1.xpose.msra.mxu0 %v1582
      %1602 = vmatprep.subr.mxu0 0.0
      %1603 = vmatpush1.xpose.msra.mxu0 %v1579
      %1604 = vmatprep.subr.mxu0 0.0
      %1605 = vmatpush1.xpose.msra.mxu0 %v1576
      %1606 = vmatprep.subr.mxu0 0.0
      %1607 = vmatpush1.xpose.msra.mxu0 %v1573
      %1608 = vmatprep.subr.mxu0 0.0
      %1609 = vmatpush1.xpose.msra.mxu0 %v1570
      %1610 = vmatprep.subr.mxu0 0.0
      %1611 = vmatpush1.xpose.msra.mxu0 %v1567
      %1612 = vmatprep.subr.mxu0 0.0
      %1613 = vmatpush1.xpose.msra.mxu0 %v1564
      %1614 = vmatprep.subr.mxu0 0.0
      %1615 = vmatpush1.xpose.msra.mxu0 %v1561
      %1616 = vmatprep.subr.mxu0 0.0
      %1617 = vmatpush2.xpose.msra.mxu0 0.0
      %1618 = vmatprep.subr.mxu0 0.0
      %1619 = vmatpush2.xpose.msra.mxu0 0.0
      %1620 = vmatprep.subr.mxu0 0.0
      %1621 = vmatpush2.xpose.msra.mxu0 0.0
      %1622 = vmatprep.subr.mxu0 0.0
      %1623 = vmatpush2.xpose.msra.mxu0 0.0
      %1624 = vmatprep.subr.mxu0 0.0
      %1625 = vmatpush2.xpose.msra.mxu0 0.0
      %1626 = vmatprep.subr.mxu0 0.0
      %1627 = vmatpush2.xpose.msra.mxu0 0.0
      %1628 = vmatprep.subr.mxu0 0.0
      %1629 = vmatpush2.xpose.msra.mxu0 0.0
      %1630 = vmatprep.subr.mxu0 0.0
      %1631 = vmatpush2.xpose.msra.mxu0 0.0
      %1632 = vmatprep.subr.mxu0 0.0
      %1633 = vmatpush2.xpose.msra.mxu0 0.0
      %1634 = vmatprep.subr.mxu0 0.0
      %1635 = vmatpush2.xpose.msra.mxu0 0.0
      %1636 = vmatprep.subr.mxu0 0.0
      %1637 = vmatpush2.xpose.msra.mxu0 0.0
      %1638 = vmatprep.subr.mxu0 0.0
      %1639 = vmatpush2.xpose.msra.mxu0 0.0
      %1640 = vmatprep.subr.mxu0 0.0
      %1641 = vmatpush2.xpose.msra.mxu0 0.0
      %1642 = vmatprep.subr.mxu0 0.0
      %1643 = vmatpush2.xpose.msra.mxu0 0.0
      %1644 = vmatprep.subr.mxu0 0.0
      %1645 = vmatpush2.xpose.msra.mxu0 0.0
      %1646 = vmatprep.subr.mxu0 0.0
      %1647 = vmatpush2.xpose.msra.mxu0 0.0
      %1648 = vmatprep.mubr.f32.mxu0 0.0
      %1649 = vmatmul.mubr.f32.gmra.mxu0 %v1537
      %v1650 = vpop.f32.mrf.mxu0
      %v1651 = vadd.f32 0.0, %v1650
      %v1652 = vpop.f32.mrf.mxu0
      %1653 = vmatprep.mubr.f32.mxu0 0.0
      %1654 = vmatmul.mubr.f32.gmra.mxu0 %v1540
      %v1655 = vpop.f32.mrf.mxu0
      %v1656 = vadd.f32 0.0, %v1655
      %v1657 = vpop.f32.mrf.mxu0
      %1658 = vmatprep.mubr.f32.mxu0 0.0
      %1659 = vmatmul.mubr.f32.gmra.mxu0 %v1543
      %v1660 = vpop.f32.mrf.mxu0
      %v1661 = vadd.f32 0.0, %v1660
      %v1662 = vpop.f32.mrf.mxu0
      %1663 = vmatprep.mubr.f32.mxu0 0.0
      %1664 = vmatmul.mubr.f32.gmra.mxu0 %v1546
      %v1665 = vpop.f32.mrf.mxu0
      %v1666 = vadd.f32 0.0, %v1665
      %v1667 = vpop.f32.mrf.mxu0
      %1668 = vmatprep.mubr.f32.mxu0 0.0
      %1669 = vmatmul.mubr.f32.gmra.mxu0 %v1549
      %v1670 = vpop.f32.mrf.mxu0
      %v1671 = vadd.f32 0.0, %v1670
      %v1672 = vpop.f32.mrf.mxu0
      %1673 = vmatprep.mubr.f32.mxu0 0.0
      %1674 = vmatmul.mubr.f32.gmra.mxu0 %v1552
      %v1675 = vpop.f32.mrf.mxu0
      %v1676 = vadd.f32 0.0, %v1675
      %v1677 = vpop.f32.mrf.mxu0
      %1678 = vmatprep.mubr.f32.mxu0 0.0
      %1679 = vmatmul.mubr.f32.gmra.mxu0 %v1555
      %v1680 = vpop.f32.mrf.mxu0
      %v1681 = vadd.f32 0.0, %v1680
      %v1682 = vpop.f32.mrf.mxu0
      %1683 = vmatprep.mubr.f32.mxu0 0.0
      %1684 = vmatmul.mubr.f32.gmra.mxu0 %v1558
      %v1685 = vpop.f32.mrf.mxu0
      %v1686 = vadd.f32 0.0, %v1685
      %v1687 = vpop.f32.mrf.mxu0
      %1688 = vdwg.mxu0
      %vm1689 = vcmask 523264
      %v1690 = vsel %vm1689, %v1192, -inf
      %1691 = vmax.xlane.f32.xlu0 %v1690
      %v1692 = vpop.xlane.xlu0 %1691
      %v1693 = vsel %vm1689, %v1197, -inf
      %1694 = vmax.xlane.f32.xlu0 %v1693
      %v1695 = vpop.xlane.xlu0 %1694
      %v1696 = vsel %vm1689, %v1202, -inf
      %1697 = vmax.xlane.f32.xlu0 %v1696
      %v1698 = vpop.xlane.xlu0 %1697
      %v1699 = vsel %vm1689, %v1207, -inf
      %1700 = vmax.xlane.f32.xlu0 %v1699
      %v1701 = vpop.xlane.xlu0 %1700
      %v1702 = vsel %vm1689, %v1212, -inf
      %1703 = vmax.xlane.f32.xlu0 %v1702
      %v1704 = vpop.xlane.xlu0 %1703
      %v1705 = vsel %vm1689, %v1217, -inf
      %1706 = vmax.xlane.f32.xlu0 %v1705
      %v1707 = vpop.xlane.xlu0 %1706
      %v1708 = vsel %vm1689, %v1222, -inf
      %1709 = vmax.xlane.f32.xlu0 %v1708
      %v1710 = vpop.xlane.xlu0 %1709
      %v1711 = vsel %vm1689, %v1227, -inf
      %1712 = vmax.xlane.f32.xlu0 %v1711
      %v1713 = vpop.xlane.xlu0 %1712
      %v1714 = vsel %vm1689, %v1345, -inf
      %1715 = vmax.xlane.f32.xlu0 %v1714
      %v1716 = vpop.xlane.xlu0 %1715
      %v1717 = vsel %vm1689, %v1350, -inf
      %1718 = vmax.xlane.f32.xlu0 %v1717
      %v1719 = vpop.xlane.xlu0 %1718
      %v1720 = vsel %vm1689, %v1355, -inf
      %1721 = vmax.xlane.f32.xlu0 %v1720
      %v1722 = vpop.xlane.xlu0 %1721
      %v1723 = vsel %vm1689, %v1360, -inf
      %1724 = vmax.xlane.f32.xlu0 %v1723
      %v1725 = vpop.xlane.xlu0 %1724
      %v1726 = vsel %vm1689, %v1365, -inf
      %1727 = vmax.xlane.f32.xlu0 %v1726
      %v1728 = vpop.xlane.xlu0 %1727
      %v1729 = vsel %vm1689, %v1370, -inf
      %1730 = vmax.xlane.f32.xlu0 %v1729
      %v1731 = vpop.xlane.xlu0 %1730
      %v1732 = vsel %vm1689, %v1375, -inf
      %1733 = vmax.xlane.f32.xlu0 %v1732
      %v1734 = vpop.xlane.xlu0 %1733
      %v1735 = vsel %vm1689, %v1380, -inf
      %1736 = vmax.xlane.f32.xlu0 %v1735
      %v1737 = vpop.xlane.xlu0 %1736
      %v1738 = vsel %vm1689, %v1498, -inf
      %1739 = vmax.xlane.f32.xlu0 %v1738
      %v1740 = vpop.xlane.xlu0 %1739
      %v1741 = vsel %vm1689, %v1503, -inf
      %1742 = vmax.xlane.f32.xlu0 %v1741
      %v1743 = vpop.xlane.xlu0 %1742
      %v1744 = vsel %vm1689, %v1508, -inf
      %1745 = vmax.xlane.f32.xlu0 %v1744
      %v1746 = vpop.xlane.xlu0 %1745
      %v1747 = vsel %vm1689, %v1513, -inf
      %1748 = vmax.xlane.f32.xlu0 %v1747
      %v1749 = vpop.xlane.xlu0 %1748
      %v1750 = vsel %vm1689, %v1518, -inf
      %1751 = vmax.xlane.f32.xlu0 %v1750
      %v1752 = vpop.xlane.xlu0 %1751
      %v1753 = vsel %vm1689, %v1523, -inf
      %1754 = vmax.xlane.f32.xlu0 %v1753
      %v1755 = vpop.xlane.xlu0 %1754
      %v1756 = vsel %vm1689, %v1528, -inf
      %1757 = vmax.xlane.f32.xlu0 %v1756
      %v1758 = vpop.xlane.xlu0 %1757
      %v1759 = vsel %vm1689, %v1533, -inf
      %1760 = vmax.xlane.f32.xlu0 %v1759
      %v1761 = vpop.xlane.xlu0 %1760
      %v1762 = vsel %vm1689, %v1651, -inf
      %1763 = vmax.xlane.f32.xlu0 %v1762
      %v1764 = vpop.xlane.xlu0 %1763
      %v1765 = vsel %vm1689, %v1656, -inf
      %1766 = vmax.xlane.f32.xlu0 %v1765
      %v1767 = vpop.xlane.xlu0 %1766
      %v1768 = vsel %vm1689, %v1661, -inf
      %1769 = vmax.xlane.f32.xlu0 %v1768
      %v1770 = vpop.xlane.xlu0 %1769
      %v1771 = vsel %vm1689, %v1666, -inf
      %1772 = vmax.xlane.f32.xlu0 %v1771
      %v1773 = vpop.xlane.xlu0 %1772
      %v1774 = vsel %vm1689, %v1671, -inf
      %1775 = vmax.xlane.f32.xlu0 %v1774
      %v1776 = vpop.xlane.xlu0 %1775
      %v1777 = vsel %vm1689, %v1676, -inf
      %1778 = vmax.xlane.f32.xlu0 %v1777
      %v1779 = vpop.xlane.xlu0 %1778
      %v1780 = vsel %vm1689, %v1681, -inf
      %1781 = vmax.xlane.f32.xlu0 %v1780
      %v1782 = vpop.xlane.xlu0 %1781
      %v1783 = vsel %vm1689, %v1686, -inf
      %1784 = vmax.xlane.f32.xlu0 %v1783
      %v1785 = vpop.xlane.xlu0 %1784
      %v1786 = vsub.f32 %v1192, %v1692
      %v1787 = vsub.f32 %v1197, %v1695
      %v1788 = vsub.f32 %v1202, %v1698
      %v1789 = vsub.f32 %v1207, %v1701
      %v1790 = vsub.f32 %v1212, %v1704
      %v1791 = vsub.f32 %v1217, %v1707
      %v1792 = vsub.f32 %v1222, %v1710
      %v1793 = vsub.f32 %v1227, %v1713
      %v1794 = vsub.f32 %v1345, %v1716
      %v1795 = vsub.f32 %v1350, %v1719
      %v1796 = vsub.f32 %v1355, %v1722
      %v1797 = vsub.f32 %v1360, %v1725
      %v1798 = vsub.f32 %v1365, %v1728
      %v1799 = vsub.f32 %v1370, %v1731
      %v1800 = vsub.f32 %v1375, %v1734
      %v1801 = vsub.f32 %v1380, %v1737
      %v1802 = vsub.f32 %v1498, %v1740
      %v1803 = vsub.f32 %v1503, %v1743
      %v1804 = vsub.f32 %v1508, %v1746
      %v1805 = vsub.f32 %v1513, %v1749
      %v1806 = vsub.f32 %v1518, %v1752
      %v1807 = vsub.f32 %v1523, %v1755
      %v1808 = vsub.f32 %v1528, %v1758
      %v1809 = vsub.f32 %v1533, %v1761
      %v1810 = vsub.f32 %v1651, %v1764
      %v1811 = vsub.f32 %v1656, %v1767
      %v1812 = vsub.f32 %v1661, %v1770
      %v1813 = vsub.f32 %v1666, %v1773
      %v1814 = vsub.f32 %v1671, %v1776
      %v1815 = vsub.f32 %v1676, %v1779
      %v1816 = vsub.f32 %v1681, %v1782
      %v1817 = vsub.f32 %v1686, %v1785
      %v1818 = vmul.f32 %v1786, 1.442695
      %v1819 = vpow.pop %v1818
      %v1820 = vmul.f32 %v1787, 1.442695
      %v1821 = vpow.pop %v1820
      %v1822 = vmul.f32 %v1788, 1.442695
      %v1823 = vpow.pop %v1822
      %v1824 = vmul.f32 %v1789, 1.442695
      %v1825 = vpow.pop %v1824
      %v1826 = vmul.f32 %v1790, 1.442695
      %v1827 = vpow.pop %v1826
      %v1828 = vmul.f32 %v1791, 1.442695
      %v1829 = vpow.pop %v1828
      %v1830 = vmul.f32 %v1792, 1.442695
      %v1831 = vpow.pop %v1830
      %v1832 = vmul.f32 %v1793, 1.442695
      %v1833 = vpow.pop %v1832
      %v1834 = vmul.f32 %v1794, 1.442695
      %v1835 = vpow.pop %v1834
      %v1836 = vmul.f32 %v1795, 1.442695
      %v1837 = vpow.pop %v1836
      %v1838 = vmul.f32 %v1796, 1.442695
      %v1839 = vpow.pop %v1838
      %v1840 = vmul.f32 %v1797, 1.442695
      %v1841 = vpow.pop %v1840
      %v1842 = vmul.f32 %v1798, 1.442695
      %v1843 = vpow.pop %v1842
      %v1844 = vmul.f32 %v1799, 1.442695
      %v1845 = vpow.pop %v1844
      %v1846 = vmul.f32 %v1800, 1.442695
      %v1847 = vpow.pop %v1846
      %v1848 = vmul.f32 %v1801, 1.442695
      %v1849 = vpow.pop %v1848
      %v1850 = vmul.f32 %v1802, 1.442695
      %v1851 = vpow.pop %v1850
      %v1852 = vmul.f32 %v1803, 1.442695
      %v1853 = vpow.pop %v1852
      %v1854 = vmul.f32 %v1804, 1.442695
      %v1855 = vpow.pop %v1854
      %v1856 = vmul.f32 %v1805, 1.442695
      %v1857 = vpow.pop %v1856
      %v1858 = vmul.f32 %v1806, 1.442695
      %v1859 = vpow.pop %v1858
      %v1860 = vmul.f32 %v1807, 1.442695
      %v1861 = vpow.pop %v1860
      %v1862 = vmul.f32 %v1808, 1.442695
      %v1863 = vpow.pop %v1862
      %v1864 = vmul.f32 %v1809, 1.442695
      %v1865 = vpow.pop %v1864
      %v1866 = vmul.f32 %v1810, 1.442695
      %v1867 = vpow.pop %v1866
      %v1868 = vmul.f32 %v1811, 1.442695
      %v1869 = vpow.pop %v1868
      %v1870 = vmul.f32 %v1812, 1.442695
      %v1871 = vpow.pop %v1870
      %v1872 = vmul.f32 %v1813, 1.442695
      %v1873 = vpow.pop %v1872
      %v1874 = vmul.f32 %v1814, 1.442695
      %v1875 = vpow.pop %v1874
      %v1876 = vmul.f32 %v1815, 1.442695
      %v1877 = vpow.pop %v1876
      %v1878 = vmul.f32 %v1816, 1.442695
      %v1879 = vpow.pop %v1878
      %v1880 = vmul.f32 %v1817, 1.442695
      %v1881 = vpow.pop %v1880
      %v1882 = vsel %vm1689, %v1819, 0.0
      %1883 = vadd.xlane.f32.xlu0 %v1882
      %v1884 = vpop.xlane.xlu0 %1883
      %v1885 = vsel %vm1689, %v1821, 0.0
      %1886 = vadd.xlane.f32.xlu0 %v1885
      %v1887 = vpop.xlane.xlu0 %1886
      %v1888 = vsel %vm1689, %v1823, 0.0
      %1889 = vadd.xlane.f32.xlu0 %v1888
      %v1890 = vpop.xlane.xlu0 %1889
      %v1891 = vsel %vm1689, %v1825, 0.0
      %1892 = vadd.xlane.f32.xlu0 %v1891
      %v1893 = vpop.xlane.xlu0 %1892
      %v1894 = vsel %vm1689, %v1827, 0.0
      %1895 = vadd.xlane.f32.xlu0 %v1894
      %v1896 = vpop.xlane.xlu0 %1895
      %v1897 = vsel %vm1689, %v1829, 0.0
      %1898 = vadd.xlane.f32.xlu0 %v1897
      %v1899 = vpop.xlane.xlu0 %1898
      %v1900 = vsel %vm1689, %v1831, 0.0
      %1901 = vadd.xlane.f32.xlu0 %v1900
      %v1902 = vpop.xlane.xlu0 %1901
      %v1903 = vsel %vm1689, %v1833, 0.0
      %1904 = vadd.xlane.f32.xlu0 %v1903
      %v1905 = vpop.xlane.xlu0 %1904
      %v1906 = vsel %vm1689, %v1835, 0.0
      %1907 = vadd.xlane.f32.xlu0 %v1906
      %v1908 = vpop.xlane.xlu0 %1907
      %v1909 = vsel %vm1689, %v1837, 0.0
      %1910 = vadd.xlane.f32.xlu0 %v1909
      %v1911 = vpop.xlane.xlu0 %1910
      %v1912 = vsel %vm1689, %v1839, 0.0
      %1913 = vadd.xlane.f32.xlu0 %v1912
      %v1914 = vpop.xlane.xlu0 %1913
      %v1915 = vsel %vm1689, %v1841, 0.0
      %1916 = vadd.xlane.f32.xlu0 %v1915
      %v1917 = vpop.xlane.xlu0 %1916
      %v1918 = vsel %vm1689, %v1843, 0.0
      %1919 = vadd.xlane.f32.xlu0 %v1918
      %v1920 = vpop.xlane.xlu0 %1919
      %v1921 = vsel %vm1689, %v1845, 0.0
      %1922 = vadd.xlane.f32.xlu0 %v1921
      %v1923 = vpop.xlane.xlu0 %1922
      %v1924 = vsel %vm1689, %v1847, 0.0
      %1925 = vadd.xlane.f32.xlu0 %v1924
      %v1926 = vpop.xlane.xlu0 %1925
      %v1927 = vsel %vm1689, %v1849, 0.0
      %1928 = vadd.xlane.f32.xlu0 %v1927
      %v1929 = vpop.xlane.xlu0 %1928
      %v1930 = vsel %vm1689, %v1851, 0.0
      %1931 = vadd.xlane.f32.xlu0 %v1930
      %v1932 = vpop.xlane.xlu0 %1931
      %v1933 = vsel %vm1689, %v1853, 0.0
      %1934 = vadd.xlane.f32.xlu0 %v1933
      %v1935 = vpop.xlane.xlu0 %1934
      %v1936 = vsel %vm1689, %v1855, 0.0
      %1937 = vadd.xlane.f32.xlu0 %v1936
      %v1938 = vpop.xlane.xlu0 %1937
      %v1939 = vsel %vm1689, %v1857, 0.0
      %1940 = vadd.xlane.f32.xlu0 %v1939
      %v1941 = vpop.xlane.xlu0 %1940
      %v1942 = vsel %vm1689, %v1859, 0.0
      %1943 = vadd.xlane.f32.xlu0 %v1942
      %v1944 = vpop.xlane.xlu0 %1943
      %v1945 = vsel %vm1689, %v1861, 0.0
      %1946 = vadd.xlane.f32.xlu0 %v1945
      %v1947 = vpop.xlane.xlu0 %1946
      %v1948 = vsel %vm1689, %v1863, 0.0
      %1949 = vadd.xlane.f32.xlu0 %v1948
      %v1950 = vpop.xlane.xlu0 %1949
      %v1951 = vsel %vm1689, %v1865, 0.0
      %1952 = vadd.xlane.f32.xlu0 %v1951
      %v1953 = vpop.xlane.xlu0 %1952
      %v1954 = vsel %vm1689, %v1867, 0.0
      %1955 = vadd.xlane.f32.xlu0 %v1954
      %v1956 = vpop.xlane.xlu0 %1955
      %v1957 = vsel %vm1689, %v1869, 0.0
      %1958 = vadd.xlane.f32.xlu0 %v1957
      %v1959 = vpop.xlane.xlu0 %1958
      %v1960 = vsel %vm1689, %v1871, 0.0
      %1961 = vadd.xlane.f32.xlu0 %v1960
      %v1962 = vpop.xlane.xlu0 %1961
      %v1963 = vsel %vm1689, %v1873, 0.0
      %1964 = vadd.xlane.f32.xlu0 %v1963
      %v1965 = vpop.xlane.xlu0 %1964
      %v1966 = vsel %vm1689, %v1875, 0.0
      %1967 = vadd.xlane.f32.xlu0 %v1966
      %v1968 = vpop.xlane.xlu0 %1967
      %v1969 = vsel %vm1689, %v1877, 0.0
      %1970 = vadd.xlane.f32.xlu0 %v1969
      %v1971 = vpop.xlane.xlu0 %1970
      %v1972 = vsel %vm1689, %v1879, 0.0
      %1973 = vadd.xlane.f32.xlu0 %v1972
      %v1974 = vpop.xlane.xlu0 %1973
      %v1975 = vsel %vm1689, %v1881, 0.0
      %1976 = vadd.xlane.f32.xlu0 %v1975
      %v1977 = vpop.xlane.xlu0 %1976
      %v1978 = vrcp.pop %v1884
      %v1979 = vrcp.pop %v1887
      %v1980 = vrcp.pop %v1890
      %v1981 = vrcp.pop %v1893
      %v1982 = vrcp.pop %v1896
      %v1983 = vrcp.pop %v1899
      %v1984 = vrcp.pop %v1902
      %v1985 = vrcp.pop %v1905
      %v1986 = vrcp.pop %v1908
      %v1987 = vrcp.pop %v1911
      %v1988 = vrcp.pop %v1914
      %v1989 = vrcp.pop %v1917
      %v1990 = vrcp.pop %v1920
      %v1991 = vrcp.pop %v1923
      %v1992 = vrcp.pop %v1926
      %v1993 = vrcp.pop %v1929
      %v1994 = vrcp.pop %v1932
      %v1995 = vrcp.pop %v1935
      %v1996 = vrcp.pop %v1938
      %v1997 = vrcp.pop %v1941
      %v1998 = vrcp.pop %v1944
      %v1999 = vrcp.pop %v1947
      %v2000 = vrcp.pop %v1950
      %v2001 = vrcp.pop %v1953
      %v2002 = vrcp.pop %v1956
      %v2003 = vrcp.pop %v1959
      %v2004 = vrcp.pop %v1962
      %v2005 = vrcp.pop %v1965
      %v2006 = vrcp.pop %v1968
      %v2007 = vrcp.pop %v1971
      %v2008 = vrcp.pop %v1974
      %v2009 = vrcp.pop %v1977
      %v2010 = vmul.f32 %v1819, %v1978
      %v2011 = vmul.f32 %v1821, %v1979
      %v2012 = vmul.f32 %v1823, %v1980
      %v2013 = vmul.f32 %v1825, %v1981
      %v2014 = vmul.f32 %v1827, %v1982
      %v2015 = vmul.f32 %v1829, %v1983
      %v2016 = vmul.f32 %v1831, %v1984
      %v2017 = vmul.f32 %v1833, %v1985
      %v2018 = vmul.f32 %v1835, %v1986
      %v2019 = vmul.f32 %v1837, %v1987
      %v2020 = vmul.f32 %v1839, %v1988
      %v2021 = vmul.f32 %v1841, %v1989
      %v2022 = vmul.f32 %v1843, %v1990
      %v2023 = vmul.f32 %v1845, %v1991
      %v2024 = vmul.f32 %v1847, %v1992
      %v2025 = vmul.f32 %v1849, %v1993
      %v2026 = vmul.f32 %v1851, %v1994
      %v2027 = vmul.f32 %v1853, %v1995
      %v2028 = vmul.f32 %v1855, %v1996
      %v2029 = vmul.f32 %v1857, %v1997
      %v2030 = vmul.f32 %v1859, %v1998
      %v2031 = vmul.f32 %v1861, %v1999
      %v2032 = vmul.f32 %v1863, %v2000
      %v2033 = vmul.f32 %v1865, %v2001
      %v2034 = vmul.f32 %v1867, %v2002
      %v2035 = vmul.f32 %v1869, %v2003
      %v2036 = vmul.f32 %v1871, %v2004
      %v2037 = vmul.f32 %v1873, %v2005
      %v2038 = vmul.f32 %v1875, %v2006
      %v2039 = vmul.f32 %v1877, %v2007
      %v2040 = vmul.f32 %v1879, %v2008
      %v2041 = vmul.f32 %v1881, %v2009
      %v2043 = vsel %vm1689, %v2010, 0
      %v2046 = vsel %vm1689, %v2011, 0
      %v2049 = vsel %vm1689, %v2012, 0
      %v2052 = vsel %vm1689, %v2013, 0
      %v2055 = vsel %vm1689, %v2014, 0
      %v2058 = vsel %vm1689, %v2015, 0
      %v2061 = vsel %vm1689, %v2016, 0
      %v2064 = vsel %vm1689, %v2017, 0
      %2066 = vmatprep.subr.mxu0 0.0
      %2067 = vmatpush1.msra.mxu0 0.0
      %2068 = vmatprep.subr.mxu0 0.0
      %2069 = vmatpush1.msra.mxu0 0.0
      %2070 = vmatprep.subr.mxu0 0.0
      %2071 = vmatpush1.msra.mxu0 0.0
      %2072 = vmatprep.subr.mxu0 0.0
      %2073 = vmatpush1.msra.mxu0 0.0
      %2074 = vmatprep.subr.mxu0 0.0
      %2075 = vmatpush1.msra.mxu0 0.0
      %2076 = vmatprep.subr.mxu0 0.0
      %2077 = vmatpush1.msra.mxu0 0.0
      %2078 = vmatprep.subr.mxu0 0.0
      %2079 = vmatpush1.msra.mxu0 0.0
      %2080 = vmatprep.subr.mxu0 0.0
      %2081 = vmatpush1.msra.mxu0 0.0
      %2082 = vmatprep.subr.mxu0 0.0
      %2083 = vmatpush1.msra.mxu0 %v953
      %2084 = vmatprep.subr.mxu0 0.0
      %2085 = vmatpush1.msra.mxu0 %v948
      %2086 = vmatprep.subr.mxu0 0.0
      %2087 = vmatpush1.msra.mxu0 %v943
      %2088 = vmatprep.subr.mxu0 0.0
      %2089 = vmatpush1.msra.mxu0 %v938
      %2090 = vmatprep.subr.mxu0 0.0
      %2091 = vmatpush1.msra.mxu0 %v933
      %2092 = vmatprep.subr.mxu0 0.0
      %2093 = vmatpush1.msra.mxu0 %v928
      %2094 = vmatprep.subr.mxu0 0.0
      %2095 = vmatpush1.msra.mxu0 %v923
      %2096 = vmatprep.subr.mxu0 0.0
      %2097 = vmatpush1.msra.mxu0 %v918
      %2098 = vmatprep.subr.mxu0 0.0
      %2099 = vmatpush2.msra.mxu0 0.0
      %2100 = vmatprep.subr.mxu0 0.0
      %2101 = vmatpush2.msra.mxu0 0.0
      %2102 = vmatprep.subr.mxu0 0.0
      %2103 = vmatpush2.msra.mxu0 0.0
      %2104 = vmatprep.subr.mxu0 0.0
      %2105 = vmatpush2.msra.mxu0 0.0
      %2106 = vmatprep.subr.mxu0 0.0
      %2107 = vmatpush2.msra.mxu0 0.0
      %2108 = vmatprep.subr.mxu0 0.0
      %2109 = vmatpush2.msra.mxu0 0.0
      %2110 = vmatprep.subr.mxu0 0.0
      %2111 = vmatpush2.msra.mxu0 0.0
      %2112 = vmatprep.subr.mxu0 0.0
      %2113 = vmatpush2.msra.mxu0 0.0
      %2114 = vmatprep.subr.mxu0 0.0
      %2115 = vmatpush2.msra.mxu0 0.0
      %2116 = vmatprep.subr.mxu0 0.0
      %2117 = vmatpush2.msra.mxu0 0.0
      %2118 = vmatprep.subr.mxu0 0.0
      %2119 = vmatpush2.msra.mxu0 0.0
      %2120 = vmatprep.subr.mxu0 0.0
      %2121 = vmatpush2.msra.mxu0 0.0
      %2122 = vmatprep.subr.mxu0 0.0
      %2123 = vmatpush2.msra.mxu0 0.0
      %2124 = vmatprep.subr.mxu0 0.0
      %2125 = vmatpush2.msra.mxu0 0.0
      %2126 = vmatprep.subr.mxu0 0.0
      %2127 = vmatpush2.msra.mxu0 0.0
      %2128 = vmatprep.subr.mxu0 0.0
      %2129 = vmatpush2.msra.mxu0 0.0
      %2130 = vmatprep.mubr.f32.mxu0 0.0
      %2131 = vmatmul.mubr.f32.gmra.mxu0 %v2043
      %v2132 = vpop.f32.mrf.mxu0
      %v2133 = vadd.f32 0.0, %v2132
      %v2134 = vpop.f32.mrf.mxu0
      %2135 = vmatprep.mubr.f32.mxu0 0.0
      %2136 = vmatmul.mubr.f32.gmra.mxu0 %v2046
      %v2137 = vpop.f32.mrf.mxu0
      %v2138 = vadd.f32 0.0, %v2137
      %v2139 = vpop.f32.mrf.mxu0
      %2140 = vmatprep.mubr.f32.mxu0 0.0
      %2141 = vmatmul.mubr.f32.gmra.mxu0 %v2049
      %v2142 = vpop.f32.mrf.mxu0
      %v2143 = vadd.f32 0.0, %v2142
      %v2144 = vpop.f32.mrf.mxu0
      %2145 = vmatprep.mubr.f32.mxu0 0.0
      %2146 = vmatmul.mubr.f32.gmra.mxu0 %v2052
      %v2147 = vpop.f32.mrf.mxu0
      %v2148 = vadd.f32 0.0, %v2147
      %v2149 = vpop.f32.mrf.mxu0
      %2150 = vmatprep.mubr.f32.mxu0 0.0
      %2151 = vmatmul.mubr.f32.gmra.mxu0 %v2055
      %v2152 = vpop.f32.mrf.mxu0
      %v2153 = vadd.f32 0.0, %v2152
      %v2154 = vpop.f32.mrf.mxu0
      %2155 = vmatprep.mubr.f32.mxu0 0.0
      %2156 = vmatmul.mubr.f32.gmra.mxu0 %v2058
      %v2157 = vpop.f32.mrf.mxu0
      %v2158 = vadd.f32 0.0, %v2157
      %v2159 = vpop.f32.mrf.mxu0
      %2160 = vmatprep.mubr.f32.mxu0 0.0
      %2161 = vmatmul.mubr.f32.gmra.mxu0 %v2061
      %v2162 = vpop.f32.mrf.mxu0
      %v2163 = vadd.f32 0.0, %v2162
      %v2164 = vpop.f32.mrf.mxu0
      %2165 = vmatprep.mubr.f32.mxu0 0.0
      %2166 = vmatmul.mubr.f32.gmra.mxu0 %v2064
      %v2167 = vpop.f32.mrf.mxu0
      %v2168 = vadd.f32 0.0, %v2167
      %v2169 = vpop.f32.mrf.mxu0
      %2170 = vdwg.mxu0
      %v2172 = vsel %vm1689, %v2018, 0
      %v2175 = vsel %vm1689, %v2019, 0
      %v2178 = vsel %vm1689, %v2020, 0
      %v2181 = vsel %vm1689, %v2021, 0
      %v2184 = vsel %vm1689, %v2022, 0
      %v2187 = vsel %vm1689, %v2023, 0
      %v2190 = vsel %vm1689, %v2024, 0
      %v2193 = vsel %vm1689, %v2025, 0
      %2195 = vmatprep.subr.mxu0 0.0
      %2196 = vmatpush1.msra.mxu0 0.0
      %2197 = vmatprep.subr.mxu0 0.0
      %2198 = vmatpush1.msra.mxu0 0.0
      %2199 = vmatprep.subr.mxu0 0.0
      %2200 = vmatpush1.msra.mxu0 0.0
      %2201 = vmatprep.subr.mxu0 0.0
      %2202 = vmatpush1.msra.mxu0 0.0
      %2203 = vmatprep.subr.mxu0 0.0
      %2204 = vmatpush1.msra.mxu0 0.0
      %2205 = vmatprep.subr.mxu0 0.0
      %2206 = vmatpush1.msra.mxu0 0.0
      %2207 = vmatprep.subr.mxu0 0.0
      %2208 = vmatpush1.msra.mxu0 0.0
      %2209 = vmatprep.subr.mxu0 0.0
      %2210 = vmatpush1.msra.mxu0 0.0
      %2211 = vmatprep.subr.mxu0 0.0
      %2212 = vmatpush1.msra.mxu0 %v993
      %2213 = vmatprep.subr.mxu0 0.0
      %2214 = vmatpush1.msra.mxu0 %v988
      %2215 = vmatprep.subr.mxu0 0.0
      %2216 = vmatpush1.msra.mxu0 %v983
      %2217 = vmatprep.subr.mxu0 0.0
      %2218 = vmatpush1.msra.mxu0 %v978
      %2219 = vmatprep.subr.mxu0 0.0
      %2220 = vmatpush1.msra.mxu0 %v973
      %2221 = vmatprep.subr.mxu0 0.0
      %2222 = vmatpush1.msra.mxu0 %v968
      %2223 = vmatprep.subr.mxu0 0.0
      %2224 = vmatpush1.msra.mxu0 %v963
      %2225 = vmatprep.subr.mxu0 0.0
      %2226 = vmatpush1.msra.mxu0 %v958
      %2227 = vmatprep.subr.mxu0 0.0
      %2228 = vmatpush2.msra.mxu0 0.0
      %2229 = vmatprep.subr.mxu0 0.0
      %2230 = vmatpush2.msra.mxu0 0.0
      %2231 = vmatprep.subr.mxu0 0.0
      %2232 = vmatpush2.msra.mxu0 0.0
      %2233 = vmatprep.subr.mxu0 0.0
      %2234 = vmatpush2.msra.mxu0 0.0
      %2235 = vmatprep.subr.mxu0 0.0
      %2236 = vmatpush2.msra.mxu0 0.0
      %2237 = vmatprep.subr.mxu0 0.0
      %2238 = vmatpush2.msra.mxu0 0.0
      %2239 = vmatprep.subr.mxu0 0.0
      %2240 = vmatpush2.msra.mxu0 0.0
      %2241 = vmatprep.subr.mxu0 0.0
      %2242 = vmatpush2.msra.mxu0 0.0
      %2243 = vmatprep.subr.mxu0 0.0
      %2244 = vmatpush2.msra.mxu0 0.0
      %2245 = vmatprep.subr.mxu0 0.0
      %2246 = vmatpush2.msra.mxu0 0.0
      %2247 = vmatprep.subr.mxu0 0.0
      %2248 = vmatpush2.msra.mxu0 0.0
      %2249 = vmatprep.subr.mxu0 0.0
      %2250 = vmatpush2.msra.mxu0 0.0
      %2251 = vmatprep.subr.mxu0 0.0
      %2252 = vmatpush2.msra.mxu0 0.0
      %2253 = vmatprep.subr.mxu0 0.0
      %2254 = vmatpush2.msra.mxu0 0.0
      %2255 = vmatprep.subr.mxu0 0.0
      %2256 = vmatpush2.msra.mxu0 0.0
      %2257 = vmatprep.subr.mxu0 0.0
      %2258 = vmatpush2.msra.mxu0 0.0
      %2259 = vmatprep.mubr.f32.mxu0 0.0
      %2260 = vmatmul.mubr.f32.gmra.mxu0 %v2172
      %v2261 = vpop.f32.mrf.mxu0
      %v2262 = vadd.f32 0.0, %v2261
      %v2263 = vpop.f32.mrf.mxu0
      %2264 = vmatprep.mubr.f32.mxu0 0.0
      %2265 = vmatmul.mubr.f32.gmra.mxu0 %v2175
      %v2266 = vpop.f32.mrf.mxu0
      %v2267 = vadd.f32 0.0, %v2266
      %v2268 = vpop.f32.mrf.mxu0
      %2269 = vmatprep.mubr.f32.mxu0 0.0
      %2270 = vmatmul.mubr.f32.gmra.mxu0 %v2178
      %v2271 = vpop.f32.mrf.mxu0
      %v2272 = vadd.f32 0.0, %v2271
      %v2273 = vpop.f32.mrf.mxu0
      %2274 = vmatprep.mubr.f32.mxu0 0.0
      %2275 = vmatmul.mubr.f32.gmra.mxu0 %v2181
      %v2276 = vpop.f32.mrf.mxu0
      %v2277 = vadd.f32 0.0, %v2276
      %v2278 = vpop.f32.mrf.mxu0
      %2279 = vmatprep.mubr.f32.mxu0 0.0
      %2280 = vmatmul.mubr.f32.gmra.mxu0 %v2184
      %v2281 = vpop.f32.mrf.mxu0
      %v2282 = vadd.f32 0.0, %v2281
      %v2283 = vpop.f32.mrf.mxu0
      %2284 = vmatprep.mubr.f32.mxu0 0.0
      %2285 = vmatmul.mubr.f32.gmra.mxu0 %v2187
      %v2286 = vpop.f32.mrf.mxu0
      %v2287 = vadd.f32 0.0, %v2286
      %v2288 = vpop.f32.mrf.mxu0
      %2289 = vmatprep.mubr.f32.mxu0 0.0
      %2290 = vmatmul.mubr.f32.gmra.mxu0 %v2190
      %v2291 = vpop.f32.mrf.mxu0
      %v2292 = vadd.f32 0.0, %v2291
      %v2293 = vpop.f32.mrf.mxu0
      %2294 = vmatprep.mubr.f32.mxu0 0.0
      %2295 = vmatmul.mubr.f32.gmra.mxu0 %v2193
      %v2296 = vpop.f32.mrf.mxu0
      %v2297 = vadd.f32 0.0, %v2296
      %v2298 = vpop.f32.mrf.mxu0
      %2299 = vdwg.mxu0
      %v2301 = vsel %vm1689, %v2026, 0
      %v2304 = vsel %vm1689, %v2027, 0
      %v2307 = vsel %vm1689, %v2028, 0
      %v2310 = vsel %vm1689, %v2029, 0
      %v2313 = vsel %vm1689, %v2030, 0
      %v2316 = vsel %vm1689, %v2031, 0
      %v2319 = vsel %vm1689, %v2032, 0
      %v2322 = vsel %vm1689, %v2033, 0
      %2324 = vmatprep.subr.mxu0 0.0
      %2325 = vmatpush1.msra.mxu0 0.0
      %2326 = vmatprep.subr.mxu0 0.0
      %2327 = vmatpush1.msra.mxu0 0.0
      %2328 = vmatprep.subr.mxu0 0.0
      %2329 = vmatpush1.msra.mxu0 0.0
      %2330 = vmatprep.subr.mxu0 0.0
      %2331 = vmatpush1.msra.mxu0 0.0
      %2332 = vmatprep.subr.mxu0 0.0
      %2333 = vmatpush1.msra.mxu0 0.0
      %2334 = vmatprep.subr.mxu0 0.0
      %2335 = vmatpush1.msra.mxu0 0.0
      %2336 = vmatprep.subr.mxu0 0.0
      %2337 = vmatpush1.msra.mxu0 0.0
      %2338 = vmatprep.subr.mxu0 0.0
      %2339 = vmatpush1.msra.mxu0 0.0
      %2340 = vmatprep.subr.mxu0 0.0
      %2341 = vmatpush1.msra.mxu0 %v1033
      %2342 = vmatprep.subr.mxu0 0.0
      %2343 = vmatpush1.msra.mxu0 %v1028
      %2344 = vmatprep.subr.mxu0 0.0
      %2345 = vmatpush1.msra.mxu0 %v1023
      %2346 = vmatprep.subr.mxu0 0.0
      %2347 = vmatpush1.msra.mxu0 %v1018
      %2348 = vmatprep.subr.mxu0 0.0
      %2349 = vmatpush1.msra.mxu0 %v1013
      %2350 = vmatprep.subr.mxu0 0.0
      %2351 = vmatpush1.msra.mxu0 %v1008
      %2352 = vmatprep.subr.mxu0 0.0
      %2353 = vmatpush1.msra.mxu0 %v1003
      %2354 = vmatprep.subr.mxu0 0.0
      %2355 = vmatpush1.msra.mxu0 %v998
      %2356 = vmatprep.subr.mxu0 0.0
      %2357 = vmatpush2.msra.mxu0 0.0
      %2358 = vmatprep.subr.mxu0 0.0
      %2359 = vmatpush2.msra.mxu0 0.0
      %2360 = vmatprep.subr.mxu0 0.0
      %2361 = vmatpush2.msra.mxu0 0.0
      %2362 = vmatprep.subr.mxu0 0.0
      %2363 = vmatpush2.msra.mxu0 0.0
      %2364 = vmatprep.subr.mxu0 0.0
      %2365 = vmatpush2.msra.mxu0 0.0
      %2366 = vmatprep.subr.mxu0 0.0
      %2367 = vmatpush2.msra.mxu0 0.0
      %2368 = vmatprep.subr.mxu0 0.0
      %2369 = vmatpush2.msra.mxu0 0.0
      %2370 = vmatprep.subr.mxu0 0.0
      %2371 = vmatpush2.msra.mxu0 0.0
      %2372 = vmatprep.subr.mxu0 0.0
      %2373 = vmatpush2.msra.mxu0 0.0
      %2374 = vmatprep.subr.mxu0 0.0
      %2375 = vmatpush2.msra.mxu0 0.0
      %2376 = vmatprep.subr.mxu0 0.0
      %2377 = vmatpush2.msra.mxu0 0.0
      %2378 = vmatprep.subr.mxu0 0.0
      %2379 = vmatpush2.msra.mxu0 0.0
      %2380 = vmatprep.subr.mxu0 0.0
      %2381 = vmatpush2.msra.mxu0 0.0
      %2382 = vmatprep.subr.mxu0 0.0
      %2383 = vmatpush2.msra.mxu0 0.0
      %2384 = vmatprep.subr.mxu0 0.0
      %2385 = vmatpush2.msra.mxu0 0.0
      %2386 = vmatprep.subr.mxu0 0.0
      %2387 = vmatpush2.msra.mxu0 0.0
      %2388 = vmatprep.mubr.f32.mxu0 0.0
      %2389 = vmatmul.mubr.f32.gmra.mxu0 %v2301
      %v2390 = vpop.f32.mrf.mxu0
      %v2391 = vadd.f32 0.0, %v2390
      %v2392 = vpop.f32.mrf.mxu0
      %2393 = vmatprep.mubr.f32.mxu0 0.0
      %2394 = vmatmul.mubr.f32.gmra.mxu0 %v2304
      %v2395 = vpop.f32.mrf.mxu0
      %v2396 = vadd.f32 0.0, %v2395
      %v2397 = vpop.f32.mrf.mxu0
      %2398 = vmatprep.mubr.f32.mxu0 0.0
      %2399 = vmatmul.mubr.f32.gmra.mxu0 %v2307
      %v2400 = vpop.f32.mrf.mxu0
      %v2401 = vadd.f32 0.0, %v2400
      %v2402 = vpop.f32.mrf.mxu0
      %2403 = vmatprep.mubr.f32.mxu0 0.0
      %2404 = vmatmul.mubr.f32.gmra.mxu0 %v2310
      %v2405 = vpop.f32.mrf.mxu0
      %v2406 = vadd.f32 0.0, %v2405
      %v2407 = vpop.f32.mrf.mxu0
      %2408 = vmatprep.mubr.f32.mxu0 0.0
      %2409 = vmatmul.mubr.f32.gmra.mxu0 %v2313
      %v2410 = vpop.f32.mrf.mxu0
      %v2411 = vadd.f32 0.0, %v2410
      %v2412 = vpop.f32.mrf.mxu0
      %2413 = vmatprep.mubr.f32.mxu0 0.0
      %2414 = vmatmul.mubr.f32.gmra.mxu0 %v2316
      %v2415 = vpop.f32.mrf.mxu0
      %v2416 = vadd.f32 0.0, %v2415
      %v2417 = vpop.f32.mrf.mxu0
      %2418 = vmatprep.mubr.f32.mxu0 0.0
      %2419 = vmatmul.mubr.f32.gmra.mxu0 %v2319
      %v2420 = vpop.f32.mrf.mxu0
      %v2421 = vadd.f32 0.0, %v2420
      %v2422 = vpop.f32.mrf.mxu0
      %2423 = vmatprep.mubr.f32.mxu0 0.0
      %2424 = vmatmul.mubr.f32.gmra.mxu0 %v2322
      %v2425 = vpop.f32.mrf.mxu0
      %v2426 = vadd.f32 0.0, %v2425
      %v2427 = vpop.f32.mrf.mxu0
      %2428 = vdwg.mxu0
      %v2430 = vsel %vm1689, %v2034, 0
      %v2433 = vsel %vm1689, %v2035, 0
      %v2436 = vsel %vm1689, %v2036, 0
      %v2439 = vsel %vm1689, %v2037, 0
      %v2442 = vsel %vm1689, %v2038, 0
      %v2445 = vsel %vm1689, %v2039, 0
      %v2448 = vsel %vm1689, %v2040, 0
      %v2451 = vsel %vm1689, %v2041, 0
      %2453 = vmatprep.subr.mxu0 0.0
      %2454 = vmatpush1.msra.mxu0 0.0
      %2455 = vmatprep.subr.mxu0 0.0
      %2456 = vmatpush1.msra.mxu0 0.0
      %2457 = vmatprep.subr.mxu0 0.0
      %2458 = vmatpush1.msra.mxu0 0.0
      %2459 = vmatprep.subr.mxu0 0.0
      %2460 = vmatpush1.msra.mxu0 0.0
      %2461 = vmatprep.subr.mxu0 0.0
      %2462 = vmatpush1.msra.mxu0 0.0
      %2463 = vmatprep.subr.mxu0 0.0
      %2464 = vmatpush1.msra.mxu0 0.0
      %2465 = vmatprep.subr.mxu0 0.0
      %2466 = vmatpush1.msra.mxu0 0.0
      %2467 = vmatprep.subr.mxu0 0.0
      %2468 = vmatpush1.msra.mxu0 0.0
      %2469 = vmatprep.subr.mxu0 0.0
      %2470 = vmatpush1.msra.mxu0 %v1073
      %2471 = vmatprep.subr.mxu0 0.0
      %2472 = vmatpush1.msra.mxu0 %v1068
      %2473 = vmatprep.subr.mxu0 0.0
      %2474 = vmatpush1.msra.mxu0 %v1063
      %2475 = vmatprep.subr.mxu0 0.0
      %2476 = vmatpush1.msra.mxu0 %v1058
      %2477 = vmatprep.subr.mxu0 0.0
      %2478 = vmatpush1.msra.mxu0 %v1053
      %2479 = vmatprep.subr.mxu0 0.0
      %2480 = vmatpush1.msra.mxu0 %v1048
      %2481 = vmatprep.subr.mxu0 0.0
      %2482 = vmatpush1.msra.mxu0 %v1043
      %2483 = vmatprep.subr.mxu0 0.0
      %2484 = vmatpush1.msra.mxu0 %v1038
      %2485 = vmatprep.subr.mxu0 0.0
      %2486 = vmatpush2.msra.mxu0 0.0
      %2487 = vmatprep.subr.mxu0 0.0
      %2488 = vmatpush2.msra.mxu0 0.0
      %2489 = vmatprep.subr.mxu0 0.0
      %2490 = vmatpush2.msra.mxu0 0.0
      %2491 = vmatprep.subr.mxu0 0.0
      %2492 = vmatpush2.msra.mxu0 0.0
      %2493 = vmatprep.subr.mxu0 0.0
      %2494 = vmatpush2.msra.mxu0 0.0
      %2495 = vmatprep.subr.mxu0 0.0
      %2496 = vmatpush2.msra.mxu0 0.0
      %2497 = vmatprep.subr.mxu0 0.0
      %2498 = vmatpush2.msra.mxu0 0.0
      %2499 = vmatprep.subr.mxu0 0.0
      %2500 = vmatpush2.msra.mxu0 0.0
      %2501 = vmatprep.subr.mxu0 0.0
      %2502 = vmatpush2.msra.mxu0 0.0
      %2503 = vmatprep.subr.mxu0 0.0
      %2504 = vmatpush2.msra.mxu0 0.0
      %2505 = vmatprep.subr.mxu0 0.0
      %2506 = vmatpush2.msra.mxu0 0.0
      %2507 = vmatprep.subr.mxu0 0.0
      %2508 = vmatpush2.msra.mxu0 0.0
      %2509 = vmatprep.subr.mxu0 0.0
      %2510 = vmatpush2.msra.mxu0 0.0
      %2511 = vmatprep.subr.mxu0 0.0
      %2512 = vmatpush2.msra.mxu0 0.0
      %2513 = vmatprep.subr.mxu0 0.0
      %2514 = vmatpush2.msra.mxu0 0.0
      %2515 = vmatprep.subr.mxu0 0.0
      %2516 = vmatpush2.msra.mxu0 0.0
      %2517 = vmatprep.mubr.f32.mxu0 0.0
      %2518 = vmatmul.mubr.f32.gmra.mxu0 %v2430
      %v2519 = vpop.f32.mrf.mxu0
      %v2520 = vadd.f32 0.0, %v2519
      %v2521 = vpop.f32.mrf.mxu0
      %2522 = vmatprep.mubr.f32.mxu0 0.0
      %2523 = vmatmul.mubr.f32.gmra.mxu0 %v2433
      %v2524 = vpop.f32.mrf.mxu0
      %v2525 = vadd.f32 0.0, %v2524
      %v2526 = vpop.f32.mrf.mxu0
      %2527 = vmatprep.mubr.f32.mxu0 0.0
      %2528 = vmatmul.mubr.f32.gmra.mxu0 %v2436
      %v2529 = vpop.f32.mrf.mxu0
      %v2530 = vadd.f32 0.0, %v2529
      %v2531 = vpop.f32.mrf.mxu0
      %2532 = vmatprep.mubr.f32.mxu0 0.0
      %2533 = vmatmul.mubr.f32.gmra.mxu0 %v2439
      %v2534 = vpop.f32.mrf.mxu0
      %v2535 = vadd.f32 0.0, %v2534
      %v2536 = vpop.f32.mrf.mxu0
      %2537 = vmatprep.mubr.f32.mxu0 0.0
      %2538 = vmatmul.mubr.f32.gmra.mxu0 %v2442
      %v2539 = vpop.f32.mrf.mxu0
      %v2540 = vadd.f32 0.0, %v2539
      %v2541 = vpop.f32.mrf.mxu0
      %2542 = vmatprep.mubr.f32.mxu0 0.0
      %2543 = vmatmul.mubr.f32.gmra.mxu0 %v2445
      %v2544 = vpop.f32.mrf.mxu0
      %v2545 = vadd.f32 0.0, %v2544
      %v2546 = vpop.f32.mrf.mxu0
      %2547 = vmatprep.mubr.f32.mxu0 0.0
      %2548 = vmatmul.mubr.f32.gmra.mxu0 %v2448
      %v2549 = vpop.f32.mrf.mxu0
      %v2550 = vadd.f32 0.0, %v2549
      %v2551 = vpop.f32.mrf.mxu0
      %2552 = vmatprep.mubr.f32.mxu0 0.0
      %2553 = vmatmul.mubr.f32.gmra.mxu0 %v2451
      %v2554 = vpop.f32.mrf.mxu0
      %v2555 = vadd.f32 0.0, %v2554
      %v2556 = vpop.f32.mrf.mxu0
      %2557 = vdwg.mxu0
      %v2558 = vld [vmem:[%s4] sm:$0xff]
      %2559 = vrot.lane.b32.xlu0 %v460, 120
      %v2560 = vpop.permute.xlu0 %2559
      %2561 = vrot.lane.b32.xlu0 %v465, 120
      %v2562 = vpop.permute.xlu0 %2561
      %2563 = vrot.lane.b32.xlu0 %v470, 120
      %v2564 = vpop.permute.xlu0 %2563
      %2565 = vrot.lane.b32.xlu0 %v475, 120
      %v2566 = vpop.permute.xlu0 %2565
      %2567 = vrot.lane.b32.xlu0 %v480, 120
      %v2568 = vpop.permute.xlu0 %2567
      %2569 = vrot.lane.b32.xlu0 %v485, 120
      %v2570 = vpop.permute.xlu0 %2569
      %2571 = vrot.lane.b32.xlu0 %v490, 120
      %v2572 = vpop.permute.xlu0 %2571
      %2573 = vrot.lane.b32.xlu0 %v495, 120
      %v2574 = vpop.permute.xlu0 %2573
      %2575 = vrot.lane.b32.xlu0 %v689, 120
      %v2576 = vpop.permute.xlu0 %2575
      %2577 = vrot.lane.b32.xlu0 %v694, 120
      %v2578 = vpop.permute.xlu0 %2577
      %2579 = vrot.lane.b32.xlu0 %v699, 120
      %v2580 = vpop.permute.xlu0 %2579
      %2581 = vrot.lane.b32.xlu0 %v704, 120
      %v2582 = vpop.permute.xlu0 %2581
      %2583 = vrot.lane.b32.xlu0 %v709, 120
      %v2584 = vpop.permute.xlu0 %2583
      %2585 = vrot.lane.b32.xlu0 %v714, 120
      %v2586 = vpop.permute.xlu0 %2585
      %2587 = vrot.lane.b32.xlu0 %v719, 120
      %v2588 = vpop.permute.xlu0 %2587
      %2589 = vrot.lane.b32.xlu0 %v724, 120
      %v2590 = vpop.permute.xlu0 %2589
      %v2591 = vsel %vm1076, %v2560, 0
      %v2593 = vsel %vm1076, %v2562, 0
      %v2595 = vsel %vm1076, %v2564, 0
      %v2597 = vsel %vm1076, %v2566, 0
      %v2599 = vsel %vm1076, %v2568, 0
      %v2601 = vsel %vm1076, %v2570, 0
      %v2603 = vsel %vm1076, %v2572, 0
      %v2605 = vsel %vm1076, %v2574, 0
      %v2607 = vsel %vm1076, %v2576, 0
      %v2609 = vsel %vm1076, %v2578, 0
      %v2611 = vsel %vm1076, %v2580, 0
      %v2613 = vsel %vm1076, %v2582, 0
      %v2615 = vsel %vm1076, %v2584, 0
      %v2617 = vsel %vm1076, %v2586, 0
      %v2619 = vsel %vm1076, %v2588, 0
      %v2621 = vsel %vm1076, %v2590, 0
      %2623 = vmatprep.subr.mxu0 0.0
      %2624 = vmatpush1.xpose.msra.mxu0 0.0
      %2625 = vmatprep.subr.mxu0 0.0
      %2626 = vmatpush1.xpose.msra.mxu0 0.0
      %2627 = vmatprep.subr.mxu0 0.0
      %2628 = vmatpush1.xpose.msra.mxu0 0.0
      %2629 = vmatprep.subr.mxu0 0.0
      %2630 = vmatpush1.xpose.msra.mxu0 0.0
      %2631 = vmatprep.subr.mxu0 0.0
      %2632 = vmatpush1.xpose.msra.mxu0 0.0
      %2633 = vmatprep.subr.mxu0 0.0
      %2634 = vmatpush1.xpose.msra.mxu0 0.0
      %2635 = vmatprep.subr.mxu0 0.0
      %2636 = vmatpush1.xpose.msra.mxu0 0.0
      %2637 = vmatprep.subr.mxu0 0.0
      %2638 = vmatpush1.xpose.msra.mxu0 0.0
      %2639 = vmatprep.subr.mxu0 0.0
      %2640 = vmatpush1.xpose.msra.mxu0 %v2621
      %2641 = vmatprep.subr.mxu0 0.0
      %2642 = vmatpush1.xpose.msra.mxu0 %v2619
      %2643 = vmatprep.subr.mxu0 0.0
      %2644 = vmatpush1.xpose.msra.mxu0 %v2617
      %2645 = vmatprep.subr.mxu0 0.0
      %2646 = vmatpush1.xpose.msra.mxu0 %v2615
      %2647 = vmatprep.subr.mxu0 0.0
      %2648 = vmatpush1.xpose.msra.mxu0 %v2613
      %2649 = vmatprep.subr.mxu0 0.0
      %2650 = vmatpush1.xpose.msra.mxu0 %v2611
      %2651 = vmatprep.subr.mxu0 0.0
      %2652 = vmatpush1.xpose.msra.mxu0 %v2609
      %2653 = vmatprep.subr.mxu0 0.0
      %2654 = vmatpush1.xpose.msra.mxu0 %v2607
      %2655 = vmatprep.subr.mxu0 0.0
      %2656 = vmatpush2.xpose.msra.mxu0 0.0
      %2657 = vmatprep.subr.mxu0 0.0
      %2658 = vmatpush2.xpose.msra.mxu0 0.0
      %2659 = vmatprep.subr.mxu0 0.0
      %2660 = vmatpush2.xpose.msra.mxu0 0.0
      %2661 = vmatprep.subr.mxu0 0.0
      %2662 = vmatpush2.xpose.msra.mxu0 0.0
      %2663 = vmatprep.subr.mxu0 0.0
      %2664 = vmatpush2.xpose.msra.mxu0 0.0
      %2665 = vmatprep.subr.mxu0 0.0
      %2666 = vmatpush2.xpose.msra.mxu0 0.0
      %2667 = vmatprep.subr.mxu0 0.0
      %2668 = vmatpush2.xpose.msra.mxu0 0.0
      %2669 = vmatprep.subr.mxu0 0.0
      %2670 = vmatpush2.xpose.msra.mxu0 0.0
      %2671 = vmatprep.subr.mxu0 0.0
      %2672 = vmatpush2.xpose.msra.mxu0 0.0
      %2673 = vmatprep.subr.mxu0 0.0
      %2674 = vmatpush2.xpose.msra.mxu0 0.0
      %2675 = vmatprep.subr.mxu0 0.0
      %2676 = vmatpush2.xpose.msra.mxu0 0.0
      %2677 = vmatprep.subr.mxu0 0.0
      %2678 = vmatpush2.xpose.msra.mxu0 0.0
      %2679 = vmatprep.subr.mxu0 0.0
      %2680 = vmatpush2.xpose.msra.mxu0 0.0
      %2681 = vmatprep.subr.mxu0 0.0
      %2682 = vmatpush2.xpose.msra.mxu0 0.0
      %2683 = vmatprep.subr.mxu0 0.0
      %2684 = vmatpush2.xpose.msra.mxu0 0.0
      %2685 = vmatprep.subr.mxu0 0.0
      %2686 = vmatpush2.xpose.msra.mxu0 0.0
      %2687 = vmatprep.mubr.f32.mxu0 0.0
      %2688 = vmatmul.mubr.f32.gmra.mxu0 %v2591
      %v2689 = vpop.f32.mrf.mxu0
      %v2690 = vadd.f32 0.0, %v2689
      %v2691 = vpop.f32.mrf.mxu0
      %2692 = vmatprep.mubr.f32.mxu0 0.0
      %2693 = vmatmul.mubr.f32.gmra.mxu0 %v2593
      %v2694 = vpop.f32.mrf.mxu0
      %v2695 = vadd.f32 0.0, %v2694
      %v2696 = vpop.f32.mrf.mxu0
      %2697 = vmatprep.mubr.f32.mxu0 0.0
      %2698 = vmatmul.mubr.f32.gmra.mxu0 %v2595
      %v2699 = vpop.f32.mrf.mxu0
      %v2700 = vadd.f32 0.0, %v2699
      %v2701 = vpop.f32.mrf.mxu0
      %2702 = vmatprep.mubr.f32.mxu0 0.0
      %2703 = vmatmul.mubr.f32.gmra.mxu0 %v2597
      %v2704 = vpop.f32.mrf.mxu0
      %v2705 = vadd.f32 0.0, %v2704
      %v2706 = vpop.f32.mrf.mxu0
      %2707 = vmatprep.mubr.f32.mxu0 0.0
      %2708 = vmatmul.mubr.f32.gmra.mxu0 %v2599
      %v2709 = vpop.f32.mrf.mxu0
      %v2710 = vadd.f32 0.0, %v2709
      %v2711 = vpop.f32.mrf.mxu0
      %2712 = vmatprep.mubr.f32.mxu0 0.0
      %2713 = vmatmul.mubr.f32.gmra.mxu0 %v2601
      %v2714 = vpop.f32.mrf.mxu0
      %v2715 = vadd.f32 0.0, %v2714
      %v2716 = vpop.f32.mrf.mxu0
      %2717 = vmatprep.mubr.f32.mxu0 0.0
      %2718 = vmatmul.mubr.f32.gmra.mxu0 %v2603
      %v2719 = vpop.f32.mrf.mxu0
      %v2720 = vadd.f32 0.0, %v2719
      %v2721 = vpop.f32.mrf.mxu0
      %2722 = vmatprep.mubr.f32.mxu0 0.0
      %2723 = vmatmul.mubr.f32.gmra.mxu0 %v2605
      %v2724 = vpop.f32.mrf.mxu0
      %v2725 = vadd.f32 0.0, %v2724
      %v2726 = vpop.f32.mrf.mxu0
      %2727 = vdwg.mxu0
      %2728 = vrot.lane.b32.xlu0 %v500, 120
      %v2729 = vpop.permute.xlu0 %2728
      %2730 = vrot.lane.b32.xlu0 %v505, 120
      %v2731 = vpop.permute.xlu0 %2730
      %2732 = vrot.lane.b32.xlu0 %v510, 120
      %v2733 = vpop.permute.xlu0 %2732
      %2734 = vrot.lane.b32.xlu0 %v515, 120
      %v2735 = vpop.permute.xlu0 %2734
      %2736 = vrot.lane.b32.xlu0 %v520, 120
      %v2737 = vpop.permute.xlu0 %2736
      %2738 = vrot.lane.b32.xlu0 %v525, 120
      %v2739 = vpop.permute.xlu0 %2738
      %2740 = vrot.lane.b32.xlu0 %v530, 120
      %v2741 = vpop.permute.xlu0 %2740
      %2742 = vrot.lane.b32.xlu0 %v535, 120
      %v2743 = vpop.permute.xlu0 %2742
      %2744 = vrot.lane.b32.xlu0 %v729, 120
      %v2745 = vpop.permute.xlu0 %2744
      %2746 = vrot.lane.b32.xlu0 %v734, 120
      %v2747 = vpop.permute.xlu0 %2746
      %2748 = vrot.lane.b32.xlu0 %v739, 120
      %v2749 = vpop.permute.xlu0 %2748
      %2750 = vrot.lane.b32.xlu0 %v744, 120
      %v2751 = vpop.permute.xlu0 %2750
      %2752 = vrot.lane.b32.xlu0 %v749, 120
      %v2753 = vpop.permute.xlu0 %2752
      %2754 = vrot.lane.b32.xlu0 %v754, 120
      %v2755 = vpop.permute.xlu0 %2754
      %2756 = vrot.lane.b32.xlu0 %v759, 120
      %v2757 = vpop.permute.xlu0 %2756
      %2758 = vrot.lane.b32.xlu0 %v764, 120
      %v2759 = vpop.permute.xlu0 %2758
      %v2760 = vsel %vm1076, %v2729, 0
      %v2762 = vsel %vm1076, %v2731, 0
      %v2764 = vsel %vm1076, %v2733, 0
      %v2766 = vsel %vm1076, %v2735, 0
      %v2768 = vsel %vm1076, %v2737, 0
      %v2770 = vsel %vm1076, %v2739, 0
      %v2772 = vsel %vm1076, %v2741, 0
      %v2774 = vsel %vm1076, %v2743, 0
      %v2776 = vsel %vm1076, %v2745, 0
      %v2778 = vsel %vm1076, %v2747, 0
      %v2780 = vsel %vm1076, %v2749, 0
      %v2782 = vsel %vm1076, %v2751, 0
      %v2784 = vsel %vm1076, %v2753, 0
      %v2786 = vsel %vm1076, %v2755, 0
      %v2788 = vsel %vm1076, %v2757, 0
      %v2790 = vsel %vm1076, %v2759, 0
      %2792 = vmatprep.subr.mxu0 0.0
      %2793 = vmatpush1.xpose.msra.mxu0 0.0
      %2794 = vmatprep.subr.mxu0 0.0
      %2795 = vmatpush1.xpose.msra.mxu0 0.0
      %2796 = vmatprep.subr.mxu0 0.0
      %2797 = vmatpush1.xpose.msra.mxu0 0.0
      %2798 = vmatprep.subr.mxu0 0.0
      %2799 = vmatpush1.xpose.msra.mxu0 0.0
      %2800 = vmatprep.subr.mxu0 0.0
      %2801 = vmatpush1.xpose.msra.mxu0 0.0
      %2802 = vmatprep.subr.mxu0 0.0
      %2803 = vmatpush1.xpose.msra.mxu0 0.0
      %2804 = vmatprep.subr.mxu0 0.0
      %2805 = vmatpush1.xpose.msra.mxu0 0.0
      %2806 = vmatprep.subr.mxu0 0.0
      %2807 = vmatpush1.xpose.msra.mxu0 0.0
      %2808 = vmatprep.subr.mxu0 0.0
      %2809 = vmatpush1.xpose.msra.mxu0 %v2790
      %2810 = vmatprep.subr.mxu0 0.0
      %2811 = vmatpush1.xpose.msra.mxu0 %v2788
      %2812 = vmatprep.subr.mxu0 0.0
      %2813 = vmatpush1.xpose.msra.mxu0 %v2786
      %2814 = vmatprep.subr.mxu0 0.0
      %2815 = vmatpush1.xpose.msra.mxu0 %v2784
      %2816 = vmatprep.subr.mxu0 0.0
      %2817 = vmatpush1.xpose.msra.mxu0 %v2782
      %2818 = vmatprep.subr.mxu0 0.0
      %2819 = vmatpush1.xpose.msra.mxu0 %v2780
      %2820 = vmatprep.subr.mxu0 0.0
      %2821 = vmatpush1.xpose.msra.mxu0 %v2778
      %2822 = vmatprep.subr.mxu0 0.0
      %2823 = vmatpush1.xpose.msra.mxu0 %v2776
      %2824 = vmatprep.subr.mxu0 0.0
      %2825 = vmatpush2.xpose.msra.mxu0 0.0
      %2826 = vmatprep.subr.mxu0 0.0
      %2827 = vmatpush2.xpose.msra.mxu0 0.0
      %2828 = vmatprep.subr.mxu0 0.0
      %2829 = vmatpush2.xpose.msra.mxu0 0.0
      %2830 = vmatprep.subr.mxu0 0.0
      %2831 = vmatpush2.xpose.msra.mxu0 0.0
      %2832 = vmatprep.subr.mxu0 0.0
      %2833 = vmatpush2.xpose.msra.mxu0 0.0
      %2834 = vmatprep.subr.mxu0 0.0
      %2835 = vmatpush2.xpose.msra.mxu0 0.0
      %2836 = vmatprep.subr.mxu0 0.0
      %2837 = vmatpush2.xpose.msra.mxu0 0.0
      %2838 = vmatprep.subr.mxu0 0.0
      %2839 = vmatpush2.xpose.msra.mxu0 0.0
      %2840 = vmatprep.subr.mxu0 0.0
      %2841 = vmatpush2.xpose.msra.mxu0 0.0
      %2842 = vmatprep.subr.mxu0 0.0
      %2843 = vmatpush2.xpose.msra.mxu0 0.0
      %2844 = vmatprep.subr.mxu0 0.0
      %2845 = vmatpush2.xpose.msra.mxu0 0.0
      %2846 = vmatprep.subr.mxu0 0.0
      %2847 = vmatpush2.xpose.msra.mxu0 0.0
      %2848 = vmatprep.subr.mxu0 0.0
      %2849 = vmatpush2.xpose.msra.mxu0 0.0
      %2850 = vmatprep.subr.mxu0 0.0
      %2851 = vmatpush2.xpose.msra.mxu0 0.0
      %2852 = vmatprep.subr.mxu0 0.0
      %2853 = vmatpush2.xpose.msra.mxu0 0.0
      %2854 = vmatprep.subr.mxu0 0.0
      %2855 = vmatpush2.xpose.msra.mxu0 0.0
      %2856 = vmatprep.mubr.f32.mxu0 0.0
      %2857 = vmatmul.mubr.f32.gmra.mxu0 %v2760
      %v2858 = vpop.f32.mrf.mxu0
      %v2859 = vadd.f32 0.0, %v2858
      %v2860 = vpop.f32.mrf.mxu0
      %2861 = vmatprep.mubr.f32.mxu0 0.0
      %2862 = vmatmul.mubr.f32.gmra.mxu0 %v2762
      %v2863 = vpop.f32.mrf.mxu0
      %v2864 = vadd.f32 0.0, %v2863
      %v2865 = vpop.f32.mrf.mxu0
      %2866 = vmatprep.mubr.f32.mxu0 0.0
      %2867 = vmatmul.mubr.f32.gmra.mxu0 %v2764
      %v2868 = vpop.f32.mrf.mxu0
      %v2869 = vadd.f32 0.0, %v2868
      %v2870 = vpop.f32.mrf.mxu0
      %2871 = vmatprep.mubr.f32.mxu0 0.0
      %2872 = vmatmul.mubr.f32.gmra.mxu0 %v2766
      %v2873 = vpop.f32.mrf.mxu0
      %v2874 = vadd.f32 0.0, %v2873
      %v2875 = vpop.f32.mrf.mxu0
      %2876 = vmatprep.mubr.f32.mxu0 0.0
      %2877 = vmatmul.mubr.f32.gmra.mxu0 %v2768
      %v2878 = vpop.f32.mrf.mxu0
      %v2879 = vadd.f32 0.0, %v2878
      %v2880 = vpop.f32.mrf.mxu0
      %2881 = vmatprep.mubr.f32.mxu0 0.0
      %2882 = vmatmul.mubr.f32.gmra.mxu0 %v2770
      %v2883 = vpop.f32.mrf.mxu0
      %v2884 = vadd.f32 0.0, %v2883
      %v2885 = vpop.f32.mrf.mxu0
      %2886 = vmatprep.mubr.f32.mxu0 0.0
      %2887 = vmatmul.mubr.f32.gmra.mxu0 %v2772
      %v2888 = vpop.f32.mrf.mxu0
      %v2889 = vadd.f32 0.0, %v2888
      %v2890 = vpop.f32.mrf.mxu0
      %2891 = vmatprep.mubr.f32.mxu0 0.0
      %2892 = vmatmul.mubr.f32.gmra.mxu0 %v2774
      %v2893 = vpop.f32.mrf.mxu0
      %v2894 = vadd.f32 0.0, %v2893
      %v2895 = vpop.f32.mrf.mxu0
      %2896 = vdwg.mxu0
      %2897 = vrot.lane.b32.xlu0 %v540, 120
      %v2898 = vpop.permute.xlu0 %2897
      %2899 = vrot.lane.b32.xlu0 %v545, 120
      %v2900 = vpop.permute.xlu0 %2899
      %2901 = vrot.lane.b32.xlu0 %v550, 120
      %v2902 = vpop.permute.xlu0 %2901
      %2903 = vrot.lane.b32.xlu0 %v555, 120
      %v2904 = vpop.permute.xlu0 %2903
      %2905 = vrot.lane.b32.xlu0 %v560, 120
      %v2906 = vpop.permute.xlu0 %2905
      %2907 = vrot.lane.b32.xlu0 %v565, 120
      %v2908 = vpop.permute.xlu0 %2907
      %2909 = vrot.lane.b32.xlu0 %v570, 120
      %v2910 = vpop.permute.xlu0 %2909
      %2911 = vrot.lane.b32.xlu0 %v575, 120
      %v2912 = vpop.permute.xlu0 %2911
      %2913 = vrot.lane.b32.xlu0 %v769, 120
      %v2914 = vpop.permute.xlu0 %2913
      %2915 = vrot.lane.b32.xlu0 %v774, 120
      %v2916 = vpop.permute.xlu0 %2915
      %2917 = vrot.lane.b32.xlu0 %v779, 120
      %v2918 = vpop.permute.xlu0 %2917
      %2919 = vrot.lane.b32.xlu0 %v784, 120
      %v2920 = vpop.permute.xlu0 %2919
      %2921 = vrot.lane.b32.xlu0 %v789, 120
      %v2922 = vpop.permute.xlu0 %2921
      %2923 = vrot.lane.b32.xlu0 %v794, 120
      %v2924 = vpop.permute.xlu0 %2923
      %2925 = vrot.lane.b32.xlu0 %v799, 120
      %v2926 = vpop.permute.xlu0 %2925
      %2927 = vrot.lane.b32.xlu0 %v804, 120
      %v2928 = vpop.permute.xlu0 %2927
      %v2929 = vsel %vm1076, %v2898, 0
      %v2931 = vsel %vm1076, %v2900, 0
      %v2933 = vsel %vm1076, %v2902, 0
      %v2935 = vsel %vm1076, %v2904, 0
      %v2937 = vsel %vm1076, %v2906, 0
      %v2939 = vsel %vm1076, %v2908, 0
      %v2941 = vsel %vm1076, %v2910, 0
      %v2943 = vsel %vm1076, %v2912, 0
      %v2945 = vsel %vm1076, %v2914, 0
      %v2947 = vsel %vm1076, %v2916, 0
      %v2949 = vsel %vm1076, %v2918, 0
      %v2951 = vsel %vm1076, %v2920, 0
      %v2953 = vsel %vm1076, %v2922, 0
      %v2955 = vsel %vm1076, %v2924, 0
      %v2957 = vsel %vm1076, %v2926, 0
      %v2959 = vsel %vm1076, %v2928, 0
      %2961 = vmatprep.subr.mxu0 0.0
      %2962 = vmatpush1.xpose.msra.mxu0 0.0
      %2963 = vmatprep.subr.mxu0 0.0
      %2964 = vmatpush1.xpose.msra.mxu0 0.0
      %2965 = vmatprep.subr.mxu0 0.0
      %2966 = vmatpush1.xpose.msra.mxu0 0.0
      %2967 = vmatprep.subr.mxu0 0.0
      %2968 = vmatpush1.xpose.msra.mxu0 0.0
      %2969 = vmatprep.subr.mxu0 0.0
      %2970 = vmatpush1.xpose.msra.mxu0 0.0
      %2971 = vmatprep.subr.mxu0 0.0
      %2972 = vmatpush1.xpose.msra.mxu0 0.0
      %2973 = vmatprep.subr.mxu0 0.0
      %2974 = vmatpush1.xpose.msra.mxu0 0.0
      %2975 = vmatprep.subr.mxu0 0.0
      %2976 = vmatpush1.xpose.msra.mxu0 0.0
      %2977 = vmatprep.subr.mxu0 0.0
      %2978 = vmatpush1.xpose.msra.mxu0 %v2959
      %2979 = vmatprep.subr.mxu0 0.0
      %2980 = vmatpush1.xpose.msra.mxu0 %v2957
      %2981 = vmatprep.subr.mxu0 0.0
      %2982 = vmatpush1.xpose.msra.mxu0 %v2955
      %2983 = vmatprep.subr.mxu0 0.0
      %2984 = vmatpush1.xpose.msra.mxu0 %v2953
      %2985 = vmatprep.subr.mxu0 0.0
      %2986 = vmatpush1.xpose.msra.mxu0 %v2951
      %2987 = vmatprep.subr.mxu0 0.0
      %2988 = vmatpush1.xpose.msra.mxu0 %v2949
      %2989 = vmatprep.subr.mxu0 0.0
      %2990 = vmatpush1.xpose.msra.mxu0 %v2947
      %2991 = vmatprep.subr.mxu0 0.0
      %2992 = vmatpush1.xpose.msra.mxu0 %v2945
      %2993 = vmatprep.subr.mxu0 0.0
      %2994 = vmatpush2.xpose.msra.mxu0 0.0
      %2995 = vmatprep.subr.mxu0 0.0
      %2996 = vmatpush2.xpose.msra.mxu0 0.0
      %2997 = vmatprep.subr.mxu0 0.0
      %2998 = vmatpush2.xpose.msra.mxu0 0.0
      %2999 = vmatprep.subr.mxu0 0.0
      %3000 = vmatpush2.xpose.msra.mxu0 0.0
      %3001 = vmatprep.subr.mxu0 0.0
      %3002 = vmatpush2.xpose.msra.mxu0 0.0
      %3003 = vmatprep.subr.mxu0 0.0
      %3004 = vmatpush2.xpose.msra.mxu0 0.0
      %3005 = vmatprep.subr.mxu0 0.0
      %3006 = vmatpush2.xpose.msra.mxu0 0.0
      %3007 = vmatprep.subr.mxu0 0.0
      %3008 = vmatpush2.xpose.msra.mxu0 0.0
      %3009 = vmatprep.subr.mxu0 0.0
      %3010 = vmatpush2.xpose.msra.mxu0 0.0
      %3011 = vmatprep.subr.mxu0 0.0
      %3012 = vmatpush2.xpose.msra.mxu0 0.0
      %3013 = vmatprep.subr.mxu0 0.0
      %3014 = vmatpush2.xpose.msra.mxu0 0.0
      %3015 = vmatprep.subr.mxu0 0.0
      %3016 = vmatpush2.xpose.msra.mxu0 0.0
      %3017 = vmatprep.subr.mxu0 0.0
      %3018 = vmatpush2.xpose.msra.mxu0 0.0
      %3019 = vmatprep.subr.mxu0 0.0
      %3020 = vmatpush2.xpose.msra.mxu0 0.0
      %3021 = vmatprep.subr.mxu0 0.0
      %3022 = vmatpush2.xpose.msra.mxu0 0.0
      %3023 = vmatprep.subr.mxu0 0.0
      %3024 = vmatpush2.xpose.msra.mxu0 0.0
      %3025 = vmatprep.mubr.f32.mxu0 0.0
      %3026 = vmatmul.mubr.f32.gmra.mxu0 %v2929
      %v3027 = vpop.f32.mrf.mxu0
      %v3028 = vadd.f32 0.0, %v3027
      %v3029 = vpop.f32.mrf.mxu0
      %3030 = vmatprep.mubr.f32.mxu0 0.0
      %3031 = vmatmul.mubr.f32.gmra.mxu0 %v2931
      %v3032 = vpop.f32.mrf.mxu0
      %v3033 = vadd.f32 0.0, %v3032
      %v3034 = vpop.f32.mrf.mxu0
      %3035 = vmatprep.mubr.f32.mxu0 0.0
      %3036 = vmatmul.mubr.f32.gmra.mxu0 %v2933
      %v3037 = vpop.f32.mrf.mxu0
      %v3038 = vadd.f32 0.0, %v3037
      %v3039 = vpop.f32.mrf.mxu0
      %3040 = vmatprep.mubr.f32.mxu0 0.0
      %3041 = vmatmul.mubr.f32.gmra.mxu0 %v2935
      %v3042 = vpop.f32.mrf.mxu0
      %v3043 = vadd.f32 0.0, %v3042
      %v3044 = vpop.f32.mrf.mxu0
      %3045 = vmatprep.mubr.f32.mxu0 0.0
      %3046 = vmatmul.mubr.f32.gmra.mxu0 %v2937
      %v3047 = vpop.f32.mrf.mxu0
      %v3048 = vadd.f32 0.0, %v3047
      %v3049 = vpop.f32.mrf.mxu0
      %3050 = vmatprep.mubr.f32.mxu0 0.0
      %3051 = vmatmul.mubr.f32.gmra.mxu0 %v2939
      %v3052 = vpop.f32.mrf.mxu0
      %v3053 = vadd.f32 0.0, %v3052
      %v3054 = vpop.f32.mrf.mxu0
      %3055 = vmatprep.mubr.f32.mxu0 0.0
      %3056 = vmatmul.mubr.f32.gmra.mxu0 %v2941
      %v3057 = vpop.f32.mrf.mxu0
      %v3058 = vadd.f32 0.0, %v3057
      %v3059 = vpop.f32.mrf.mxu0
      %3060 = vmatprep.mubr.f32.mxu0 0.0
      %3061 = vmatmul.mubr.f32.gmra.mxu0 %v2943
      %v3062 = vpop.f32.mrf.mxu0
      %v3063 = vadd.f32 0.0, %v3062
      %v3064 = vpop.f32.mrf.mxu0
      %3065 = vdwg.mxu0
      %3066 = vrot.lane.b32.xlu0 %v580, 120
      %v3067 = vpop.permute.xlu0 %3066
      %3068 = vrot.lane.b32.xlu0 %v585, 120
      %v3069 = vpop.permute.xlu0 %3068
      %3070 = vrot.lane.b32.xlu0 %v590, 120
      %v3071 = vpop.permute.xlu0 %3070
      %3072 = vrot.lane.b32.xlu0 %v595, 120
      %v3073 = vpop.permute.xlu0 %3072
      %3074 = vrot.lane.b32.xlu0 %v600, 120
      %v3075 = vpop.permute.xlu0 %3074
      %3076 = vrot.lane.b32.xlu0 %v605, 120
      %v3077 = vpop.permute.xlu0 %3076
      %3078 = vrot.lane.b32.xlu0 %v610, 120
      %v3079 = vpop.permute.xlu0 %3078
      %3080 = vrot.lane.b32.xlu0 %v615, 120
      %v3081 = vpop.permute.xlu0 %3080
      %3082 = vrot.lane.b32.xlu0 %v809, 120
      %v3083 = vpop.permute.xlu0 %3082
      %3084 = vrot.lane.b32.xlu0 %v814, 120
      %v3085 = vpop.permute.xlu0 %3084
      %3086 = vrot.lane.b32.xlu0 %v819, 120
      %v3087 = vpop.permute.xlu0 %3086
      %3088 = vrot.lane.b32.xlu0 %v824, 120
      %v3089 = vpop.permute.xlu0 %3088
      %3090 = vrot.lane.b32.xlu0 %v829, 120
      %v3091 = vpop.permute.xlu0 %3090
      %3092 = vrot.lane.b32.xlu0 %v834, 120
      %v3093 = vpop.permute.xlu0 %3092
      %3094 = vrot.lane.b32.xlu0 %v839, 120
      %v3095 = vpop.permute.xlu0 %3094
      %3096 = vrot.lane.b32.xlu0 %v844, 120
      %v3097 = vpop.permute.xlu0 %3096
      %v3098 = vsel %vm1076, %v3067, 0
      %v3100 = vsel %vm1076, %v3069, 0
      %v3102 = vsel %vm1076, %v3071, 0
      %v3104 = vsel %vm1076, %v3073, 0
      %v3106 = vsel %vm1076, %v3075, 0
      %v3108 = vsel %vm1076, %v3077, 0
      %v3110 = vsel %vm1076, %v3079, 0
      %v3112 = vsel %vm1076, %v3081, 0
      %v3114 = vsel %vm1076, %v3083, 0
      %v3116 = vsel %vm1076, %v3085, 0
      %v3118 = vsel %vm1076, %v3087, 0
      %v3120 = vsel %vm1076, %v3089, 0
      %v3122 = vsel %vm1076, %v3091, 0
      %v3124 = vsel %vm1076, %v3093, 0
      %v3126 = vsel %vm1076, %v3095, 0
      %v3128 = vsel %vm1076, %v3097, 0
      %3130 = vmatprep.subr.mxu0 0.0
      %3131 = vmatpush1.xpose.msra.mxu0 0.0
      %3132 = vmatprep.subr.mxu0 0.0
      %3133 = vmatpush1.xpose.msra.mxu0 0.0
      %3134 = vmatprep.subr.mxu0 0.0
      %3135 = vmatpush1.xpose.msra.mxu0 0.0
      %3136 = vmatprep.subr.mxu0 0.0
      %3137 = vmatpush1.xpose.msra.mxu0 0.0
      %3138 = vmatprep.subr.mxu0 0.0
      %3139 = vmatpush1.xpose.msra.mxu0 0.0
      %3140 = vmatprep.subr.mxu0 0.0
      %3141 = vmatpush1.xpose.msra.mxu0 0.0
      %3142 = vmatprep.subr.mxu0 0.0
      %3143 = vmatpush1.xpose.msra.mxu0 0.0
      %3144 = vmatprep.subr.mxu0 0.0
      %3145 = vmatpush1.xpose.msra.mxu0 0.0
      %3146 = vmatprep.subr.mxu0 0.0
      %3147 = vmatpush1.xpose.msra.mxu0 %v3128
      %3148 = vmatprep.subr.mxu0 0.0
      %3149 = vmatpush1.xpose.msra.mxu0 %v3126
      %3150 = vmatprep.subr.mxu0 0.0
      %3151 = vmatpush1.xpose.msra.mxu0 %v3124
      %3152 = vmatprep.subr.mxu0 0.0
      %3153 = vmatpush1.xpose.msra.mxu0 %v3122
      %3154 = vmatprep.subr.mxu0 0.0
      %3155 = vmatpush1.xpose.msra.mxu0 %v3120
      %3156 = vmatprep.subr.mxu0 0.0
      %3157 = vmatpush1.xpose.msra.mxu0 %v3118
      %3158 = vmatprep.subr.mxu0 0.0
      %3159 = vmatpush1.xpose.msra.mxu0 %v3116
      %3160 = vmatprep.subr.mxu0 0.0
      %3161 = vmatpush1.xpose.msra.mxu0 %v3114
      %3162 = vmatprep.subr.mxu0 0.0
      %3163 = vmatpush2.xpose.msra.mxu0 0.0
      %3164 = vmatprep.subr.mxu0 0.0
      %3165 = vmatpush2.xpose.msra.mxu0 0.0
      %3166 = vmatprep.subr.mxu0 0.0
      %3167 = vmatpush2.xpose.msra.mxu0 0.0
      %3168 = vmatprep.subr.mxu0 0.0
      %3169 = vmatpush2.xpose.msra.mxu0 0.0
      %3170 = vmatprep.subr.mxu0 0.0
      %3171 = vmatpush2.xpose.msra.mxu0 0.0
      %3172 = vmatprep.subr.mxu0 0.0
      %3173 = vmatpush2.xpose.msra.mxu0 0.0
      %3174 = vmatprep.subr.mxu0 0.0
      %3175 = vmatpush2.xpose.msra.mxu0 0.0
      %3176 = vmatprep.subr.mxu0 0.0
      %3177 = vmatpush2.xpose.msra.mxu0 0.0
      %3178 = vmatprep.subr.mxu0 0.0
      %3179 = vmatpush2.xpose.msra.mxu0 0.0
      %3180 = vmatprep.subr.mxu0 0.0
      %3181 = vmatpush2.xpose.msra.mxu0 0.0
      %3182 = vmatprep.subr.mxu0 0.0
      %3183 = vmatpush2.xpose.msra.mxu0 0.0
      %3184 = vmatprep.subr.mxu0 0.0
      %3185 = vmatpush2.xpose.msra.mxu0 0.0
      %3186 = vmatprep.subr.mxu0 0.0
      %3187 = vmatpush2.xpose.msra.mxu0 0.0
      %3188 = vmatprep.subr.mxu0 0.0
      %3189 = vmatpush2.xpose.msra.mxu0 0.0
      %3190 = vmatprep.subr.mxu0 0.0
      %3191 = vmatpush2.xpose.msra.mxu0 0.0
      %3192 = vmatprep.subr.mxu0 0.0
      %3193 = vmatpush2.xpose.msra.mxu0 0.0
      %3194 = vmatprep.mubr.f32.mxu0 0.0
      %3195 = vmatmul.mubr.f32.gmra.mxu0 %v3098
      %v3196 = vpop.f32.mrf.mxu0
      %v3197 = vadd.f32 0.0, %v3196
      %v3198 = vpop.f32.mrf.mxu0
      %3199 = vmatprep.mubr.f32.mxu0 0.0
      %3200 = vmatmul.mubr.f32.gmra.mxu0 %v3100
      %v3201 = vpop.f32.mrf.mxu0
      %v3202 = vadd.f32 0.0, %v3201
      %v3203 = vpop.f32.mrf.mxu0
      %3204 = vmatprep.mubr.f32.mxu0 0.0
      %3205 = vmatmul.mubr.f32.gmra.mxu0 %v3102
      %v3206 = vpop.f32.mrf.mxu0
      %v3207 = vadd.f32 0.0, %v3206
      %v3208 = vpop.f32.mrf.mxu0
      %3209 = vmatprep.mubr.f32.mxu0 0.0
      %3210 = vmatmul.mubr.f32.gmra.mxu0 %v3104
      %v3211 = vpop.f32.mrf.mxu0
      %v3212 = vadd.f32 0.0, %v3211
      %v3213 = vpop.f32.mrf.mxu0
      %3214 = vmatprep.mubr.f32.mxu0 0.0
      %3215 = vmatmul.mubr.f32.gmra.mxu0 %v3106
      %v3216 = vpop.f32.mrf.mxu0
      %v3217 = vadd.f32 0.0, %v3216
      %v3218 = vpop.f32.mrf.mxu0
      %3219 = vmatprep.mubr.f32.mxu0 0.0
      %3220 = vmatmul.mubr.f32.gmra.mxu0 %v3108
      %v3221 = vpop.f32.mrf.mxu0
      %v3222 = vadd.f32 0.0, %v3221
      %v3223 = vpop.f32.mrf.mxu0
      %3224 = vmatprep.mubr.f32.mxu0 0.0
      %3225 = vmatmul.mubr.f32.gmra.mxu0 %v3110
      %v3226 = vpop.f32.mrf.mxu0
      %v3227 = vadd.f32 0.0, %v3226
      %v3228 = vpop.f32.mrf.mxu0
      %3229 = vmatprep.mubr.f32.mxu0 0.0
      %3230 = vmatmul.mubr.f32.gmra.mxu0 %v3112
      %v3231 = vpop.f32.mrf.mxu0
      %v3232 = vadd.f32 0.0, %v3231
      %v3233 = vpop.f32.mrf.mxu0
      %3234 = vdwg.mxu0
      %v3235 = vsel %vm1689, %v2690, -inf
      %3236 = vmax.xlane.f32.xlu0 %v3235
      %v3237 = vpop.xlane.xlu0 %3236
      %v3238 = vsel %vm1689, %v2695, -inf
      %3239 = vmax.xlane.f32.xlu0 %v3238
      %v3240 = vpop.xlane.xlu0 %3239
      %v3241 = vsel %vm1689, %v2700, -inf
      %3242 = vmax.xlane.f32.xlu0 %v3241
      %v3243 = vpop.xlane.xlu0 %3242
      %v3244 = vsel %vm1689, %v2705, -inf
      %3245 = vmax.xlane.f32.xlu0 %v3244
      %v3246 = vpop.xlane.xlu0 %3245
      %v3247 = vsel %vm1689, %v2710, -inf
      %3248 = vmax.xlane.f32.xlu0 %v3247
      %v3249 = vpop.xlane.xlu0 %3248
      %v3250 = vsel %vm1689, %v2715, -inf
      %3251 = vmax.xlane.f32.xlu0 %v3250
      %v3252 = vpop.xlane.xlu0 %3251
      %v3253 = vsel %vm1689, %v2720, -inf
      %3254 = vmax.xlane.f32.xlu0 %v3253
      %v3255 = vpop.xlane.xlu0 %3254
      %v3256 = vsel %vm1689, %v2725, -inf
      %3257 = vmax.xlane.f32.xlu0 %v3256
      %v3258 = vpop.xlane.xlu0 %3257
      %v3259 = vsel %vm1689, %v2859, -inf
      %3260 = vmax.xlane.f32.xlu0 %v3259
      %v3261 = vpop.xlane.xlu0 %3260
      %v3262 = vsel %vm1689, %v2864, -inf
      %3263 = vmax.xlane.f32.xlu0 %v3262
      %v3264 = vpop.xlane.xlu0 %3263
      %v3265 = vsel %vm1689, %v2869, -inf
      %3266 = vmax.xlane.f32.xlu0 %v3265
      %v3267 = vpop.xlane.xlu0 %3266
      %v3268 = vsel %vm1689, %v2874, -inf
      %3269 = vmax.xlane.f32.xlu0 %v3268
      %v3270 = vpop.xlane.xlu0 %3269
      %v3271 = vsel %vm1689, %v2879, -inf
      %3272 = vmax.xlane.f32.xlu0 %v3271
      %v3273 = vpop.xlane.xlu0 %3272
      %v3274 = vsel %vm1689, %v2884, -inf
      %3275 = vmax.xlane.f32.xlu0 %v3274
      %v3276 = vpop.xlane.xlu0 %3275
      %v3277 = vsel %vm1689, %v2889, -inf
      %3278 = vmax.xlane.f32.xlu0 %v3277
      %v3279 = vpop.xlane.xlu0 %3278
      %v3280 = vsel %vm1689, %v2894, -inf
      %3281 = vmax.xlane.f32.xlu0 %v3280
      %v3282 = vpop.xlane.xlu0 %3281
      %v3283 = vsel %vm1689, %v3028, -inf
      %3284 = vmax.xlane.f32.xlu0 %v3283
      %v3285 = vpop.xlane.xlu0 %3284
      %v3286 = vsel %vm1689, %v3033, -inf
      %3287 = vmax.xlane.f32.xlu0 %v3286
      %v3288 = vpop.xlane.xlu0 %3287
      %v3289 = vsel %vm1689, %v3038, -inf
      %3290 = vmax.xlane.f32.xlu0 %v3289
      %v3291 = vpop.xlane.xlu0 %3290
      %v3292 = vsel %vm1689, %v3043, -inf
      %3293 = vmax.xlane.f32.xlu0 %v3292
      %v3294 = vpop.xlane.xlu0 %3293
      %v3295 = vsel %vm1689, %v3048, -inf
      %3296 = vmax.xlane.f32.xlu0 %v3295
      %v3297 = vpop.xlane.xlu0 %3296
      %v3298 = vsel %vm1689, %v3053, -inf
      %3299 = vmax.xlane.f32.xlu0 %v3298
      %v3300 = vpop.xlane.xlu0 %3299
      %v3301 = vsel %vm1689, %v3058, -inf
      %3302 = vmax.xlane.f32.xlu0 %v3301
      %v3303 = vpop.xlane.xlu0 %3302
      %v3304 = vsel %vm1689, %v3063, -inf
      %3305 = vmax.xlane.f32.xlu0 %v3304
      %v3306 = vpop.xlane.xlu0 %3305
      %v3307 = vsel %vm1689, %v3197, -inf
      %3308 = vmax.xlane.f32.xlu0 %v3307
      %v3309 = vpop.xlane.xlu0 %3308
      %v3310 = vsel %vm1689, %v3202, -inf
      %3311 = vmax.xlane.f32.xlu0 %v3310
      %v3312 = vpop.xlane.xlu0 %3311
      %v3313 = vsel %vm1689, %v3207, -inf
      %3314 = vmax.xlane.f32.xlu0 %v3313
      %v3315 = vpop.xlane.xlu0 %3314
      %v3316 = vsel %vm1689, %v3212, -inf
      %3317 = vmax.xlane.f32.xlu0 %v3316
      %v3318 = vpop.xlane.xlu0 %3317
      %v3319 = vsel %vm1689, %v3217, -inf
      %3320 = vmax.xlane.f32.xlu0 %v3319
      %v3321 = vpop.xlane.xlu0 %3320
      %v3322 = vsel %vm1689, %v3222, -inf
      %3323 = vmax.xlane.f32.xlu0 %v3322
      %v3324 = vpop.xlane.xlu0 %3323
      %v3325 = vsel %vm1689, %v3227, -inf
      %3326 = vmax.xlane.f32.xlu0 %v3325
      %v3327 = vpop.xlane.xlu0 %3326
      %v3328 = vsel %vm1689, %v3232, -inf
      %3329 = vmax.xlane.f32.xlu0 %v3328
      %v3330 = vpop.xlane.xlu0 %3329
      %v3331 = vsub.f32 %v2690, %v3237
      %v3332 = vsub.f32 %v2695, %v3240
      %v3333 = vsub.f32 %v2700, %v3243
      %v3334 = vsub.f32 %v2705, %v3246
      %v3335 = vsub.f32 %v2710, %v3249
      %v3336 = vsub.f32 %v2715, %v3252
      %v3337 = vsub.f32 %v2720, %v3255
      %v3338 = vsub.f32 %v2725, %v3258
      %v3339 = vsub.f32 %v2859, %v3261
      %v3340 = vsub.f32 %v2864, %v3264
      %v3341 = vsub.f32 %v2869, %v3267
      %v3342 = vsub.f32 %v2874, %v3270
      %v3343 = vsub.f32 %v2879, %v3273
      %v3344 = vsub.f32 %v2884, %v3276
      %v3345 = vsub.f32 %v2889, %v3279
      %v3346 = vsub.f32 %v2894, %v3282
      %v3347 = vsub.f32 %v3028, %v3285
      %v3348 = vsub.f32 %v3033, %v3288
      %v3349 = vsub.f32 %v3038, %v3291
      %v3350 = vsub.f32 %v3043, %v3294
      %v3351 = vsub.f32 %v3048, %v3297
      %v3352 = vsub.f32 %v3053, %v3300
      %v3353 = vsub.f32 %v3058, %v3303
      %v3354 = vsub.f32 %v3063, %v3306
      %v3355 = vsub.f32 %v3197, %v3309
      %v3356 = vsub.f32 %v3202, %v3312
      %v3357 = vsub.f32 %v3207, %v3315
      %v3358 = vsub.f32 %v3212, %v3318
      %v3359 = vsub.f32 %v3217, %v3321
      %v3360 = vsub.f32 %v3222, %v3324
      %v3361 = vsub.f32 %v3227, %v3327
      %v3362 = vsub.f32 %v3232, %v3330
      %v3363 = vmul.f32 %v3331, 1.442695
      %v3364 = vpow.pop %v3363
      %v3365 = vmul.f32 %v3332, 1.442695
      %v3366 = vpow.pop %v3365
      %v3367 = vmul.f32 %v3333, 1.442695
      %v3368 = vpow.pop %v3367
      %v3369 = vmul.f32 %v3334, 1.442695
      %v3370 = vpow.pop %v3369
      %v3371 = vmul.f32 %v3335, 1.442695
      %v3372 = vpow.pop %v3371
      %v3373 = vmul.f32 %v3336, 1.442695
      %v3374 = vpow.pop %v3373
      %v3375 = vmul.f32 %v3337, 1.442695
      %v3376 = vpow.pop %v3375
      %v3377 = vmul.f32 %v3338, 1.442695
      %v3378 = vpow.pop %v3377
      %v3379 = vmul.f32 %v3339, 1.442695
      %v3380 = vpow.pop %v3379
      %v3381 = vmul.f32 %v3340, 1.442695
      %v3382 = vpow.pop %v3381
      %v3383 = vmul.f32 %v3341, 1.442695
      %v3384 = vpow.pop %v3383
      %v3385 = vmul.f32 %v3342, 1.442695
      %v3386 = vpow.pop %v3385
      %v3387 = vmul.f32 %v3343, 1.442695
      %v3388 = vpow.pop %v3387
      %v3389 = vmul.f32 %v3344, 1.442695
      %v3390 = vpow.pop %v3389
      %v3391 = vmul.f32 %v3345, 1.442695
      %v3392 = vpow.pop %v3391
      %v3393 = vmul.f32 %v3346, 1.442695
      %v3394 = vpow.pop %v3393
      %v3395 = vmul.f32 %v3347, 1.442695
      %v3396 = vpow.pop %v3395
      %v3397 = vmul.f32 %v3348, 1.442695
      %v3398 = vpow.pop %v3397
      %v3399 = vmul.f32 %v3349, 1.442695
      %v3400 = vpow.pop %v3399
      %v3401 = vmul.f32 %v3350, 1.442695
      %v3402 = vpow.pop %v3401
      %v3403 = vmul.f32 %v3351, 1.442695
      %v3404 = vpow.pop %v3403
      %v3405 = vmul.f32 %v3352, 1.442695
      %v3406 = vpow.pop %v3405
      %v3407 = vmul.f32 %v3353, 1.442695
      %v3408 = vpow.pop %v3407
      %v3409 = vmul.f32 %v3354, 1.442695
      %v3410 = vpow.pop %v3409
      %v3411 = vmul.f32 %v3355, 1.442695
      %v3412 = vpow.pop %v3411
      %v3413 = vmul.f32 %v3356, 1.442695
      %v3414 = vpow.pop %v3413
      %v3415 = vmul.f32 %v3357, 1.442695
      %v3416 = vpow.pop %v3415
      %v3417 = vmul.f32 %v3358, 1.442695
      %v3418 = vpow.pop %v3417
      %v3419 = vmul.f32 %v3359, 1.442695
      %v3420 = vpow.pop %v3419
      %v3421 = vmul.f32 %v3360, 1.442695
      %v3422 = vpow.pop %v3421
      %v3423 = vmul.f32 %v3361, 1.442695
      %v3424 = vpow.pop %v3423
      %v3425 = vmul.f32 %v3362, 1.442695
      %v3426 = vpow.pop %v3425
      %v3427 = vsel %vm1689, %v3364, 0.0
      %3428 = vadd.xlane.f32.xlu0 %v3427
      %v3429 = vpop.xlane.xlu0 %3428
      %v3430 = vsel %vm1689, %v3366, 0.0
      %3431 = vadd.xlane.f32.xlu0 %v3430
      %v3432 = vpop.xlane.xlu0 %3431
      %v3433 = vsel %vm1689, %v3368, 0.0
      %3434 = vadd.xlane.f32.xlu0 %v3433
      %v3435 = vpop.xlane.xlu0 %3434
      %v3436 = vsel %vm1689, %v3370, 0.0
      %3437 = vadd.xlane.f32.xlu0 %v3436
      %v3438 = vpop.xlane.xlu0 %3437
      %v3439 = vsel %vm1689, %v3372, 0.0
      %3440 = vadd.xlane.f32.xlu0 %v3439
      %v3441 = vpop.xlane.xlu0 %3440
      %v3442 = vsel %vm1689, %v3374, 0.0
      %3443 = vadd.xlane.f32.xlu0 %v3442
      %v3444 = vpop.xlane.xlu0 %3443
      %v3445 = vsel %vm1689, %v3376, 0.0
      %3446 = vadd.xlane.f32.xlu0 %v3445
      %v3447 = vpop.xlane.xlu0 %3446
      %v3448 = vsel %vm1689, %v3378, 0.0
      %3449 = vadd.xlane.f32.xlu0 %v3448
      %v3450 = vpop.xlane.xlu0 %3449
      %v3451 = vsel %vm1689, %v3380, 0.0
      %3452 = vadd.xlane.f32.xlu0 %v3451
      %v3453 = vpop.xlane.xlu0 %3452
      %v3454 = vsel %vm1689, %v3382, 0.0
      %3455 = vadd.xlane.f32.xlu0 %v3454
      %v3456 = vpop.xlane.xlu0 %3455
      %v3457 = vsel %vm1689, %v3384, 0.0
      %3458 = vadd.xlane.f32.xlu0 %v3457
      %v3459 = vpop.xlane.xlu0 %3458
      %v3460 = vsel %vm1689, %v3386, 0.0
      %3461 = vadd.xlane.f32.xlu0 %v3460
      %v3462 = vpop.xlane.xlu0 %3461
      %v3463 = vsel %vm1689, %v3388, 0.0
      %3464 = vadd.xlane.f32.xlu0 %v3463
      %v3465 = vpop.xlane.xlu0 %3464
      %v3466 = vsel %vm1689, %v3390, 0.0
      %3467 = vadd.xlane.f32.xlu0 %v3466
      %v3468 = vpop.xlane.xlu0 %3467
      %v3469 = vsel %vm1689, %v3392, 0.0
      %3470 = vadd.xlane.f32.xlu0 %v3469
      %v3471 = vpop.xlane.xlu0 %3470
      %v3472 = vsel %vm1689, %v3394, 0.0
      %3473 = vadd.xlane.f32.xlu0 %v3472
      %v3474 = vpop.xlane.xlu0 %3473
      %v3475 = vsel %vm1689, %v3396, 0.0
      %3476 = vadd.xlane.f32.xlu0 %v3475
      %v3477 = vpop.xlane.xlu0 %3476
      %v3478 = vsel %vm1689, %v3398, 0.0
      %3479 = vadd.xlane.f32.xlu0 %v3478
      %v3480 = vpop.xlane.xlu0 %3479
      %v3481 = vsel %vm1689, %v3400, 0.0
      %3482 = vadd.xlane.f32.xlu0 %v3481
      %v3483 = vpop.xlane.xlu0 %3482
      %v3484 = vsel %vm1689, %v3402, 0.0
      %3485 = vadd.xlane.f32.xlu0 %v3484
      %v3486 = vpop.xlane.xlu0 %3485
      %v3487 = vsel %vm1689, %v3404, 0.0
      %3488 = vadd.xlane.f32.xlu0 %v3487
      %v3489 = vpop.xlane.xlu0 %3488
      %v3490 = vsel %vm1689, %v3406, 0.0
      %3491 = vadd.xlane.f32.xlu0 %v3490
      %v3492 = vpop.xlane.xlu0 %3491
      %v3493 = vsel %vm1689, %v3408, 0.0
      %3494 = vadd.xlane.f32.xlu0 %v3493
      %v3495 = vpop.xlane.xlu0 %3494
      %v3496 = vsel %vm1689, %v3410, 0.0
      %3497 = vadd.xlane.f32.xlu0 %v3496
      %v3498 = vpop.xlane.xlu0 %3497
      %v3499 = vsel %vm1689, %v3412, 0.0
      %3500 = vadd.xlane.f32.xlu0 %v3499
      %v3501 = vpop.xlane.xlu0 %3500
      %v3502 = vsel %vm1689, %v3414, 0.0
      %3503 = vadd.xlane.f32.xlu0 %v3502
      %v3504 = vpop.xlane.xlu0 %3503
      %v3505 = vsel %vm1689, %v3416, 0.0
      %3506 = vadd.xlane.f32.xlu0 %v3505
      %v3507 = vpop.xlane.xlu0 %3506
      %v3508 = vsel %vm1689, %v3418, 0.0
      %3509 = vadd.xlane.f32.xlu0 %v3508
      %v3510 = vpop.xlane.xlu0 %3509
      %v3511 = vsel %vm1689, %v3420, 0.0
      %3512 = vadd.xlane.f32.xlu0 %v3511
      %v3513 = vpop.xlane.xlu0 %3512
      %v3514 = vsel %vm1689, %v3422, 0.0
      %3515 = vadd.xlane.f32.xlu0 %v3514
      %v3516 = vpop.xlane.xlu0 %3515
      %v3517 = vsel %vm1689, %v3424, 0.0
      %3518 = vadd.xlane.f32.xlu0 %v3517
      %v3519 = vpop.xlane.xlu0 %3518
      %v3520 = vsel %vm1689, %v3426, 0.0
      %3521 = vadd.xlane.f32.xlu0 %v3520
      %v3522 = vpop.xlane.xlu0 %3521
      %v3523 = vrcp.pop %v3429
      %v3524 = vrcp.pop %v3432
      %v3525 = vrcp.pop %v3435
      %v3526 = vrcp.pop %v3438
      %v3527 = vrcp.pop %v3441
      %v3528 = vrcp.pop %v3444
      %v3529 = vrcp.pop %v3447
      %v3530 = vrcp.pop %v3450
      %v3531 = vrcp.pop %v3453
      %v3532 = vrcp.pop %v3456
      %v3533 = vrcp.pop %v3459
      %v3534 = vrcp.pop %v3462
      %v3535 = vrcp.pop %v3465
      %v3536 = vrcp.pop %v3468
      %v3537 = vrcp.pop %v3471
      %v3538 = vrcp.pop %v3474
      %v3539 = vrcp.pop %v3477
      %v3540 = vrcp.pop %v3480
      %v3541 = vrcp.pop %v3483
      %v3542 = vrcp.pop %v3486
      %v3543 = vrcp.pop %v3489
      %v3544 = vrcp.pop %v3492
      %v3545 = vrcp.pop %v3495
      %v3546 = vrcp.pop %v3498
      %v3547 = vrcp.pop %v3501
      %v3548 = vrcp.pop %v3504
      %v3549 = vrcp.pop %v3507
      %v3550 = vrcp.pop %v3510
      %v3551 = vrcp.pop %v3513
      %v3552 = vrcp.pop %v3516
      %v3553 = vrcp.pop %v3519
      %v3554 = vrcp.pop %v3522
      %v3555 = vmul.f32 %v3364, %v3523
      %v3556 = vmul.f32 %v3366, %v3524
      %v3557 = vmul.f32 %v3368, %v3525
      %v3558 = vmul.f32 %v3370, %v3526
      %v3559 = vmul.f32 %v3372, %v3527
      %v3560 = vmul.f32 %v3374, %v3528
      %v3561 = vmul.f32 %v3376, %v3529
      %v3562 = vmul.f32 %v3378, %v3530
      %v3563 = vmul.f32 %v3380, %v3531
      %v3564 = vmul.f32 %v3382, %v3532
      %v3565 = vmul.f32 %v3384, %v3533
      %v3566 = vmul.f32 %v3386, %v3534
      %v3567 = vmul.f32 %v3388, %v3535
      %v3568 = vmul.f32 %v3390, %v3536
      %v3569 = vmul.f32 %v3392, %v3537
      %v3570 = vmul.f32 %v3394, %v3538
      %v3571 = vmul.f32 %v3396, %v3539
      %v3572 = vmul.f32 %v3398, %v3540
      %v3573 = vmul.f32 %v3400, %v3541
      %v3574 = vmul.f32 %v3402, %v3542
      %v3575 = vmul.f32 %v3404, %v3543
      %v3576 = vmul.f32 %v3406, %v3544
      %v3577 = vmul.f32 %v3408, %v3545
      %v3578 = vmul.f32 %v3410, %v3546
      %v3579 = vmul.f32 %v3412, %v3547
      %v3580 = vmul.f32 %v3414, %v3548
      %v3581 = vmul.f32 %v3416, %v3549
      %v3582 = vmul.f32 %v3418, %v3550
      %v3583 = vmul.f32 %v3420, %v3551
      %v3584 = vmul.f32 %v3422, %v3552
      %v3585 = vmul.f32 %v3424, %v3553
      %v3586 = vmul.f32 %v3426, %v3554
      %3595 = vrot.lane.b32.xlu0 %v918, 120
      %v3596 = vpop.permute.xlu0 %3595
      %3597 = vrot.lane.b32.xlu0 %v923, 120
      %v3598 = vpop.permute.xlu0 %3597
      %3599 = vrot.lane.b32.xlu0 %v928, 120
      %v3600 = vpop.permute.xlu0 %3599
      %3601 = vrot.lane.b32.xlu0 %v933, 120
      %v3602 = vpop.permute.xlu0 %3601
      %3603 = vrot.lane.b32.xlu0 %v938, 120
      %v3604 = vpop.permute.xlu0 %3603
      %3605 = vrot.lane.b32.xlu0 %v943, 120
      %v3606 = vpop.permute.xlu0 %3605
      %3607 = vrot.lane.b32.xlu0 %v948, 120
      %v3608 = vpop.permute.xlu0 %3607
      %3609 = vrot.lane.b32.xlu0 %v953, 120
      %v3610 = vpop.permute.xlu0 %3609
      %v3620 = vsel %vm1689, %v3555, 0
      %v3623 = vsel %vm1689, %v3556, 0
      %v3626 = vsel %vm1689, %v3557, 0
      %v3629 = vsel %vm1689, %v3558, 0
      %v3632 = vsel %vm1689, %v3559, 0
      %v3635 = vsel %vm1689, %v3560, 0
      %v3638 = vsel %vm1689, %v3561, 0
      %v3641 = vsel %vm1689, %v3562, 0
      %3643 = vmatprep.subr.mxu0 0.0
      %3644 = vmatpush1.msra.mxu0 0.0
      %3645 = vmatprep.subr.mxu0 0.0
      %3646 = vmatpush1.msra.mxu0 0.0
      %3647 = vmatprep.subr.mxu0 0.0
      %3648 = vmatpush1.msra.mxu0 0.0
      %3649 = vmatprep.subr.mxu0 0.0
      %3650 = vmatpush1.msra.mxu0 0.0
      %3651 = vmatprep.subr.mxu0 0.0
      %3652 = vmatpush1.msra.mxu0 0.0
      %3653 = vmatprep.subr.mxu0 0.0
      %3654 = vmatpush1.msra.mxu0 0.0
      %3655 = vmatprep.subr.mxu0 0.0
      %3656 = vmatpush1.msra.mxu0 0.0
      %3657 = vmatprep.subr.mxu0 0.0
      %3658 = vmatpush1.msra.mxu0 0.0
      %3659 = vmatprep.subr.mxu0 0.0
      %3660 = vmatpush1.msra.mxu0 %v3610
      %3661 = vmatprep.subr.mxu0 0.0
      %3662 = vmatpush1.msra.mxu0 %v3608
      %3663 = vmatprep.subr.mxu0 0.0
      %3664 = vmatpush1.msra.mxu0 %v3606
      %3665 = vmatprep.subr.mxu0 0.0
      %3666 = vmatpush1.msra.mxu0 %v3604
      %3667 = vmatprep.subr.mxu0 0.0
      %3668 = vmatpush1.msra.mxu0 %v3602
      %3669 = vmatprep.subr.mxu0 0.0
      %3670 = vmatpush1.msra.mxu0 %v3600
      %3671 = vmatprep.subr.mxu0 0.0
      %3672 = vmatpush1.msra.mxu0 %v3598
      %3673 = vmatprep.subr.mxu0 0.0
      %3674 = vmatpush1.msra.mxu0 %v3596
      %3675 = vmatprep.subr.mxu0 0.0
      %3676 = vmatpush2.msra.mxu0 0.0
      %3677 = vmatprep.subr.mxu0 0.0
      %3678 = vmatpush2.msra.mxu0 0.0
      %3679 = vmatprep.subr.mxu0 0.0
      %3680 = vmatpush2.msra.mxu0 0.0
      %3681 = vmatprep.subr.mxu0 0.0
      %3682 = vmatpush2.msra.mxu0 0.0
      %3683 = vmatprep.subr.mxu0 0.0
      %3684 = vmatpush2.msra.mxu0 0.0
      %3685 = vmatprep.subr.mxu0 0.0
      %3686 = vmatpush2.msra.mxu0 0.0
      %3687 = vmatprep.subr.mxu0 0.0
      %3688 = vmatpush2.msra.mxu0 0.0
      %3689 = vmatprep.subr.mxu0 0.0
      %3690 = vmatpush2.msra.mxu0 0.0
      %3691 = vmatprep.subr.mxu0 0.0
      %3692 = vmatpush2.msra.mxu0 0.0
      %3693 = vmatprep.subr.mxu0 0.0
      %3694 = vmatpush2.msra.mxu0 0.0
      %3695 = vmatprep.subr.mxu0 0.0
      %3696 = vmatpush2.msra.mxu0 0.0
      %3697 = vmatprep.subr.mxu0 0.0
      %3698 = vmatpush2.msra.mxu0 0.0
      %3699 = vmatprep.subr.mxu0 0.0
      %3700 = vmatpush2.msra.mxu0 0.0
      %3701 = vmatprep.subr.mxu0 0.0
      %3702 = vmatpush2.msra.mxu0 0.0
      %3703 = vmatprep.subr.mxu0 0.0
      %3704 = vmatpush2.msra.mxu0 0.0
      %3705 = vmatprep.subr.mxu0 0.0
      %3706 = vmatpush2.msra.mxu0 0.0
      %3707 = vmatprep.mubr.f32.mxu0 0.0
      %3708 = vmatmul.mubr.f32.gmra.mxu0 %v3620
      %v3709 = vpop.f32.mrf.mxu0
      %v3710 = vadd.f32 0.0, %v3709
      %v3711 = vpop.f32.mrf.mxu0
      %3712 = vmatprep.mubr.f32.mxu0 0.0
      %3713 = vmatmul.mubr.f32.gmra.mxu0 %v3623
      %v3714 = vpop.f32.mrf.mxu0
      %v3715 = vadd.f32 0.0, %v3714
      %v3716 = vpop.f32.mrf.mxu0
      %3717 = vmatprep.mubr.f32.mxu0 0.0
      %3718 = vmatmul.mubr.f32.gmra.mxu0 %v3626
      %v3719 = vpop.f32.mrf.mxu0
      %v3720 = vadd.f32 0.0, %v3719
      %v3721 = vpop.f32.mrf.mxu0
      %3722 = vmatprep.mubr.f32.mxu0 0.0
      %3723 = vmatmul.mubr.f32.gmra.mxu0 %v3629
      %v3724 = vpop.f32.mrf.mxu0
      %v3725 = vadd.f32 0.0, %v3724
      %v3726 = vpop.f32.mrf.mxu0
      %3727 = vmatprep.mubr.f32.mxu0 0.0
      %3728 = vmatmul.mubr.f32.gmra.mxu0 %v3632
      %v3729 = vpop.f32.mrf.mxu0
      %v3730 = vadd.f32 0.0, %v3729
      %v3731 = vpop.f32.mrf.mxu0
      %3732 = vmatprep.mubr.f32.mxu0 0.0
      %3733 = vmatmul.mubr.f32.gmra.mxu0 %v3635
      %v3734 = vpop.f32.mrf.mxu0
      %v3735 = vadd.f32 0.0, %v3734
      %v3736 = vpop.f32.mrf.mxu0
      %3737 = vmatprep.mubr.f32.mxu0 0.0
      %3738 = vmatmul.mubr.f32.gmra.mxu0 %v3638
      %v3739 = vpop.f32.mrf.mxu0
      %v3740 = vadd.f32 0.0, %v3739
      %v3741 = vpop.f32.mrf.mxu0
      %3742 = vmatprep.mubr.f32.mxu0 0.0
      %3743 = vmatmul.mubr.f32.gmra.mxu0 %v3641
      %v3744 = vpop.f32.mrf.mxu0
      %v3745 = vadd.f32 0.0, %v3744
      %v3746 = vpop.f32.mrf.mxu0
      %3747 = vdwg.mxu0
      %3756 = vrot.lane.b32.xlu0 %v958, 120
      %v3757 = vpop.permute.xlu0 %3756
      %3758 = vrot.lane.b32.xlu0 %v963, 120
      %v3759 = vpop.permute.xlu0 %3758
      %3760 = vrot.lane.b32.xlu0 %v968, 120
      %v3761 = vpop.permute.xlu0 %3760
      %3762 = vrot.lane.b32.xlu0 %v973, 120
      %v3763 = vpop.permute.xlu0 %3762
      %3764 = vrot.lane.b32.xlu0 %v978, 120
      %v3765 = vpop.permute.xlu0 %3764
      %3766 = vrot.lane.b32.xlu0 %v983, 120
      %v3767 = vpop.permute.xlu0 %3766
      %3768 = vrot.lane.b32.xlu0 %v988, 120
      %v3769 = vpop.permute.xlu0 %3768
      %3770 = vrot.lane.b32.xlu0 %v993, 120
      %v3771 = vpop.permute.xlu0 %3770
      %v3781 = vsel %vm1689, %v3563, 0
      %v3784 = vsel %vm1689, %v3564, 0
      %v3787 = vsel %vm1689, %v3565, 0
      %v3790 = vsel %vm1689, %v3566, 0
      %v3793 = vsel %vm1689, %v3567, 0
      %v3796 = vsel %vm1689, %v3568, 0
      %v3799 = vsel %vm1689, %v3569, 0
      %v3802 = vsel %vm1689, %v3570, 0
      %3804 = vmatprep.subr.mxu0 0.0
      %3805 = vmatpush1.msra.mxu0 0.0
      %3806 = vmatprep.subr.mxu0 0.0
      %3807 = vmatpush1.msra.mxu0 0.0
      %3808 = vmatprep.subr.mxu0 0.0
      %3809 = vmatpush1.msra.mxu0 0.0
      %3810 = vmatprep.subr.mxu0 0.0
      %3811 = vmatpush1.msra.mxu0 0.0
      %3812 = vmatprep.subr.mxu0 0.0
      %3813 = vmatpush1.msra.mxu0 0.0
      %3814 = vmatprep.subr.mxu0 0.0
      %3815 = vmatpush1.msra.mxu0 0.0
      %3816 = vmatprep.subr.mxu0 0.0
      %3817 = vmatpush1.msra.mxu0 0.0
      %3818 = vmatprep.subr.mxu0 0.0
      %3819 = vmatpush1.msra.mxu0 0.0
      %3820 = vmatprep.subr.mxu0 0.0
      %3821 = vmatpush1.msra.mxu0 %v3771
      %3822 = vmatprep.subr.mxu0 0.0
      %3823 = vmatpush1.msra.mxu0 %v3769
      %3824 = vmatprep.subr.mxu0 0.0
      %3825 = vmatpush1.msra.mxu0 %v3767
      %3826 = vmatprep.subr.mxu0 0.0
      %3827 = vmatpush1.msra.mxu0 %v3765
      %3828 = vmatprep.subr.mxu0 0.0
      %3829 = vmatpush1.msra.mxu0 %v3763
      %3830 = vmatprep.subr.mxu0 0.0
      %3831 = vmatpush1.msra.mxu0 %v3761
      %3832 = vmatprep.subr.mxu0 0.0
      %3833 = vmatpush1.msra.mxu0 %v3759
      %3834 = vmatprep.subr.mxu0 0.0
      %3835 = vmatpush1.msra.mxu0 %v3757
      %3836 = vmatprep.subr.mxu0 0.0
      %3837 = vmatpush2.msra.mxu0 0.0
      %3838 = vmatprep.subr.mxu0 0.0
      %3839 = vmatpush2.msra.mxu0 0.0
      %3840 = vmatprep.subr.mxu0 0.0
      %3841 = vmatpush2.msra.mxu0 0.0
      %3842 = vmatprep.subr.mxu0 0.0
      %3843 = vmatpush2.msra.mxu0 0.0
      %3844 = vmatprep.subr.mxu0 0.0
      %3845 = vmatpush2.msra.mxu0 0.0
      %3846 = vmatprep.subr.mxu0 0.0
      %3847 = vmatpush2.msra.mxu0 0.0
      %3848 = vmatprep.subr.mxu0 0.0
      %3849 = vmatpush2.msra.mxu0 0.0
      %3850 = vmatprep.subr.mxu0 0.0
      %3851 = vmatpush2.msra.mxu0 0.0
      %3852 = vmatprep.subr.mxu0 0.0
      %3853 = vmatpush2.msra.mxu0 0.0
      %3854 = vmatprep.subr.mxu0 0.0
      %3855 = vmatpush2.msra.mxu0 0.0
      %3856 = vmatprep.subr.mxu0 0.0
      %3857 = vmatpush2.msra.mxu0 0.0
      %3858 = vmatprep.subr.mxu0 0.0
      %3859 = vmatpush2.msra.mxu0 0.0
      %3860 = vmatprep.subr.mxu0 0.0
      %3861 = vmatpush2.msra.mxu0 0.0
      %3862 = vmatprep.subr.mxu0 0.0
      %3863 = vmatpush2.msra.mxu0 0.0
      %3864 = vmatprep.subr.mxu0 0.0
      %3865 = vmatpush2.msra.mxu0 0.0
      %3866 = vmatprep.subr.mxu0 0.0
      %3867 = vmatpush2.msra.mxu0 0.0
      %3868 = vmatprep.mubr.f32.mxu0 0.0
      %3869 = vmatmul.mubr.f32.gmra.mxu0 %v3781
      %v3870 = vpop.f32.mrf.mxu0
      %v3871 = vadd.f32 0.0, %v3870
      %v3872 = vpop.f32.mrf.mxu0
      %3873 = vmatprep.mubr.f32.mxu0 0.0
      %3874 = vmatmul.mubr.f32.gmra.mxu0 %v3784
      %v3875 = vpop.f32.mrf.mxu0
      %v3876 = vadd.f32 0.0, %v3875
      %v3877 = vpop.f32.mrf.mxu0
      %3878 = vmatprep.mubr.f32.mxu0 0.0
      %3879 = vmatmul.mubr.f32.gmra.mxu0 %v3787
      %v3880 = vpop.f32.mrf.mxu0
      %v3881 = vadd.f32 0.0, %v3880
      %v3882 = vpop.f32.mrf.mxu0
      %3883 = vmatprep.mubr.f32.mxu0 0.0
      %3884 = vmatmul.mubr.f32.gmra.mxu0 %v3790
      %v3885 = vpop.f32.mrf.mxu0
      %v3886 = vadd.f32 0.0, %v3885
      %v3887 = vpop.f32.mrf.mxu0
      %3888 = vmatprep.mubr.f32.mxu0 0.0
      %3889 = vmatmul.mubr.f32.gmra.mxu0 %v3793
      %v3890 = vpop.f32.mrf.mxu0
      %v3891 = vadd.f32 0.0, %v3890
      %v3892 = vpop.f32.mrf.mxu0
      %3893 = vmatprep.mubr.f32.mxu0 0.0
      %3894 = vmatmul.mubr.f32.gmra.mxu0 %v3796
      %v3895 = vpop.f32.mrf.mxu0
      %v3896 = vadd.f32 0.0, %v3895
      %v3897 = vpop.f32.mrf.mxu0
      %3898 = vmatprep.mubr.f32.mxu0 0.0
      %3899 = vmatmul.mubr.f32.gmra.mxu0 %v3799
      %v3900 = vpop.f32.mrf.mxu0
      %v3901 = vadd.f32 0.0, %v3900
      %v3902 = vpop.f32.mrf.mxu0
      %3903 = vmatprep.mubr.f32.mxu0 0.0
      %3904 = vmatmul.mubr.f32.gmra.mxu0 %v3802
      %v3905 = vpop.f32.mrf.mxu0
      %v3906 = vadd.f32 0.0, %v3905
      %v3907 = vpop.f32.mrf.mxu0
      %3908 = vdwg.mxu0
      %3917 = vrot.lane.b32.xlu0 %v998, 120
      %v3918 = vpop.permute.xlu0 %3917
      %3919 = vrot.lane.b32.xlu0 %v1003, 120
      %v3920 = vpop.permute.xlu0 %3919
      %3921 = vrot.lane.b32.xlu0 %v1008, 120
      %v3922 = vpop.permute.xlu0 %3921
      %3923 = vrot.lane.b32.xlu0 %v1013, 120
      %v3924 = vpop.permute.xlu0 %3923
      %3925 = vrot.lane.b32.xlu0 %v1018, 120
      %v3926 = vpop.permute.xlu0 %3925
      %3927 = vrot.lane.b32.xlu0 %v1023, 120
      %v3928 = vpop.permute.xlu0 %3927
      %3929 = vrot.lane.b32.xlu0 %v1028, 120
      %v3930 = vpop.permute.xlu0 %3929
      %3931 = vrot.lane.b32.xlu0 %v1033, 120
      %v3932 = vpop.permute.xlu0 %3931
      %v3942 = vsel %vm1689, %v3571, 0
      %v3945 = vsel %vm1689, %v3572, 0
      %v3948 = vsel %vm1689, %v3573, 0
      %v3951 = vsel %vm1689, %v3574, 0
      %v3954 = vsel %vm1689, %v3575, 0
      %v3957 = vsel %vm1689, %v3576, 0
      %v3960 = vsel %vm1689, %v3577, 0
      %v3963 = vsel %vm1689, %v3578, 0
      %3965 = vmatprep.subr.mxu0 0.0
      %3966 = vmatpush1.msra.mxu0 0.0
      %3967 = vmatprep.subr.mxu0 0.0
      %3968 = vmatpush1.msra.mxu0 0.0
      %3969 = vmatprep.subr.mxu0 0.0
      %3970 = vmatpush1.msra.mxu0 0.0
      %3971 = vmatprep.subr.mxu0 0.0
      %3972 = vmatpush1.msra.mxu0 0.0
      %3973 = vmatprep.subr.mxu0 0.0
      %3974 = vmatpush1.msra.mxu0 0.0
      %3975 = vmatprep.subr.mxu0 0.0
      %3976 = vmatpush1.msra.mxu0 0.0
      %3977 = vmatprep.subr.mxu0 0.0
      %3978 = vmatpush1.msra.mxu0 0.0
      %3979 = vmatprep.subr.mxu0 0.0
      %3980 = vmatpush1.msra.mxu0 0.0
      %3981 = vmatprep.subr.mxu0 0.0
      %3982 = vmatpush1.msra.mxu0 %v3932
      %3983 = vmatprep.subr.mxu0 0.0
      %3984 = vmatpush1.msra.mxu0 %v3930
      %3985 = vmatprep.subr.mxu0 0.0
      %3986 = vmatpush1.msra.mxu0 %v3928
      %3987 = vmatprep.subr.mxu0 0.0
      %3988 = vmatpush1.msra.mxu0 %v3926
      %3989 = vmatprep.subr.mxu0 0.0
      %3990 = vmatpush1.msra.mxu0 %v3924
      %3991 = vmatprep.subr.mxu0 0.0
      %3992 = vmatpush1.msra.mxu0 %v3922
      %3993 = vmatprep.subr.mxu0 0.0
      %3994 = vmatpush1.msra.mxu0 %v3920
      %3995 = vmatprep.subr.mxu0 0.0
      %3996 = vmatpush1.msra.mxu0 %v3918
      %3997 = vmatprep.subr.mxu0 0.0
      %3998 = vmatpush2.msra.mxu0 0.0
      %3999 = vmatprep.subr.mxu0 0.0
      %4000 = vmatpush2.msra.mxu0 0.0
      %4001 = vmatprep.subr.mxu0 0.0
      %4002 = vmatpush2.msra.mxu0 0.0
      %4003 = vmatprep.subr.mxu0 0.0
      %4004 = vmatpush2.msra.mxu0 0.0
      %4005 = vmatprep.subr.mxu0 0.0
      %4006 = vmatpush2.msra.mxu0 0.0
      %4007 = vmatprep.subr.mxu0 0.0
      %4008 = vmatpush2.msra.mxu0 0.0
      %4009 = vmatprep.subr.mxu0 0.0
      %4010 = vmatpush2.msra.mxu0 0.0
      %4011 = vmatprep.subr.mxu0 0.0
      %4012 = vmatpush2.msra.mxu0 0.0
      %4013 = vmatprep.subr.mxu0 0.0
      %4014 = vmatpush2.msra.mxu0 0.0
      %4015 = vmatprep.subr.mxu0 0.0
      %4016 = vmatpush2.msra.mxu0 0.0
      %4017 = vmatprep.subr.mxu0 0.0
      %4018 = vmatpush2.msra.mxu0 0.0
      %4019 = vmatprep.subr.mxu0 0.0
      %4020 = vmatpush2.msra.mxu0 0.0
      %4021 = vmatprep.subr.mxu0 0.0
      %4022 = vmatpush2.msra.mxu0 0.0
      %4023 = vmatprep.subr.mxu0 0.0
      %4024 = vmatpush2.msra.mxu0 0.0
      %4025 = vmatprep.subr.mxu0 0.0
      %4026 = vmatpush2.msra.mxu0 0.0
      %4027 = vmatprep.subr.mxu0 0.0
      %4028 = vmatpush2.msra.mxu0 0.0
      %4029 = vmatprep.mubr.f32.mxu0 0.0
      %4030 = vmatmul.mubr.f32.gmra.mxu0 %v3942
      %v4031 = vpop.f32.mrf.mxu0
      %v4032 = vadd.f32 0.0, %v4031
      %v4033 = vpop.f32.mrf.mxu0
      %4034 = vmatprep.mubr.f32.mxu0 0.0
      %4035 = vmatmul.mubr.f32.gmra.mxu0 %v3945
      %v4036 = vpop.f32.mrf.mxu0
      %v4037 = vadd.f32 0.0, %v4036
      %v4038 = vpop.f32.mrf.mxu0
      %4039 = vmatprep.mubr.f32.mxu0 0.0
      %4040 = vmatmul.mubr.f32.gmra.mxu0 %v3948
      %v4041 = vpop.f32.mrf.mxu0
      %v4042 = vadd.f32 0.0, %v4041
      %v4043 = vpop.f32.mrf.mxu0
      %4044 = vmatprep.mubr.f32.mxu0 0.0
      %4045 = vmatmul.mubr.f32.gmra.mxu0 %v3951
      %v4046 = vpop.f32.mrf.mxu0
      %v4047 = vadd.f32 0.0, %v4046
      %v4048 = vpop.f32.mrf.mxu0
      %4049 = vmatprep.mubr.f32.mxu0 0.0
      %4050 = vmatmul.mubr.f32.gmra.mxu0 %v3954
      %v4051 = vpop.f32.mrf.mxu0
      %v4052 = vadd.f32 0.0, %v4051
      %v4053 = vpop.f32.mrf.mxu0
      %4054 = vmatprep.mubr.f32.mxu0 0.0
      %4055 = vmatmul.mubr.f32.gmra.mxu0 %v3957
      %v4056 = vpop.f32.mrf.mxu0
      %v4057 = vadd.f32 0.0, %v4056
      %v4058 = vpop.f32.mrf.mxu0
      %4059 = vmatprep.mubr.f32.mxu0 0.0
      %4060 = vmatmul.mubr.f32.gmra.mxu0 %v3960
      %v4061 = vpop.f32.mrf.mxu0
      %v4062 = vadd.f32 0.0, %v4061
      %v4063 = vpop.f32.mrf.mxu0
      %4064 = vmatprep.mubr.f32.mxu0 0.0
      %4065 = vmatmul.mubr.f32.gmra.mxu0 %v3963
      %v4066 = vpop.f32.mrf.mxu0
      %v4067 = vadd.f32 0.0, %v4066
      %v4068 = vpop.f32.mrf.mxu0
      %4069 = vdwg.mxu0
      %4078 = vrot.lane.b32.xlu0 %v1038, 120
      %v4079 = vpop.permute.xlu0 %4078
      %4080 = vrot.lane.b32.xlu0 %v1043, 120
      %v4081 = vpop.permute.xlu0 %4080
      %4082 = vrot.lane.b32.xlu0 %v1048, 120
      %v4083 = vpop.permute.xlu0 %4082
      %4084 = vrot.lane.b32.xlu0 %v1053, 120
      %v4085 = vpop.permute.xlu0 %4084
      %4086 = vrot.lane.b32.xlu0 %v1058, 120
      %v4087 = vpop.permute.xlu0 %4086
      %4088 = vrot.lane.b32.xlu0 %v1063, 120
      %v4089 = vpop.permute.xlu0 %4088
      %4090 = vrot.lane.b32.xlu0 %v1068, 120
      %v4091 = vpop.permute.xlu0 %4090
      %4092 = vrot.lane.b32.xlu0 %v1073, 120
      %v4093 = vpop.permute.xlu0 %4092
      %v4103 = vsel %vm1689, %v3579, 0
      %v4106 = vsel %vm1689, %v3580, 0
      %v4109 = vsel %vm1689, %v3581, 0
      %v4112 = vsel %vm1689, %v3582, 0
      %v4115 = vsel %vm1689, %v3583, 0
      %v4118 = vsel %vm1689, %v3584, 0
      %v4121 = vsel %vm1689, %v3585, 0
      %v4124 = vsel %vm1689, %v3586, 0
      %4126 = vmatprep.subr.mxu0 0.0
      %4127 = vmatpush1.msra.mxu0 0.0
      %4128 = vmatprep.subr.mxu0 0.0
      %4129 = vmatpush1.msra.mxu0 0.0
      %4130 = vmatprep.subr.mxu0 0.0
      %4131 = vmatpush1.msra.mxu0 0.0
      %4132 = vmatprep.subr.mxu0 0.0
      %4133 = vmatpush1.msra.mxu0 0.0
      %4134 = vmatprep.subr.mxu0 0.0
      %4135 = vmatpush1.msra.mxu0 0.0
      %4136 = vmatprep.subr.mxu0 0.0
      %4137 = vmatpush1.msra.mxu0 0.0
      %4138 = vmatprep.subr.mxu0 0.0
      %4139 = vmatpush1.msra.mxu0 0.0
      %4140 = vmatprep.subr.mxu0 0.0
      %4141 = vmatpush1.msra.mxu0 0.0
      %4142 = vmatprep.subr.mxu0 0.0
      %4143 = vmatpush1.msra.mxu0 %v4093
      %4144 = vmatprep.subr.mxu0 0.0
      %4145 = vmatpush1.msra.mxu0 %v4091
      %4146 = vmatprep.subr.mxu0 0.0
      %4147 = vmatpush1.msra.mxu0 %v4089
      %4148 = vmatprep.subr.mxu0 0.0
      %4149 = vmatpush1.msra.mxu0 %v4087
      %4150 = vmatprep.subr.mxu0 0.0
      %4151 = vmatpush1.msra.mxu0 %v4085
      %4152 = vmatprep.subr.mxu0 0.0
      %4153 = vmatpush1.msra.mxu0 %v4083
      %4154 = vmatprep.subr.mxu0 0.0
      %4155 = vmatpush1.msra.mxu0 %v4081
      %4156 = vmatprep.subr.mxu0 0.0
      %4157 = vmatpush1.msra.mxu0 %v4079
      %4158 = vmatprep.subr.mxu0 0.0
      %4159 = vmatpush2.msra.mxu0 0.0
      %4160 = vmatprep.subr.mxu0 0.0
      %4161 = vmatpush2.msra.mxu0 0.0
      %4162 = vmatprep.subr.mxu0 0.0
      %4163 = vmatpush2.msra.mxu0 0.0
      %4164 = vmatprep.subr.mxu0 0.0
      %4165 = vmatpush2.msra.mxu0 0.0
      %4166 = vmatprep.subr.mxu0 0.0
      %4167 = vmatpush2.msra.mxu0 0.0
      %4168 = vmatprep.subr.mxu0 0.0
      %4169 = vmatpush2.msra.mxu0 0.0
      %4170 = vmatprep.subr.mxu0 0.0
      %4171 = vmatpush2.msra.mxu0 0.0
      %4172 = vmatprep.subr.mxu0 0.0
      %4173 = vmatpush2.msra.mxu0 0.0
      %4174 = vmatprep.subr.mxu0 0.0
      %4175 = vmatpush2.msra.mxu0 0.0
      %4176 = vmatprep.subr.mxu0 0.0
      %4177 = vmatpush2.msra.mxu0 0.0
      %4178 = vmatprep.subr.mxu0 0.0
      %4179 = vmatpush2.msra.mxu0 0.0
      %4180 = vmatprep.subr.mxu0 0.0
      %4181 = vmatpush2.msra.mxu0 0.0
      %4182 = vmatprep.subr.mxu0 0.0
      %4183 = vmatpush2.msra.mxu0 0.0
      %4184 = vmatprep.subr.mxu0 0.0
      %4185 = vmatpush2.msra.mxu0 0.0
      %4186 = vmatprep.subr.mxu0 0.0
      %4187 = vmatpush2.msra.mxu0 0.0
      %4188 = vmatprep.subr.mxu0 0.0
      %4189 = vmatpush2.msra.mxu0 0.0
      %4190 = vmatprep.mubr.f32.mxu0 0.0
      %4191 = vmatmul.mubr.f32.gmra.mxu0 %v4103
      %v4192 = vpop.f32.mrf.mxu0
      %v4193 = vadd.f32 0.0, %v4192
      %v4194 = vpop.f32.mrf.mxu0
      %4195 = vmatprep.mubr.f32.mxu0 0.0
      %4196 = vmatmul.mubr.f32.gmra.mxu0 %v4106
      %v4197 = vpop.f32.mrf.mxu0
      %v4198 = vadd.f32 0.0, %v4197
      %v4199 = vpop.f32.mrf.mxu0
      %4200 = vmatprep.mubr.f32.mxu0 0.0
      %4201 = vmatmul.mubr.f32.gmra.mxu0 %v4109
      %v4202 = vpop.f32.mrf.mxu0
      %v4203 = vadd.f32 0.0, %v4202
      %v4204 = vpop.f32.mrf.mxu0
      %4205 = vmatprep.mubr.f32.mxu0 0.0
      %4206 = vmatmul.mubr.f32.gmra.mxu0 %v4112
      %v4207 = vpop.f32.mrf.mxu0
      %v4208 = vadd.f32 0.0, %v4207
      %v4209 = vpop.f32.mrf.mxu0
      %4210 = vmatprep.mubr.f32.mxu0 0.0
      %4211 = vmatmul.mubr.f32.gmra.mxu0 %v4115
      %v4212 = vpop.f32.mrf.mxu0
      %v4213 = vadd.f32 0.0, %v4212
      %v4214 = vpop.f32.mrf.mxu0
      %4215 = vmatprep.mubr.f32.mxu0 0.0
      %4216 = vmatmul.mubr.f32.gmra.mxu0 %v4118
      %v4217 = vpop.f32.mrf.mxu0
      %v4218 = vadd.f32 0.0, %v4217
      %v4219 = vpop.f32.mrf.mxu0
      %4220 = vmatprep.mubr.f32.mxu0 0.0
      %4221 = vmatmul.mubr.f32.gmra.mxu0 %v4121
      %v4222 = vpop.f32.mrf.mxu0
      %v4223 = vadd.f32 0.0, %v4222
      %v4224 = vpop.f32.mrf.mxu0
      %4225 = vmatprep.mubr.f32.mxu0 0.0
      %4226 = vmatmul.mubr.f32.gmra.mxu0 %v4124
      %v4227 = vpop.f32.mrf.mxu0
      %v4228 = vadd.f32 0.0, %v4227
      %v4229 = vpop.f32.mrf.mxu0
      %4230 = vdwg.mxu0
      %s4231 = scalar_lea.vmem %s4, 8
      %v4232 = vld [vmem:[%s4231] sm:$0xff]
      %v4234 = vsel %vm1076, %v3710, 0
      %v4237 = vsel %vm1076, %v3715, 0
      %v4240 = vsel %vm1076, %v3720, 0
      %v4243 = vsel %vm1076, %v3725, 0
      %v4246 = vsel %vm1076, %v3730, 0
      %v4249 = vsel %vm1076, %v3735, 0
      %v4252 = vsel %vm1076, %v3740, 0
      %v4255 = vsel %vm1076, %v3745, 0
      %v4258 = vsel %vm1076, %v3871, 0
      %v4261 = vsel %vm1076, %v3876, 0
      %v4264 = vsel %vm1076, %v3881, 0
      %v4267 = vsel %vm1076, %v3886, 0
      %v4270 = vsel %vm1076, %v3891, 0
      %v4273 = vsel %vm1076, %v3896, 0
      %v4276 = vsel %vm1076, %v3901, 0
      %v4279 = vsel %vm1076, %v3906, 0
      %v4282 = vsel %vm1076, %v4032, 0
      %v4285 = vsel %vm1076, %v4037, 0
      %v4288 = vsel %vm1076, %v4042, 0
      %v4291 = vsel %vm1076, %v4047, 0
      %v4294 = vsel %vm1076, %v4052, 0
      %v4297 = vsel %vm1076, %v4057, 0
      %v4300 = vsel %vm1076, %v4062, 0
      %v4303 = vsel %vm1076, %v4067, 0
      %v4306 = vsel %vm1076, %v4193, 0
      %v4309 = vsel %vm1076, %v4198, 0
      %v4312 = vsel %vm1076, %v4203, 0
      %v4315 = vsel %vm1076, %v4208, 0
      %v4318 = vsel %vm1076, %v4213, 0
      %v4321 = vsel %vm1076, %v4218, 0
      %v4324 = vsel %vm1076, %v4223, 0
      %v4327 = vsel %vm1076, %v4228, 0
      %4329 = vmatprep.subr.mxu0 0.0
      %4330 = vmatpush1.msra.mxu0 0.0
      %4331 = vmatprep.subr.mxu0 0.0
      %4332 = vmatpush1.msra.mxu0 0.0
      %4333 = vmatprep.subr.mxu0 0.0
      %4334 = vmatpush1.msra.mxu0 0.0
      %4335 = vmatprep.subr.mxu0 0.0
      %4336 = vmatpush1.msra.mxu0 0.0
      %4337 = vmatprep.subr.mxu0 0.0
      %4338 = vmatpush1.msra.mxu0 0.0
      %4339 = vmatprep.subr.mxu0 0.0
      %4340 = vmatpush1.msra.mxu0 0.0
      %4341 = vmatprep.subr.mxu0 0.0
      %4342 = vmatpush1.msra.mxu0 0.0
      %4343 = vmatprep.subr.mxu0 0.0
      %4344 = vmatpush1.msra.mxu0 0.0
      %4345 = vmatprep.subr.mxu0 0.0
      %4346 = vmatpush1.msra.mxu0 0.0
      %4347 = vmatprep.subr.mxu0 0.0
      %4348 = vmatpush1.msra.mxu0 0.0
      %4349 = vmatprep.subr.mxu0 0.0
      %4350 = vmatpush1.msra.mxu0 0.0
      %4351 = vmatprep.subr.mxu0 0.0
      %4352 = vmatpush1.msra.mxu0 0.0
      %4353 = vmatprep.subr.mxu0 0.0
      %4354 = vmatpush1.msra.mxu0 0.0
      %4355 = vmatprep.subr.mxu0 0.0
      %4356 = vmatpush1.msra.mxu0 0.0
      %4357 = vmatprep.subr.mxu0 0.0
      %4358 = vmatpush1.msra.mxu0 0.0
      %4359 = vmatprep.subr.mxu0 0.0
      %4360 = vmatpush1.msra.mxu0 %v4232
      %4361 = vmatprep.subr.mxu0 0.0
      %4362 = vmatpush2.msra.mxu0 0.0
      %4363 = vmatprep.subr.mxu0 0.0
      %4364 = vmatpush2.msra.mxu0 0.0
      %4365 = vmatprep.subr.mxu0 0.0
      %4366 = vmatpush2.msra.mxu0 0.0
      %4367 = vmatprep.subr.mxu0 0.0
      %4368 = vmatpush2.msra.mxu0 0.0
      %4369 = vmatprep.subr.mxu0 0.0
      %4370 = vmatpush2.msra.mxu0 0.0
      %4371 = vmatprep.subr.mxu0 0.0
      %4372 = vmatpush2.msra.mxu0 0.0
      %4373 = vmatprep.subr.mxu0 0.0
      %4374 = vmatpush2.msra.mxu0 0.0
      %4375 = vmatprep.subr.mxu0 0.0
      %4376 = vmatpush2.msra.mxu0 0.0
      %4377 = vmatprep.subr.mxu0 0.0
      %4378 = vmatpush2.msra.mxu0 0.0
      %4379 = vmatprep.subr.mxu0 0.0
      %4380 = vmatpush2.msra.mxu0 0.0
      %4381 = vmatprep.subr.mxu0 0.0
      %4382 = vmatpush2.msra.mxu0 0.0
      %4383 = vmatprep.subr.mxu0 0.0
      %4384 = vmatpush2.msra.mxu0 0.0
      %4385 = vmatprep.subr.mxu0 0.0
      %4386 = vmatpush2.msra.mxu0 0.0
      %4387 = vmatprep.subr.mxu0 0.0
      %4388 = vmatpush2.msra.mxu0 0.0
      %4389 = vmatprep.subr.mxu0 0.0
      %4390 = vmatpush2.msra.mxu0 0.0
      %4391 = vmatprep.subr.mxu0 0.0
      %4392 = vmatpush2.msra.mxu0 0.0
      %4393 = vmatprep.mubr.f32.mxu0 0.0
      %4394 = vmatmul.mubr.f32.gmra.mxu0 %v4234
      %v4395 = vpop.f32.mrf.mxu0
      %v4396 = vadd.f32 0.0, %v4395
      %v4397 = vpop.f32.mrf.mxu0
      %4398 = vmatprep.mubr.f32.mxu0 0.0
      %4399 = vmatmul.mubr.f32.gmra.mxu0 %v4237
      %v4400 = vpop.f32.mrf.mxu0
      %v4401 = vadd.f32 0.0, %v4400
      %v4402 = vpop.f32.mrf.mxu0
      %4403 = vmatprep.mubr.f32.mxu0 0.0
      %4404 = vmatmul.mubr.f32.gmra.mxu0 %v4240
      %v4405 = vpop.f32.mrf.mxu0
      %v4406 = vadd.f32 0.0, %v4405
      %v4407 = vpop.f32.mrf.mxu0
      %4408 = vmatprep.mubr.f32.mxu0 0.0
      %4409 = vmatmul.mubr.f32.gmra.mxu0 %v4243
      %v4410 = vpop.f32.mrf.mxu0
      %v4411 = vadd.f32 0.0, %v4410
      %v4412 = vpop.f32.mrf.mxu0
      %4413 = vmatprep.mubr.f32.mxu0 0.0
      %4414 = vmatmul.mubr.f32.gmra.mxu0 %v4246
      %v4415 = vpop.f32.mrf.mxu0
      %v4416 = vadd.f32 0.0, %v4415
      %v4417 = vpop.f32.mrf.mxu0
      %4418 = vmatprep.mubr.f32.mxu0 0.0
      %4419 = vmatmul.mubr.f32.gmra.mxu0 %v4249
      %v4420 = vpop.f32.mrf.mxu0
      %v4421 = vadd.f32 0.0, %v4420
      %v4422 = vpop.f32.mrf.mxu0
      %4423 = vmatprep.mubr.f32.mxu0 0.0
      %4424 = vmatmul.mubr.f32.gmra.mxu0 %v4252
      %v4425 = vpop.f32.mrf.mxu0
      %v4426 = vadd.f32 0.0, %v4425
      %v4427 = vpop.f32.mrf.mxu0
      %4428 = vmatprep.mubr.f32.mxu0 0.0
      %4429 = vmatmul.mubr.f32.gmra.mxu0 %v4255
      %v4430 = vpop.f32.mrf.mxu0
      %v4431 = vadd.f32 0.0, %v4430
      %v4432 = vpop.f32.mrf.mxu0
      %4433 = vmatprep.mubr.f32.mxu0 0.0
      %4434 = vmatmul.mubr.f32.gmra.mxu0 %v4258
      %v4435 = vpop.f32.mrf.mxu0
      %v4436 = vadd.f32 0.0, %v4435
      %v4437 = vpop.f32.mrf.mxu0
      %4438 = vmatprep.mubr.f32.mxu0 0.0
      %4439 = vmatmul.mubr.f32.gmra.mxu0 %v4261
      %v4440 = vpop.f32.mrf.mxu0
      %v4441 = vadd.f32 0.0, %v4440
      %v4442 = vpop.f32.mrf.mxu0
      %4443 = vmatprep.mubr.f32.mxu0 0.0
      %4444 = vmatmul.mubr.f32.gmra.mxu0 %v4264
      %v4445 = vpop.f32.mrf.mxu0
      %v4446 = vadd.f32 0.0, %v4445
      %v4447 = vpop.f32.mrf.mxu0
      %4448 = vmatprep.mubr.f32.mxu0 0.0
      %4449 = vmatmul.mubr.f32.gmra.mxu0 %v4267
      %v4450 = vpop.f32.mrf.mxu0
      %v4451 = vadd.f32 0.0, %v4450
      %v4452 = vpop.f32.mrf.mxu0
      %4453 = vmatprep.mubr.f32.mxu0 0.0
      %4454 = vmatmul.mubr.f32.gmra.mxu0 %v4270
      %v4455 = vpop.f32.mrf.mxu0
      %v4456 = vadd.f32 0.0, %v4455
      %v4457 = vpop.f32.mrf.mxu0
      %4458 = vmatprep.mubr.f32.mxu0 0.0
      %4459 = vmatmul.mubr.f32.gmra.mxu0 %v4273
      %v4460 = vpop.f32.mrf.mxu0
      %v4461 = vadd.f32 0.0, %v4460
      %v4462 = vpop.f32.mrf.mxu0
      %4463 = vmatprep.mubr.f32.mxu0 0.0
      %4464 = vmatmul.mubr.f32.gmra.mxu0 %v4276
      %v4465 = vpop.f32.mrf.mxu0
      %v4466 = vadd.f32 0.0, %v4465
      %v4467 = vpop.f32.mrf.mxu0
      %4468 = vmatprep.mubr.f32.mxu0 0.0
      %4469 = vmatmul.mubr.f32.gmra.mxu0 %v4279
      %v4470 = vpop.f32.mrf.mxu0
      %v4471 = vadd.f32 0.0, %v4470
      %v4472 = vpop.f32.mrf.mxu0
      %4473 = vmatprep.mubr.f32.mxu0 0.0
      %4474 = vmatmul.mubr.f32.gmra.mxu0 %v4282
      %v4475 = vpop.f32.mrf.mxu0
      %v4476 = vadd.f32 0.0, %v4475
      %v4477 = vpop.f32.mrf.mxu0
      %4478 = vmatprep.mubr.f32.mxu0 0.0
      %4479 = vmatmul.mubr.f32.gmra.mxu0 %v4285
      %v4480 = vpop.f32.mrf.mxu0
      %v4481 = vadd.f32 0.0, %v4480
      %v4482 = vpop.f32.mrf.mxu0
      %4483 = vmatprep.mubr.f32.mxu0 0.0
      %4484 = vmatmul.mubr.f32.gmra.mxu0 %v4288
      %v4485 = vpop.f32.mrf.mxu0
      %v4486 = vadd.f32 0.0, %v4485
      %v4487 = vpop.f32.mrf.mxu0
      %4488 = vmatprep.mubr.f32.mxu0 0.0
      %4489 = vmatmul.mubr.f32.gmra.mxu0 %v4291
      %v4490 = vpop.f32.mrf.mxu0
      %v4491 = vadd.f32 0.0, %v4490
      %v4492 = vpop.f32.mrf.mxu0
      %4493 = vmatprep.mubr.f32.mxu0 0.0
      %4494 = vmatmul.mubr.f32.gmra.mxu0 %v4294
      %v4495 = vpop.f32.mrf.mxu0
      %v4496 = vadd.f32 0.0, %v4495
      %v4497 = vpop.f32.mrf.mxu0
      %4498 = vmatprep.mubr.f32.mxu0 0.0
      %4499 = vmatmul.mubr.f32.gmra.mxu0 %v4297
      %v4500 = vpop.f32.mrf.mxu0
      %v4501 = vadd.f32 0.0, %v4500
      %v4502 = vpop.f32.mrf.mxu0
      %4503 = vmatprep.mubr.f32.mxu0 0.0
      %4504 = vmatmul.mubr.f32.gmra.mxu0 %v4300
      %v4505 = vpop.f32.mrf.mxu0
      %v4506 = vadd.f32 0.0, %v4505
      %v4507 = vpop.f32.mrf.mxu0
      %4508 = vmatprep.mubr.f32.mxu0 0.0
      %4509 = vmatmul.mubr.f32.gmra.mxu0 %v4303
      %v4510 = vpop.f32.mrf.mxu0
      %v4511 = vadd.f32 0.0, %v4510
      %v4512 = vpop.f32.mrf.mxu0
      %4513 = vmatprep.mubr.f32.mxu0 0.0
      %4514 = vmatmul.mubr.f32.gmra.mxu0 %v4306
      %v4515 = vpop.f32.mrf.mxu0
      %v4516 = vadd.f32 0.0, %v4515
      %v4517 = vpop.f32.mrf.mxu0
      %4518 = vmatprep.mubr.f32.mxu0 0.0
      %4519 = vmatmul.mubr.f32.gmra.mxu0 %v4309
      %v4520 = vpop.f32.mrf.mxu0
      %v4521 = vadd.f32 0.0, %v4520
      %v4522 = vpop.f32.mrf.mxu0
      %4523 = vmatprep.mubr.f32.mxu0 0.0
      %4524 = vmatmul.mubr.f32.gmra.mxu0 %v4312
      %v4525 = vpop.f32.mrf.mxu0
      %v4526 = vadd.f32 0.0, %v4525
      %v4527 = vpop.f32.mrf.mxu0
      %4528 = vmatprep.mubr.f32.mxu0 0.0
      %4529 = vmatmul.mubr.f32.gmra.mxu0 %v4315
      %v4530 = vpop.f32.mrf.mxu0
      %v4531 = vadd.f32 0.0, %v4530
      %v4532 = vpop.f32.mrf.mxu0
      %4533 = vmatprep.mubr.f32.mxu0 0.0
      %4534 = vmatmul.mubr.f32.gmra.mxu0 %v4318
      %v4535 = vpop.f32.mrf.mxu0
      %v4536 = vadd.f32 0.0, %v4535
      %v4537 = vpop.f32.mrf.mxu0
      %4538 = vmatprep.mubr.f32.mxu0 0.0
      %4539 = vmatmul.mubr.f32.gmra.mxu0 %v4321
      %v4540 = vpop.f32.mrf.mxu0
      %v4541 = vadd.f32 0.0, %v4540
      %v4542 = vpop.f32.mrf.mxu0
      %4543 = vmatprep.mubr.f32.mxu0 0.0
      %4544 = vmatmul.mubr.f32.gmra.mxu0 %v4324
      %v4545 = vpop.f32.mrf.mxu0
      %v4546 = vadd.f32 0.0, %v4545
      %v4547 = vpop.f32.mrf.mxu0
      %4548 = vmatprep.mubr.f32.mxu0 0.0
      %4549 = vmatmul.mubr.f32.gmra.mxu0 %v4327
      %v4550 = vpop.f32.mrf.mxu0
      %v4551 = vadd.f32 0.0, %v4550
      %v4552 = vpop.f32.mrf.mxu0
      %4553 = vdwg.mxu0
      %v4555 = vsel %vm1076, %v2133, 0
      %v4558 = vsel %vm1076, %v2138, 0
      %v4561 = vsel %vm1076, %v2143, 0
      %v4564 = vsel %vm1076, %v2148, 0
      %v4567 = vsel %vm1076, %v2153, 0
      %v4570 = vsel %vm1076, %v2158, 0
      %v4573 = vsel %vm1076, %v2163, 0
      %v4576 = vsel %vm1076, %v2168, 0
      %v4579 = vsel %vm1076, %v2262, 0
      %v4582 = vsel %vm1076, %v2267, 0
      %v4585 = vsel %vm1076, %v2272, 0
      %v4588 = vsel %vm1076, %v2277, 0
      %v4591 = vsel %vm1076, %v2282, 0
      %v4594 = vsel %vm1076, %v2287, 0
      %v4597 = vsel %vm1076, %v2292, 0
      %v4600 = vsel %vm1076, %v2297, 0
      %v4603 = vsel %vm1076, %v2391, 0
      %v4606 = vsel %vm1076, %v2396, 0
      %v4609 = vsel %vm1076, %v2401, 0
      %v4612 = vsel %vm1076, %v2406, 0
      %v4615 = vsel %vm1076, %v2411, 0
      %v4618 = vsel %vm1076, %v2416, 0
      %v4621 = vsel %vm1076, %v2421, 0
      %v4624 = vsel %vm1076, %v2426, 0
      %v4627 = vsel %vm1076, %v2520, 0
      %v4630 = vsel %vm1076, %v2525, 0
      %v4633 = vsel %vm1076, %v2530, 0
      %v4636 = vsel %vm1076, %v2535, 0
      %v4639 = vsel %vm1076, %v2540, 0
      %v4642 = vsel %vm1076, %v2545, 0
      %v4645 = vsel %vm1076, %v2550, 0
      %v4648 = vsel %vm1076, %v2555, 0
      %4650 = vmatprep.subr.mxu0 0.0
      %4651 = vmatpush1.msra.mxu0 0.0
      %4652 = vmatprep.subr.mxu0 0.0
      %4653 = vmatpush1.msra.mxu0 0.0
      %4654 = vmatprep.subr.mxu0 0.0
      %4655 = vmatpush1.msra.mxu0 0.0
      %4656 = vmatprep.subr.mxu0 0.0
      %4657 = vmatpush1.msra.mxu0 0.0
      %4658 = vmatprep.subr.mxu0 0.0
      %4659 = vmatpush1.msra.mxu0 0.0
      %4660 = vmatprep.subr.mxu0 0.0
      %4661 = vmatpush1.msra.mxu0 0.0
      %4662 = vmatprep.subr.mxu0 0.0
      %4663 = vmatpush1.msra.mxu0 0.0
      %4664 = vmatprep.subr.mxu0 0.0
      %4665 = vmatpush1.msra.mxu0 0.0
      %4666 = vmatprep.subr.mxu0 0.0
      %4667 = vmatpush1.msra.mxu0 0.0
      %4668 = vmatprep.subr.mxu0 0.0
      %4669 = vmatpush1.msra.mxu0 0.0
      %4670 = vmatprep.subr.mxu0 0.0
      %4671 = vmatpush1.msra.mxu0 0.0
      %4672 = vmatprep.subr.mxu0 0.0
      %4673 = vmatpush1.msra.mxu0 0.0
      %4674 = vmatprep.subr.mxu0 0.0
      %4675 = vmatpush1.msra.mxu0 0.0
      %4676 = vmatprep.subr.mxu0 0.0
      %4677 = vmatpush1.msra.mxu0 0.0
      %4678 = vmatprep.subr.mxu0 0.0
      %4679 = vmatpush1.msra.mxu0 0.0
      %4680 = vmatprep.subr.mxu0 0.0
      %4681 = vmatpush1.msra.mxu0 %v2558
      %4682 = vmatprep.subr.mxu0 0.0
      %4683 = vmatpush2.msra.mxu0 0.0
      %4684 = vmatprep.subr.mxu0 0.0
      %4685 = vmatpush2.msra.mxu0 0.0
      %4686 = vmatprep.subr.mxu0 0.0
      %4687 = vmatpush2.msra.mxu0 0.0
      %4688 = vmatprep.subr.mxu0 0.0
      %4689 = vmatpush2.msra.mxu0 0.0
      %4690 = vmatprep.subr.mxu0 0.0
      %4691 = vmatpush2.msra.mxu0 0.0
      %4692 = vmatprep.subr.mxu0 0.0
      %4693 = vmatpush2.msra.mxu0 0.0
      %4694 = vmatprep.subr.mxu0 0.0
      %4695 = vmatpush2.msra.mxu0 0.0
      %4696 = vmatprep.subr.mxu0 0.0
      %4697 = vmatpush2.msra.mxu0 0.0
      %4698 = vmatprep.subr.mxu0 0.0
      %4699 = vmatpush2.msra.mxu0 0.0
      %4700 = vmatprep.subr.mxu0 0.0
      %4701 = vmatpush2.msra.mxu0 0.0
      %4702 = vmatprep.subr.mxu0 0.0
      %4703 = vmatpush2.msra.mxu0 0.0
      %4704 = vmatprep.subr.mxu0 0.0
      %4705 = vmatpush2.msra.mxu0 0.0
      %4706 = vmatprep.subr.mxu0 0.0
      %4707 = vmatpush2.msra.mxu0 0.0
      %4708 = vmatprep.subr.mxu0 0.0
      %4709 = vmatpush2.msra.mxu0 0.0
      %4710 = vmatprep.subr.mxu0 0.0
      %4711 = vmatpush2.msra.mxu0 0.0
      %4712 = vmatprep.subr.mxu0 0.0
      %4713 = vmatpush2.msra.mxu0 0.0
      %4714 = vmatprep.mubr.f32.mxu0 0.0
      %4715 = vmatmul.mubr.f32.gmra.mxu0 %v4555
      %v4716 = vpop.f32.mrf.mxu0
      %v4717 = vadd.f32 %v4396, %v4716
      %v4718 = vpop.f32.mrf.mxu0
      %4719 = vmatprep.mubr.f32.mxu0 0.0
      %4720 = vmatmul.mubr.f32.gmra.mxu0 %v4558
      %v4721 = vpop.f32.mrf.mxu0
      %v4722 = vadd.f32 %v4401, %v4721
      %v4723 = vpop.f32.mrf.mxu0
      %4724 = vmatprep.mubr.f32.mxu0 0.0
      %4725 = vmatmul.mubr.f32.gmra.mxu0 %v4561
      %v4726 = vpop.f32.mrf.mxu0
      %v4727 = vadd.f32 %v4406, %v4726
      %v4728 = vpop.f32.mrf.mxu0
      %4729 = vmatprep.mubr.f32.mxu0 0.0
      %4730 = vmatmul.mubr.f32.gmra.mxu0 %v4564
      %v4731 = vpop.f32.mrf.mxu0
      %v4732 = vadd.f32 %v4411, %v4731
      %v4733 = vpop.f32.mrf.mxu0
      %4734 = vmatprep.mubr.f32.mxu0 0.0
      %4735 = vmatmul.mubr.f32.gmra.mxu0 %v4567
      %v4736 = vpop.f32.mrf.mxu0
      %v4737 = vadd.f32 %v4416, %v4736
      %v4738 = vpop.f32.mrf.mxu0
      %4739 = vmatprep.mubr.f32.mxu0 0.0
      %4740 = vmatmul.mubr.f32.gmra.mxu0 %v4570
      %v4741 = vpop.f32.mrf.mxu0
      %v4742 = vadd.f32 %v4421, %v4741
      %v4743 = vpop.f32.mrf.mxu0
      %4744 = vmatprep.mubr.f32.mxu0 0.0
      %4745 = vmatmul.mubr.f32.gmra.mxu0 %v4573
      %v4746 = vpop.f32.mrf.mxu0
      %v4747 = vadd.f32 %v4426, %v4746
      %v4748 = vpop.f32.mrf.mxu0
      %4749 = vmatprep.mubr.f32.mxu0 0.0
      %4750 = vmatmul.mubr.f32.gmra.mxu0 %v4576
      %v4751 = vpop.f32.mrf.mxu0
      %v4752 = vadd.f32 %v4431, %v4751
      %v4753 = vpop.f32.mrf.mxu0
      %4754 = vmatprep.mubr.f32.mxu0 0.0
      %4755 = vmatmul.mubr.f32.gmra.mxu0 %v4579
      %v4756 = vpop.f32.mrf.mxu0
      %v4757 = vadd.f32 %v4436, %v4756
      %v4758 = vpop.f32.mrf.mxu0
      %4759 = vmatprep.mubr.f32.mxu0 0.0
      %4760 = vmatmul.mubr.f32.gmra.mxu0 %v4582
      %v4761 = vpop.f32.mrf.mxu0
      %v4762 = vadd.f32 %v4441, %v4761
      %v4763 = vpop.f32.mrf.mxu0
      %4764 = vmatprep.mubr.f32.mxu0 0.0
      %4765 = vmatmul.mubr.f32.gmra.mxu0 %v4585
      %v4766 = vpop.f32.mrf.mxu0
      %v4767 = vadd.f32 %v4446, %v4766
      %v4768 = vpop.f32.mrf.mxu0
      %4769 = vmatprep.mubr.f32.mxu0 0.0
      %4770 = vmatmul.mubr.f32.gmra.mxu0 %v4588
      %v4771 = vpop.f32.mrf.mxu0
      %v4772 = vadd.f32 %v4451, %v4771
      %v4773 = vpop.f32.mrf.mxu0
      %4774 = vmatprep.mubr.f32.mxu0 0.0
      %4775 = vmatmul.mubr.f32.gmra.mxu0 %v4591
      %v4776 = vpop.f32.mrf.mxu0
      %v4777 = vadd.f32 %v4456, %v4776
      %v4778 = vpop.f32.mrf.mxu0
      %4779 = vmatprep.mubr.f32.mxu0 0.0
      %4780 = vmatmul.mubr.f32.gmra.mxu0 %v4594
      %v4781 = vpop.f32.mrf.mxu0
      %v4782 = vadd.f32 %v4461, %v4781
      %v4783 = vpop.f32.mrf.mxu0
      %4784 = vmatprep.mubr.f32.mxu0 0.0
      %4785 = vmatmul.mubr.f32.gmra.mxu0 %v4597
      %v4786 = vpop.f32.mrf.mxu0
      %v4787 = vadd.f32 %v4466, %v4786
      %v4788 = vpop.f32.mrf.mxu0
      %4789 = vmatprep.mubr.f32.mxu0 0.0
      %4790 = vmatmul.mubr.f32.gmra.mxu0 %v4600
      %v4791 = vpop.f32.mrf.mxu0
      %v4792 = vadd.f32 %v4471, %v4791
      %v4793 = vpop.f32.mrf.mxu0
      %4794 = vmatprep.mubr.f32.mxu0 0.0
      %4795 = vmatmul.mubr.f32.gmra.mxu0 %v4603
      %v4796 = vpop.f32.mrf.mxu0
      %v4797 = vadd.f32 %v4476, %v4796
      %v4798 = vpop.f32.mrf.mxu0
      %4799 = vmatprep.mubr.f32.mxu0 0.0
      %4800 = vmatmul.mubr.f32.gmra.mxu0 %v4606
      %v4801 = vpop.f32.mrf.mxu0
      %v4802 = vadd.f32 %v4481, %v4801
      %v4803 = vpop.f32.mrf.mxu0
      %4804 = vmatprep.mubr.f32.mxu0 0.0
      %4805 = vmatmul.mubr.f32.gmra.mxu0 %v4609
      %v4806 = vpop.f32.mrf.mxu0
      %v4807 = vadd.f32 %v4486, %v4806
      %v4808 = vpop.f32.mrf.mxu0
      %4809 = vmatprep.mubr.f32.mxu0 0.0
      %4810 = vmatmul.mubr.f32.gmra.mxu0 %v4612
      %v4811 = vpop.f32.mrf.mxu0
      %v4812 = vadd.f32 %v4491, %v4811
      %v4813 = vpop.f32.mrf.mxu0
      %4814 = vmatprep.mubr.f32.mxu0 0.0
      %4815 = vmatmul.mubr.f32.gmra.mxu0 %v4615
      %v4816 = vpop.f32.mrf.mxu0
      %v4817 = vadd.f32 %v4496, %v4816
      %v4818 = vpop.f32.mrf.mxu0
      %4819 = vmatprep.mubr.f32.mxu0 0.0
      %4820 = vmatmul.mubr.f32.gmra.mxu0 %v4618
      %v4821 = vpop.f32.mrf.mxu0
      %v4822 = vadd.f32 %v4501, %v4821
      %v4823 = vpop.f32.mrf.mxu0
      %4824 = vmatprep.mubr.f32.mxu0 0.0
      %4825 = vmatmul.mubr.f32.gmra.mxu0 %v4621
      %v4826 = vpop.f32.mrf.mxu0
      %v4827 = vadd.f32 %v4506, %v4826
      %v4828 = vpop.f32.mrf.mxu0
      %4829 = vmatprep.mubr.f32.mxu0 0.0
      %4830 = vmatmul.mubr.f32.gmra.mxu0 %v4624
      %v4831 = vpop.f32.mrf.mxu0
      %v4832 = vadd.f32 %v4511, %v4831
      %v4833 = vpop.f32.mrf.mxu0
      %4834 = vmatprep.mubr.f32.mxu0 0.0
      %4835 = vmatmul.mubr.f32.gmra.mxu0 %v4627
      %v4836 = vpop.f32.mrf.mxu0
      %v4837 = vadd.f32 %v4516, %v4836
      %v4838 = vpop.f32.mrf.mxu0
      %4839 = vmatprep.mubr.f32.mxu0 0.0
      %4840 = vmatmul.mubr.f32.gmra.mxu0 %v4630
      %v4841 = vpop.f32.mrf.mxu0
      %v4842 = vadd.f32 %v4521, %v4841
      %v4843 = vpop.f32.mrf.mxu0
      %4844 = vmatprep.mubr.f32.mxu0 0.0
      %4845 = vmatmul.mubr.f32.gmra.mxu0 %v4633
      %v4846 = vpop.f32.mrf.mxu0
      %v4847 = vadd.f32 %v4526, %v4846
      %v4848 = vpop.f32.mrf.mxu0
      %4849 = vmatprep.mubr.f32.mxu0 0.0
      %4850 = vmatmul.mubr.f32.gmra.mxu0 %v4636
      %v4851 = vpop.f32.mrf.mxu0
      %v4852 = vadd.f32 %v4531, %v4851
      %v4853 = vpop.f32.mrf.mxu0
      %4854 = vmatprep.mubr.f32.mxu0 0.0
      %4855 = vmatmul.mubr.f32.gmra.mxu0 %v4639
      %v4856 = vpop.f32.mrf.mxu0
      %v4857 = vadd.f32 %v4536, %v4856
      %v4858 = vpop.f32.mrf.mxu0
      %4859 = vmatprep.mubr.f32.mxu0 0.0
      %4860 = vmatmul.mubr.f32.gmra.mxu0 %v4642
      %v4861 = vpop.f32.mrf.mxu0
      %v4862 = vadd.f32 %v4541, %v4861
      %v4863 = vpop.f32.mrf.mxu0
      %4864 = vmatprep.mubr.f32.mxu0 0.0
      %4865 = vmatmul.mubr.f32.gmra.mxu0 %v4645
      %v4866 = vpop.f32.mrf.mxu0
      %v4867 = vadd.f32 %v4546, %v4866
      %v4868 = vpop.f32.mrf.mxu0
      %4869 = vmatprep.mubr.f32.mxu0 0.0
      %4870 = vmatmul.mubr.f32.gmra.mxu0 %v4648
      %v4871 = vpop.f32.mrf.mxu0
      %v4872 = vadd.f32 %v4551, %v4871
      %v4873 = vpop.f32.mrf.mxu0
      %4874 = vdwg.mxu0
      %4875 = vrot.lane.b32.xlu0 %v460, 112
      %v4876 = vpop.permute.xlu0 %4875
      %4877 = vrot.lane.b32.xlu0 %v465, 112
      %v4878 = vpop.permute.xlu0 %4877
      %4879 = vrot.lane.b32.xlu0 %v470, 112
      %v4880 = vpop.permute.xlu0 %4879
      %4881 = vrot.lane.b32.xlu0 %v475, 112
      %v4882 = vpop.permute.xlu0 %4881
      %4883 = vrot.lane.b32.xlu0 %v480, 112
      %v4884 = vpop.permute.xlu0 %4883
      %4885 = vrot.lane.b32.xlu0 %v485, 112
      %v4886 = vpop.permute.xlu0 %4885
      %4887 = vrot.lane.b32.xlu0 %v490, 112
      %v4888 = vpop.permute.xlu0 %4887
      %4889 = vrot.lane.b32.xlu0 %v495, 112
      %v4890 = vpop.permute.xlu0 %4889
      %4891 = vrot.lane.b32.xlu0 %v689, 112
      %v4892 = vpop.permute.xlu0 %4891
      %4893 = vrot.lane.b32.xlu0 %v694, 112
      %v4894 = vpop.permute.xlu0 %4893
      %4895 = vrot.lane.b32.xlu0 %v699, 112
      %v4896 = vpop.permute.xlu0 %4895
      %4897 = vrot.lane.b32.xlu0 %v704, 112
      %v4898 = vpop.permute.xlu0 %4897
      %4899 = vrot.lane.b32.xlu0 %v709, 112
      %v4900 = vpop.permute.xlu0 %4899
      %4901 = vrot.lane.b32.xlu0 %v714, 112
      %v4902 = vpop.permute.xlu0 %4901
      %4903 = vrot.lane.b32.xlu0 %v719, 112
      %v4904 = vpop.permute.xlu0 %4903
      %4905 = vrot.lane.b32.xlu0 %v724, 112
      %v4906 = vpop.permute.xlu0 %4905
      %v4907 = vsel %vm1076, %v4876, 0
      %v4909 = vsel %vm1076, %v4878, 0
      %v4911 = vsel %vm1076, %v4880, 0
      %v4913 = vsel %vm1076, %v4882, 0
      %v4915 = vsel %vm1076, %v4884, 0
      %v4917 = vsel %vm1076, %v4886, 0
      %v4919 = vsel %vm1076, %v4888, 0
      %v4921 = vsel %vm1076, %v4890, 0
      %v4923 = vsel %vm1076, %v4892, 0
      %v4925 = vsel %vm1076, %v4894, 0
      %v4927 = vsel %vm1076, %v4896, 0
      %v4929 = vsel %vm1076, %v4898, 0
      %v4931 = vsel %vm1076, %v4900, 0
      %v4933 = vsel %vm1076, %v4902, 0
      %v4935 = vsel %vm1076, %v4904, 0
      %v4937 = vsel %vm1076, %v4906, 0
      %4939 = vmatprep.subr.mxu0 0.0
      %4940 = vmatpush1.xpose.msra.mxu0 0.0
      %4941 = vmatprep.subr.mxu0 0.0
      %4942 = vmatpush1.xpose.msra.mxu0 0.0
      %4943 = vmatprep.subr.mxu0 0.0
      %4944 = vmatpush1.xpose.msra.mxu0 0.0
      %4945 = vmatprep.subr.mxu0 0.0
      %4946 = vmatpush1.xpose.msra.mxu0 0.0
      %4947 = vmatprep.subr.mxu0 0.0
      %4948 = vmatpush1.xpose.msra.mxu0 0.0
      %4949 = vmatprep.subr.mxu0 0.0
      %4950 = vmatpush1.xpose.msra.mxu0 0.0
      %4951 = vmatprep.subr.mxu0 0.0
      %4952 = vmatpush1.xpose.msra.mxu0 0.0
      %4953 = vmatprep.subr.mxu0 0.0
      %4954 = vmatpush1.xpose.msra.mxu0 0.0
      %4955 = vmatprep.subr.mxu0 0.0
      %4956 = vmatpush1.xpose.msra.mxu0 %v4937
      %4957 = vmatprep.subr.mxu0 0.0
      %4958 = vmatpush1.xpose.msra.mxu0 %v4935
      %4959 = vmatprep.subr.mxu0 0.0
      %4960 = vmatpush1.xpose.msra.mxu0 %v4933
      %4961 = vmatprep.subr.mxu0 0.0
      %4962 = vmatpush1.xpose.msra.mxu0 %v4931
      %4963 = vmatprep.subr.mxu0 0.0
      %4964 = vmatpush1.xpose.msra.mxu0 %v4929
      %4965 = vmatprep.subr.mxu0 0.0
      %4966 = vmatpush1.xpose.msra.mxu0 %v4927
      %4967 = vmatprep.subr.mxu0 0.0
      %4968 = vmatpush1.xpose.msra.mxu0 %v4925
      %4969 = vmatprep.subr.mxu0 0.0
      %4970 = vmatpush1.xpose.msra.mxu0 %v4923
      %4971 = vmatprep.subr.mxu0 0.0
      %4972 = vmatpush2.xpose.msra.mxu0 0.0
      %4973 = vmatprep.subr.mxu0 0.0
      %4974 = vmatpush2.xpose.msra.mxu0 0.0
      %4975 = vmatprep.subr.mxu0 0.0
      %4976 = vmatpush2.xpose.msra.mxu0 0.0
      %4977 = vmatprep.subr.mxu0 0.0
      %4978 = vmatpush2.xpose.msra.mxu0 0.0
      %4979 = vmatprep.subr.mxu0 0.0
      %4980 = vmatpush2.xpose.msra.mxu0 0.0
      %4981 = vmatprep.subr.mxu0 0.0
      %4982 = vmatpush2.xpose.msra.mxu0 0.0
      %4983 = vmatprep.subr.mxu0 0.0
      %4984 = vmatpush2.xpose.msra.mxu0 0.0
      %4985 = vmatprep.subr.mxu0 0.0
      %4986 = vmatpush2.xpose.msra.mxu0 0.0
      %4987 = vmatprep.subr.mxu0 0.0
      %4988 = vmatpush2.xpose.msra.mxu0 0.0
      %4989 = vmatprep.subr.mxu0 0.0
      %4990 = vmatpush2.xpose.msra.mxu0 0.0
      %4991 = vmatprep.subr.mxu0 0.0
      %4992 = vmatpush2.xpose.msra.mxu0 0.0
      %4993 = vmatprep.subr.mxu0 0.0
      %4994 = vmatpush2.xpose.msra.mxu0 0.0
      %4995 = vmatprep.subr.mxu0 0.0
      %4996 = vmatpush2.xpose.msra.mxu0 0.0
      %4997 = vmatprep.subr.mxu0 0.0
      %4998 = vmatpush2.xpose.msra.mxu0 0.0
      %4999 = vmatprep.subr.mxu0 0.0
      %5000 = vmatpush2.xpose.msra.mxu0 0.0
      %5001 = vmatprep.subr.mxu0 0.0
      %5002 = vmatpush2.xpose.msra.mxu0 0.0
      %5003 = vmatprep.mubr.f32.mxu0 0.0
      %5004 = vmatmul.mubr.f32.gmra.mxu0 %v4907
      %v5005 = vpop.f32.mrf.mxu0
      %v5006 = vadd.f32 0.0, %v5005
      %v5007 = vpop.f32.mrf.mxu0
      %5008 = vmatprep.mubr.f32.mxu0 0.0
      %5009 = vmatmul.mubr.f32.gmra.mxu0 %v4909
      %v5010 = vpop.f32.mrf.mxu0
      %v5011 = vadd.f32 0.0, %v5010
      %v5012 = vpop.f32.mrf.mxu0
      %5013 = vmatprep.mubr.f32.mxu0 0.0
      %5014 = vmatmul.mubr.f32.gmra.mxu0 %v4911
      %v5015 = vpop.f32.mrf.mxu0
      %v5016 = vadd.f32 0.0, %v5015
      %v5017 = vpop.f32.mrf.mxu0
      %5018 = vmatprep.mubr.f32.mxu0 0.0
      %5019 = vmatmul.mubr.f32.gmra.mxu0 %v4913
      %v5020 = vpop.f32.mrf.mxu0
      %v5021 = vadd.f32 0.0, %v5020
      %v5022 = vpop.f32.mrf.mxu0
      %5023 = vmatprep.mubr.f32.mxu0 0.0
      %5024 = vmatmul.mubr.f32.gmra.mxu0 %v4915
      %v5025 = vpop.f32.mrf.mxu0
      %v5026 = vadd.f32 0.0, %v5025
      %v5027 = vpop.f32.mrf.mxu0
      %5028 = vmatprep.mubr.f32.mxu0 0.0
      %5029 = vmatmul.mubr.f32.gmra.mxu0 %v4917
      %v5030 = vpop.f32.mrf.mxu0
      %v5031 = vadd.f32 0.0, %v5030
      %v5032 = vpop.f32.mrf.mxu0
      %5033 = vmatprep.mubr.f32.mxu0 0.0
      %5034 = vmatmul.mubr.f32.gmra.mxu0 %v4919
      %v5035 = vpop.f32.mrf.mxu0
      %v5036 = vadd.f32 0.0, %v5035
      %v5037 = vpop.f32.mrf.mxu0
      %5038 = vmatprep.mubr.f32.mxu0 0.0
      %5039 = vmatmul.mubr.f32.gmra.mxu0 %v4921
      %v5040 = vpop.f32.mrf.mxu0
      %v5041 = vadd.f32 0.0, %v5040
      %v5042 = vpop.f32.mrf.mxu0
      %5043 = vdwg.mxu0
      %5044 = vrot.lane.b32.xlu0 %v500, 112
      %v5045 = vpop.permute.xlu0 %5044
      %5046 = vrot.lane.b32.xlu0 %v505, 112
      %v5047 = vpop.permute.xlu0 %5046
      %5048 = vrot.lane.b32.xlu0 %v510, 112
      %v5049 = vpop.permute.xlu0 %5048
      %5050 = vrot.lane.b32.xlu0 %v515, 112
      %v5051 = vpop.permute.xlu0 %5050
      %5052 = vrot.lane.b32.xlu0 %v520, 112
      %v5053 = vpop.permute.xlu0 %5052
      %5054 = vrot.lane.b32.xlu0 %v525, 112
      %v5055 = vpop.permute.xlu0 %5054
      %5056 = vrot.lane.b32.xlu0 %v530, 112
      %v5057 = vpop.permute.xlu0 %5056
      %5058 = vrot.lane.b32.xlu0 %v535, 112
      %v5059 = vpop.permute.xlu0 %5058
      %5060 = vrot.lane.b32.xlu0 %v729, 112
      %v5061 = vpop.permute.xlu0 %5060
      %5062 = vrot.lane.b32.xlu0 %v734, 112
      %v5063 = vpop.permute.xlu0 %5062
      %5064 = vrot.lane.b32.xlu0 %v739, 112
      %v5065 = vpop.permute.xlu0 %5064
      %5066 = vrot.lane.b32.xlu0 %v744, 112
      %v5067 = vpop.permute.xlu0 %5066
      %5068 = vrot.lane.b32.xlu0 %v749, 112
      %v5069 = vpop.permute.xlu0 %5068
      %5070 = vrot.lane.b32.xlu0 %v754, 112
      %v5071 = vpop.permute.xlu0 %5070
      %5072 = vrot.lane.b32.xlu0 %v759, 112
      %v5073 = vpop.permute.xlu0 %5072
      %5074 = vrot.lane.b32.xlu0 %v764, 112
      %v5075 = vpop.permute.xlu0 %5074
      %v5076 = vsel %vm1076, %v5045, 0
      %v5078 = vsel %vm1076, %v5047, 0
      %v5080 = vsel %vm1076, %v5049, 0
      %v5082 = vsel %vm1076, %v5051, 0
      %v5084 = vsel %vm1076, %v5053, 0
      %v5086 = vsel %vm1076, %v5055, 0
      %v5088 = vsel %vm1076, %v5057, 0
      %v5090 = vsel %vm1076, %v5059, 0
      %v5092 = vsel %vm1076, %v5061, 0
      %v5094 = vsel %vm1076, %v5063, 0
      %v5096 = vsel %vm1076, %v5065, 0
      %v5098 = vsel %vm1076, %v5067, 0
      %v5100 = vsel %vm1076, %v5069, 0
      %v5102 = vsel %vm1076, %v5071, 0
      %v5104 = vsel %vm1076, %v5073, 0
      %v5106 = vsel %vm1076, %v5075, 0
      %5108 = vmatprep.subr.mxu0 0.0
      %5109 = vmatpush1.xpose.msra.mxu0 0.0
      %5110 = vmatprep.subr.mxu0 0.0
      %5111 = vmatpush1.xpose.msra.mxu0 0.0
      %5112 = vmatprep.subr.mxu0 0.0
      %5113 = vmatpush1.xpose.msra.mxu0 0.0
      %5114 = vmatprep.subr.mxu0 0.0
      %5115 = vmatpush1.xpose.msra.mxu0 0.0
      %5116 = vmatprep.subr.mxu0 0.0
      %5117 = vmatpush1.xpose.msra.mxu0 0.0
      %5118 = vmatprep.subr.mxu0 0.0
      %5119 = vmatpush1.xpose.msra.mxu0 0.0
      %5120 = vmatprep.subr.mxu0 0.0
      %5121 = vmatpush1.xpose.msra.mxu0 0.0
      %5122 = vmatprep.subr.mxu0 0.0
      %5123 = vmatpush1.xpose.msra.mxu0 0.0
      %5124 = vmatprep.subr.mxu0 0.0
      %5125 = vmatpush1.xpose.msra.mxu0 %v5106
      %5126 = vmatprep.subr.mxu0 0.0
      %5127 = vmatpush1.xpose.msra.mxu0 %v5104
      %5128 = vmatprep.subr.mxu0 0.0
      %5129 = vmatpush1.xpose.msra.mxu0 %v5102
      %5130 = vmatprep.subr.mxu0 0.0
      %5131 = vmatpush1.xpose.msra.mxu0 %v5100
      %5132 = vmatprep.subr.mxu0 0.0
      %5133 = vmatpush1.xpose.msra.mxu0 %v5098
      %5134 = vmatprep.subr.mxu0 0.0
      %5135 = vmatpush1.xpose.msra.mxu0 %v5096
      %5136 = vmatprep.subr.mxu0 0.0
      %5137 = vmatpush1.xpose.msra.mxu0 %v5094
      %5138 = vmatprep.subr.mxu0 0.0
      %5139 = vmatpush1.xpose.msra.mxu0 %v5092
      %5140 = vmatprep.subr.mxu0 0.0
      %5141 = vmatpush2.xpose.msra.mxu0 0.0
      %5142 = vmatprep.subr.mxu0 0.0
      %5143 = vmatpush2.xpose.msra.mxu0 0.0
      %5144 = vmatprep.subr.mxu0 0.0
      %5145 = vmatpush2.xpose.msra.mxu0 0.0
      %5146 = vmatprep.subr.mxu0 0.0
      %5147 = vmatpush2.xpose.msra.mxu0 0.0
      %5148 = vmatprep.subr.mxu0 0.0
      %5149 = vmatpush2.xpose.msra.mxu0 0.0
      %5150 = vmatprep.subr.mxu0 0.0
      %5151 = vmatpush2.xpose.msra.mxu0 0.0
      %5152 = vmatprep.subr.mxu0 0.0
      %5153 = vmatpush2.xpose.msra.mxu0 0.0
      %5154 = vmatprep.subr.mxu0 0.0
      %5155 = vmatpush2.xpose.msra.mxu0 0.0
      %5156 = vmatprep.subr.mxu0 0.0
      %5157 = vmatpush2.xpose.msra.mxu0 0.0
      %5158 = vmatprep.subr.mxu0 0.0
      %5159 = vmatpush2.xpose.msra.mxu0 0.0
      %5160 = vmatprep.subr.mxu0 0.0
      %5161 = vmatpush2.xpose.msra.mxu0 0.0
      %5162 = vmatprep.subr.mxu0 0.0
      %5163 = vmatpush2.xpose.msra.mxu0 0.0
      %5164 = vmatprep.subr.mxu0 0.0
      %5165 = vmatpush2.xpose.msra.mxu0 0.0
      %5166 = vmatprep.subr.mxu0 0.0
      %5167 = vmatpush2.xpose.msra.mxu0 0.0
      %5168 = vmatprep.subr.mxu0 0.0
      %5169 = vmatpush2.xpose.msra.mxu0 0.0
      %5170 = vmatprep.subr.mxu0 0.0
      %5171 = vmatpush2.xpose.msra.mxu0 0.0
      %5172 = vmatprep.mubr.f32.mxu0 0.0
      %5173 = vmatmul.mubr.f32.gmra.mxu0 %v5076
      %v5174 = vpop.f32.mrf.mxu0
      %v5175 = vadd.f32 0.0, %v5174
      %v5176 = vpop.f32.mrf.mxu0
      %5177 = vmatprep.mubr.f32.mxu0 0.0
      %5178 = vmatmul.mubr.f32.gmra.mxu0 %v5078
      %v5179 = vpop.f32.mrf.mxu0
      %v5180 = vadd.f32 0.0, %v5179
      %v5181 = vpop.f32.mrf.mxu0
      %5182 = vmatprep.mubr.f32.mxu0 0.0
      %5183 = vmatmul.mubr.f32.gmra.mxu0 %v5080
      %v5184 = vpop.f32.mrf.mxu0
      %v5185 = vadd.f32 0.0, %v5184
      %v5186 = vpop.f32.mrf.mxu0
      %5187 = vmatprep.mubr.f32.mxu0 0.0
      %5188 = vmatmul.mubr.f32.gmra.mxu0 %v5082
      %v5189 = vpop.f32.mrf.mxu0
      %v5190 = vadd.f32 0.0, %v5189
      %v5191 = vpop.f32.mrf.mxu0
      %5192 = vmatprep.mubr.f32.mxu0 0.0
      %5193 = vmatmul.mubr.f32.gmra.mxu0 %v5084
      %v5194 = vpop.f32.mrf.mxu0
      %v5195 = vadd.f32 0.0, %v5194
      %v5196 = vpop.f32.mrf.mxu0
      %5197 = vmatprep.mubr.f32.mxu0 0.0
      %5198 = vmatmul.mubr.f32.gmra.mxu0 %v5086
      %v5199 = vpop.f32.mrf.mxu0
      %v5200 = vadd.f32 0.0, %v5199
      %v5201 = vpop.f32.mrf.mxu0
      %5202 = vmatprep.mubr.f32.mxu0 0.0
      %5203 = vmatmul.mubr.f32.gmra.mxu0 %v5088
      %v5204 = vpop.f32.mrf.mxu0
      %v5205 = vadd.f32 0.0, %v5204
      %v5206 = vpop.f32.mrf.mxu0
      %5207 = vmatprep.mubr.f32.mxu0 0.0
      %5208 = vmatmul.mubr.f32.gmra.mxu0 %v5090
      %v5209 = vpop.f32.mrf.mxu0
      %v5210 = vadd.f32 0.0, %v5209
      %v5211 = vpop.f32.mrf.mxu0
      %5212 = vdwg.mxu0
      %5213 = vrot.lane.b32.xlu0 %v540, 112
      %v5214 = vpop.permute.xlu0 %5213
      %5215 = vrot.lane.b32.xlu0 %v545, 112
      %v5216 = vpop.permute.xlu0 %5215
      %5217 = vrot.lane.b32.xlu0 %v550, 112
      %v5218 = vpop.permute.xlu0 %5217
      %5219 = vrot.lane.b32.xlu0 %v555, 112
      %v5220 = vpop.permute.xlu0 %5219
      %5221 = vrot.lane.b32.xlu0 %v560, 112
      %v5222 = vpop.permute.xlu0 %5221
      %5223 = vrot.lane.b32.xlu0 %v565, 112
      %v5224 = vpop.permute.xlu0 %5223
      %5225 = vrot.lane.b32.xlu0 %v570, 112
      %v5226 = vpop.permute.xlu0 %5225
      %5227 = vrot.lane.b32.xlu0 %v575, 112
      %v5228 = vpop.permute.xlu0 %5227
      %5229 = vrot.lane.b32.xlu0 %v769, 112
      %v5230 = vpop.permute.xlu0 %5229
      %5231 = vrot.lane.b32.xlu0 %v774, 112
      %v5232 = vpop.permute.xlu0 %5231
      %5233 = vrot.lane.b32.xlu0 %v779, 112
      %v5234 = vpop.permute.xlu0 %5233
      %5235 = vrot.lane.b32.xlu0 %v784, 112
      %v5236 = vpop.permute.xlu0 %5235
      %5237 = vrot.lane.b32.xlu0 %v789, 112
      %v5238 = vpop.permute.xlu0 %5237
      %5239 = vrot.lane.b32.xlu0 %v794, 112
      %v5240 = vpop.permute.xlu0 %5239
      %5241 = vrot.lane.b32.xlu0 %v799, 112
      %v5242 = vpop.permute.xlu0 %5241
      %5243 = vrot.lane.b32.xlu0 %v804, 112
      %v5244 = vpop.permute.xlu0 %5243
      %v5245 = vsel %vm1076, %v5214, 0
      %v5247 = vsel %vm1076, %v5216, 0
      %v5249 = vsel %vm1076, %v5218, 0
      %v5251 = vsel %vm1076, %v5220, 0
      %v5253 = vsel %vm1076, %v5222, 0
      %v5255 = vsel %vm1076, %v5224, 0
      %v5257 = vsel %vm1076, %v5226, 0
      %v5259 = vsel %vm1076, %v5228, 0
      %v5261 = vsel %vm1076, %v5230, 0
      %v5263 = vsel %vm1076, %v5232, 0
      %v5265 = vsel %vm1076, %v5234, 0
      %v5267 = vsel %vm1076, %v5236, 0
      %v5269 = vsel %vm1076, %v5238, 0
      %v5271 = vsel %vm1076, %v5240, 0
      %v5273 = vsel %vm1076, %v5242, 0
      %v5275 = vsel %vm1076, %v5244, 0
      %5277 = vmatprep.subr.mxu0 0.0
      %5278 = vmatpush1.xpose.msra.mxu0 0.0
      %5279 = vmatprep.subr.mxu0 0.0
      %5280 = vmatpush1.xpose.msra.mxu0 0.0
      %5281 = vmatprep.subr.mxu0 0.0
      %5282 = vmatpush1.xpose.msra.mxu0 0.0
      %5283 = vmatprep.subr.mxu0 0.0
      %5284 = vmatpush1.xpose.msra.mxu0 0.0
      %5285 = vmatprep.subr.mxu0 0.0
      %5286 = vmatpush1.xpose.msra.mxu0 0.0
      %5287 = vmatprep.subr.mxu0 0.0
      %5288 = vmatpush1.xpose.msra.mxu0 0.0
      %5289 = vmatprep.subr.mxu0 0.0
      %5290 = vmatpush1.xpose.msra.mxu0 0.0
      %5291 = vmatprep.subr.mxu0 0.0
      %5292 = vmatpush1.xpose.msra.mxu0 0.0
      %5293 = vmatprep.subr.mxu0 0.0
      %5294 = vmatpush1.xpose.msra.mxu0 %v5275
      %5295 = vmatprep.subr.mxu0 0.0
      %5296 = vmatpush1.xpose.msra.mxu0 %v5273
      %5297 = vmatprep.subr.mxu0 0.0
      %5298 = vmatpush1.xpose.msra.mxu0 %v5271
      %5299 = vmatprep.subr.mxu0 0.0
      %5300 = vmatpush1.xpose.msra.mxu0 %v5269
      %5301 = vmatprep.subr.mxu0 0.0
      %5302 = vmatpush1.xpose.msra.mxu0 %v5267
      %5303 = vmatprep.subr.mxu0 0.0
      %5304 = vmatpush1.xpose.msra.mxu0 %v5265
      %5305 = vmatprep.subr.mxu0 0.0
      %5306 = vmatpush1.xpose.msra.mxu0 %v5263
      %5307 = vmatprep.subr.mxu0 0.0
      %5308 = vmatpush1.xpose.msra.mxu0 %v5261
      %5309 = vmatprep.subr.mxu0 0.0
      %5310 = vmatpush2.xpose.msra.mxu0 0.0
      %5311 = vmatprep.subr.mxu0 0.0
      %5312 = vmatpush2.xpose.msra.mxu0 0.0
      %5313 = vmatprep.subr.mxu0 0.0
      %5314 = vmatpush2.xpose.msra.mxu0 0.0
      %5315 = vmatprep.subr.mxu0 0.0
      %5316 = vmatpush2.xpose.msra.mxu0 0.0
      %5317 = vmatprep.subr.mxu0 0.0
      %5318 = vmatpush2.xpose.msra.mxu0 0.0
      %5319 = vmatprep.subr.mxu0 0.0
      %5320 = vmatpush2.xpose.msra.mxu0 0.0
      %5321 = vmatprep.subr.mxu0 0.0
      %5322 = vmatpush2.xpose.msra.mxu0 0.0
      %5323 = vmatprep.subr.mxu0 0.0
      %5324 = vmatpush2.xpose.msra.mxu0 0.0
      %5325 = vmatprep.subr.mxu0 0.0
      %5326 = vmatpush2.xpose.msra.mxu0 0.0
      %5327 = vmatprep.subr.mxu0 0.0
      %5328 = vmatpush2.xpose.msra.mxu0 0.0
      %5329 = vmatprep.subr.mxu0 0.0
      %5330 = vmatpush2.xpose.msra.mxu0 0.0
      %5331 = vmatprep.subr.mxu0 0.0
      %5332 = vmatpush2.xpose.msra.mxu0 0.0
      %5333 = vmatprep.subr.mxu0 0.0
      %5334 = vmatpush2.xpose.msra.mxu0 0.0
      %5335 = vmatprep.subr.mxu0 0.0
      %5336 = vmatpush2.xpose.msra.mxu0 0.0
      %5337 = vmatprep.subr.mxu0 0.0
      %5338 = vmatpush2.xpose.msra.mxu0 0.0
      %5339 = vmatprep.subr.mxu0 0.0
      %5340 = vmatpush2.xpose.msra.mxu0 0.0
      %5341 = vmatprep.mubr.f32.mxu0 0.0
      %5342 = vmatmul.mubr.f32.gmra.mxu0 %v5245
      %v5343 = vpop.f32.mrf.mxu0
      %v5344 = vadd.f32 0.0, %v5343
      %v5345 = vpop.f32.mrf.mxu0
      %5346 = vmatprep.mubr.f32.mxu0 0.0
      %5347 = vmatmul.mubr.f32.gmra.mxu0 %v5247
      %v5348 = vpop.f32.mrf.mxu0
      %v5349 = vadd.f32 0.0, %v5348
      %v5350 = vpop.f32.mrf.mxu0
      %5351 = vmatprep.mubr.f32.mxu0 0.0
      %5352 = vmatmul.mubr.f32.gmra.mxu0 %v5249
      %v5353 = vpop.f32.mrf.mxu0
      %v5354 = vadd.f32 0.0, %v5353
      %v5355 = vpop.f32.mrf.mxu0
      %5356 = vmatprep.mubr.f32.mxu0 0.0
      %5357 = vmatmul.mubr.f32.gmra.mxu0 %v5251
      %v5358 = vpop.f32.mrf.mxu0
      %v5359 = vadd.f32 0.0, %v5358
      %v5360 = vpop.f32.mrf.mxu0
      %5361 = vmatprep.mubr.f32.mxu0 0.0
      %5362 = vmatmul.mubr.f32.gmra.mxu0 %v5253
      %v5363 = vpop.f32.mrf.mxu0
      %v5364 = vadd.f32 0.0, %v5363
      %v5365 = vpop.f32.mrf.mxu0
      %5366 = vmatprep.mubr.f32.mxu0 0.0
      %5367 = vmatmul.mubr.f32.gmra.mxu0 %v5255
      %v5368 = vpop.f32.mrf.mxu0
      %v5369 = vadd.f32 0.0, %v5368
      %v5370 = vpop.f32.mrf.mxu0
      %5371 = vmatprep.mubr.f32.mxu0 0.0
      %5372 = vmatmul.mubr.f32.gmra.mxu0 %v5257
      %v5373 = vpop.f32.mrf.mxu0
      %v5374 = vadd.f32 0.0, %v5373
      %v5375 = vpop.f32.mrf.mxu0
      %5376 = vmatprep.mubr.f32.mxu0 0.0
      %5377 = vmatmul.mubr.f32.gmra.mxu0 %v5259
      %v5378 = vpop.f32.mrf.mxu0
      %v5379 = vadd.f32 0.0, %v5378
      %v5380 = vpop.f32.mrf.mxu0
      %5381 = vdwg.mxu0
      %5382 = vrot.lane.b32.xlu0 %v580, 112
      %v5383 = vpop.permute.xlu0 %5382
      %5384 = vrot.lane.b32.xlu0 %v585, 112
      %v5385 = vpop.permute.xlu0 %5384
      %5386 = vrot.lane.b32.xlu0 %v590, 112
      %v5387 = vpop.permute.xlu0 %5386
      %5388 = vrot.lane.b32.xlu0 %v595, 112
      %v5389 = vpop.permute.xlu0 %5388
      %5390 = vrot.lane.b32.xlu0 %v600, 112
      %v5391 = vpop.permute.xlu0 %5390
      %5392 = vrot.lane.b32.xlu0 %v605, 112
      %v5393 = vpop.permute.xlu0 %5392
      %5394 = vrot.lane.b32.xlu0 %v610, 112
      %v5395 = vpop.permute.xlu0 %5394
      %5396 = vrot.lane.b32.xlu0 %v615, 112
      %v5397 = vpop.permute.xlu0 %5396
      %5398 = vrot.lane.b32.xlu0 %v809, 112
      %v5399 = vpop.permute.xlu0 %5398
      %5400 = vrot.lane.b32.xlu0 %v814, 112
      %v5401 = vpop.permute.xlu0 %5400
      %5402 = vrot.lane.b32.xlu0 %v819, 112
      %v5403 = vpop.permute.xlu0 %5402
      %5404 = vrot.lane.b32.xlu0 %v824, 112
      %v5405 = vpop.permute.xlu0 %5404
      %5406 = vrot.lane.b32.xlu0 %v829, 112
      %v5407 = vpop.permute.xlu0 %5406
      %5408 = vrot.lane.b32.xlu0 %v834, 112
      %v5409 = vpop.permute.xlu0 %5408
      %5410 = vrot.lane.b32.xlu0 %v839, 112
      %v5411 = vpop.permute.xlu0 %5410
      %5412 = vrot.lane.b32.xlu0 %v844, 112
      %v5413 = vpop.permute.xlu0 %5412
      %v5414 = vsel %vm1076, %v5383, 0
      %v5416 = vsel %vm1076, %v5385, 0
      %v5418 = vsel %vm1076, %v5387, 0
      %v5420 = vsel %vm1076, %v5389, 0
      %v5422 = vsel %vm1076, %v5391, 0
      %v5424 = vsel %vm1076, %v5393, 0
      %v5426 = vsel %vm1076, %v5395, 0
      %v5428 = vsel %vm1076, %v5397, 0
      %v5430 = vsel %vm1076, %v5399, 0
      %v5432 = vsel %vm1076, %v5401, 0
      %v5434 = vsel %vm1076, %v5403, 0
      %v5436 = vsel %vm1076, %v5405, 0
      %v5438 = vsel %vm1076, %v5407, 0
      %v5440 = vsel %vm1076, %v5409, 0
      %v5442 = vsel %vm1076, %v5411, 0
      %v5444 = vsel %vm1076, %v5413, 0
      %5446 = vmatprep.subr.mxu0 0.0
      %5447 = vmatpush1.xpose.msra.mxu0 0.0
      %5448 = vmatprep.subr.mxu0 0.0
      %5449 = vmatpush1.xpose.msra.mxu0 0.0
      %5450 = vmatprep.subr.mxu0 0.0
      %5451 = vmatpush1.xpose.msra.mxu0 0.0
      %5452 = vmatprep.subr.mxu0 0.0
      %5453 = vmatpush1.xpose.msra.mxu0 0.0
      %5454 = vmatprep.subr.mxu0 0.0
      %5455 = vmatpush1.xpose.msra.mxu0 0.0
      %5456 = vmatprep.subr.mxu0 0.0
      %5457 = vmatpush1.xpose.msra.mxu0 0.0
      %5458 = vmatprep.subr.mxu0 0.0
      %5459 = vmatpush1.xpose.msra.mxu0 0.0
      %5460 = vmatprep.subr.mxu0 0.0
      %5461 = vmatpush1.xpose.msra.mxu0 0.0
      %5462 = vmatprep.subr.mxu0 0.0
      %5463 = vmatpush1.xpose.msra.mxu0 %v5444
      %5464 = vmatprep.subr.mxu0 0.0
      %5465 = vmatpush1.xpose.msra.mxu0 %v5442
      %5466 = vmatprep.subr.mxu0 0.0
      %5467 = vmatpush1.xpose.msra.mxu0 %v5440
      %5468 = vmatprep.subr.mxu0 0.0
      %5469 = vmatpush1.xpose.msra.mxu0 %v5438
      %5470 = vmatprep.subr.mxu0 0.0
      %5471 = vmatpush1.xpose.msra.mxu0 %v5436
      %5472 = vmatprep.subr.mxu0 0.0
      %5473 = vmatpush1.xpose.msra.mxu0 %v5434
      %5474 = vmatprep.subr.mxu0 0.0
      %5475 = vmatpush1.xpose.msra.mxu0 %v5432
      %5476 = vmatprep.subr.mxu0 0.0
      %5477 = vmatpush1.xpose.msra.mxu0 %v5430
      %5478 = vmatprep.subr.mxu0 0.0
      %5479 = vmatpush2.xpose.msra.mxu0 0.0
      %5480 = vmatprep.subr.mxu0 0.0
      %5481 = vmatpush2.xpose.msra.mxu0 0.0
      %5482 = vmatprep.subr.mxu0 0.0
      %5483 = vmatpush2.xpose.msra.mxu0 0.0
      %5484 = vmatprep.subr.mxu0 0.0
      %5485 = vmatpush2.xpose.msra.mxu0 0.0
      %5486 = vmatprep.subr.mxu0 0.0
      %5487 = vmatpush2.xpose.msra.mxu0 0.0
      %5488 = vmatprep.subr.mxu0 0.0
      %5489 = vmatpush2.xpose.msra.mxu0 0.0
      %5490 = vmatprep.subr.mxu0 0.0
      %5491 = vmatpush2.xpose.msra.mxu0 0.0
      %5492 = vmatprep.subr.mxu0 0.0
      %5493 = vmatpush2.xpose.msra.mxu0 0.0
      %5494 = vmatprep.subr.mxu0 0.0
      %5495 = vmatpush2.xpose.msra.mxu0 0.0
      %5496 = vmatprep.subr.mxu0 0.0
      %5497 = vmatpush2.xpose.msra.mxu0 0.0
      %5498 = vmatprep.subr.mxu0 0.0
      %5499 = vmatpush2.xpose.msra.mxu0 0.0
      %5500 = vmatprep.subr.mxu0 0.0
      %5501 = vmatpush2.xpose.msra.mxu0 0.0
      %5502 = vmatprep.subr.mxu0 0.0
      %5503 = vmatpush2.xpose.msra.mxu0 0.0
      %5504 = vmatprep.subr.mxu0 0.0
      %5505 = vmatpush2.xpose.msra.mxu0 0.0
      %5506 = vmatprep.subr.mxu0 0.0
      %5507 = vmatpush2.xpose.msra.mxu0 0.0
      %5508 = vmatprep.subr.mxu0 0.0
      %5509 = vmatpush2.xpose.msra.mxu0 0.0
      %5510 = vmatprep.mubr.f32.mxu0 0.0
      %5511 = vmatmul.mubr.f32.gmra.mxu0 %v5414
      %v5512 = vpop.f32.mrf.mxu0
      %v5513 = vadd.f32 0.0, %v5512
      %v5514 = vpop.f32.mrf.mxu0
      %5515 = vmatprep.mubr.f32.mxu0 0.0
      %5516 = vmatmul.mubr.f32.gmra.mxu0 %v5416
      %v5517 = vpop.f32.mrf.mxu0
      %v5518 = vadd.f32 0.0, %v5517
      %v5519 = vpop.f32.mrf.mxu0
      %5520 = vmatprep.mubr.f32.mxu0 0.0
      %5521 = vmatmul.mubr.f32.gmra.mxu0 %v5418
      %v5522 = vpop.f32.mrf.mxu0
      %v5523 = vadd.f32 0.0, %v5522
      %v5524 = vpop.f32.mrf.mxu0
      %5525 = vmatprep.mubr.f32.mxu0 0.0
      %5526 = vmatmul.mubr.f32.gmra.mxu0 %v5420
      %v5527 = vpop.f32.mrf.mxu0
      %v5528 = vadd.f32 0.0, %v5527
      %v5529 = vpop.f32.mrf.mxu0
      %5530 = vmatprep.mubr.f32.mxu0 0.0
      %5531 = vmatmul.mubr.f32.gmra.mxu0 %v5422
      %v5532 = vpop.f32.mrf.mxu0
      %v5533 = vadd.f32 0.0, %v5532
      %v5534 = vpop.f32.mrf.mxu0
      %5535 = vmatprep.mubr.f32.mxu0 0.0
      %5536 = vmatmul.mubr.f32.gmra.mxu0 %v5424
      %v5537 = vpop.f32.mrf.mxu0
      %v5538 = vadd.f32 0.0, %v5537
      %v5539 = vpop.f32.mrf.mxu0
      %5540 = vmatprep.mubr.f32.mxu0 0.0
      %5541 = vmatmul.mubr.f32.gmra.mxu0 %v5426
      %v5542 = vpop.f32.mrf.mxu0
      %v5543 = vadd.f32 0.0, %v5542
      %v5544 = vpop.f32.mrf.mxu0
      %5545 = vmatprep.mubr.f32.mxu0 0.0
      %5546 = vmatmul.mubr.f32.gmra.mxu0 %v5428
      %v5547 = vpop.f32.mrf.mxu0
      %v5548 = vadd.f32 0.0, %v5547
      %v5549 = vpop.f32.mrf.mxu0
      %5550 = vdwg.mxu0
      %v5551 = vsel %vm1689, %v5006, -inf
      %5552 = vmax.xlane.f32.xlu0 %v5551
      %v5553 = vpop.xlane.xlu0 %5552
      %v5554 = vsel %vm1689, %v5011, -inf
      %5555 = vmax.xlane.f32.xlu0 %v5554
      %v5556 = vpop.xlane.xlu0 %5555
      %v5557 = vsel %vm1689, %v5016, -inf
      %5558 = vmax.xlane.f32.xlu0 %v5557
      %v5559 = vpop.xlane.xlu0 %5558
      %v5560 = vsel %vm1689, %v5021, -inf
      %5561 = vmax.xlane.f32.xlu0 %v5560
      %v5562 = vpop.xlane.xlu0 %5561
      %v5563 = vsel %vm1689, %v5026, -inf
      %5564 = vmax.xlane.f32.xlu0 %v5563
      %v5565 = vpop.xlane.xlu0 %5564
      %v5566 = vsel %vm1689, %v5031, -inf
      %5567 = vmax.xlane.f32.xlu0 %v5566
      %v5568 = vpop.xlane.xlu0 %5567
      %v5569 = vsel %vm1689, %v5036, -inf
      %5570 = vmax.xlane.f32.xlu0 %v5569
      %v5571 = vpop.xlane.xlu0 %5570
      %v5572 = vsel %vm1689, %v5041, -inf
      %5573 = vmax.xlane.f32.xlu0 %v5572
      %v5574 = vpop.xlane.xlu0 %5573
      %v5575 = vsel %vm1689, %v5175, -inf
      %5576 = vmax.xlane.f32.xlu0 %v5575
      %v5577 = vpop.xlane.xlu0 %5576
      %v5578 = vsel %vm1689, %v5180, -inf
      %5579 = vmax.xlane.f32.xlu0 %v5578
      %v5580 = vpop.xlane.xlu0 %5579
      %v5581 = vsel %vm1689, %v5185, -inf
      %5582 = vmax.xlane.f32.xlu0 %v5581
      %v5583 = vpop.xlane.xlu0 %5582
      %v5584 = vsel %vm1689, %v5190, -inf
      %5585 = vmax.xlane.f32.xlu0 %v5584
      %v5586 = vpop.xlane.xlu0 %5585
      %v5587 = vsel %vm1689, %v5195, -inf
      %5588 = vmax.xlane.f32.xlu0 %v5587
      %v5589 = vpop.xlane.xlu0 %5588
      %v5590 = vsel %vm1689, %v5200, -inf
      %5591 = vmax.xlane.f32.xlu0 %v5590
      %v5592 = vpop.xlane.xlu0 %5591
      %v5593 = vsel %vm1689, %v5205, -inf
      %5594 = vmax.xlane.f32.xlu0 %v5593
      %v5595 = vpop.xlane.xlu0 %5594
      %v5596 = vsel %vm1689, %v5210, -inf
      %5597 = vmax.xlane.f32.xlu0 %v5596
      %v5598 = vpop.xlane.xlu0 %5597
      %v5599 = vsel %vm1689, %v5344, -inf
      %5600 = vmax.xlane.f32.xlu0 %v5599
      %v5601 = vpop.xlane.xlu0 %5600
      %v5602 = vsel %vm1689, %v5349, -inf
      %5603 = vmax.xlane.f32.xlu0 %v5602
      %v5604 = vpop.xlane.xlu0 %5603
      %v5605 = vsel %vm1689, %v5354, -inf
      %5606 = vmax.xlane.f32.xlu0 %v5605
      %v5607 = vpop.xlane.xlu0 %5606
      %v5608 = vsel %vm1689, %v5359, -inf
      %5609 = vmax.xlane.f32.xlu0 %v5608
      %v5610 = vpop.xlane.xlu0 %5609
      %v5611 = vsel %vm1689, %v5364, -inf
      %5612 = vmax.xlane.f32.xlu0 %v5611
      %v5613 = vpop.xlane.xlu0 %5612
      %v5614 = vsel %vm1689, %v5369, -inf
      %5615 = vmax.xlane.f32.xlu0 %v5614
      %v5616 = vpop.xlane.xlu0 %5615
      %v5617 = vsel %vm1689, %v5374, -inf
      %5618 = vmax.xlane.f32.xlu0 %v5617
      %v5619 = vpop.xlane.xlu0 %5618
      %v5620 = vsel %vm1689, %v5379, -inf
      %5621 = vmax.xlane.f32.xlu0 %v5620
      %v5622 = vpop.xlane.xlu0 %5621
      %v5623 = vsel %vm1689, %v5513, -inf
      %5624 = vmax.xlane.f32.xlu0 %v5623
      %v5625 = vpop.xlane.xlu0 %5624
      %v5626 = vsel %vm1689, %v5518, -inf
      %5627 = vmax.xlane.f32.xlu0 %v5626
      %v5628 = vpop.xlane.xlu0 %5627
      %v5629 = vsel %vm1689, %v5523, -inf
      %5630 = vmax.xlane.f32.xlu0 %v5629
      %v5631 = vpop.xlane.xlu0 %5630
      %v5632 = vsel %vm1689, %v5528, -inf
      %5633 = vmax.xlane.f32.xlu0 %v5632
      %v5634 = vpop.xlane.xlu0 %5633
      %v5635 = vsel %vm1689, %v5533, -inf
      %5636 = vmax.xlane.f32.xlu0 %v5635
      %v5637 = vpop.xlane.xlu0 %5636
      %v5638 = vsel %vm1689, %v5538, -inf
      %5639 = vmax.xlane.f32.xlu0 %v5638
      %v5640 = vpop.xlane.xlu0 %5639
      %v5641 = vsel %vm1689, %v5543, -inf
      %5642 = vmax.xlane.f32.xlu0 %v5641
      %v5643 = vpop.xlane.xlu0 %5642
      %v5644 = vsel %vm1689, %v5548, -inf
      %5645 = vmax.xlane.f32.xlu0 %v5644
      %v5646 = vpop.xlane.xlu0 %5645
      %v5647 = vsub.f32 %v5006, %v5553
      %v5648 = vsub.f32 %v5011, %v5556
      %v5649 = vsub.f32 %v5016, %v5559
      %v5650 = vsub.f32 %v5021, %v5562
      %v5651 = vsub.f32 %v5026, %v5565
      %v5652 = vsub.f32 %v5031, %v5568
      %v5653 = vsub.f32 %v5036, %v5571
      %v5654 = vsub.f32 %v5041, %v5574
      %v5655 = vsub.f32 %v5175, %v5577
      %v5656 = vsub.f32 %v5180, %v5580
      %v5657 = vsub.f32 %v5185, %v5583
      %v5658 = vsub.f32 %v5190, %v5586
      %v5659 = vsub.f32 %v5195, %v5589
      %v5660 = vsub.f32 %v5200, %v5592
      %v5661 = vsub.f32 %v5205, %v5595
      %v5662 = vsub.f32 %v5210, %v5598
      %v5663 = vsub.f32 %v5344, %v5601
      %v5664 = vsub.f32 %v5349, %v5604
      %v5665 = vsub.f32 %v5354, %v5607
      %v5666 = vsub.f32 %v5359, %v5610
      %v5667 = vsub.f32 %v5364, %v5613
      %v5668 = vsub.f32 %v5369, %v5616
      %v5669 = vsub.f32 %v5374, %v5619
      %v5670 = vsub.f32 %v5379, %v5622
      %v5671 = vsub.f32 %v5513, %v5625
      %v5672 = vsub.f32 %v5518, %v5628
      %v5673 = vsub.f32 %v5523, %v5631
      %v5674 = vsub.f32 %v5528, %v5634
      %v5675 = vsub.f32 %v5533, %v5637
      %v5676 = vsub.f32 %v5538, %v5640
      %v5677 = vsub.f32 %v5543, %v5643
      %v5678 = vsub.f32 %v5548, %v5646
      %v5679 = vmul.f32 %v5647, 1.442695
      %v5680 = vpow.pop %v5679
      %v5681 = vmul.f32 %v5648, 1.442695
      %v5682 = vpow.pop %v5681
      %v5683 = vmul.f32 %v5649, 1.442695
      %v5684 = vpow.pop %v5683
      %v5685 = vmul.f32 %v5650, 1.442695
      %v5686 = vpow.pop %v5685
      %v5687 = vmul.f32 %v5651, 1.442695
      %v5688 = vpow.pop %v5687
      %v5689 = vmul.f32 %v5652, 1.442695
      %v5690 = vpow.pop %v5689
      %v5691 = vmul.f32 %v5653, 1.442695
      %v5692 = vpow.pop %v5691
      %v5693 = vmul.f32 %v5654, 1.442695
      %v5694 = vpow.pop %v5693
      %v5695 = vmul.f32 %v5655, 1.442695
      %v5696 = vpow.pop %v5695
      %v5697 = vmul.f32 %v5656, 1.442695
      %v5698 = vpow.pop %v5697
      %v5699 = vmul.f32 %v5657, 1.442695
      %v5700 = vpow.pop %v5699
      %v5701 = vmul.f32 %v5658, 1.442695
      %v5702 = vpow.pop %v5701
      %v5703 = vmul.f32 %v5659, 1.442695
      %v5704 = vpow.pop %v5703
      %v5705 = vmul.f32 %v5660, 1.442695
      %v5706 = vpow.pop %v5705
      %v5707 = vmul.f32 %v5661, 1.442695
      %v5708 = vpow.pop %v5707
      %v5709 = vmul.f32 %v5662, 1.442695
      %v5710 = vpow.pop %v5709
      %v5711 = vmul.f32 %v5663, 1.442695
      %v5712 = vpow.pop %v5711
      %v5713 = vmul.f32 %v5664, 1.442695
      %v5714 = vpow.pop %v5713
      %v5715 = vmul.f32 %v5665, 1.442695
      %v5716 = vpow.pop %v5715
      %v5717 = vmul.f32 %v5666, 1.442695
      %v5718 = vpow.pop %v5717
      %v5719 = vmul.f32 %v5667, 1.442695
      %v5720 = vpow.pop %v5719
      %v5721 = vmul.f32 %v5668, 1.442695
      %v5722 = vpow.pop %v5721
      %v5723 = vmul.f32 %v5669, 1.442695
      %v5724 = vpow.pop %v5723
      %v5725 = vmul.f32 %v5670, 1.442695
      %v5726 = vpow.pop %v5725
      %v5727 = vmul.f32 %v5671, 1.442695
      %v5728 = vpow.pop %v5727
      %v5729 = vmul.f32 %v5672, 1.442695
      %v5730 = vpow.pop %v5729
      %v5731 = vmul.f32 %v5673, 1.442695
      %v5732 = vpow.pop %v5731
      %v5733 = vmul.f32 %v5674, 1.442695
      %v5734 = vpow.pop %v5733
      %v5735 = vmul.f32 %v5675, 1.442695
      %v5736 = vpow.pop %v5735
      %v5737 = vmul.f32 %v5676, 1.442695
      %v5738 = vpow.pop %v5737
      %v5739 = vmul.f32 %v5677, 1.442695
      %v5740 = vpow.pop %v5739
      %v5741 = vmul.f32 %v5678, 1.442695
      %v5742 = vpow.pop %v5741
      %v5743 = vsel %vm1689, %v5680, 0.0
      %5744 = vadd.xlane.f32.xlu0 %v5743
      %v5745 = vpop.xlane.xlu0 %5744
      %v5746 = vsel %vm1689, %v5682, 0.0
      %5747 = vadd.xlane.f32.xlu0 %v5746
      %v5748 = vpop.xlane.xlu0 %5747
      %v5749 = vsel %vm1689, %v5684, 0.0
      %5750 = vadd.xlane.f32.xlu0 %v5749
      %v5751 = vpop.xlane.xlu0 %5750
      %v5752 = vsel %vm1689, %v5686, 0.0
      %5753 = vadd.xlane.f32.xlu0 %v5752
      %v5754 = vpop.xlane.xlu0 %5753
      %v5755 = vsel %vm1689, %v5688, 0.0
      %5756 = vadd.xlane.f32.xlu0 %v5755
      %v5757 = vpop.xlane.xlu0 %5756
      %v5758 = vsel %vm1689, %v5690, 0.0
      %5759 = vadd.xlane.f32.xlu0 %v5758
      %v5760 = vpop.xlane.xlu0 %5759
      %v5761 = vsel %vm1689, %v5692, 0.0
      %5762 = vadd.xlane.f32.xlu0 %v5761
      %v5763 = vpop.xlane.xlu0 %5762
      %v5764 = vsel %vm1689, %v5694, 0.0
      %5765 = vadd.xlane.f32.xlu0 %v5764
      %v5766 = vpop.xlane.xlu0 %5765
      %v5767 = vsel %vm1689, %v5696, 0.0
      %5768 = vadd.xlane.f32.xlu0 %v5767
      %v5769 = vpop.xlane.xlu0 %5768
      %v5770 = vsel %vm1689, %v5698, 0.0
      %5771 = vadd.xlane.f32.xlu0 %v5770
      %v5772 = vpop.xlane.xlu0 %5771
      %v5773 = vsel %vm1689, %v5700, 0.0
      %5774 = vadd.xlane.f32.xlu0 %v5773
      %v5775 = vpop.xlane.xlu0 %5774
      %v5776 = vsel %vm1689, %v5702, 0.0
      %5777 = vadd.xlane.f32.xlu0 %v5776
      %v5778 = vpop.xlane.xlu0 %5777
      %v5779 = vsel %vm1689, %v5704, 0.0
      %5780 = vadd.xlane.f32.xlu0 %v5779
      %v5781 = vpop.xlane.xlu0 %5780
      %v5782 = vsel %vm1689, %v5706, 0.0
      %5783 = vadd.xlane.f32.xlu0 %v5782
      %v5784 = vpop.xlane.xlu0 %5783
      %v5785 = vsel %vm1689, %v5708, 0.0
      %5786 = vadd.xlane.f32.xlu0 %v5785
      %v5787 = vpop.xlane.xlu0 %5786
      %v5788 = vsel %vm1689, %v5710, 0.0
      %5789 = vadd.xlane.f32.xlu0 %v5788
      %v5790 = vpop.xlane.xlu0 %5789
      %v5791 = vsel %vm1689, %v5712, 0.0
      %5792 = vadd.xlane.f32.xlu0 %v5791
      %v5793 = vpop.xlane.xlu0 %5792
      %v5794 = vsel %vm1689, %v5714, 0.0
      %5795 = vadd.xlane.f32.xlu0 %v5794
      %v5796 = vpop.xlane.xlu0 %5795
      %v5797 = vsel %vm1689, %v5716, 0.0
      %5798 = vadd.xlane.f32.xlu0 %v5797
      %v5799 = vpop.xlane.xlu0 %5798
      %v5800 = vsel %vm1689, %v5718, 0.0
      %5801 = vadd.xlane.f32.xlu0 %v5800
      %v5802 = vpop.xlane.xlu0 %5801
      %v5803 = vsel %vm1689, %v5720, 0.0
      %5804 = vadd.xlane.f32.xlu0 %v5803
      %v5805 = vpop.xlane.xlu0 %5804
      %v5806 = vsel %vm1689, %v5722, 0.0
      %5807 = vadd.xlane.f32.xlu0 %v5806
      %v5808 = vpop.xlane.xlu0 %5807
      %v5809 = vsel %vm1689, %v5724, 0.0
      %5810 = vadd.xlane.f32.xlu0 %v5809
      %v5811 = vpop.xlane.xlu0 %5810
      %v5812 = vsel %vm1689, %v5726, 0.0
      %5813 = vadd.xlane.f32.xlu0 %v5812
      %v5814 = vpop.xlane.xlu0 %5813
      %v5815 = vsel %vm1689, %v5728, 0.0
      %5816 = vadd.xlane.f32.xlu0 %v5815
      %v5817 = vpop.xlane.xlu0 %5816
      %v5818 = vsel %vm1689, %v5730, 0.0
      %5819 = vadd.xlane.f32.xlu0 %v5818
      %v5820 = vpop.xlane.xlu0 %5819
      %v5821 = vsel %vm1689, %v5732, 0.0
      %5822 = vadd.xlane.f32.xlu0 %v5821
      %v5823 = vpop.xlane.xlu0 %5822
      %v5824 = vsel %vm1689, %v5734, 0.0
      %5825 = vadd.xlane.f32.xlu0 %v5824
      %v5826 = vpop.xlane.xlu0 %5825
      %v5827 = vsel %vm1689, %v5736, 0.0
      %5828 = vadd.xlane.f32.xlu0 %v5827
      %v5829 = vpop.xlane.xlu0 %5828
      %v5830 = vsel %vm1689, %v5738, 0.0
      %5831 = vadd.xlane.f32.xlu0 %v5830
      %v5832 = vpop.xlane.xlu0 %5831
      %v5833 = vsel %vm1689, %v5740, 0.0
      %5834 = vadd.xlane.f32.xlu0 %v5833
      %v5835 = vpop.xlane.xlu0 %5834
      %v5836 = vsel %vm1689, %v5742, 0.0
      %5837 = vadd.xlane.f32.xlu0 %v5836
      %v5838 = vpop.xlane.xlu0 %5837
      %v5839 = vrcp.pop %v5745
      %v5840 = vrcp.pop %v5748
      %v5841 = vrcp.pop %v5751
      %v5842 = vrcp.pop %v5754
      %v5843 = vrcp.pop %v5757
      %v5844 = vrcp.pop %v5760
      %v5845 = vrcp.pop %v5763
      %v5846 = vrcp.pop %v5766
      %v5847 = vrcp.pop %v5769
      %v5848 = vrcp.pop %v5772
      %v5849 = vrcp.pop %v5775
      %v5850 = vrcp.pop %v5778
      %v5851 = vrcp.pop %v5781
      %v5852 = vrcp.pop %v5784
      %v5853 = vrcp.pop %v5787
      %v5854 = vrcp.pop %v5790
      %v5855 = vrcp.pop %v5793
      %v5856 = vrcp.pop %v5796
      %v5857 = vrcp.pop %v5799
      %v5858 = vrcp.pop %v5802
      %v5859 = vrcp.pop %v5805
      %v5860 = vrcp.pop %v5808
      %v5861 = vrcp.pop %v5811
      %v5862 = vrcp.pop %v5814
      %v5863 = vrcp.pop %v5817
      %v5864 = vrcp.pop %v5820
      %v5865 = vrcp.pop %v5823
      %v5866 = vrcp.pop %v5826
      %v5867 = vrcp.pop %v5829
      %v5868 = vrcp.pop %v5832
      %v5869 = vrcp.pop %v5835
      %v5870 = vrcp.pop %v5838
      %v5871 = vmul.f32 %v5680, %v5839
      %v5872 = vmul.f32 %v5682, %v5840
      %v5873 = vmul.f32 %v5684, %v5841
      %v5874 = vmul.f32 %v5686, %v5842
      %v5875 = vmul.f32 %v5688, %v5843
      %v5876 = vmul.f32 %v5690, %v5844
      %v5877 = vmul.f32 %v5692, %v5845
      %v5878 = vmul.f32 %v5694, %v5846
      %v5879 = vmul.f32 %v5696, %v5847
      %v5880 = vmul.f32 %v5698, %v5848
      %v5881 = vmul.f32 %v5700, %v5849
      %v5882 = vmul.f32 %v5702, %v5850
      %v5883 = vmul.f32 %v5704, %v5851
      %v5884 = vmul.f32 %v5706, %v5852
      %v5885 = vmul.f32 %v5708, %v5853
      %v5886 = vmul.f32 %v5710, %v5854
      %v5887 = vmul.f32 %v5712, %v5855
      %v5888 = vmul.f32 %v5714, %v5856
      %v5889 = vmul.f32 %v5716, %v5857
      %v5890 = vmul.f32 %v5718, %v5858
      %v5891 = vmul.f32 %v5720, %v5859
      %v5892 = vmul.f32 %v5722, %v5860
      %v5893 = vmul.f32 %v5724, %v5861
      %v5894 = vmul.f32 %v5726, %v5862
      %v5895 = vmul.f32 %v5728, %v5863
      %v5896 = vmul.f32 %v5730, %v5864
      %v5897 = vmul.f32 %v5732, %v5865
      %v5898 = vmul.f32 %v5734, %v5866
      %v5899 = vmul.f32 %v5736, %v5867
      %v5900 = vmul.f32 %v5738, %v5868
      %v5901 = vmul.f32 %v5740, %v5869
      %v5902 = vmul.f32 %v5742, %v5870
      %5903 = vrot.lane.b32.xlu0 %v918, 112
      %v5904 = vpop.permute.xlu0 %5903
      %5905 = vrot.lane.b32.xlu0 %v923, 112
      %v5906 = vpop.permute.xlu0 %5905
      %5907 = vrot.lane.b32.xlu0 %v928, 112
      %v5908 = vpop.permute.xlu0 %5907
      %5909 = vrot.lane.b32.xlu0 %v933, 112
      %v5910 = vpop.permute.xlu0 %5909
      %5911 = vrot.lane.b32.xlu0 %v938, 112
      %v5912 = vpop.permute.xlu0 %5911
      %5913 = vrot.lane.b32.xlu0 %v943, 112
      %v5914 = vpop.permute.xlu0 %5913
      %5915 = vrot.lane.b32.xlu0 %v948, 112
      %v5916 = vpop.permute.xlu0 %5915
      %5917 = vrot.lane.b32.xlu0 %v953, 112
      %v5918 = vpop.permute.xlu0 %5917
      %v5928 = vsel %vm1689, %v5871, 0
      %v5931 = vsel %vm1689, %v5872, 0
      %v5934 = vsel %vm1689, %v5873, 0
      %v5937 = vsel %vm1689, %v5874, 0
      %v5940 = vsel %vm1689, %v5875, 0
      %v5943 = vsel %vm1689, %v5876, 0
      %v5946 = vsel %vm1689, %v5877, 0
      %v5949 = vsel %vm1689, %v5878, 0
      %5951 = vmatprep.subr.mxu0 0.0
      %5952 = vmatpush1.msra.mxu0 0.0
      %5953 = vmatprep.subr.mxu0 0.0
      %5954 = vmatpush1.msra.mxu0 0.0
      %5955 = vmatprep.subr.mxu0 0.0
      %5956 = vmatpush1.msra.mxu0 0.0
      %5957 = vmatprep.subr.mxu0 0.0
      %5958 = vmatpush1.msra.mxu0 0.0
      %5959 = vmatprep.subr.mxu0 0.0
      %5960 = vmatpush1.msra.mxu0 0.0
      %5961 = vmatprep.subr.mxu0 0.0
      %5962 = vmatpush1.msra.mxu0 0.0
      %5963 = vmatprep.subr.mxu0 0.0
      %5964 = vmatpush1.msra.mxu0 0.0
      %5965 = vmatprep.subr.mxu0 0.0
      %5966 = vmatpush1.msra.mxu0 0.0
      %5967 = vmatprep.subr.mxu0 0.0
      %5968 = vmatpush1.msra.mxu0 %v5918
      %5969 = vmatprep.subr.mxu0 0.0
      %5970 = vmatpush1.msra.mxu0 %v5916
      %5971 = vmatprep.subr.mxu0 0.0
      %5972 = vmatpush1.msra.mxu0 %v5914
      %5973 = vmatprep.subr.mxu0 0.0
      %5974 = vmatpush1.msra.mxu0 %v5912
      %5975 = vmatprep.subr.mxu0 0.0
      %5976 = vmatpush1.msra.mxu0 %v5910
      %5977 = vmatprep.subr.mxu0 0.0
      %5978 = vmatpush1.msra.mxu0 %v5908
      %5979 = vmatprep.subr.mxu0 0.0
      %5980 = vmatpush1.msra.mxu0 %v5906
      %5981 = vmatprep.subr.mxu0 0.0
      %5982 = vmatpush1.msra.mxu0 %v5904
      %5983 = vmatprep.subr.mxu0 0.0
      %5984 = vmatpush2.msra.mxu0 0.0
      %5985 = vmatprep.subr.mxu0 0.0
      %5986 = vmatpush2.msra.mxu0 0.0
      %5987 = vmatprep.subr.mxu0 0.0
      %5988 = vmatpush2.msra.mxu0 0.0
      %5989 = vmatprep.subr.mxu0 0.0
      %5990 = vmatpush2.msra.mxu0 0.0
      %5991 = vmatprep.subr.mxu0 0.0
      %5992 = vmatpush2.msra.mxu0 0.0
      %5993 = vmatprep.subr.mxu0 0.0
      %5994 = vmatpush2.msra.mxu0 0.0
      %5995 = vmatprep.subr.mxu0 0.0
      %5996 = vmatpush2.msra.mxu0 0.0
      %5997 = vmatprep.subr.mxu0 0.0
      %5998 = vmatpush2.msra.mxu0 0.0
      %5999 = vmatprep.subr.mxu0 0.0
      %6000 = vmatpush2.msra.mxu0 0.0
      %6001 = vmatprep.subr.mxu0 0.0
      %6002 = vmatpush2.msra.mxu0 0.0
      %6003 = vmatprep.subr.mxu0 0.0
      %6004 = vmatpush2.msra.mxu0 0.0
      %6005 = vmatprep.subr.mxu0 0.0
      %6006 = vmatpush2.msra.mxu0 0.0
      %6007 = vmatprep.subr.mxu0 0.0
      %6008 = vmatpush2.msra.mxu0 0.0
      %6009 = vmatprep.subr.mxu0 0.0
      %6010 = vmatpush2.msra.mxu0 0.0
      %6011 = vmatprep.subr.mxu0 0.0
      %6012 = vmatpush2.msra.mxu0 0.0
      %6013 = vmatprep.subr.mxu0 0.0
      %6014 = vmatpush2.msra.mxu0 0.0
      %6015 = vmatprep.mubr.f32.mxu0 0.0
      %6016 = vmatmul.mubr.f32.gmra.mxu0 %v5928
      %v6017 = vpop.f32.mrf.mxu0
      %v6018 = vadd.f32 0.0, %v6017
      %v6019 = vpop.f32.mrf.mxu0
      %6020 = vmatprep.mubr.f32.mxu0 0.0
      %6021 = vmatmul.mubr.f32.gmra.mxu0 %v5931
      %v6022 = vpop.f32.mrf.mxu0
      %v6023 = vadd.f32 0.0, %v6022
      %v6024 = vpop.f32.mrf.mxu0
      %6025 = vmatprep.mubr.f32.mxu0 0.0
      %6026 = vmatmul.mubr.f32.gmra.mxu0 %v5934
      %v6027 = vpop.f32.mrf.mxu0
      %v6028 = vadd.f32 0.0, %v6027
      %v6029 = vpop.f32.mrf.mxu0
      %6030 = vmatprep.mubr.f32.mxu0 0.0
      %6031 = vmatmul.mubr.f32.gmra.mxu0 %v5937
      %v6032 = vpop.f32.mrf.mxu0
      %v6033 = vadd.f32 0.0, %v6032
      %v6034 = vpop.f32.mrf.mxu0
      %6035 = vmatprep.mubr.f32.mxu0 0.0
      %6036 = vmatmul.mubr.f32.gmra.mxu0 %v5940
      %v6037 = vpop.f32.mrf.mxu0
      %v6038 = vadd.f32 0.0, %v6037
      %v6039 = vpop.f32.mrf.mxu0
      %6040 = vmatprep.mubr.f32.mxu0 0.0
      %6041 = vmatmul.mubr.f32.gmra.mxu0 %v5943
      %v6042 = vpop.f32.mrf.mxu0
      %v6043 = vadd.f32 0.0, %v6042
      %v6044 = vpop.f32.mrf.mxu0
      %6045 = vmatprep.mubr.f32.mxu0 0.0
      %6046 = vmatmul.mubr.f32.gmra.mxu0 %v5946
      %v6047 = vpop.f32.mrf.mxu0
      %v6048 = vadd.f32 0.0, %v6047
      %v6049 = vpop.f32.mrf.mxu0
      %6050 = vmatprep.mubr.f32.mxu0 0.0
      %6051 = vmatmul.mubr.f32.gmra.mxu0 %v5949
      %v6052 = vpop.f32.mrf.mxu0
      %v6053 = vadd.f32 0.0, %v6052
      %v6054 = vpop.f32.mrf.mxu0
      %6055 = vdwg.mxu0
      %6056 = vrot.lane.b32.xlu0 %v958, 112
      %v6057 = vpop.permute.xlu0 %6056
      %6058 = vrot.lane.b32.xlu0 %v963, 112
      %v6059 = vpop.permute.xlu0 %6058
      %6060 = vrot.lane.b32.xlu0 %v968, 112
      %v6061 = vpop.permute.xlu0 %6060
      %6062 = vrot.lane.b32.xlu0 %v973, 112
      %v6063 = vpop.permute.xlu0 %6062
      %6064 = vrot.lane.b32.xlu0 %v978, 112
      %v6065 = vpop.permute.xlu0 %6064
      %6066 = vrot.lane.b32.xlu0 %v983, 112
      %v6067 = vpop.permute.xlu0 %6066
      %6068 = vrot.lane.b32.xlu0 %v988, 112
      %v6069 = vpop.permute.xlu0 %6068
      %6070 = vrot.lane.b32.xlu0 %v993, 112
      %v6071 = vpop.permute.xlu0 %6070
      %v6081 = vsel %vm1689, %v5879, 0
      %v6084 = vsel %vm1689, %v5880, 0
      %v6087 = vsel %vm1689, %v5881, 0
      %v6090 = vsel %vm1689, %v5882, 0
      %v6093 = vsel %vm1689, %v5883, 0
      %v6096 = vsel %vm1689, %v5884, 0
      %v6099 = vsel %vm1689, %v5885, 0
      %v6102 = vsel %vm1689, %v5886, 0
      %6104 = vmatprep.subr.mxu0 0.0
      %6105 = vmatpush1.msra.mxu0 0.0
      %6106 = vmatprep.subr.mxu0 0.0
      %6107 = vmatpush1.msra.mxu0 0.0
      %6108 = vmatprep.subr.mxu0 0.0
      %6109 = vmatpush1.msra.mxu0 0.0
      %6110 = vmatprep.subr.mxu0 0.0
      %6111 = vmatpush1.msra.mxu0 0.0
      %6112 = vmatprep.subr.mxu0 0.0
      %6113 = vmatpush1.msra.mxu0 0.0
      %6114 = vmatprep.subr.mxu0 0.0
      %6115 = vmatpush1.msra.mxu0 0.0
      %6116 = vmatprep.subr.mxu0 0.0
      %6117 = vmatpush1.msra.mxu0 0.0
      %6118 = vmatprep.subr.mxu0 0.0
      %6119 = vmatpush1.msra.mxu0 0.0
      %6120 = vmatprep.subr.mxu0 0.0
      %6121 = vmatpush1.msra.mxu0 %v6071
      %6122 = vmatprep.subr.mxu0 0.0
      %6123 = vmatpush1.msra.mxu0 %v6069
      %6124 = vmatprep.subr.mxu0 0.0
      %6125 = vmatpush1.msra.mxu0 %v6067
      %6126 = vmatprep.subr.mxu0 0.0
      %6127 = vmatpush1.msra.mxu0 %v6065
      %6128 = vmatprep.subr.mxu0 0.0
      %6129 = vmatpush1.msra.mxu0 %v6063
      %6130 = vmatprep.subr.mxu0 0.0
      %6131 = vmatpush1.msra.mxu0 %v6061
      %6132 = vmatprep.subr.mxu0 0.0
      %6133 = vmatpush1.msra.mxu0 %v6059
      %6134 = vmatprep.subr.mxu0 0.0
      %6135 = vmatpush1.msra.mxu0 %v6057
      %6136 = vmatprep.subr.mxu0 0.0
      %6137 = vmatpush2.msra.mxu0 0.0
      %6138 = vmatprep.subr.mxu0 0.0
      %6139 = vmatpush2.msra.mxu0 0.0
      %6140 = vmatprep.subr.mxu0 0.0
      %6141 = vmatpush2.msra.mxu0 0.0
      %6142 = vmatprep.subr.mxu0 0.0
      %6143 = vmatpush2.msra.mxu0 0.0
      %6144 = vmatprep.subr.mxu0 0.0
      %6145 = vmatpush2.msra.mxu0 0.0
      %6146 = vmatprep.subr.mxu0 0.0
      %6147 = vmatpush2.msra.mxu0 0.0
      %6148 = vmatprep.subr.mxu0 0.0
      %6149 = vmatpush2.msra.mxu0 0.0
      %6150 = vmatprep.subr.mxu0 0.0
      %6151 = vmatpush2.msra.mxu0 0.0
      %6152 = vmatprep.subr.mxu0 0.0
      %6153 = vmatpush2.msra.mxu0 0.0
      %6154 = vmatprep.subr.mxu0 0.0
      %6155 = vmatpush2.msra.mxu0 0.0
      %6156 = vmatprep.subr.mxu0 0.0
      %6157 = vmatpush2.msra.mxu0 0.0
      %6158 = vmatprep.subr.mxu0 0.0
      %6159 = vmatpush2.msra.mxu0 0.0
      %6160 = vmatprep.subr.mxu0 0.0
      %6161 = vmatpush2.msra.mxu0 0.0
      %6162 = vmatprep.subr.mxu0 0.0
      %6163 = vmatpush2.msra.mxu0 0.0
      %6164 = vmatprep.subr.mxu0 0.0
      %6165 = vmatpush2.msra.mxu0 0.0
      %6166 = vmatprep.subr.mxu0 0.0
      %6167 = vmatpush2.msra.mxu0 0.0
      %6168 = vmatprep.mubr.f32.mxu0 0.0
      %6169 = vmatmul.mubr.f32.gmra.mxu0 %v6081
      %v6170 = vpop.f32.mrf.mxu0
      %v6171 = vadd.f32 0.0, %v6170
      %v6172 = vpop.f32.mrf.mxu0
      %6173 = vmatprep.mubr.f32.mxu0 0.0
      %6174 = vmatmul.mubr.f32.gmra.mxu0 %v6084
      %v6175 = vpop.f32.mrf.mxu0
      %v6176 = vadd.f32 0.0, %v6175
      %v6177 = vpop.f32.mrf.mxu0
      %6178 = vmatprep.mubr.f32.mxu0 0.0
      %6179 = vmatmul.mubr.f32.gmra.mxu0 %v6087
      %v6180 = vpop.f32.mrf.mxu0
      %v6181 = vadd.f32 0.0, %v6180
      %v6182 = vpop.f32.mrf.mxu0
      %6183 = vmatprep.mubr.f32.mxu0 0.0
      %6184 = vmatmul.mubr.f32.gmra.mxu0 %v6090
      %v6185 = vpop.f32.mrf.mxu0
      %v6186 = vadd.f32 0.0, %v6185
      %v6187 = vpop.f32.mrf.mxu0
      %6188 = vmatprep.mubr.f32.mxu0 0.0
      %6189 = vmatmul.mubr.f32.gmra.mxu0 %v6093
      %v6190 = vpop.f32.mrf.mxu0
      %v6191 = vadd.f32 0.0, %v6190
      %v6192 = vpop.f32.mrf.mxu0
      %6193 = vmatprep.mubr.f32.mxu0 0.0
      %6194 = vmatmul.mubr.f32.gmra.mxu0 %v6096
      %v6195 = vpop.f32.mrf.mxu0
      %v6196 = vadd.f32 0.0, %v6195
      %v6197 = vpop.f32.mrf.mxu0
      %6198 = vmatprep.mubr.f32.mxu0 0.0
      %6199 = vmatmul.mubr.f32.gmra.mxu0 %v6099
      %v6200 = vpop.f32.mrf.mxu0
      %v6201 = vadd.f32 0.0, %v6200
      %v6202 = vpop.f32.mrf.mxu0
      %6203 = vmatprep.mubr.f32.mxu0 0.0
      %6204 = vmatmul.mubr.f32.gmra.mxu0 %v6102
      %v6205 = vpop.f32.mrf.mxu0
      %v6206 = vadd.f32 0.0, %v6205
      %v6207 = vpop.f32.mrf.mxu0
      %6208 = vdwg.mxu0
      %6209 = vrot.lane.b32.xlu0 %v998, 112
      %v6210 = vpop.permute.xlu0 %6209
      %6211 = vrot.lane.b32.xlu0 %v1003, 112
      %v6212 = vpop.permute.xlu0 %6211
      %6213 = vrot.lane.b32.xlu0 %v1008, 112
      %v6214 = vpop.permute.xlu0 %6213
      %6215 = vrot.lane.b32.xlu0 %v1013, 112
      %v6216 = vpop.permute.xlu0 %6215
      %6217 = vrot.lane.b32.xlu0 %v1018, 112
      %v6218 = vpop.permute.xlu0 %6217
      %6219 = vrot.lane.b32.xlu0 %v1023, 112
      %v6220 = vpop.permute.xlu0 %6219
      %6221 = vrot.lane.b32.xlu0 %v1028, 112
      %v6222 = vpop.permute.xlu0 %6221
      %6223 = vrot.lane.b32.xlu0 %v1033, 112
      %v6224 = vpop.permute.xlu0 %6223
      %v6234 = vsel %vm1689, %v5887, 0
      %v6237 = vsel %vm1689, %v5888, 0
      %v6240 = vsel %vm1689, %v5889, 0
      %v6243 = vsel %vm1689, %v5890, 0
      %v6246 = vsel %vm1689, %v5891, 0
      %v6249 = vsel %vm1689, %v5892, 0
      %v6252 = vsel %vm1689, %v5893, 0
      %v6255 = vsel %vm1689, %v5894, 0
      %6257 = vmatprep.subr.mxu0 0.0
      %6258 = vmatpush1.msra.mxu0 0.0
      %6259 = vmatprep.subr.mxu0 0.0
      %6260 = vmatpush1.msra.mxu0 0.0
      %6261 = vmatprep.subr.mxu0 0.0
      %6262 = vmatpush1.msra.mxu0 0.0
      %6263 = vmatprep.subr.mxu0 0.0
      %6264 = vmatpush1.msra.mxu0 0.0
      %6265 = vmatprep.subr.mxu0 0.0
      %6266 = vmatpush1.msra.mxu0 0.0
      %6267 = vmatprep.subr.mxu0 0.0
      %6268 = vmatpush1.msra.mxu0 0.0
      %6269 = vmatprep.subr.mxu0 0.0
      %6270 = vmatpush1.msra.mxu0 0.0
      %6271 = vmatprep.subr.mxu0 0.0
      %6272 = vmatpush1.msra.mxu0 0.0
      %6273 = vmatprep.subr.mxu0 0.0
      %6274 = vmatpush1.msra.mxu0 %v6224
      %6275 = vmatprep.subr.mxu0 0.0
      %6276 = vmatpush1.msra.mxu0 %v6222
      %6277 = vmatprep.subr.mxu0 0.0
      %6278 = vmatpush1.msra.mxu0 %v6220
      %6279 = vmatprep.subr.mxu0 0.0
      %6280 = vmatpush1.msra.mxu0 %v6218
      %6281 = vmatprep.subr.mxu0 0.0
      %6282 = vmatpush1.msra.mxu0 %v6216
      %6283 = vmatprep.subr.mxu0 0.0
      %6284 = vmatpush1.msra.mxu0 %v6214
      %6285 = vmatprep.subr.mxu0 0.0
      %6286 = vmatpush1.msra.mxu0 %v6212
      %6287 = vmatprep.subr.mxu0 0.0
      %6288 = vmatpush1.msra.mxu0 %v6210
      %6289 = vmatprep.subr.mxu0 0.0
      %6290 = vmatpush2.msra.mxu0 0.0
      %6291 = vmatprep.subr.mxu0 0.0
      %6292 = vmatpush2.msra.mxu0 0.0
      %6293 = vmatprep.subr.mxu0 0.0
      %6294 = vmatpush2.msra.mxu0 0.0
      %6295 = vmatprep.subr.mxu0 0.0
      %6296 = vmatpush2.msra.mxu0 0.0
      %6297 = vmatprep.subr.mxu0 0.0
      %6298 = vmatpush2.msra.mxu0 0.0
      %6299 = vmatprep.subr.mxu0 0.0
      %6300 = vmatpush2.msra.mxu0 0.0
      %6301 = vmatprep.subr.mxu0 0.0
      %6302 = vmatpush2.msra.mxu0 0.0
      %6303 = vmatprep.subr.mxu0 0.0
      %6304 = vmatpush2.msra.mxu0 0.0
      %6305 = vmatprep.subr.mxu0 0.0
      %6306 = vmatpush2.msra.mxu0 0.0
      %6307 = vmatprep.subr.mxu0 0.0
      %6308 = vmatpush2.msra.mxu0 0.0
      %6309 = vmatprep.subr.mxu0 0.0
      %6310 = vmatpush2.msra.mxu0 0.0
      %6311 = vmatprep.subr.mxu0 0.0
      %6312 = vmatpush2.msra.mxu0 0.0
      %6313 = vmatprep.subr.mxu0 0.0
      %6314 = vmatpush2.msra.mxu0 0.0
      %6315 = vmatprep.subr.mxu0 0.0
      %6316 = vmatpush2.msra.mxu0 0.0
      %6317 = vmatprep.subr.mxu0 0.0
      %6318 = vmatpush2.msra.mxu0 0.0
      %6319 = vmatprep.subr.mxu0 0.0
      %6320 = vmatpush2.msra.mxu0 0.0
      %6321 = vmatprep.mubr.f32.mxu0 0.0
      %6322 = vmatmul.mubr.f32.gmra.mxu0 %v6234
      %v6323 = vpop.f32.mrf.mxu0
      %v6324 = vadd.f32 0.0, %v6323
      %v6325 = vpop.f32.mrf.mxu0
      %6326 = vmatprep.mubr.f32.mxu0 0.0
      %6327 = vmatmul.mubr.f32.gmra.mxu0 %v6237
      %v6328 = vpop.f32.mrf.mxu0
      %v6329 = vadd.f32 0.0, %v6328
      %v6330 = vpop.f32.mrf.mxu0
      %6331 = vmatprep.mubr.f32.mxu0 0.0
      %6332 = vmatmul.mubr.f32.gmra.mxu0 %v6240
      %v6333 = vpop.f32.mrf.mxu0
      %v6334 = vadd.f32 0.0, %v6333
      %v6335 = vpop.f32.mrf.mxu0
      %6336 = vmatprep.mubr.f32.mxu0 0.0
      %6337 = vmatmul.mubr.f32.gmra.mxu0 %v6243
      %v6338 = vpop.f32.mrf.mxu0
      %v6339 = vadd.f32 0.0, %v6338
      %v6340 = vpop.f32.mrf.mxu0
      %6341 = vmatprep.mubr.f32.mxu0 0.0
      %6342 = vmatmul.mubr.f32.gmra.mxu0 %v6246
      %v6343 = vpop.f32.mrf.mxu0
      %v6344 = vadd.f32 0.0, %v6343
      %v6345 = vpop.f32.mrf.mxu0
      %6346 = vmatprep.mubr.f32.mxu0 0.0
      %6347 = vmatmul.mubr.f32.gmra.mxu0 %v6249
      %v6348 = vpop.f32.mrf.mxu0
      %v6349 = vadd.f32 0.0, %v6348
      %v6350 = vpop.f32.mrf.mxu0
      %6351 = vmatprep.mubr.f32.mxu0 0.0
      %6352 = vmatmul.mubr.f32.gmra.mxu0 %v6252
      %v6353 = vpop.f32.mrf.mxu0
      %v6354 = vadd.f32 0.0, %v6353
      %v6355 = vpop.f32.mrf.mxu0
      %6356 = vmatprep.mubr.f32.mxu0 0.0
      %6357 = vmatmul.mubr.f32.gmra.mxu0 %v6255
      %v6358 = vpop.f32.mrf.mxu0
      %v6359 = vadd.f32 0.0, %v6358
      %v6360 = vpop.f32.mrf.mxu0
      %6361 = vdwg.mxu0
      %6362 = vrot.lane.b32.xlu0 %v1038, 112
      %v6363 = vpop.permute.xlu0 %6362
      %6364 = vrot.lane.b32.xlu0 %v1043, 112
      %v6365 = vpop.permute.xlu0 %6364
      %6366 = vrot.lane.b32.xlu0 %v1048, 112
      %v6367 = vpop.permute.xlu0 %6366
      %6368 = vrot.lane.b32.xlu0 %v1053, 112
      %v6369 = vpop.permute.xlu0 %6368
      %6370 = vrot.lane.b32.xlu0 %v1058, 112
      %v6371 = vpop.permute.xlu0 %6370
      %6372 = vrot.lane.b32.xlu0 %v1063, 112
      %v6373 = vpop.permute.xlu0 %6372
      %6374 = vrot.lane.b32.xlu0 %v1068, 112
      %v6375 = vpop.permute.xlu0 %6374
      %6376 = vrot.lane.b32.xlu0 %v1073, 112
      %v6377 = vpop.permute.xlu0 %6376
      %v6387 = vsel %vm1689, %v5895, 0
      %v6390 = vsel %vm1689, %v5896, 0
      %v6393 = vsel %vm1689, %v5897, 0
      %v6396 = vsel %vm1689, %v5898, 0
      %v6399 = vsel %vm1689, %v5899, 0
      %v6402 = vsel %vm1689, %v5900, 0
      %v6405 = vsel %vm1689, %v5901, 0
      %v6408 = vsel %vm1689, %v5902, 0
      %6410 = vmatprep.subr.mxu0 0.0
      %6411 = vmatpush1.msra.mxu0 0.0
      %6412 = vmatprep.subr.mxu0 0.0
      %6413 = vmatpush1.msra.mxu0 0.0
      %6414 = vmatprep.subr.mxu0 0.0
      %6415 = vmatpush1.msra.mxu0 0.0
      %6416 = vmatprep.subr.mxu0 0.0
      %6417 = vmatpush1.msra.mxu0 0.0
      %6418 = vmatprep.subr.mxu0 0.0
      %6419 = vmatpush1.msra.mxu0 0.0
      %6420 = vmatprep.subr.mxu0 0.0
      %6421 = vmatpush1.msra.mxu0 0.0
      %6422 = vmatprep.subr.mxu0 0.0
      %6423 = vmatpush1.msra.mxu0 0.0
      %6424 = vmatprep.subr.mxu0 0.0
      %6425 = vmatpush1.msra.mxu0 0.0
      %6426 = vmatprep.subr.mxu0 0.0
      %6427 = vmatpush1.msra.mxu0 %v6377
      %6428 = vmatprep.subr.mxu0 0.0
      %6429 = vmatpush1.msra.mxu0 %v6375
      %6430 = vmatprep.subr.mxu0 0.0
      %6431 = vmatpush1.msra.mxu0 %v6373
      %6432 = vmatprep.subr.mxu0 0.0
      %6433 = vmatpush1.msra.mxu0 %v6371
      %6434 = vmatprep.subr.mxu0 0.0
      %6435 = vmatpush1.msra.mxu0 %v6369
      %6436 = vmatprep.subr.mxu0 0.0
      %6437 = vmatpush1.msra.mxu0 %v6367
      %6438 = vmatprep.subr.mxu0 0.0
      %6439 = vmatpush1.msra.mxu0 %v6365
      %6440 = vmatprep.subr.mxu0 0.0
      %6441 = vmatpush1.msra.mxu0 %v6363
      %6442 = vmatprep.subr.mxu0 0.0
      %6443 = vmatpush2.msra.mxu0 0.0
      %6444 = vmatprep.subr.mxu0 0.0
      %6445 = vmatpush2.msra.mxu0 0.0
      %6446 = vmatprep.subr.mxu0 0.0
      %6447 = vmatpush2.msra.mxu0 0.0
      %6448 = vmatprep.subr.mxu0 0.0
      %6449 = vmatpush2.msra.mxu0 0.0
      %6450 = vmatprep.subr.mxu0 0.0
      %6451 = vmatpush2.msra.mxu0 0.0
      %6452 = vmatprep.subr.mxu0 0.0
      %6453 = vmatpush2.msra.mxu0 0.0
      %6454 = vmatprep.subr.mxu0 0.0
      %6455 = vmatpush2.msra.mxu0 0.0
      %6456 = vmatprep.subr.mxu0 0.0
      %6457 = vmatpush2.msra.mxu0 0.0
      %6458 = vmatprep.subr.mxu0 0.0
      %6459 = vmatpush2.msra.mxu0 0.0
      %6460 = vmatprep.subr.mxu0 0.0
      %6461 = vmatpush2.msra.mxu0 0.0
      %6462 = vmatprep.subr.mxu0 0.0
      %6463 = vmatpush2.msra.mxu0 0.0
      %6464 = vmatprep.subr.mxu0 0.0
      %6465 = vmatpush2.msra.mxu0 0.0
      %6466 = vmatprep.subr.mxu0 0.0
      %6467 = vmatpush2.msra.mxu0 0.0
      %6468 = vmatprep.subr.mxu0 0.0
      %6469 = vmatpush2.msra.mxu0 0.0
      %6470 = vmatprep.subr.mxu0 0.0
      %6471 = vmatpush2.msra.mxu0 0.0
      %6472 = vmatprep.subr.mxu0 0.0
      %6473 = vmatpush2.msra.mxu0 0.0
      %6474 = vmatprep.mubr.f32.mxu0 0.0
      %6475 = vmatmul.mubr.f32.gmra.mxu0 %v6387
      %v6476 = vpop.f32.mrf.mxu0
      %v6477 = vadd.f32 0.0, %v6476
      %v6478 = vpop.f32.mrf.mxu0
      %6479 = vmatprep.mubr.f32.mxu0 0.0
      %6480 = vmatmul.mubr.f32.gmra.mxu0 %v6390
      %v6481 = vpop.f32.mrf.mxu0
      %v6482 = vadd.f32 0.0, %v6481
      %v6483 = vpop.f32.mrf.mxu0
      %6484 = vmatprep.mubr.f32.mxu0 0.0
      %6485 = vmatmul.mubr.f32.gmra.mxu0 %v6393
      %v6486 = vpop.f32.mrf.mxu0
      %v6487 = vadd.f32 0.0, %v6486
      %v6488 = vpop.f32.mrf.mxu0
      %6489 = vmatprep.mubr.f32.mxu0 0.0
      %6490 = vmatmul.mubr.f32.gmra.mxu0 %v6396
      %v6491 = vpop.f32.mrf.mxu0
      %v6492 = vadd.f32 0.0, %v6491
      %v6493 = vpop.f32.mrf.mxu0
      %6494 = vmatprep.mubr.f32.mxu0 0.0
      %6495 = vmatmul.mubr.f32.gmra.mxu0 %v6399
      %v6496 = vpop.f32.mrf.mxu0
      %v6497 = vadd.f32 0.0, %v6496
      %v6498 = vpop.f32.mrf.mxu0
      %6499 = vmatprep.mubr.f32.mxu0 0.0
      %6500 = vmatmul.mubr.f32.gmra.mxu0 %v6402
      %v6501 = vpop.f32.mrf.mxu0
      %v6502 = vadd.f32 0.0, %v6501
      %v6503 = vpop.f32.mrf.mxu0
      %6504 = vmatprep.mubr.f32.mxu0 0.0
      %6505 = vmatmul.mubr.f32.gmra.mxu0 %v6405
      %v6506 = vpop.f32.mrf.mxu0
      %v6507 = vadd.f32 0.0, %v6506
      %v6508 = vpop.f32.mrf.mxu0
      %6509 = vmatprep.mubr.f32.mxu0 0.0
      %6510 = vmatmul.mubr.f32.gmra.mxu0 %v6408
      %v6511 = vpop.f32.mrf.mxu0
      %v6512 = vadd.f32 0.0, %v6511
      %v6513 = vpop.f32.mrf.mxu0
      %6514 = vdwg.mxu0
      %s6515 = scalar_lea.vmem %s4, 16
      %v6516 = vld [vmem:[%s6515] sm:$0xff]
      %v6518 = vsel %vm1076, %v6018, 0
      %v6521 = vsel %vm1076, %v6023, 0
      %v6524 = vsel %vm1076, %v6028, 0
      %v6527 = vsel %vm1076, %v6033, 0
      %v6530 = vsel %vm1076, %v6038, 0
      %v6533 = vsel %vm1076, %v6043, 0
      %v6536 = vsel %vm1076, %v6048, 0
      %v6539 = vsel %vm1076, %v6053, 0
      %v6542 = vsel %vm1076, %v6171, 0
      %v6545 = vsel %vm1076, %v6176, 0
      %v6548 = vsel %vm1076, %v6181, 0
      %v6551 = vsel %vm1076, %v6186, 0
      %v6554 = vsel %vm1076, %v6191, 0
      %v6557 = vsel %vm1076, %v6196, 0
      %v6560 = vsel %vm1076, %v6201, 0
      %v6563 = vsel %vm1076, %v6206, 0
      %v6566 = vsel %vm1076, %v6324, 0
      %v6569 = vsel %vm1076, %v6329, 0
      %v6572 = vsel %vm1076, %v6334, 0
      %v6575 = vsel %vm1076, %v6339, 0
      %v6578 = vsel %vm1076, %v6344, 0
      %v6581 = vsel %vm1076, %v6349, 0
      %v6584 = vsel %vm1076, %v6354, 0
      %v6587 = vsel %vm1076, %v6359, 0
      %v6590 = vsel %vm1076, %v6477, 0
      %v6593 = vsel %vm1076, %v6482, 0
      %v6596 = vsel %vm1076, %v6487, 0
      %v6599 = vsel %vm1076, %v6492, 0
      %v6602 = vsel %vm1076, %v6497, 0
      %v6605 = vsel %vm1076, %v6502, 0
      %v6608 = vsel %vm1076, %v6507, 0
      %v6611 = vsel %vm1076, %v6512, 0
      %6613 = vmatprep.subr.mxu0 0.0
      %6614 = vmatpush1.msra.mxu0 0.0
      %6615 = vmatprep.subr.mxu0 0.0
      %6616 = vmatpush1.msra.mxu0 0.0
      %6617 = vmatprep.subr.mxu0 0.0
      %6618 = vmatpush1.msra.mxu0 0.0
      %6619 = vmatprep.subr.mxu0 0.0
      %6620 = vmatpush1.msra.mxu0 0.0
      %6621 = vmatprep.subr.mxu0 0.0
      %6622 = vmatpush1.msra.mxu0 0.0
      %6623 = vmatprep.subr.mxu0 0.0
      %6624 = vmatpush1.msra.mxu0 0.0
      %6625 = vmatprep.subr.mxu0 0.0
      %6626 = vmatpush1.msra.mxu0 0.0
      %6627 = vmatprep.subr.mxu0 0.0
      %6628 = vmatpush1.msra.mxu0 0.0
      %6629 = vmatprep.subr.mxu0 0.0
      %6630 = vmatpush1.msra.mxu0 0.0
      %6631 = vmatprep.subr.mxu0 0.0
      %6632 = vmatpush1.msra.mxu0 0.0
      %6633 = vmatprep.subr.mxu0 0.0
      %6634 = vmatpush1.msra.mxu0 0.0
      %6635 = vmatprep.subr.mxu0 0.0
      %6636 = vmatpush1.msra.mxu0 0.0
      %6637 = vmatprep.subr.mxu0 0.0
      %6638 = vmatpush1.msra.mxu0 0.0
      %6639 = vmatprep.subr.mxu0 0.0
      %6640 = vmatpush1.msra.mxu0 0.0
      %6641 = vmatprep.subr.mxu0 0.0
      %6642 = vmatpush1.msra.mxu0 0.0
      %6643 = vmatprep.subr.mxu0 0.0
      %6644 = vmatpush1.msra.mxu0 %v6516
      %6645 = vmatprep.subr.mxu0 0.0
      %6646 = vmatpush2.msra.mxu0 0.0
      %6647 = vmatprep.subr.mxu0 0.0
      %6648 = vmatpush2.msra.mxu0 0.0
      %6649 = vmatprep.subr.mxu0 0.0
      %6650 = vmatpush2.msra.mxu0 0.0
      %6651 = vmatprep.subr.mxu0 0.0
      %6652 = vmatpush2.msra.mxu0 0.0
      %6653 = vmatprep.subr.mxu0 0.0
      %6654 = vmatpush2.msra.mxu0 0.0
      %6655 = vmatprep.subr.mxu0 0.0
      %6656 = vmatpush2.msra.mxu0 0.0
      %6657 = vmatprep.subr.mxu0 0.0
      %6658 = vmatpush2.msra.mxu0 0.0
      %6659 = vmatprep.subr.mxu0 0.0
      %6660 = vmatpush2.msra.mxu0 0.0
      %6661 = vmatprep.subr.mxu0 0.0
      %6662 = vmatpush2.msra.mxu0 0.0
      %6663 = vmatprep.subr.mxu0 0.0
      %6664 = vmatpush2.msra.mxu0 0.0
      %6665 = vmatprep.subr.mxu0 0.0
      %6666 = vmatpush2.msra.mxu0 0.0
      %6667 = vmatprep.subr.mxu0 0.0
      %6668 = vmatpush2.msra.mxu0 0.0
      %6669 = vmatprep.subr.mxu0 0.0
      %6670 = vmatpush2.msra.mxu0 0.0
      %6671 = vmatprep.subr.mxu0 0.0
      %6672 = vmatpush2.msra.mxu0 0.0
      %6673 = vmatprep.subr.mxu0 0.0
      %6674 = vmatpush2.msra.mxu0 0.0
      %6675 = vmatprep.subr.mxu0 0.0
      %6676 = vmatpush2.msra.mxu0 0.0
      %6677 = vmatprep.mubr.f32.mxu0 0.0
      %6678 = vmatmul.mubr.f32.gmra.mxu0 %v6518
      %v6679 = vpop.f32.mrf.mxu0
      %v6680 = vadd.f32 0.0, %v6679
      %v6681 = vpop.f32.mrf.mxu0
      %6682 = vmatprep.mubr.f32.mxu0 0.0
      %6683 = vmatmul.mubr.f32.gmra.mxu0 %v6521
      %v6684 = vpop.f32.mrf.mxu0
      %v6685 = vadd.f32 0.0, %v6684
      %v6686 = vpop.f32.mrf.mxu0
      %6687 = vmatprep.mubr.f32.mxu0 0.0
      %6688 = vmatmul.mubr.f32.gmra.mxu0 %v6524
      %v6689 = vpop.f32.mrf.mxu0
      %v6690 = vadd.f32 0.0, %v6689
      %v6691 = vpop.f32.mrf.mxu0
      %6692 = vmatprep.mubr.f32.mxu0 0.0
      %6693 = vmatmul.mubr.f32.gmra.mxu0 %v6527
      %v6694 = vpop.f32.mrf.mxu0
      %v6695 = vadd.f32 0.0, %v6694
      %v6696 = vpop.f32.mrf.mxu0
      %6697 = vmatprep.mubr.f32.mxu0 0.0
      %6698 = vmatmul.mubr.f32.gmra.mxu0 %v6530
      %v6699 = vpop.f32.mrf.mxu0
      %v6700 = vadd.f32 0.0, %v6699
      %v6701 = vpop.f32.mrf.mxu0
      %6702 = vmatprep.mubr.f32.mxu0 0.0
      %6703 = vmatmul.mubr.f32.gmra.mxu0 %v6533
      %v6704 = vpop.f32.mrf.mxu0
      %v6705 = vadd.f32 0.0, %v6704
      %v6706 = vpop.f32.mrf.mxu0
      %6707 = vmatprep.mubr.f32.mxu0 0.0
      %6708 = vmatmul.mubr.f32.gmra.mxu0 %v6536
      %v6709 = vpop.f32.mrf.mxu0
      %v6710 = vadd.f32 0.0, %v6709
      %v6711 = vpop.f32.mrf.mxu0
      %6712 = vmatprep.mubr.f32.mxu0 0.0
      %6713 = vmatmul.mubr.f32.gmra.mxu0 %v6539
      %v6714 = vpop.f32.mrf.mxu0
      %v6715 = vadd.f32 0.0, %v6714
      %v6716 = vpop.f32.mrf.mxu0
      %6717 = vmatprep.mubr.f32.mxu0 0.0
      %6718 = vmatmul.mubr.f32.gmra.mxu0 %v6542
      %v6719 = vpop.f32.mrf.mxu0
      %v6720 = vadd.f32 0.0, %v6719
      %v6721 = vpop.f32.mrf.mxu0
      %6722 = vmatprep.mubr.f32.mxu0 0.0
      %6723 = vmatmul.mubr.f32.gmra.mxu0 %v6545
      %v6724 = vpop.f32.mrf.mxu0
      %v6725 = vadd.f32 0.0, %v6724
      %v6726 = vpop.f32.mrf.mxu0
      %6727 = vmatprep.mubr.f32.mxu0 0.0
      %6728 = vmatmul.mubr.f32.gmra.mxu0 %v6548
      %v6729 = vpop.f32.mrf.mxu0
      %v6730 = vadd.f32 0.0, %v6729
      %v6731 = vpop.f32.mrf.mxu0
      %6732 = vmatprep.mubr.f32.mxu0 0.0
      %6733 = vmatmul.mubr.f32.gmra.mxu0 %v6551
      %v6734 = vpop.f32.mrf.mxu0
      %v6735 = vadd.f32 0.0, %v6734
      %v6736 = vpop.f32.mrf.mxu0
      %6737 = vmatprep.mubr.f32.mxu0 0.0
      %6738 = vmatmul.mubr.f32.gmra.mxu0 %v6554
      %v6739 = vpop.f32.mrf.mxu0
      %v6740 = vadd.f32 0.0, %v6739
      %v6741 = vpop.f32.mrf.mxu0
      %6742 = vmatprep.mubr.f32.mxu0 0.0
      %6743 = vmatmul.mubr.f32.gmra.mxu0 %v6557
      %v6744 = vpop.f32.mrf.mxu0
      %v6745 = vadd.f32 0.0, %v6744
      %v6746 = vpop.f32.mrf.mxu0
      %6747 = vmatprep.mubr.f32.mxu0 0.0
      %6748 = vmatmul.mubr.f32.gmra.mxu0 %v6560
      %v6749 = vpop.f32.mrf.mxu0
      %v6750 = vadd.f32 0.0, %v6749
      %v6751 = vpop.f32.mrf.mxu0
      %6752 = vmatprep.mubr.f32.mxu0 0.0
      %6753 = vmatmul.mubr.f32.gmra.mxu0 %v6563
      %v6754 = vpop.f32.mrf.mxu0
      %v6755 = vadd.f32 0.0, %v6754
      %v6756 = vpop.f32.mrf.mxu0
      %6757 = vmatprep.mubr.f32.mxu0 0.0
      %6758 = vmatmul.mubr.f32.gmra.mxu0 %v6566
      %v6759 = vpop.f32.mrf.mxu0
      %v6760 = vadd.f32 0.0, %v6759
      %v6761 = vpop.f32.mrf.mxu0
      %6762 = vmatprep.mubr.f32.mxu0 0.0
      %6763 = vmatmul.mubr.f32.gmra.mxu0 %v6569
      %v6764 = vpop.f32.mrf.mxu0
      %v6765 = vadd.f32 0.0, %v6764
      %v6766 = vpop.f32.mrf.mxu0
      %6767 = vmatprep.mubr.f32.mxu0 0.0
      %6768 = vmatmul.mubr.f32.gmra.mxu0 %v6572
      %v6769 = vpop.f32.mrf.mxu0
      %v6770 = vadd.f32 0.0, %v6769
      %v6771 = vpop.f32.mrf.mxu0
      %6772 = vmatprep.mubr.f32.mxu0 0.0
      %6773 = vmatmul.mubr.f32.gmra.mxu0 %v6575
      %v6774 = vpop.f32.mrf.mxu0
      %v6775 = vadd.f32 0.0, %v6774
      %v6776 = vpop.f32.mrf.mxu0
      %6777 = vmatprep.mubr.f32.mxu0 0.0
      %6778 = vmatmul.mubr.f32.gmra.mxu0 %v6578
      %v6779 = vpop.f32.mrf.mxu0
      %v6780 = vadd.f32 0.0, %v6779
      %v6781 = vpop.f32.mrf.mxu0
      %6782 = vmatprep.mubr.f32.mxu0 0.0
      %6783 = vmatmul.mubr.f32.gmra.mxu0 %v6581
      %v6784 = vpop.f32.mrf.mxu0
      %v6785 = vadd.f32 0.0, %v6784
      %v6786 = vpop.f32.mrf.mxu0
      %6787 = vmatprep.mubr.f32.mxu0 0.0
      %6788 = vmatmul.mubr.f32.gmra.mxu0 %v6584
      %v6789 = vpop.f32.mrf.mxu0
      %v6790 = vadd.f32 0.0, %v6789
      %v6791 = vpop.f32.mrf.mxu0
      %6792 = vmatprep.mubr.f32.mxu0 0.0
      %6793 = vmatmul.mubr.f32.gmra.mxu0 %v6587
      %v6794 = vpop.f32.mrf.mxu0
      %v6795 = vadd.f32 0.0, %v6794
      %v6796 = vpop.f32.mrf.mxu0
      %6797 = vmatprep.mubr.f32.mxu0 0.0
      %6798 = vmatmul.mubr.f32.gmra.mxu0 %v6590
      %v6799 = vpop.f32.mrf.mxu0
      %v6800 = vadd.f32 0.0, %v6799
      %v6801 = vpop.f32.mrf.mxu0
      %6802 = vmatprep.mubr.f32.mxu0 0.0
      %6803 = vmatmul.mubr.f32.gmra.mxu0 %v6593
      %v6804 = vpop.f32.mrf.mxu0
      %v6805 = vadd.f32 0.0, %v6804
      %v6806 = vpop.f32.mrf.mxu0
      %6807 = vmatprep.mubr.f32.mxu0 0.0
      %6808 = vmatmul.mubr.f32.gmra.mxu0 %v6596
      %v6809 = vpop.f32.mrf.mxu0
      %v6810 = vadd.f32 0.0, %v6809
      %v6811 = vpop.f32.mrf.mxu0
      %6812 = vmatprep.mubr.f32.mxu0 0.0
      %6813 = vmatmul.mubr.f32.gmra.mxu0 %v6599
      %v6814 = vpop.f32.mrf.mxu0
      %v6815 = vadd.f32 0.0, %v6814
      %v6816 = vpop.f32.mrf.mxu0
      %6817 = vmatprep.mubr.f32.mxu0 0.0
      %6818 = vmatmul.mubr.f32.gmra.mxu0 %v6602
      %v6819 = vpop.f32.mrf.mxu0
      %v6820 = vadd.f32 0.0, %v6819
      %v6821 = vpop.f32.mrf.mxu0
      %6822 = vmatprep.mubr.f32.mxu0 0.0
      %6823 = vmatmul.mubr.f32.gmra.mxu0 %v6605
      %v6824 = vpop.f32.mrf.mxu0
      %v6825 = vadd.f32 0.0, %v6824
      %v6826 = vpop.f32.mrf.mxu0
      %6827 = vmatprep.mubr.f32.mxu0 0.0
      %6828 = vmatmul.mubr.f32.gmra.mxu0 %v6608
      %v6829 = vpop.f32.mrf.mxu0
      %v6830 = vadd.f32 0.0, %v6829
      %v6831 = vpop.f32.mrf.mxu0
      %6832 = vmatprep.mubr.f32.mxu0 0.0
      %6833 = vmatmul.mubr.f32.gmra.mxu0 %v6611
      %v6834 = vpop.f32.mrf.mxu0
      %v6835 = vadd.f32 0.0, %v6834
      %v6836 = vpop.f32.mrf.mxu0
      %6837 = vdwg.mxu0
      %v6838 = vadd.f32 %v4717, %v6680
      %v6839 = vadd.f32 %v4722, %v6685
      %v6840 = vadd.f32 %v4727, %v6690
      %v6841 = vadd.f32 %v4732, %v6695
      %v6842 = vadd.f32 %v4737, %v6700
      %v6843 = vadd.f32 %v4742, %v6705
      %v6844 = vadd.f32 %v4747, %v6710
      %v6845 = vadd.f32 %v4752, %v6715
      %v6846 = vadd.f32 %v4757, %v6720
      %v6847 = vadd.f32 %v4762, %v6725
      %v6848 = vadd.f32 %v4767, %v6730
      %v6849 = vadd.f32 %v4772, %v6735
      %v6850 = vadd.f32 %v4777, %v6740
      %v6851 = vadd.f32 %v4782, %v6745
      %v6852 = vadd.f32 %v4787, %v6750
      %v6853 = vadd.f32 %v4792, %v6755
      %v6854 = vadd.f32 %v4797, %v6760
      %v6855 = vadd.f32 %v4802, %v6765
      %v6856 = vadd.f32 %v4807, %v6770
      %v6857 = vadd.f32 %v4812, %v6775
      %v6858 = vadd.f32 %v4817, %v6780
      %v6859 = vadd.f32 %v4822, %v6785
      %v6860 = vadd.f32 %v4827, %v6790
      %v6861 = vadd.f32 %v4832, %v6795
      %v6862 = vadd.f32 %v4837, %v6800
      %v6863 = vadd.f32 %v4842, %v6805
      %v6864 = vadd.f32 %v4847, %v6810
      %v6865 = vadd.f32 %v4852, %v6815
      %v6866 = vadd.f32 %v4857, %v6820
      %v6867 = vadd.f32 %v4862, %v6825
      %v6868 = vadd.f32 %v4867, %v6830
      %v6869 = vadd.f32 %v4872, %v6835
      %6870 = vrot.lane.b32.xlu0 %v460, 104
      %v6871 = vpop.permute.xlu0 %6870
      %6872 = vrot.lane.b32.xlu0 %v465, 104
      %v6873 = vpop.permute.xlu0 %6872
      %6874 = vrot.lane.b32.xlu0 %v470, 104
      %v6875 = vpop.permute.xlu0 %6874
      %6876 = vrot.lane.b32.xlu0 %v475, 104
      %v6877 = vpop.permute.xlu0 %6876
      %6878 = vrot.lane.b32.xlu0 %v480, 104
      %v6879 = vpop.permute.xlu0 %6878
      %6880 = vrot.lane.b32.xlu0 %v485, 104
      %v6881 = vpop.permute.xlu0 %6880
      %6882 = vrot.lane.b32.xlu0 %v490, 104
      %v6883 = vpop.permute.xlu0 %6882
      %6884 = vrot.lane.b32.xlu0 %v495, 104
      %v6885 = vpop.permute.xlu0 %6884
      %6886 = vrot.lane.b32.xlu0 %v689, 104
      %v6887 = vpop.permute.xlu0 %6886
      %6888 = vrot.lane.b32.xlu0 %v694, 104
      %v6889 = vpop.permute.xlu0 %6888
      %6890 = vrot.lane.b32.xlu0 %v699, 104
      %v6891 = vpop.permute.xlu0 %6890
      %6892 = vrot.lane.b32.xlu0 %v704, 104
      %v6893 = vpop.permute.xlu0 %6892
      %6894 = vrot.lane.b32.xlu0 %v709, 104
      %v6895 = vpop.permute.xlu0 %6894
      %6896 = vrot.lane.b32.xlu0 %v714, 104
      %v6897 = vpop.permute.xlu0 %6896
      %6898 = vrot.lane.b32.xlu0 %v719, 104
      %v6899 = vpop.permute.xlu0 %6898
      %6900 = vrot.lane.b32.xlu0 %v724, 104
      %v6901 = vpop.permute.xlu0 %6900
      %v6902 = vsel %vm1076, %v6871, 0
      %v6904 = vsel %vm1076, %v6873, 0
      %v6906 = vsel %vm1076, %v6875, 0
      %v6908 = vsel %vm1076, %v6877, 0
      %v6910 = vsel %vm1076, %v6879, 0
      %v6912 = vsel %vm1076, %v6881, 0
      %v6914 = vsel %vm1076, %v6883, 0
      %v6916 = vsel %vm1076, %v6885, 0
      %v6918 = vsel %vm1076, %v6887, 0
      %v6920 = vsel %vm1076, %v6889, 0
      %v6922 = vsel %vm1076, %v6891, 0
      %v6924 = vsel %vm1076, %v6893, 0
      %v6926 = vsel %vm1076, %v6895, 0
      %v6928 = vsel %vm1076, %v6897, 0
      %v6930 = vsel %vm1076, %v6899, 0
      %v6932 = vsel %vm1076, %v6901, 0
      %6934 = vmatprep.subr.mxu0 0.0
      %6935 = vmatpush1.xpose.msra.mxu0 0.0
      %6936 = vmatprep.subr.mxu0 0.0
      %6937 = vmatpush1.xpose.msra.mxu0 0.0
      %6938 = vmatprep.subr.mxu0 0.0
      %6939 = vmatpush1.xpose.msra.mxu0 0.0
      %6940 = vmatprep.subr.mxu0 0.0
      %6941 = vmatpush1.xpose.msra.mxu0 0.0
      %6942 = vmatprep.subr.mxu0 0.0
      %6943 = vmatpush1.xpose.msra.mxu0 0.0
      %6944 = vmatprep.subr.mxu0 0.0
      %6945 = vmatpush1.xpose.msra.mxu0 0.0
      %6946 = vmatprep.subr.mxu0 0.0
      %6947 = vmatpush1.xpose.msra.mxu0 0.0
      %6948 = vmatprep.subr.mxu0 0.0
      %6949 = vmatpush1.xpose.msra.mxu0 0.0
      %6950 = vmatprep.subr.mxu0 0.0
      %6951 = vmatpush1.xpose.msra.mxu0 %v6932
      %6952 = vmatprep.subr.mxu0 0.0
      %6953 = vmatpush1.xpose.msra.mxu0 %v6930
      %6954 = vmatprep.subr.mxu0 0.0
      %6955 = vmatpush1.xpose.msra.mxu0 %v6928
      %6956 = vmatprep.subr.mxu0 0.0
      %6957 = vmatpush1.xpose.msra.mxu0 %v6926
      %6958 = vmatprep.subr.mxu0 0.0
      %6959 = vmatpush1.xpose.msra.mxu0 %v6924
      %6960 = vmatprep.subr.mxu0 0.0
      %6961 = vmatpush1.xpose.msra.mxu0 %v6922
      %6962 = vmatprep.subr.mxu0 0.0
      %6963 = vmatpush1.xpose.msra.mxu0 %v6920
      %6964 = vmatprep.subr.mxu0 0.0
      %6965 = vmatpush1.xpose.msra.mxu0 %v6918
      %6966 = vmatprep.subr.mxu0 0.0
      %6967 = vmatpush2.xpose.msra.mxu0 0.0
      %6968 = vmatprep.subr.mxu0 0.0
      %6969 = vmatpush2.xpose.msra.mxu0 0.0
      %6970 = vmatprep.subr.mxu0 0.0
      %6971 = vmatpush2.xpose.msra.mxu0 0.0
      %6972 = vmatprep.subr.mxu0 0.0
      %6973 = vmatpush2.xpose.msra.mxu0 0.0
      %6974 = vmatprep.subr.mxu0 0.0
      %6975 = vmatpush2.xpose.msra.mxu0 0.0
      %6976 = vmatprep.subr.mxu0 0.0
      %6977 = vmatpush2.xpose.msra.mxu0 0.0
      %6978 = vmatprep.subr.mxu0 0.0
      %6979 = vmatpush2.xpose.msra.mxu0 0.0
      %6980 = vmatprep.subr.mxu0 0.0
      %6981 = vmatpush2.xpose.msra.mxu0 0.0
      %6982 = vmatprep.subr.mxu0 0.0
      %6983 = vmatpush2.xpose.msra.mxu0 0.0
      %6984 = vmatprep.subr.mxu0 0.0
      %6985 = vmatpush2.xpose.msra.mxu0 0.0
      %6986 = vmatprep.subr.mxu0 0.0
      %6987 = vmatpush2.xpose.msra.mxu0 0.0
      %6988 = vmatprep.subr.mxu0 0.0
      %6989 = vmatpush2.xpose.msra.mxu0 0.0
      %6990 = vmatprep.subr.mxu0 0.0
      %6991 = vmatpush2.xpose.msra.mxu0 0.0
      %6992 = vmatprep.subr.mxu0 0.0
      %6993 = vmatpush2.xpose.msra.mxu0 0.0
      %6994 = vmatprep.subr.mxu0 0.0
      %6995 = vmatpush2.xpose.msra.mxu0 0.0
      %6996 = vmatprep.subr.mxu0 0.0
      %6997 = vmatpush2.xpose.msra.mxu0 0.0
      %6998 = vmatprep.mubr.f32.mxu0 0.0
      %6999 = vmatmul.mubr.f32.gmra.mxu0 %v6902
      %v7000 = vpop.f32.mrf.mxu0
      %v7001 = vadd.f32 0.0, %v7000
      %v7002 = vpop.f32.mrf.mxu0
      %7003 = vmatprep.mubr.f32.mxu0 0.0
      %7004 = vmatmul.mubr.f32.gmra.mxu0 %v6904
      %v7005 = vpop.f32.mrf.mxu0
      %v7006 = vadd.f32 0.0, %v7005
      %v7007 = vpop.f32.mrf.mxu0
      %7008 = vmatprep.mubr.f32.mxu0 0.0
      %7009 = vmatmul.mubr.f32.gmra.mxu0 %v6906
      %v7010 = vpop.f32.mrf.mxu0
      %v7011 = vadd.f32 0.0, %v7010
      %v7012 = vpop.f32.mrf.mxu0
      %7013 = vmatprep.mubr.f32.mxu0 0.0
      %7014 = vmatmul.mubr.f32.gmra.mxu0 %v6908
      %v7015 = vpop.f32.mrf.mxu0
      %v7016 = vadd.f32 0.0, %v7015
      %v7017 = vpop.f32.mrf.mxu0
      %7018 = vmatprep.mubr.f32.mxu0 0.0
      %7019 = vmatmul.mubr.f32.gmra.mxu0 %v6910
      %v7020 = vpop.f32.mrf.mxu0
      %v7021 = vadd.f32 0.0, %v7020
      %v7022 = vpop.f32.mrf.mxu0
      %7023 = vmatprep.mubr.f32.mxu0 0.0
      %7024 = vmatmul.mubr.f32.gmra.mxu0 %v6912
      %v7025 = vpop.f32.mrf.mxu0
      %v7026 = vadd.f32 0.0, %v7025
      %v7027 = vpop.f32.mrf.mxu0
      %7028 = vmatprep.mubr.f32.mxu0 0.0
      %7029 = vmatmul.mubr.f32.gmra.mxu0 %v6914
      %v7030 = vpop.f32.mrf.mxu0
      %v7031 = vadd.f32 0.0, %v7030
      %v7032 = vpop.f32.mrf.mxu0
      %7033 = vmatprep.mubr.f32.mxu0 0.0
      %7034 = vmatmul.mubr.f32.gmra.mxu0 %v6916
      %v7035 = vpop.f32.mrf.mxu0
      %v7036 = vadd.f32 0.0, %v7035
      %v7037 = vpop.f32.mrf.mxu0
      %7038 = vdwg.mxu0
      %7039 = vrot.lane.b32.xlu0 %v500, 104
      %v7040 = vpop.permute.xlu0 %7039
      %7041 = vrot.lane.b32.xlu0 %v505, 104
      %v7042 = vpop.permute.xlu0 %7041
      %7043 = vrot.lane.b32.xlu0 %v510, 104
      %v7044 = vpop.permute.xlu0 %7043
      %7045 = vrot.lane.b32.xlu0 %v515, 104
      %v7046 = vpop.permute.xlu0 %7045
      %7047 = vrot.lane.b32.xlu0 %v520, 104
      %v7048 = vpop.permute.xlu0 %7047
      %7049 = vrot.lane.b32.xlu0 %v525, 104
      %v7050 = vpop.permute.xlu0 %7049
      %7051 = vrot.lane.b32.xlu0 %v530, 104
      %v7052 = vpop.permute.xlu0 %7051
      %7053 = vrot.lane.b32.xlu0 %v535, 104
      %v7054 = vpop.permute.xlu0 %7053
      %7055 = vrot.lane.b32.xlu0 %v729, 104
      %v7056 = vpop.permute.xlu0 %7055
      %7057 = vrot.lane.b32.xlu0 %v734, 104
      %v7058 = vpop.permute.xlu0 %7057
      %7059 = vrot.lane.b32.xlu0 %v739, 104
      %v7060 = vpop.permute.xlu0 %7059
      %7061 = vrot.lane.b32.xlu0 %v744, 104
      %v7062 = vpop.permute.xlu0 %7061
      %7063 = vrot.lane.b32.xlu0 %v749, 104
      %v7064 = vpop.permute.xlu0 %7063
      %7065 = vrot.lane.b32.xlu0 %v754, 104
      %v7066 = vpop.permute.xlu0 %7065
      %7067 = vrot.lane.b32.xlu0 %v759, 104
      %v7068 = vpop.permute.xlu0 %7067
      %7069 = vrot.lane.b32.xlu0 %v764, 104
      %v7070 = vpop.permute.xlu0 %7069
      %v7071 = vsel %vm1076, %v7040, 0
      %v7073 = vsel %vm1076, %v7042, 0
      %v7075 = vsel %vm1076, %v7044, 0
      %v7077 = vsel %vm1076, %v7046, 0
      %v7079 = vsel %vm1076, %v7048, 0
      %v7081 = vsel %vm1076, %v7050, 0
      %v7083 = vsel %vm1076, %v7052, 0
      %v7085 = vsel %vm1076, %v7054, 0
      %v7087 = vsel %vm1076, %v7056, 0
      %v7089 = vsel %vm1076, %v7058, 0
      %v7091 = vsel %vm1076, %v7060, 0
      %v7093 = vsel %vm1076, %v7062, 0
      %v7095 = vsel %vm1076, %v7064, 0
      %v7097 = vsel %vm1076, %v7066, 0
      %v7099 = vsel %vm1076, %v7068, 0
      %v7101 = vsel %vm1076, %v7070, 0
      %7103 = vmatprep.subr.mxu0 0.0
      %7104 = vmatpush1.xpose.msra.mxu0 0.0
      %7105 = vmatprep.subr.mxu0 0.0
      %7106 = vmatpush1.xpose.msra.mxu0 0.0
      %7107 = vmatprep.subr.mxu0 0.0
      %7108 = vmatpush1.xpose.msra.mxu0 0.0
      %7109 = vmatprep.subr.mxu0 0.0
      %7110 = vmatpush1.xpose.msra.mxu0 0.0
      %7111 = vmatprep.subr.mxu0 0.0
      %7112 = vmatpush1.xpose.msra.mxu0 0.0
      %7113 = vmatprep.subr.mxu0 0.0
      %7114 = vmatpush1.xpose.msra.mxu0 0.0
      %7115 = vmatprep.subr.mxu0 0.0
      %7116 = vmatpush1.xpose.msra.mxu0 0.0
      %7117 = vmatprep.subr.mxu0 0.0
      %7118 = vmatpush1.xpose.msra.mxu0 0.0
      %7119 = vmatprep.subr.mxu0 0.0
      %7120 = vmatpush1.xpose.msra.mxu0 %v7101
      %7121 = vmatprep.subr.mxu0 0.0
      %7122 = vmatpush1.xpose.msra.mxu0 %v7099
      %7123 = vmatprep.subr.mxu0 0.0
      %7124 = vmatpush1.xpose.msra.mxu0 %v7097
      %7125 = vmatprep.subr.mxu0 0.0
      %7126 = vmatpush1.xpose.msra.mxu0 %v7095
      %7127 = vmatprep.subr.mxu0 0.0
      %7128 = vmatpush1.xpose.msra.mxu0 %v7093
      %7129 = vmatprep.subr.mxu0 0.0
      %7130 = vmatpush1.xpose.msra.mxu0 %v7091
      %7131 = vmatprep.subr.mxu0 0.0
      %7132 = vmatpush1.xpose.msra.mxu0 %v7089
      %7133 = vmatprep.subr.mxu0 0.0
      %7134 = vmatpush1.xpose.msra.mxu0 %v7087
      %7135 = vmatprep.subr.mxu0 0.0
      %7136 = vmatpush2.xpose.msra.mxu0 0.0
      %7137 = vmatprep.subr.mxu0 0.0
      %7138 = vmatpush2.xpose.msra.mxu0 0.0
      %7139 = vmatprep.subr.mxu0 0.0
      %7140 = vmatpush2.xpose.msra.mxu0 0.0
      %7141 = vmatprep.subr.mxu0 0.0
      %7142 = vmatpush2.xpose.msra.mxu0 0.0
      %7143 = vmatprep.subr.mxu0 0.0
      %7144 = vmatpush2.xpose.msra.mxu0 0.0
      %7145 = vmatprep.subr.mxu0 0.0
      %7146 = vmatpush2.xpose.msra.mxu0 0.0
      %7147 = vmatprep.subr.mxu0 0.0
      %7148 = vmatpush2.xpose.msra.mxu0 0.0
      %7149 = vmatprep.subr.mxu0 0.0
      %7150 = vmatpush2.xpose.msra.mxu0 0.0
      %7151 = vmatprep.subr.mxu0 0.0
      %7152 = vmatpush2.xpose.msra.mxu0 0.0
      %7153 = vmatprep.subr.mxu0 0.0
      %7154 = vmatpush2.xpose.msra.mxu0 0.0
      %7155 = vmatprep.subr.mxu0 0.0
      %7156 = vmatpush2.xpose.msra.mxu0 0.0
      %7157 = vmatprep.subr.mxu0 0.0
      %7158 = vmatpush2.xpose.msra.mxu0 0.0
      %7159 = vmatprep.subr.mxu0 0.0
      %7160 = vmatpush2.xpose.msra.mxu0 0.0
      %7161 = vmatprep.subr.mxu0 0.0
      %7162 = vmatpush2.xpose.msra.mxu0 0.0
      %7163 = vmatprep.subr.mxu0 0.0
      %7164 = vmatpush2.xpose.msra.mxu0 0.0
      %7165 = vmatprep.subr.mxu0 0.0
      %7166 = vmatpush2.xpose.msra.mxu0 0.0
      %7167 = vmatprep.mubr.f32.mxu0 0.0
      %7168 = vmatmul.mubr.f32.gmra.mxu0 %v7071
      %v7169 = vpop.f32.mrf.mxu0
      %v7170 = vadd.f32 0.0, %v7169
      %v7171 = vpop.f32.mrf.mxu0
      %7172 = vmatprep.mubr.f32.mxu0 0.0
      %7173 = vmatmul.mubr.f32.gmra.mxu0 %v7073
      %v7174 = vpop.f32.mrf.mxu0
      %v7175 = vadd.f32 0.0, %v7174
      %v7176 = vpop.f32.mrf.mxu0
      %7177 = vmatprep.mubr.f32.mxu0 0.0
      %7178 = vmatmul.mubr.f32.gmra.mxu0 %v7075
      %v7179 = vpop.f32.mrf.mxu0
      %v7180 = vadd.f32 0.0, %v7179
      %v7181 = vpop.f32.mrf.mxu0
      %7182 = vmatprep.mubr.f32.mxu0 0.0
      %7183 = vmatmul.mubr.f32.gmra.mxu0 %v7077
      %v7184 = vpop.f32.mrf.mxu0
      %v7185 = vadd.f32 0.0, %v7184
      %v7186 = vpop.f32.mrf.mxu0
      %7187 = vmatprep.mubr.f32.mxu0 0.0
      %7188 = vmatmul.mubr.f32.gmra.mxu0 %v7079
      %v7189 = vpop.f32.mrf.mxu0
      %v7190 = vadd.f32 0.0, %v7189
      %v7191 = vpop.f32.mrf.mxu0
      %7192 = vmatprep.mubr.f32.mxu0 0.0
      %7193 = vmatmul.mubr.f32.gmra.mxu0 %v7081
      %v7194 = vpop.f32.mrf.mxu0
      %v7195 = vadd.f32 0.0, %v7194
      %v7196 = vpop.f32.mrf.mxu0
      %7197 = vmatprep.mubr.f32.mxu0 0.0
      %7198 = vmatmul.mubr.f32.gmra.mxu0 %v7083
      %v7199 = vpop.f32.mrf.mxu0
      %v7200 = vadd.f32 0.0, %v7199
      %v7201 = vpop.f32.mrf.mxu0
      %7202 = vmatprep.mubr.f32.mxu0 0.0
      %7203 = vmatmul.mubr.f32.gmra.mxu0 %v7085
      %v7204 = vpop.f32.mrf.mxu0
      %v7205 = vadd.f32 0.0, %v7204
      %v7206 = vpop.f32.mrf.mxu0
      %7207 = vdwg.mxu0
      %7208 = vrot.lane.b32.xlu0 %v540, 104
      %v7209 = vpop.permute.xlu0 %7208
      %7210 = vrot.lane.b32.xlu0 %v545, 104
      %v7211 = vpop.permute.xlu0 %7210
      %7212 = vrot.lane.b32.xlu0 %v550, 104
      %v7213 = vpop.permute.xlu0 %7212
      %7214 = vrot.lane.b32.xlu0 %v555, 104
      %v7215 = vpop.permute.xlu0 %7214
      %7216 = vrot.lane.b32.xlu0 %v560, 104
      %v7217 = vpop.permute.xlu0 %7216
      %7218 = vrot.lane.b32.xlu0 %v565, 104
      %v7219 = vpop.permute.xlu0 %7218
      %7220 = vrot.lane.b32.xlu0 %v570, 104
      %v7221 = vpop.permute.xlu0 %7220
      %7222 = vrot.lane.b32.xlu0 %v575, 104
      %v7223 = vpop.permute.xlu0 %7222
      %7224 = vrot.lane.b32.xlu0 %v769, 104
      %v7225 = vpop.permute.xlu0 %7224
      %7226 = vrot.lane.b32.xlu0 %v774, 104
      %v7227 = vpop.permute.xlu0 %7226
      %7228 = vrot.lane.b32.xlu0 %v779, 104
      %v7229 = vpop.permute.xlu0 %7228
      %7230 = vrot.lane.b32.xlu0 %v784, 104
      %v7231 = vpop.permute.xlu0 %7230
      %7232 = vrot.lane.b32.xlu0 %v789, 104
      %v7233 = vpop.permute.xlu0 %7232
      %7234 = vrot.lane.b32.xlu0 %v794, 104
      %v7235 = vpop.permute.xlu0 %7234
      %7236 = vrot.lane.b32.xlu0 %v799, 104
      %v7237 = vpop.permute.xlu0 %7236
      %7238 = vrot.lane.b32.xlu0 %v804, 104
      %v7239 = vpop.permute.xlu0 %7238
      %v7240 = vsel %vm1076, %v7209, 0
      %v7242 = vsel %vm1076, %v7211, 0
      %v7244 = vsel %vm1076, %v7213, 0
      %v7246 = vsel %vm1076, %v7215, 0
      %v7248 = vsel %vm1076, %v7217, 0
      %v7250 = vsel %vm1076, %v7219, 0
      %v7252 = vsel %vm1076, %v7221, 0
      %v7254 = vsel %vm1076, %v7223, 0
      %v7256 = vsel %vm1076, %v7225, 0
      %v7258 = vsel %vm1076, %v7227, 0
      %v7260 = vsel %vm1076, %v7229, 0
      %v7262 = vsel %vm1076, %v7231, 0
      %v7264 = vsel %vm1076, %v7233, 0
      %v7266 = vsel %vm1076, %v7235, 0
      %v7268 = vsel %vm1076, %v7237, 0
      %v7270 = vsel %vm1076, %v7239, 0
      %7272 = vmatprep.subr.mxu0 0.0
      %7273 = vmatpush1.xpose.msra.mxu0 0.0
      %7274 = vmatprep.subr.mxu0 0.0
      %7275 = vmatpush1.xpose.msra.mxu0 0.0
      %7276 = vmatprep.subr.mxu0 0.0
      %7277 = vmatpush1.xpose.msra.mxu0 0.0
      %7278 = vmatprep.subr.mxu0 0.0
      %7279 = vmatpush1.xpose.msra.mxu0 0.0
      %7280 = vmatprep.subr.mxu0 0.0
      %7281 = vmatpush1.xpose.msra.mxu0 0.0
      %7282 = vmatprep.subr.mxu0 0.0
      %7283 = vmatpush1.xpose.msra.mxu0 0.0
      %7284 = vmatprep.subr.mxu0 0.0
      %7285 = vmatpush1.xpose.msra.mxu0 0.0
      %7286 = vmatprep.subr.mxu0 0.0
      %7287 = vmatpush1.xpose.msra.mxu0 0.0
      %7288 = vmatprep.subr.mxu0 0.0
      %7289 = vmatpush1.xpose.msra.mxu0 %v7270
      %7290 = vmatprep.subr.mxu0 0.0
      %7291 = vmatpush1.xpose.msra.mxu0 %v7268
      %7292 = vmatprep.subr.mxu0 0.0
      %7293 = vmatpush1.xpose.msra.mxu0 %v7266
      %7294 = vmatprep.subr.mxu0 0.0
      %7295 = vmatpush1.xpose.msra.mxu0 %v7264
      %7296 = vmatprep.subr.mxu0 0.0
      %7297 = vmatpush1.xpose.msra.mxu0 %v7262
      %7298 = vmatprep.subr.mxu0 0.0
      %7299 = vmatpush1.xpose.msra.mxu0 %v7260
      %7300 = vmatprep.subr.mxu0 0.0
      %7301 = vmatpush1.xpose.msra.mxu0 %v7258
      %7302 = vmatprep.subr.mxu0 0.0
      %7303 = vmatpush1.xpose.msra.mxu0 %v7256
      %7304 = vmatprep.subr.mxu0 0.0
      %7305 = vmatpush2.xpose.msra.mxu0 0.0
      %7306 = vmatprep.subr.mxu0 0.0
      %7307 = vmatpush2.xpose.msra.mxu0 0.0
      %7308 = vmatprep.subr.mxu0 0.0
      %7309 = vmatpush2.xpose.msra.mxu0 0.0
      %7310 = vmatprep.subr.mxu0 0.0
      %7311 = vmatpush2.xpose.msra.mxu0 0.0
      %7312 = vmatprep.subr.mxu0 0.0
      %7313 = vmatpush2.xpose.msra.mxu0 0.0
      %7314 = vmatprep.subr.mxu0 0.0
      %7315 = vmatpush2.xpose.msra.mxu0 0.0
      %7316 = vmatprep.subr.mxu0 0.0
      %7317 = vmatpush2.xpose.msra.mxu0 0.0
      %7318 = vmatprep.subr.mxu0 0.0
      %7319 = vmatpush2.xpose.msra.mxu0 0.0
      %7320 = vmatprep.subr.mxu0 0.0
      %7321 = vmatpush2.xpose.msra.mxu0 0.0
      %7322 = vmatprep.subr.mxu0 0.0
      %7323 = vmatpush2.xpose.msra.mxu0 0.0
      %7324 = vmatprep.subr.mxu0 0.0
      %7325 = vmatpush2.xpose.msra.mxu0 0.0
      %7326 = vmatprep.subr.mxu0 0.0
      %7327 = vmatpush2.xpose.msra.mxu0 0.0
      %7328 = vmatprep.subr.mxu0 0.0
      %7329 = vmatpush2.xpose.msra.mxu0 0.0
      %7330 = vmatprep.subr.mxu0 0.0
      %7331 = vmatpush2.xpose.msra.mxu0 0.0
      %7332 = vmatprep.subr.mxu0 0.0
      %7333 = vmatpush2.xpose.msra.mxu0 0.0
      %7334 = vmatprep.subr.mxu0 0.0
      %7335 = vmatpush2.xpose.msra.mxu0 0.0
      %7336 = vmatprep.mubr.f32.mxu0 0.0
      %7337 = vmatmul.mubr.f32.gmra.mxu0 %v7240
      %v7338 = vpop.f32.mrf.mxu0
      %v7339 = vadd.f32 0.0, %v7338
      %v7340 = vpop.f32.mrf.mxu0
      %7341 = vmatprep.mubr.f32.mxu0 0.0
      %7342 = vmatmul.mubr.f32.gmra.mxu0 %v7242
      %v7343 = vpop.f32.mrf.mxu0
      %v7344 = vadd.f32 0.0, %v7343
      %v7345 = vpop.f32.mrf.mxu0
      %7346 = vmatprep.mubr.f32.mxu0 0.0
      %7347 = vmatmul.mubr.f32.gmra.mxu0 %v7244
      %v7348 = vpop.f32.mrf.mxu0
      %v7349 = vadd.f32 0.0, %v7348
      %v7350 = vpop.f32.mrf.mxu0
      %7351 = vmatprep.mubr.f32.mxu0 0.0
      %7352 = vmatmul.mubr.f32.gmra.mxu0 %v7246
      %v7353 = vpop.f32.mrf.mxu0
      %v7354 = vadd.f32 0.0, %v7353
      %v7355 = vpop.f32.mrf.mxu0
      %7356 = vmatprep.mubr.f32.mxu0 0.0
      %7357 = vmatmul.mubr.f32.gmra.mxu0 %v7248
      %v7358 = vpop.f32.mrf.mxu0
      %v7359 = vadd.f32 0.0, %v7358
      %v7360 = vpop.f32.mrf.mxu0
      %7361 = vmatprep.mubr.f32.mxu0 0.0
      %7362 = vmatmul.mubr.f32.gmra.mxu0 %v7250
      %v7363 = vpop.f32.mrf.mxu0
      %v7364 = vadd.f32 0.0, %v7363
      %v7365 = vpop.f32.mrf.mxu0
      %7366 = vmatprep.mubr.f32.mxu0 0.0
      %7367 = vmatmul.mubr.f32.gmra.mxu0 %v7252
      %v7368 = vpop.f32.mrf.mxu0
      %v7369 = vadd.f32 0.0, %v7368
      %v7370 = vpop.f32.mrf.mxu0
      %7371 = vmatprep.mubr.f32.mxu0 0.0
      %7372 = vmatmul.mubr.f32.gmra.mxu0 %v7254
      %v7373 = vpop.f32.mrf.mxu0
      %v7374 = vadd.f32 0.0, %v7373
      %v7375 = vpop.f32.mrf.mxu0
      %7376 = vdwg.mxu0
      %7377 = vrot.lane.b32.xlu0 %v580, 104
      %v7378 = vpop.permute.xlu0 %7377
      %7379 = vrot.lane.b32.xlu0 %v585, 104
      %v7380 = vpop.permute.xlu0 %7379
      %7381 = vrot.lane.b32.xlu0 %v590, 104
      %v7382 = vpop.permute.xlu0 %7381
      %7383 = vrot.lane.b32.xlu0 %v595, 104
      %v7384 = vpop.permute.xlu0 %7383
      %7385 = vrot.lane.b32.xlu0 %v600, 104
      %v7386 = vpop.permute.xlu0 %7385
      %7387 = vrot.lane.b32.xlu0 %v605, 104
      %v7388 = vpop.permute.xlu0 %7387
      %7389 = vrot.lane.b32.xlu0 %v610, 104
      %v7390 = vpop.permute.xlu0 %7389
      %7391 = vrot.lane.b32.xlu0 %v615, 104
      %v7392 = vpop.permute.xlu0 %7391
      %7393 = vrot.lane.b32.xlu0 %v809, 104
      %v7394 = vpop.permute.xlu0 %7393
      %7395 = vrot.lane.b32.xlu0 %v814, 104
      %v7396 = vpop.permute.xlu0 %7395
      %7397 = vrot.lane.b32.xlu0 %v819, 104
      %v7398 = vpop.permute.xlu0 %7397
      %7399 = vrot.lane.b32.xlu0 %v824, 104
      %v7400 = vpop.permute.xlu0 %7399
      %7401 = vrot.lane.b32.xlu0 %v829, 104
      %v7402 = vpop.permute.xlu0 %7401
      %7403 = vrot.lane.b32.xlu0 %v834, 104
      %v7404 = vpop.permute.xlu0 %7403
      %7405 = vrot.lane.b32.xlu0 %v839, 104
      %v7406 = vpop.permute.xlu0 %7405
      %7407 = vrot.lane.b32.xlu0 %v844, 104
      %v7408 = vpop.permute.xlu0 %7407
      %v7409 = vsel %vm1076, %v7378, 0
      %v7411 = vsel %vm1076, %v7380, 0
      %v7413 = vsel %vm1076, %v7382, 0
      %v7415 = vsel %vm1076, %v7384, 0
      %v7417 = vsel %vm1076, %v7386, 0
      %v7419 = vsel %vm1076, %v7388, 0
      %v7421 = vsel %vm1076, %v7390, 0
      %v7423 = vsel %vm1076, %v7392, 0
      %v7425 = vsel %vm1076, %v7394, 0
      %v7427 = vsel %vm1076, %v7396, 0
      %v7429 = vsel %vm1076, %v7398, 0
      %v7431 = vsel %vm1076, %v7400, 0
      %v7433 = vsel %vm1076, %v7402, 0
      %v7435 = vsel %vm1076, %v7404, 0
      %v7437 = vsel %vm1076, %v7406, 0
      %v7439 = vsel %vm1076, %v7408, 0
      %7441 = vmatprep.subr.mxu0 0.0
      %7442 = vmatpush1.xpose.msra.mxu0 0.0
      %7443 = vmatprep.subr.mxu0 0.0
      %7444 = vmatpush1.xpose.msra.mxu0 0.0
      %7445 = vmatprep.subr.mxu0 0.0
      %7446 = vmatpush1.xpose.msra.mxu0 0.0
      %7447 = vmatprep.subr.mxu0 0.0
      %7448 = vmatpush1.xpose.msra.mxu0 0.0
      %7449 = vmatprep.subr.mxu0 0.0
      %7450 = vmatpush1.xpose.msra.mxu0 0.0
      %7451 = vmatprep.subr.mxu0 0.0
      %7452 = vmatpush1.xpose.msra.mxu0 0.0
      %7453 = vmatprep.subr.mxu0 0.0
      %7454 = vmatpush1.xpose.msra.mxu0 0.0
      %7455 = vmatprep.subr.mxu0 0.0
      %7456 = vmatpush1.xpose.msra.mxu0 0.0
      %7457 = vmatprep.subr.mxu0 0.0
      %7458 = vmatpush1.xpose.msra.mxu0 %v7439
      %7459 = vmatprep.subr.mxu0 0.0
      %7460 = vmatpush1.xpose.msra.mxu0 %v7437
      %7461 = vmatprep.subr.mxu0 0.0
      %7462 = vmatpush1.xpose.msra.mxu0 %v7435
      %7463 = vmatprep.subr.mxu0 0.0
      %7464 = vmatpush1.xpose.msra.mxu0 %v7433
      %7465 = vmatprep.subr.mxu0 0.0
      %7466 = vmatpush1.xpose.msra.mxu0 %v7431
      %7467 = vmatprep.subr.mxu0 0.0
      %7468 = vmatpush1.xpose.msra.mxu0 %v7429
      %7469 = vmatprep.subr.mxu0 0.0
      %7470 = vmatpush1.xpose.msra.mxu0 %v7427
      %7471 = vmatprep.subr.mxu0 0.0
      %7472 = vmatpush1.xpose.msra.mxu0 %v7425
      %7473 = vmatprep.subr.mxu0 0.0
      %7474 = vmatpush2.xpose.msra.mxu0 0.0
      %7475 = vmatprep.subr.mxu0 0.0
      %7476 = vmatpush2.xpose.msra.mxu0 0.0
      %7477 = vmatprep.subr.mxu0 0.0
      %7478 = vmatpush2.xpose.msra.mxu0 0.0
      %7479 = vmatprep.subr.mxu0 0.0
      %7480 = vmatpush2.xpose.msra.mxu0 0.0
      %7481 = vmatprep.subr.mxu0 0.0
      %7482 = vmatpush2.xpose.msra.mxu0 0.0
      %7483 = vmatprep.subr.mxu0 0.0
      %7484 = vmatpush2.xpose.msra.mxu0 0.0
      %7485 = vmatprep.subr.mxu0 0.0
      %7486 = vmatpush2.xpose.msra.mxu0 0.0
      %7487 = vmatprep.subr.mxu0 0.0
      %7488 = vmatpush2.xpose.msra.mxu0 0.0
      %7489 = vmatprep.subr.mxu0 0.0
      %7490 = vmatpush2.xpose.msra.mxu0 0.0
      %7491 = vmatprep.subr.mxu0 0.0
      %7492 = vmatpush2.xpose.msra.mxu0 0.0
      %7493 = vmatprep.subr.mxu0 0.0
      %7494 = vmatpush2.xpose.msra.mxu0 0.0
      %7495 = vmatprep.subr.mxu0 0.0
      %7496 = vmatpush2.xpose.msra.mxu0 0.0
      %7497 = vmatprep.subr.mxu0 0.0
      %7498 = vmatpush2.xpose.msra.mxu0 0.0
      %7499 = vmatprep.subr.mxu0 0.0
      %7500 = vmatpush2.xpose.msra.mxu0 0.0
      %7501 = vmatprep.subr.mxu0 0.0
      %7502 = vmatpush2.xpose.msra.mxu0 0.0
      %7503 = vmatprep.subr.mxu0 0.0
      %7504 = vmatpush2.xpose.msra.mxu0 0.0
      %7505 = vmatprep.mubr.f32.mxu0 0.0
      %7506 = vmatmul.mubr.f32.gmra.mxu0 %v7409
      %v7507 = vpop.f32.mrf.mxu0
      %v7508 = vadd.f32 0.0, %v7507
      %v7509 = vpop.f32.mrf.mxu0
      %7510 = vmatprep.mubr.f32.mxu0 0.0
      %7511 = vmatmul.mubr.f32.gmra.mxu0 %v7411
      %v7512 = vpop.f32.mrf.mxu0
      %v7513 = vadd.f32 0.0, %v7512
      %v7514 = vpop.f32.mrf.mxu0
      %7515 = vmatprep.mubr.f32.mxu0 0.0
      %7516 = vmatmul.mubr.f32.gmra.mxu0 %v7413
      %v7517 = vpop.f32.mrf.mxu0
      %v7518 = vadd.f32 0.0, %v7517
      %v7519 = vpop.f32.mrf.mxu0
      %7520 = vmatprep.mubr.f32.mxu0 0.0
      %7521 = vmatmul.mubr.f32.gmra.mxu0 %v7415
      %v7522 = vpop.f32.mrf.mxu0
      %v7523 = vadd.f32 0.0, %v7522
      %v7524 = vpop.f32.mrf.mxu0
      %7525 = vmatprep.mubr.f32.mxu0 0.0
      %7526 = vmatmul.mubr.f32.gmra.mxu0 %v7417
      %v7527 = vpop.f32.mrf.mxu0
      %v7528 = vadd.f32 0.0, %v7527
      %v7529 = vpop.f32.mrf.mxu0
      %7530 = vmatprep.mubr.f32.mxu0 0.0
      %7531 = vmatmul.mubr.f32.gmra.mxu0 %v7419
      %v7532 = vpop.f32.mrf.mxu0
      %v7533 = vadd.f32 0.0, %v7532
      %v7534 = vpop.f32.mrf.mxu0
      %7535 = vmatprep.mubr.f32.mxu0 0.0
      %7536 = vmatmul.mubr.f32.gmra.mxu0 %v7421
      %v7537 = vpop.f32.mrf.mxu0
      %v7538 = vadd.f32 0.0, %v7537
      %v7539 = vpop.f32.mrf.mxu0
      %7540 = vmatprep.mubr.f32.mxu0 0.0
      %7541 = vmatmul.mubr.f32.gmra.mxu0 %v7423
      %v7542 = vpop.f32.mrf.mxu0
      %v7543 = vadd.f32 0.0, %v7542
      %v7544 = vpop.f32.mrf.mxu0
      %7545 = vdwg.mxu0
      %v7546 = vsel %vm1689, %v7001, -inf
      %7547 = vmax.xlane.f32.xlu0 %v7546
      %v7548 = vpop.xlane.xlu0 %7547
      %v7549 = vsel %vm1689, %v7006, -inf
      %7550 = vmax.xlane.f32.xlu0 %v7549
      %v7551 = vpop.xlane.xlu0 %7550
      %v7552 = vsel %vm1689, %v7011, -inf
      %7553 = vmax.xlane.f32.xlu0 %v7552
      %v7554 = vpop.xlane.xlu0 %7553
      %v7555 = vsel %vm1689, %v7016, -inf
      %7556 = vmax.xlane.f32.xlu0 %v7555
      %v7557 = vpop.xlane.xlu0 %7556
      %v7558 = vsel %vm1689, %v7021, -inf
      %7559 = vmax.xlane.f32.xlu0 %v7558
      %v7560 = vpop.xlane.xlu0 %7559
      %v7561 = vsel %vm1689, %v7026, -inf
      %7562 = vmax.xlane.f32.xlu0 %v7561
      %v7563 = vpop.xlane.xlu0 %7562
      %v7564 = vsel %vm1689, %v7031, -inf
      %7565 = vmax.xlane.f32.xlu0 %v7564
      %v7566 = vpop.xlane.xlu0 %7565
      %v7567 = vsel %vm1689, %v7036, -inf
      %7568 = vmax.xlane.f32.xlu0 %v7567
      %v7569 = vpop.xlane.xlu0 %7568
      %v7570 = vsel %vm1689, %v7170, -inf
      %7571 = vmax.xlane.f32.xlu0 %v7570
      %v7572 = vpop.xlane.xlu0 %7571
      %v7573 = vsel %vm1689, %v7175, -inf
      %7574 = vmax.xlane.f32.xlu0 %v7573
      %v7575 = vpop.xlane.xlu0 %7574
      %v7576 = vsel %vm1689, %v7180, -inf
      %7577 = vmax.xlane.f32.xlu0 %v7576
      %v7578 = vpop.xlane.xlu0 %7577
      %v7579 = vsel %vm1689, %v7185, -inf
      %7580 = vmax.xlane.f32.xlu0 %v7579
      %v7581 = vpop.xlane.xlu0 %7580
      %v7582 = vsel %vm1689, %v7190, -inf
      %7583 = vmax.xlane.f32.xlu0 %v7582
      %v7584 = vpop.xlane.xlu0 %7583
      %v7585 = vsel %vm1689, %v7195, -inf
      %7586 = vmax.xlane.f32.xlu0 %v7585
      %v7587 = vpop.xlane.xlu0 %7586
      %v7588 = vsel %vm1689, %v7200, -inf
      %7589 = vmax.xlane.f32.xlu0 %v7588
      %v7590 = vpop.xlane.xlu0 %7589
      %v7591 = vsel %vm1689, %v7205, -inf
      %7592 = vmax.xlane.f32.xlu0 %v7591
      %v7593 = vpop.xlane.xlu0 %7592
      %v7594 = vsel %vm1689, %v7339, -inf
      %7595 = vmax.xlane.f32.xlu0 %v7594
      %v7596 = vpop.xlane.xlu0 %7595
      %v7597 = vsel %vm1689, %v7344, -inf
      %7598 = vmax.xlane.f32.xlu0 %v7597
      %v7599 = vpop.xlane.xlu0 %7598
      %v7600 = vsel %vm1689, %v7349, -inf
      %7601 = vmax.xlane.f32.xlu0 %v7600
      %v7602 = vpop.xlane.xlu0 %7601
      %v7603 = vsel %vm1689, %v7354, -inf
      %7604 = vmax.xlane.f32.xlu0 %v7603
      %v7605 = vpop.xlane.xlu0 %7604
      %v7606 = vsel %vm1689, %v7359, -inf
      %7607 = vmax.xlane.f32.xlu0 %v7606
      %v7608 = vpop.xlane.xlu0 %7607
      %v7609 = vsel %vm1689, %v7364, -inf
      %7610 = vmax.xlane.f32.xlu0 %v7609
      %v7611 = vpop.xlane.xlu0 %7610
      %v7612 = vsel %vm1689, %v7369, -inf
      %7613 = vmax.xlane.f32.xlu0 %v7612
      %v7614 = vpop.xlane.xlu0 %7613
      %v7615 = vsel %vm1689, %v7374, -inf
      %7616 = vmax.xlane.f32.xlu0 %v7615
      %v7617 = vpop.xlane.xlu0 %7616
      %v7618 = vsel %vm1689, %v7508, -inf
      %7619 = vmax.xlane.f32.xlu0 %v7618
      %v7620 = vpop.xlane.xlu0 %7619
      %v7621 = vsel %vm1689, %v7513, -inf
      %7622 = vmax.xlane.f32.xlu0 %v7621
      %v7623 = vpop.xlane.xlu0 %7622
      %v7624 = vsel %vm1689, %v7518, -inf
      %7625 = vmax.xlane.f32.xlu0 %v7624
      %v7626 = vpop.xlane.xlu0 %7625
      %v7627 = vsel %vm1689, %v7523, -inf
      %7628 = vmax.xlane.f32.xlu0 %v7627
      %v7629 = vpop.xlane.xlu0 %7628
      %v7630 = vsel %vm1689, %v7528, -inf
      %7631 = vmax.xlane.f32.xlu0 %v7630
      %v7632 = vpop.xlane.xlu0 %7631
      %v7633 = vsel %vm1689, %v7533, -inf
      %7634 = vmax.xlane.f32.xlu0 %v7633
      %v7635 = vpop.xlane.xlu0 %7634
      %v7636 = vsel %vm1689, %v7538, -inf
      %7637 = vmax.xlane.f32.xlu0 %v7636
      %v7638 = vpop.xlane.xlu0 %7637
      %v7639 = vsel %vm1689, %v7543, -inf
      %7640 = vmax.xlane.f32.xlu0 %v7639
      %v7641 = vpop.xlane.xlu0 %7640
      %v7642 = vsub.f32 %v7001, %v7548
      %v7643 = vsub.f32 %v7006, %v7551
      %v7644 = vsub.f32 %v7011, %v7554
      %v7645 = vsub.f32 %v7016, %v7557
      %v7646 = vsub.f32 %v7021, %v7560
      %v7647 = vsub.f32 %v7026, %v7563
      %v7648 = vsub.f32 %v7031, %v7566
      %v7649 = vsub.f32 %v7036, %v7569
      %v7650 = vsub.f32 %v7170, %v7572
      %v7651 = vsub.f32 %v7175, %v7575
      %v7652 = vsub.f32 %v7180, %v7578
      %v7653 = vsub.f32 %v7185, %v7581
      %v7654 = vsub.f32 %v7190, %v7584
      %v7655 = vsub.f32 %v7195, %v7587
      %v7656 = vsub.f32 %v7200, %v7590
      %v7657 = vsub.f32 %v7205, %v7593
      %v7658 = vsub.f32 %v7339, %v7596
      %v7659 = vsub.f32 %v7344, %v7599
      %v7660 = vsub.f32 %v7349, %v7602
      %v7661 = vsub.f32 %v7354, %v7605
      %v7662 = vsub.f32 %v7359, %v7608
      %v7663 = vsub.f32 %v7364, %v7611
      %v7664 = vsub.f32 %v7369, %v7614
      %v7665 = vsub.f32 %v7374, %v7617
      %v7666 = vsub.f32 %v7508, %v7620
      %v7667 = vsub.f32 %v7513, %v7623
      %v7668 = vsub.f32 %v7518, %v7626
      %v7669 = vsub.f32 %v7523, %v7629
      %v7670 = vsub.f32 %v7528, %v7632
      %v7671 = vsub.f32 %v7533, %v7635
      %v7672 = vsub.f32 %v7538, %v7638
      %v7673 = vsub.f32 %v7543, %v7641
      %v7674 = vmul.f32 %v7642, 1.442695
      %v7675 = vpow.pop %v7674
      %v7676 = vmul.f32 %v7643, 1.442695
      %v7677 = vpow.pop %v7676
      %v7678 = vmul.f32 %v7644, 1.442695
      %v7679 = vpow.pop %v7678
      %v7680 = vmul.f32 %v7645, 1.442695
      %v7681 = vpow.pop %v7680
      %v7682 = vmul.f32 %v7646, 1.442695
      %v7683 = vpow.pop %v7682
      %v7684 = vmul.f32 %v7647, 1.442695
      %v7685 = vpow.pop %v7684
      %v7686 = vmul.f32 %v7648, 1.442695
      %v7687 = vpow.pop %v7686
      %v7688 = vmul.f32 %v7649, 1.442695
      %v7689 = vpow.pop %v7688
      %v7690 = vmul.f32 %v7650, 1.442695
      %v7691 = vpow.pop %v7690
      %v7692 = vmul.f32 %v7651, 1.442695
      %v7693 = vpow.pop %v7692
      %v7694 = vmul.f32 %v7652, 1.442695
      %v7695 = vpow.pop %v7694
      %v7696 = vmul.f32 %v7653, 1.442695
      %v7697 = vpow.pop %v7696
      %v7698 = vmul.f32 %v7654, 1.442695
      %v7699 = vpow.pop %v7698
      %v7700 = vmul.f32 %v7655, 1.442695
      %v7701 = vpow.pop %v7700
      %v7702 = vmul.f32 %v7656, 1.442695
      %v7703 = vpow.pop %v7702
      %v7704 = vmul.f32 %v7657, 1.442695
      %v7705 = vpow.pop %v7704
      %v7706 = vmul.f32 %v7658, 1.442695
      %v7707 = vpow.pop %v7706
      %v7708 = vmul.f32 %v7659, 1.442695
      %v7709 = vpow.pop %v7708
      %v7710 = vmul.f32 %v7660, 1.442695
      %v7711 = vpow.pop %v7710
      %v7712 = vmul.f32 %v7661, 1.442695
      %v7713 = vpow.pop %v7712
      %v7714 = vmul.f32 %v7662, 1.442695
      %v7715 = vpow.pop %v7714
      %v7716 = vmul.f32 %v7663, 1.442695
      %v7717 = vpow.pop %v7716
      %v7718 = vmul.f32 %v7664, 1.442695
      %v7719 = vpow.pop %v7718
      %v7720 = vmul.f32 %v7665, 1.442695
      %v7721 = vpow.pop %v7720
      %v7722 = vmul.f32 %v7666, 1.442695
      %v7723 = vpow.pop %v7722
      %v7724 = vmul.f32 %v7667, 1.442695
      %v7725 = vpow.pop %v7724
      %v7726 = vmul.f32 %v7668, 1.442695
      %v7727 = vpow.pop %v7726
      %v7728 = vmul.f32 %v7669, 1.442695
      %v7729 = vpow.pop %v7728
      %v7730 = vmul.f32 %v7670, 1.442695
      %v7731 = vpow.pop %v7730
      %v7732 = vmul.f32 %v7671, 1.442695
      %v7733 = vpow.pop %v7732
      %v7734 = vmul.f32 %v7672, 1.442695
      %v7735 = vpow.pop %v7734
      %v7736 = vmul.f32 %v7673, 1.442695
      %v7737 = vpow.pop %v7736
      %v7738 = vsel %vm1689, %v7675, 0.0
      %7739 = vadd.xlane.f32.xlu0 %v7738
      %v7740 = vpop.xlane.xlu0 %7739
      %v7741 = vsel %vm1689, %v7677, 0.0
      %7742 = vadd.xlane.f32.xlu0 %v7741
      %v7743 = vpop.xlane.xlu0 %7742
      %v7744 = vsel %vm1689, %v7679, 0.0
      %7745 = vadd.xlane.f32.xlu0 %v7744
      %v7746 = vpop.xlane.xlu0 %7745
      %v7747 = vsel %vm1689, %v7681, 0.0
      %7748 = vadd.xlane.f32.xlu0 %v7747
      %v7749 = vpop.xlane.xlu0 %7748
      %v7750 = vsel %vm1689, %v7683, 0.0
      %7751 = vadd.xlane.f32.xlu0 %v7750
      %v7752 = vpop.xlane.xlu0 %7751
      %v7753 = vsel %vm1689, %v7685, 0.0
      %7754 = vadd.xlane.f32.xlu0 %v7753
      %v7755 = vpop.xlane.xlu0 %7754
      %v7756 = vsel %vm1689, %v7687, 0.0
      %7757 = vadd.xlane.f32.xlu0 %v7756
      %v7758 = vpop.xlane.xlu0 %7757
      %v7759 = vsel %vm1689, %v7689, 0.0
      %7760 = vadd.xlane.f32.xlu0 %v7759
      %v7761 = vpop.xlane.xlu0 %7760
      %v7762 = vsel %vm1689, %v7691, 0.0
      %7763 = vadd.xlane.f32.xlu0 %v7762
      %v7764 = vpop.xlane.xlu0 %7763
      %v7765 = vsel %vm1689, %v7693, 0.0
      %7766 = vadd.xlane.f32.xlu0 %v7765
      %v7767 = vpop.xlane.xlu0 %7766
      %v7768 = vsel %vm1689, %v7695, 0.0
      %7769 = vadd.xlane.f32.xlu0 %v7768
      %v7770 = vpop.xlane.xlu0 %7769
      %v7771 = vsel %vm1689, %v7697, 0.0
      %7772 = vadd.xlane.f32.xlu0 %v7771
      %v7773 = vpop.xlane.xlu0 %7772
      %v7774 = vsel %vm1689, %v7699, 0.0
      %7775 = vadd.xlane.f32.xlu0 %v7774
      %v7776 = vpop.xlane.xlu0 %7775
      %v7777 = vsel %vm1689, %v7701, 0.0
      %7778 = vadd.xlane.f32.xlu0 %v7777
      %v7779 = vpop.xlane.xlu0 %7778
      %v7780 = vsel %vm1689, %v7703, 0.0
      %7781 = vadd.xlane.f32.xlu0 %v7780
      %v7782 = vpop.xlane.xlu0 %7781
      %v7783 = vsel %vm1689, %v7705, 0.0
      %7784 = vadd.xlane.f32.xlu0 %v7783
      %v7785 = vpop.xlane.xlu0 %7784
      %v7786 = vsel %vm1689, %v7707, 0.0
      %7787 = vadd.xlane.f32.xlu0 %v7786
      %v7788 = vpop.xlane.xlu0 %7787
      %v7789 = vsel %vm1689, %v7709, 0.0
      %7790 = vadd.xlane.f32.xlu0 %v7789
      %v7791 = vpop.xlane.xlu0 %7790
      %v7792 = vsel %vm1689, %v7711, 0.0
      %7793 = vadd.xlane.f32.xlu0 %v7792
      %v7794 = vpop.xlane.xlu0 %7793
      %v7795 = vsel %vm1689, %v7713, 0.0
      %7796 = vadd.xlane.f32.xlu0 %v7795
      %v7797 = vpop.xlane.xlu0 %7796
      %v7798 = vsel %vm1689, %v7715, 0.0
      %7799 = vadd.xlane.f32.xlu0 %v7798
      %v7800 = vpop.xlane.xlu0 %7799
      %v7801 = vsel %vm1689, %v7717, 0.0
      %7802 = vadd.xlane.f32.xlu0 %v7801
      %v7803 = vpop.xlane.xlu0 %7802
      %v7804 = vsel %vm1689, %v7719, 0.0
      %7805 = vadd.xlane.f32.xlu0 %v7804
      %v7806 = vpop.xlane.xlu0 %7805
      %v7807 = vsel %vm1689, %v7721, 0.0
      %7808 = vadd.xlane.f32.xlu0 %v7807
      %v7809 = vpop.xlane.xlu0 %7808
      %v7810 = vsel %vm1689, %v7723, 0.0
      %7811 = vadd.xlane.f32.xlu0 %v7810
      %v7812 = vpop.xlane.xlu0 %7811
      %v7813 = vsel %vm1689, %v7725, 0.0
      %7814 = vadd.xlane.f32.xlu0 %v7813
      %v7815 = vpop.xlane.xlu0 %7814
      %v7816 = vsel %vm1689, %v7727, 0.0
      %7817 = vadd.xlane.f32.xlu0 %v7816
      %v7818 = vpop.xlane.xlu0 %7817
      %v7819 = vsel %vm1689, %v7729, 0.0
      %7820 = vadd.xlane.f32.xlu0 %v7819
      %v7821 = vpop.xlane.xlu0 %7820
      %v7822 = vsel %vm1689, %v7731, 0.0
      %7823 = vadd.xlane.f32.xlu0 %v7822
      %v7824 = vpop.xlane.xlu0 %7823
      %v7825 = vsel %vm1689, %v7733, 0.0
      %7826 = vadd.xlane.f32.xlu0 %v7825
      %v7827 = vpop.xlane.xlu0 %7826
      %v7828 = vsel %vm1689, %v7735, 0.0
      %7829 = vadd.xlane.f32.xlu0 %v7828
      %v7830 = vpop.xlane.xlu0 %7829
      %v7831 = vsel %vm1689, %v7737, 0.0
      %7832 = vadd.xlane.f32.xlu0 %v7831
      %v7833 = vpop.xlane.xlu0 %7832
      %v7834 = vrcp.pop %v7740
      %v7835 = vrcp.pop %v7743
      %v7836 = vrcp.pop %v7746
      %v7837 = vrcp.pop %v7749
      %v7838 = vrcp.pop %v7752
      %v7839 = vrcp.pop %v7755
      %v7840 = vrcp.pop %v7758
      %v7841 = vrcp.pop %v7761
      %v7842 = vrcp.pop %v7764
      %v7843 = vrcp.pop %v7767
      %v7844 = vrcp.pop %v7770
      %v7845 = vrcp.pop %v7773
      %v7846 = vrcp.pop %v7776
      %v7847 = vrcp.pop %v7779
      %v7848 = vrcp.pop %v7782
      %v7849 = vrcp.pop %v7785
      %v7850 = vrcp.pop %v7788
      %v7851 = vrcp.pop %v7791
      %v7852 = vrcp.pop %v7794
      %v7853 = vrcp.pop %v7797
      %v7854 = vrcp.pop %v7800
      %v7855 = vrcp.pop %v7803
      %v7856 = vrcp.pop %v7806
      %v7857 = vrcp.pop %v7809
      %v7858 = vrcp.pop %v7812
      %v7859 = vrcp.pop %v7815
      %v7860 = vrcp.pop %v7818
      %v7861 = vrcp.pop %v7821
      %v7862 = vrcp.pop %v7824
      %v7863 = vrcp.pop %v7827
      %v7864 = vrcp.pop %v7830
      %v7865 = vrcp.pop %v7833
      %v7866 = vmul.f32 %v7675, %v7834
      %v7867 = vmul.f32 %v7677, %v7835
      %v7868 = vmul.f32 %v7679, %v7836
      %v7869 = vmul.f32 %v7681, %v7837
      %v7870 = vmul.f32 %v7683, %v7838
      %v7871 = vmul.f32 %v7685, %v7839
      %v7872 = vmul.f32 %v7687, %v7840
      %v7873 = vmul.f32 %v7689, %v7841
      %v7874 = vmul.f32 %v7691, %v7842
      %v7875 = vmul.f32 %v7693, %v7843
      %v7876 = vmul.f32 %v7695, %v7844
      %v7877 = vmul.f32 %v7697, %v7845
      %v7878 = vmul.f32 %v7699, %v7846
      %v7879 = vmul.f32 %v7701, %v7847
      %v7880 = vmul.f32 %v7703, %v7848
      %v7881 = vmul.f32 %v7705, %v7849
      %v7882 = vmul.f32 %v7707, %v7850
      %v7883 = vmul.f32 %v7709, %v7851
      %v7884 = vmul.f32 %v7711, %v7852
      %v7885 = vmul.f32 %v7713, %v7853
      %v7886 = vmul.f32 %v7715, %v7854
      %v7887 = vmul.f32 %v7717, %v7855
      %v7888 = vmul.f32 %v7719, %v7856
      %v7889 = vmul.f32 %v7721, %v7857
      %v7890 = vmul.f32 %v7723, %v7858
      %v7891 = vmul.f32 %v7725, %v7859
      %v7892 = vmul.f32 %v7727, %v7860
      %v7893 = vmul.f32 %v7729, %v7861
      %v7894 = vmul.f32 %v7731, %v7862
      %v7895 = vmul.f32 %v7733, %v7863
      %v7896 = vmul.f32 %v7735, %v7864
      %v7897 = vmul.f32 %v7737, %v7865
      %7898 = vrot.lane.b32.xlu0 %v918, 104
      %v7899 = vpop.permute.xlu0 %7898
      %7900 = vrot.lane.b32.xlu0 %v923, 104
      %v7901 = vpop.permute.xlu0 %7900
      %7902 = vrot.lane.b32.xlu0 %v928, 104
      %v7903 = vpop.permute.xlu0 %7902
      %7904 = vrot.lane.b32.xlu0 %v933, 104
      %v7905 = vpop.permute.xlu0 %7904
      %7906 = vrot.lane.b32.xlu0 %v938, 104
      %v7907 = vpop.permute.xlu0 %7906
      %7908 = vrot.lane.b32.xlu0 %v943, 104
      %v7909 = vpop.permute.xlu0 %7908
      %7910 = vrot.lane.b32.xlu0 %v948, 104
      %v7911 = vpop.permute.xlu0 %7910
      %7912 = vrot.lane.b32.xlu0 %v953, 104
      %v7913 = vpop.permute.xlu0 %7912
      %v7923 = vsel %vm1689, %v7866, 0
      %v7926 = vsel %vm1689, %v7867, 0
      %v7929 = vsel %vm1689, %v7868, 0
      %v7932 = vsel %vm1689, %v7869, 0
      %v7935 = vsel %vm1689, %v7870, 0
      %v7938 = vsel %vm1689, %v7871, 0
      %v7941 = vsel %vm1689, %v7872, 0
      %v7944 = vsel %vm1689, %v7873, 0
      %7946 = vmatprep.subr.mxu0 0.0
      %7947 = vmatpush1.msra.mxu0 0.0
      %7948 = vmatprep.subr.mxu0 0.0
      %7949 = vmatpush1.msra.mxu0 0.0
      %7950 = vmatprep.subr.mxu0 0.0
      %7951 = vmatpush1.msra.mxu0 0.0
      %7952 = vmatprep.subr.mxu0 0.0
      %7953 = vmatpush1.msra.mxu0 0.0
      %7954 = vmatprep.subr.mxu0 0.0
      %7955 = vmatpush1.msra.mxu0 0.0
      %7956 = vmatprep.subr.mxu0 0.0
      %7957 = vmatpush1.msra.mxu0 0.0
      %7958 = vmatprep.subr.mxu0 0.0
      %7959 = vmatpush1.msra.mxu0 0.0
      %7960 = vmatprep.subr.mxu0 0.0
      %7961 = vmatpush1.msra.mxu0 0.0
      %7962 = vmatprep.subr.mxu0 0.0
      %7963 = vmatpush1.msra.mxu0 %v7913
      %7964 = vmatprep.subr.mxu0 0.0
      %7965 = vmatpush1.msra.mxu0 %v7911
      %7966 = vmatprep.subr.mxu0 0.0
      %7967 = vmatpush1.msra.mxu0 %v7909
      %7968 = vmatprep.subr.mxu0 0.0
      %7969 = vmatpush1.msra.mxu0 %v7907
      %7970 = vmatprep.subr.mxu0 0.0
      %7971 = vmatpush1.msra.mxu0 %v7905
      %7972 = vmatprep.subr.mxu0 0.0
      %7973 = vmatpush1.msra.mxu0 %v7903
      %7974 = vmatprep.subr.mxu0 0.0
      %7975 = vmatpush1.msra.mxu0 %v7901
      %7976 = vmatprep.subr.mxu0 0.0
      %7977 = vmatpush1.msra.mxu0 %v7899
      %7978 = vmatprep.subr.mxu0 0.0
      %7979 = vmatpush2.msra.mxu0 0.0
      %7980 = vmatprep.subr.mxu0 0.0
      %7981 = vmatpush2.msra.mxu0 0.0
      %7982 = vmatprep.subr.mxu0 0.0
      %7983 = vmatpush2.msra.mxu0 0.0
      %7984 = vmatprep.subr.mxu0 0.0
      %7985 = vmatpush2.msra.mxu0 0.0
      %7986 = vmatprep.subr.mxu0 0.0
      %7987 = vmatpush2.msra.mxu0 0.0
      %7988 = vmatprep.subr.mxu0 0.0
      %7989 = vmatpush2.msra.mxu0 0.0
      %7990 = vmatprep.subr.mxu0 0.0
      %7991 = vmatpush2.msra.mxu0 0.0
      %7992 = vmatprep.subr.mxu0 0.0
      %7993 = vmatpush2.msra.mxu0 0.0
      %7994 = vmatprep.subr.mxu0 0.0
      %7995 = vmatpush2.msra.mxu0 0.0
      %7996 = vmatprep.subr.mxu0 0.0
      %7997 = vmatpush2.msra.mxu0 0.0
      %7998 = vmatprep.subr.mxu0 0.0
      %7999 = vmatpush2.msra.mxu0 0.0
      %8000 = vmatprep.subr.mxu0 0.0
      %8001 = vmatpush2.msra.mxu0 0.0
      %8002 = vmatprep.subr.mxu0 0.0
      %8003 = vmatpush2.msra.mxu0 0.0
      %8004 = vmatprep.subr.mxu0 0.0
      %8005 = vmatpush2.msra.mxu0 0.0
      %8006 = vmatprep.subr.mxu0 0.0
      %8007 = vmatpush2.msra.mxu0 0.0
      %8008 = vmatprep.subr.mxu0 0.0
      %8009 = vmatpush2.msra.mxu0 0.0
      %8010 = vmatprep.mubr.f32.mxu0 0.0
      %8011 = vmatmul.mubr.f32.gmra.mxu0 %v7923
      %v8012 = vpop.f32.mrf.mxu0
      %v8013 = vadd.f32 0.0, %v8012
      %v8014 = vpop.f32.mrf.mxu0
      %8015 = vmatprep.mubr.f32.mxu0 0.0
      %8016 = vmatmul.mubr.f32.gmra.mxu0 %v7926
      %v8017 = vpop.f32.mrf.mxu0
      %v8018 = vadd.f32 0.0, %v8017
      %v8019 = vpop.f32.mrf.mxu0
      %8020 = vmatprep.mubr.f32.mxu0 0.0
      %8021 = vmatmul.mubr.f32.gmra.mxu0 %v7929
      %v8022 = vpop.f32.mrf.mxu0
      %v8023 = vadd.f32 0.0, %v8022
      %v8024 = vpop.f32.mrf.mxu0
      %8025 = vmatprep.mubr.f32.mxu0 0.0
      %8026 = vmatmul.mubr.f32.gmra.mxu0 %v7932
      %v8027 = vpop.f32.mrf.mxu0
      %v8028 = vadd.f32 0.0, %v8027
      %v8029 = vpop.f32.mrf.mxu0
      %8030 = vmatprep.mubr.f32.mxu0 0.0
      %8031 = vmatmul.mubr.f32.gmra.mxu0 %v7935
      %v8032 = vpop.f32.mrf.mxu0
      %v8033 = vadd.f32 0.0, %v8032
      %v8034 = vpop.f32.mrf.mxu0
      %8035 = vmatprep.mubr.f32.mxu0 0.0
      %8036 = vmatmul.mubr.f32.gmra.mxu0 %v7938
      %v8037 = vpop.f32.mrf.mxu0
      %v8038 = vadd.f32 0.0, %v8037
      %v8039 = vpop.f32.mrf.mxu0
      %8040 = vmatprep.mubr.f32.mxu0 0.0
      %8041 = vmatmul.mubr.f32.gmra.mxu0 %v7941
      %v8042 = vpop.f32.mrf.mxu0
      %v8043 = vadd.f32 0.0, %v8042
      %v8044 = vpop.f32.mrf.mxu0
      %8045 = vmatprep.mubr.f32.mxu0 0.0
      %8046 = vmatmul.mubr.f32.gmra.mxu0 %v7944
      %v8047 = vpop.f32.mrf.mxu0
      %v8048 = vadd.f32 0.0, %v8047
      %v8049 = vpop.f32.mrf.mxu0
      %8050 = vdwg.mxu0
      %8051 = vrot.lane.b32.xlu0 %v958, 104
      %v8052 = vpop.permute.xlu0 %8051
      %8053 = vrot.lane.b32.xlu0 %v963, 104
      %v8054 = vpop.permute.xlu0 %8053
      %8055 = vrot.lane.b32.xlu0 %v968, 104
      %v8056 = vpop.permute.xlu0 %8055
      %8057 = vrot.lane.b32.xlu0 %v973, 104
      %v8058 = vpop.permute.xlu0 %8057
      %8059 = vrot.lane.b32.xlu0 %v978, 104
      %v8060 = vpop.permute.xlu0 %8059
      %8061 = vrot.lane.b32.xlu0 %v983, 104
      %v8062 = vpop.permute.xlu0 %8061
      %8063 = vrot.lane.b32.xlu0 %v988, 104
      %v8064 = vpop.permute.xlu0 %8063
      %8065 = vrot.lane.b32.xlu0 %v993, 104
      %v8066 = vpop.permute.xlu0 %8065
      %v8076 = vsel %vm1689, %v7874, 0
      %v8079 = vsel %vm1689, %v7875, 0
      %v8082 = vsel %vm1689, %v7876, 0
      %v8085 = vsel %vm1689, %v7877, 0
      %v8088 = vsel %vm1689, %v7878, 0
      %v8091 = vsel %vm1689, %v7879, 0
      %v8094 = vsel %vm1689, %v7880, 0
      %v8097 = vsel %vm1689, %v7881, 0
      %8099 = vmatprep.subr.mxu0 0.0
      %8100 = vmatpush1.msra.mxu0 0.0
      %8101 = vmatprep.subr.mxu0 0.0
      %8102 = vmatpush1.msra.mxu0 0.0
      %8103 = vmatprep.subr.mxu0 0.0
      %8104 = vmatpush1.msra.mxu0 0.0
      %8105 = vmatprep.subr.mxu0 0.0
      %8106 = vmatpush1.msra.mxu0 0.0
      %8107 = vmatprep.subr.mxu0 0.0
      %8108 = vmatpush1.msra.mxu0 0.0
      %8109 = vmatprep.subr.mxu0 0.0
      %8110 = vmatpush1.msra.mxu0 0.0
      %8111 = vmatprep.subr.mxu0 0.0
      %8112 = vmatpush1.msra.mxu0 0.0
      %8113 = vmatprep.subr.mxu0 0.0
      %8114 = vmatpush1.msra.mxu0 0.0
      %8115 = vmatprep.subr.mxu0 0.0
      %8116 = vmatpush1.msra.mxu0 %v8066
      %8117 = vmatprep.subr.mxu0 0.0
      %8118 = vmatpush1.msra.mxu0 %v8064
      %8119 = vmatprep.subr.mxu0 0.0
      %8120 = vmatpush1.msra.mxu0 %v8062
      %8121 = vmatprep.subr.mxu0 0.0
      %8122 = vmatpush1.msra.mxu0 %v8060
      %8123 = vmatprep.subr.mxu0 0.0
      %8124 = vmatpush1.msra.mxu0 %v8058
      %8125 = vmatprep.subr.mxu0 0.0
      %8126 = vmatpush1.msra.mxu0 %v8056
      %8127 = vmatprep.subr.mxu0 0.0
      %8128 = vmatpush1.msra.mxu0 %v8054
      %8129 = vmatprep.subr.mxu0 0.0
      %8130 = vmatpush1.msra.mxu0 %v8052
      %8131 = vmatprep.subr.mxu0 0.0
      %8132 = vmatpush2.msra.mxu0 0.0
      %8133 = vmatprep.subr.mxu0 0.0
      %8134 = vmatpush2.msra.mxu0 0.0
      %8135 = vmatprep.subr.mxu0 0.0
      %8136 = vmatpush2.msra.mxu0 0.0
      %8137 = vmatprep.subr.mxu0 0.0
      %8138 = vmatpush2.msra.mxu0 0.0
      %8139 = vmatprep.subr.mxu0 0.0
      %8140 = vmatpush2.msra.mxu0 0.0
      %8141 = vmatprep.subr.mxu0 0.0
      %8142 = vmatpush2.msra.mxu0 0.0
      %8143 = vmatprep.subr.mxu0 0.0
      %8144 = vmatpush2.msra.mxu0 0.0
      %8145 = vmatprep.subr.mxu0 0.0
      %8146 = vmatpush2.msra.mxu0 0.0
      %8147 = vmatprep.subr.mxu0 0.0
      %8148 = vmatpush2.msra.mxu0 0.0
      %8149 = vmatprep.subr.mxu0 0.0
      %8150 = vmatpush2.msra.mxu0 0.0
      %8151 = vmatprep.subr.mxu0 0.0
      %8152 = vmatpush2.msra.mxu0 0.0
      %8153 = vmatprep.subr.mxu0 0.0
      %8154 = vmatpush2.msra.mxu0 0.0
      %8155 = vmatprep.subr.mxu0 0.0
      %8156 = vmatpush2.msra.mxu0 0.0
      %8157 = vmatprep.subr.mxu0 0.0
      %8158 = vmatpush2.msra.mxu0 0.0
      %8159 = vmatprep.subr.mxu0 0.0
      %8160 = vmatpush2.msra.mxu0 0.0
      %8161 = vmatprep.subr.mxu0 0.0
      %8162 = vmatpush2.msra.mxu0 0.0
      %8163 = vmatprep.mubr.f32.mxu0 0.0
      %8164 = vmatmul.mubr.f32.gmra.mxu0 %v8076
      %v8165 = vpop.f32.mrf.mxu0
      %v8166 = vadd.f32 0.0, %v8165
      %v8167 = vpop.f32.mrf.mxu0
      %8168 = vmatprep.mubr.f32.mxu0 0.0
      %8169 = vmatmul.mubr.f32.gmra.mxu0 %v8079
      %v8170 = vpop.f32.mrf.mxu0
      %v8171 = vadd.f32 0.0, %v8170
      %v8172 = vpop.f32.mrf.mxu0
      %8173 = vmatprep.mubr.f32.mxu0 0.0
      %8174 = vmatmul.mubr.f32.gmra.mxu0 %v8082
      %v8175 = vpop.f32.mrf.mxu0
      %v8176 = vadd.f32 0.0, %v8175
      %v8177 = vpop.f32.mrf.mxu0
      %8178 = vmatprep.mubr.f32.mxu0 0.0
      %8179 = vmatmul.mubr.f32.gmra.mxu0 %v8085
      %v8180 = vpop.f32.mrf.mxu0
      %v8181 = vadd.f32 0.0, %v8180
      %v8182 = vpop.f32.mrf.mxu0
      %8183 = vmatprep.mubr.f32.mxu0 0.0
      %8184 = vmatmul.mubr.f32.gmra.mxu0 %v8088
      %v8185 = vpop.f32.mrf.mxu0
      %v8186 = vadd.f32 0.0, %v8185
      %v8187 = vpop.f32.mrf.mxu0
      %8188 = vmatprep.mubr.f32.mxu0 0.0
      %8189 = vmatmul.mubr.f32.gmra.mxu0 %v8091
      %v8190 = vpop.f32.mrf.mxu0
      %v8191 = vadd.f32 0.0, %v8190
      %v8192 = vpop.f32.mrf.mxu0
      %8193 = vmatprep.mubr.f32.mxu0 0.0
      %8194 = vmatmul.mubr.f32.gmra.mxu0 %v8094
      %v8195 = vpop.f32.mrf.mxu0
      %v8196 = vadd.f32 0.0, %v8195
      %v8197 = vpop.f32.mrf.mxu0
      %8198 = vmatprep.mubr.f32.mxu0 0.0
      %8199 = vmatmul.mubr.f32.gmra.mxu0 %v8097
      %v8200 = vpop.f32.mrf.mxu0
      %v8201 = vadd.f32 0.0, %v8200
      %v8202 = vpop.f32.mrf.mxu0
      %8203 = vdwg.mxu0
      %8204 = vrot.lane.b32.xlu0 %v998, 104
      %v8205 = vpop.permute.xlu0 %8204
      %8206 = vrot.lane.b32.xlu0 %v1003, 104
      %v8207 = vpop.permute.xlu0 %8206
      %8208 = vrot.lane.b32.xlu0 %v1008, 104
      %v8209 = vpop.permute.xlu0 %8208
      %8210 = vrot.lane.b32.xlu0 %v1013, 104
      %v8211 = vpop.permute.xlu0 %8210
      %8212 = vrot.lane.b32.xlu0 %v1018, 104
      %v8213 = vpop.permute.xlu0 %8212
      %8214 = vrot.lane.b32.xlu0 %v1023, 104
      %v8215 = vpop.permute.xlu0 %8214
      %8216 = vrot.lane.b32.xlu0 %v1028, 104
      %v8217 = vpop.permute.xlu0 %8216
      %8218 = vrot.lane.b32.xlu0 %v1033, 104
      %v8219 = vpop.permute.xlu0 %8218
      %v8229 = vsel %vm1689, %v7882, 0
      %v8232 = vsel %vm1689, %v7883, 0
      %v8235 = vsel %vm1689, %v7884, 0
      %v8238 = vsel %vm1689, %v7885, 0
      %v8241 = vsel %vm1689, %v7886, 0
      %v8244 = vsel %vm1689, %v7887, 0
      %v8247 = vsel %vm1689, %v7888, 0
      %v8250 = vsel %vm1689, %v7889, 0
      %8252 = vmatprep.subr.mxu0 0.0
      %8253 = vmatpush1.msra.mxu0 0.0
      %8254 = vmatprep.subr.mxu0 0.0
      %8255 = vmatpush1.msra.mxu0 0.0
      %8256 = vmatprep.subr.mxu0 0.0
      %8257 = vmatpush1.msra.mxu0 0.0
      %8258 = vmatprep.subr.mxu0 0.0
      %8259 = vmatpush1.msra.mxu0 0.0
      %8260 = vmatprep.subr.mxu0 0.0
      %8261 = vmatpush1.msra.mxu0 0.0
      %8262 = vmatprep.subr.mxu0 0.0
      %8263 = vmatpush1.msra.mxu0 0.0
      %8264 = vmatprep.subr.mxu0 0.0
      %8265 = vmatpush1.msra.mxu0 0.0
      %8266 = vmatprep.subr.mxu0 0.0
      %8267 = vmatpush1.msra.mxu0 0.0
      %8268 = vmatprep.subr.mxu0 0.0
      %8269 = vmatpush1.msra.mxu0 %v8219
      %8270 = vmatprep.subr.mxu0 0.0
      %8271 = vmatpush1.msra.mxu0 %v8217
      %8272 = vmatprep.subr.mxu0 0.0
      %8273 = vmatpush1.msra.mxu0 %v8215
      %8274 = vmatprep.subr.mxu0 0.0
      %8275 = vmatpush1.msra.mxu0 %v8213
      %8276 = vmatprep.subr.mxu0 0.0
      %8277 = vmatpush1.msra.mxu0 %v8211
      %8278 = vmatprep.subr.mxu0 0.0
      %8279 = vmatpush1.msra.mxu0 %v8209
      %8280 = vmatprep.subr.mxu0 0.0
      %8281 = vmatpush1.msra.mxu0 %v8207
      %8282 = vmatprep.subr.mxu0 0.0
      %8283 = vmatpush1.msra.mxu0 %v8205
      %8284 = vmatprep.subr.mxu0 0.0
      %8285 = vmatpush2.msra.mxu0 0.0
      %8286 = vmatprep.subr.mxu0 0.0
      %8287 = vmatpush2.msra.mxu0 0.0
      %8288 = vmatprep.subr.mxu0 0.0
      %8289 = vmatpush2.msra.mxu0 0.0
      %8290 = vmatprep.subr.mxu0 0.0
      %8291 = vmatpush2.msra.mxu0 0.0
      %8292 = vmatprep.subr.mxu0 0.0
      %8293 = vmatpush2.msra.mxu0 0.0
      %8294 = vmatprep.subr.mxu0 0.0
      %8295 = vmatpush2.msra.mxu0 0.0
      %8296 = vmatprep.subr.mxu0 0.0
      %8297 = vmatpush2.msra.mxu0 0.0
      %8298 = vmatprep.subr.mxu0 0.0
      %8299 = vmatpush2.msra.mxu0 0.0
      %8300 = vmatprep.subr.mxu0 0.0
      %8301 = vmatpush2.msra.mxu0 0.0
      %8302 = vmatprep.subr.mxu0 0.0
      %8303 = vmatpush2.msra.mxu0 0.0
      %8304 = vmatprep.subr.mxu0 0.0
      %8305 = vmatpush2.msra.mxu0 0.0
      %8306 = vmatprep.subr.mxu0 0.0
      %8307 = vmatpush2.msra.mxu0 0.0
      %8308 = vmatprep.subr.mxu0 0.0
      %8309 = vmatpush2.msra.mxu0 0.0
      %8310 = vmatprep.subr.mxu0 0.0
      %8311 = vmatpush2.msra.mxu0 0.0
      %8312 = vmatprep.subr.mxu0 0.0
      %8313 = vmatpush2.msra.mxu0 0.0
      %8314 = vmatprep.subr.mxu0 0.0
      %8315 = vmatpush2.msra.mxu0 0.0
      %8316 = vmatprep.mubr.f32.mxu0 0.0
      %8317 = vmatmul.mubr.f32.gmra.mxu0 %v8229
      %v8318 = vpop.f32.mrf.mxu0
      %v8319 = vadd.f32 0.0, %v8318
      %v8320 = vpop.f32.mrf.mxu0
      %8321 = vmatprep.mubr.f32.mxu0 0.0
      %8322 = vmatmul.mubr.f32.gmra.mxu0 %v8232
      %v8323 = vpop.f32.mrf.mxu0
      %v8324 = vadd.f32 0.0, %v8323
      %v8325 = vpop.f32.mrf.mxu0
      %8326 = vmatprep.mubr.f32.mxu0 0.0
      %8327 = vmatmul.mubr.f32.gmra.mxu0 %v8235
      %v8328 = vpop.f32.mrf.mxu0
      %v8329 = vadd.f32 0.0, %v8328
      %v8330 = vpop.f32.mrf.mxu0
      %8331 = vmatprep.mubr.f32.mxu0 0.0
      %8332 = vmatmul.mubr.f32.gmra.mxu0 %v8238
      %v8333 = vpop.f32.mrf.mxu0
      %v8334 = vadd.f32 0.0, %v8333
      %v8335 = vpop.f32.mrf.mxu0
      %8336 = vmatprep.mubr.f32.mxu0 0.0
      %8337 = vmatmul.mubr.f32.gmra.mxu0 %v8241
      %v8338 = vpop.f32.mrf.mxu0
      %v8339 = vadd.f32 0.0, %v8338
      %v8340 = vpop.f32.mrf.mxu0
      %8341 = vmatprep.mubr.f32.mxu0 0.0
      %8342 = vmatmul.mubr.f32.gmra.mxu0 %v8244
      %v8343 = vpop.f32.mrf.mxu0
      %v8344 = vadd.f32 0.0, %v8343
      %v8345 = vpop.f32.mrf.mxu0
      %8346 = vmatprep.mubr.f32.mxu0 0.0
      %8347 = vmatmul.mubr.f32.gmra.mxu0 %v8247
      %v8348 = vpop.f32.mrf.mxu0
      %v8349 = vadd.f32 0.0, %v8348
      %v8350 = vpop.f32.mrf.mxu0
      %8351 = vmatprep.mubr.f32.mxu0 0.0
      %8352 = vmatmul.mubr.f32.gmra.mxu0 %v8250
      %v8353 = vpop.f32.mrf.mxu0
      %v8354 = vadd.f32 0.0, %v8353
      %v8355 = vpop.f32.mrf.mxu0
      %8356 = vdwg.mxu0
      %8357 = vrot.lane.b32.xlu0 %v1038, 104
      %v8358 = vpop.permute.xlu0 %8357
      %8359 = vrot.lane.b32.xlu0 %v1043, 104
      %v8360 = vpop.permute.xlu0 %8359
      %8361 = vrot.lane.b32.xlu0 %v1048, 104
      %v8362 = vpop.permute.xlu0 %8361
      %8363 = vrot.lane.b32.xlu0 %v1053, 104
      %v8364 = vpop.permute.xlu0 %8363
      %8365 = vrot.lane.b32.xlu0 %v1058, 104
      %v8366 = vpop.permute.xlu0 %8365
      %8367 = vrot.lane.b32.xlu0 %v1063, 104
      %v8368 = vpop.permute.xlu0 %8367
      %8369 = vrot.lane.b32.xlu0 %v1068, 104
      %v8370 = vpop.permute.xlu0 %8369
      %8371 = vrot.lane.b32.xlu0 %v1073, 104
      %v8372 = vpop.permute.xlu0 %8371
      %v8382 = vsel %vm1689, %v7890, 0
      %v8385 = vsel %vm1689, %v7891, 0
      %v8388 = vsel %vm1689, %v7892, 0
      %v8391 = vsel %vm1689, %v7893, 0
      %v8394 = vsel %vm1689, %v7894, 0
      %v8397 = vsel %vm1689, %v7895, 0
      %v8400 = vsel %vm1689, %v7896, 0
      %v8403 = vsel %vm1689, %v7897, 0
      %8405 = vmatprep.subr.mxu0 0.0
      %8406 = vmatpush1.msra.mxu0 0.0
      %8407 = vmatprep.subr.mxu0 0.0
      %8408 = vmatpush1.msra.mxu0 0.0
      %8409 = vmatprep.subr.mxu0 0.0
      %8410 = vmatpush1.msra.mxu0 0.0
      %8411 = vmatprep.subr.mxu0 0.0
      %8412 = vmatpush1.msra.mxu0 0.0
      %8413 = vmatprep.subr.mxu0 0.0
      %8414 = vmatpush1.msra.mxu0 0.0
      %8415 = vmatprep.subr.mxu0 0.0
      %8416 = vmatpush1.msra.mxu0 0.0
      %8417 = vmatprep.subr.mxu0 0.0
      %8418 = vmatpush1.msra.mxu0 0.0
      %8419 = vmatprep.subr.mxu0 0.0
      %8420 = vmatpush1.msra.mxu0 0.0
      %8421 = vmatprep.subr.mxu0 0.0
      %8422 = vmatpush1.msra.mxu0 %v8372
      %8423 = vmatprep.subr.mxu0 0.0
      %8424 = vmatpush1.msra.mxu0 %v8370
      %8425 = vmatprep.subr.mxu0 0.0
      %8426 = vmatpush1.msra.mxu0 %v8368
      %8427 = vmatprep.subr.mxu0 0.0
      %8428 = vmatpush1.msra.mxu0 %v8366
      %8429 = vmatprep.subr.mxu0 0.0
      %8430 = vmatpush1.msra.mxu0 %v8364
      %8431 = vmatprep.subr.mxu0 0.0
      %8432 = vmatpush1.msra.mxu0 %v8362
      %8433 = vmatprep.subr.mxu0 0.0
      %8434 = vmatpush1.msra.mxu0 %v8360
      %8435 = vmatprep.subr.mxu0 0.0
      %8436 = vmatpush1.msra.mxu0 %v8358
      %8437 = vmatprep.subr.mxu0 0.0
      %8438 = vmatpush2.msra.mxu0 0.0
      %8439 = vmatprep.subr.mxu0 0.0
      %8440 = vmatpush2.msra.mxu0 0.0
      %8441 = vmatprep.subr.mxu0 0.0
      %8442 = vmatpush2.msra.mxu0 0.0
      %8443 = vmatprep.subr.mxu0 0.0
      %8444 = vmatpush2.msra.mxu0 0.0
      %8445 = vmatprep.subr.mxu0 0.0
      %8446 = vmatpush2.msra.mxu0 0.0
      %8447 = vmatprep.subr.mxu0 0.0
      %8448 = vmatpush2.msra.mxu0 0.0
      %8449 = vmatprep.subr.mxu0 0.0
      %8450 = vmatpush2.msra.mxu0 0.0
      %8451 = vmatprep.subr.mxu0 0.0
      %8452 = vmatpush2.msra.mxu0 0.0
      %8453 = vmatprep.subr.mxu0 0.0
      %8454 = vmatpush2.msra.mxu0 0.0
      %8455 = vmatprep.subr.mxu0 0.0
      %8456 = vmatpush2.msra.mxu0 0.0
      %8457 = vmatprep.subr.mxu0 0.0
      %8458 = vmatpush2.msra.mxu0 0.0
      %8459 = vmatprep.subr.mxu0 0.0
      %8460 = vmatpush2.msra.mxu0 0.0
      %8461 = vmatprep.subr.mxu0 0.0
      %8462 = vmatpush2.msra.mxu0 0.0
      %8463 = vmatprep.subr.mxu0 0.0
      %8464 = vmatpush2.msra.mxu0 0.0
      %8465 = vmatprep.subr.mxu0 0.0
      %8466 = vmatpush2.msra.mxu0 0.0
      %8467 = vmatprep.subr.mxu0 0.0
      %8468 = vmatpush2.msra.mxu0 0.0
      %8469 = vmatprep.mubr.f32.mxu0 0.0
      %8470 = vmatmul.mubr.f32.gmra.mxu0 %v8382
      %v8471 = vpop.f32.mrf.mxu0
      %v8472 = vadd.f32 0.0, %v8471
      %v8473 = vpop.f32.mrf.mxu0
      %8474 = vmatprep.mubr.f32.mxu0 0.0
      %8475 = vmatmul.mubr.f32.gmra.mxu0 %v8385
      %v8476 = vpop.f32.mrf.mxu0
      %v8477 = vadd.f32 0.0, %v8476
      %v8478 = vpop.f32.mrf.mxu0
      %8479 = vmatprep.mubr.f32.mxu0 0.0
      %8480 = vmatmul.mubr.f32.gmra.mxu0 %v8388
      %v8481 = vpop.f32.mrf.mxu0
      %v8482 = vadd.f32 0.0, %v8481
      %v8483 = vpop.f32.mrf.mxu0
      %8484 = vmatprep.mubr.f32.mxu0 0.0
      %8485 = vmatmul.mubr.f32.gmra.mxu0 %v8391
      %v8486 = vpop.f32.mrf.mxu0
      %v8487 = vadd.f32 0.0, %v8486
      %v8488 = vpop.f32.mrf.mxu0
      %8489 = vmatprep.mubr.f32.mxu0 0.0
      %8490 = vmatmul.mubr.f32.gmra.mxu0 %v8394
      %v8491 = vpop.f32.mrf.mxu0
      %v8492 = vadd.f32 0.0, %v8491
      %v8493 = vpop.f32.mrf.mxu0
      %8494 = vmatprep.mubr.f32.mxu0 0.0
      %8495 = vmatmul.mubr.f32.gmra.mxu0 %v8397
      %v8496 = vpop.f32.mrf.mxu0
      %v8497 = vadd.f32 0.0, %v8496
      %v8498 = vpop.f32.mrf.mxu0
      %8499 = vmatprep.mubr.f32.mxu0 0.0
      %8500 = vmatmul.mubr.f32.gmra.mxu0 %v8400
      %v8501 = vpop.f32.mrf.mxu0
      %v8502 = vadd.f32 0.0, %v8501
      %v8503 = vpop.f32.mrf.mxu0
      %8504 = vmatprep.mubr.f32.mxu0 0.0
      %8505 = vmatmul.mubr.f32.gmra.mxu0 %v8403
      %v8506 = vpop.f32.mrf.mxu0
      %v8507 = vadd.f32 0.0, %v8506
      %v8508 = vpop.f32.mrf.mxu0
      %8509 = vdwg.mxu0
      %s8510 = scalar_lea.vmem %s4, 24
      %v8511 = vld [vmem:[%s8510] sm:$0xff]
      %v8513 = vsel %vm1076, %v8013, 0
      %v8516 = vsel %vm1076, %v8018, 0
      %v8519 = vsel %vm1076, %v8023, 0
      %v8522 = vsel %vm1076, %v8028, 0
      %v8525 = vsel %vm1076, %v8033, 0
      %v8528 = vsel %vm1076, %v8038, 0
      %v8531 = vsel %vm1076, %v8043, 0
      %v8534 = vsel %vm1076, %v8048, 0
      %v8537 = vsel %vm1076, %v8166, 0
      %v8540 = vsel %vm1076, %v8171, 0
      %v8543 = vsel %vm1076, %v8176, 0
      %v8546 = vsel %vm1076, %v8181, 0
      %v8549 = vsel %vm1076, %v8186, 0
      %v8552 = vsel %vm1076, %v8191, 0
      %v8555 = vsel %vm1076, %v8196, 0
      %v8558 = vsel %vm1076, %v8201, 0
      %v8561 = vsel %vm1076, %v8319, 0
      %v8564 = vsel %vm1076, %v8324, 0
      %v8567 = vsel %vm1076, %v8329, 0
      %v8570 = vsel %vm1076, %v8334, 0
      %v8573 = vsel %vm1076, %v8339, 0
      %v8576 = vsel %vm1076, %v8344, 0
      %v8579 = vsel %vm1076, %v8349, 0
      %v8582 = vsel %vm1076, %v8354, 0
      %v8585 = vsel %vm1076, %v8472, 0
      %v8588 = vsel %vm1076, %v8477, 0
      %v8591 = vsel %vm1076, %v8482, 0
      %v8594 = vsel %vm1076, %v8487, 0
      %v8597 = vsel %vm1076, %v8492, 0
      %v8600 = vsel %vm1076, %v8497, 0
      %v8603 = vsel %vm1076, %v8502, 0
      %v8606 = vsel %vm1076, %v8507, 0
      %8608 = vmatprep.subr.mxu0 0.0
      %8609 = vmatpush1.msra.mxu0 0.0
      %8610 = vmatprep.subr.mxu0 0.0
      %8611 = vmatpush1.msra.mxu0 0.0
      %8612 = vmatprep.subr.mxu0 0.0
      %8613 = vmatpush1.msra.mxu0 0.0
      %8614 = vmatprep.subr.mxu0 0.0
      %8615 = vmatpush1.msra.mxu0 0.0
      %8616 = vmatprep.subr.mxu0 0.0
      %8617 = vmatpush1.msra.mxu0 0.0
      %8618 = vmatprep.subr.mxu0 0.0
      %8619 = vmatpush1.msra.mxu0 0.0
      %8620 = vmatprep.subr.mxu0 0.0
      %8621 = vmatpush1.msra.mxu0 0.0
      %8622 = vmatprep.subr.mxu0 0.0
      %8623 = vmatpush1.msra.mxu0 0.0
      %8624 = vmatprep.subr.mxu0 0.0
      %8625 = vmatpush1.msra.mxu0 0.0
      %8626 = vmatprep.subr.mxu0 0.0
      %8627 = vmatpush1.msra.mxu0 0.0
      %8628 = vmatprep.subr.mxu0 0.0
      %8629 = vmatpush1.msra.mxu0 0.0
      %8630 = vmatprep.subr.mxu0 0.0
      %8631 = vmatpush1.msra.mxu0 0.0
      %8632 = vmatprep.subr.mxu0 0.0
      %8633 = vmatpush1.msra.mxu0 0.0
      %8634 = vmatprep.subr.mxu0 0.0
      %8635 = vmatpush1.msra.mxu0 0.0
      %8636 = vmatprep.subr.mxu0 0.0
      %8637 = vmatpush1.msra.mxu0 0.0
      %8638 = vmatprep.subr.mxu0 0.0
      %8639 = vmatpush1.msra.mxu0 %v8511
      %8640 = vmatprep.subr.mxu0 0.0
      %8641 = vmatpush2.msra.mxu0 0.0
      %8642 = vmatprep.subr.mxu0 0.0
      %8643 = vmatpush2.msra.mxu0 0.0
      %8644 = vmatprep.subr.mxu0 0.0
      %8645 = vmatpush2.msra.mxu0 0.0
      %8646 = vmatprep.subr.mxu0 0.0
      %8647 = vmatpush2.msra.mxu0 0.0
      %8648 = vmatprep.subr.mxu0 0.0
      %8649 = vmatpush2.msra.mxu0 0.0
      %8650 = vmatprep.subr.mxu0 0.0
      %8651 = vmatpush2.msra.mxu0 0.0
      %8652 = vmatprep.subr.mxu0 0.0
      %8653 = vmatpush2.msra.mxu0 0.0
      %8654 = vmatprep.subr.mxu0 0.0
      %8655 = vmatpush2.msra.mxu0 0.0
      %8656 = vmatprep.subr.mxu0 0.0
      %8657 = vmatpush2.msra.mxu0 0.0
      %8658 = vmatprep.subr.mxu0 0.0
      %8659 = vmatpush2.msra.mxu0 0.0
      %8660 = vmatprep.subr.mxu0 0.0
      %8661 = vmatpush2.msra.mxu0 0.0
      %8662 = vmatprep.subr.mxu0 0.0
      %8663 = vmatpush2.msra.mxu0 0.0
      %8664 = vmatprep.subr.mxu0 0.0
      %8665 = vmatpush2.msra.mxu0 0.0
      %8666 = vmatprep.subr.mxu0 0.0
      %8667 = vmatpush2.msra.mxu0 0.0
      %8668 = vmatprep.subr.mxu0 0.0
      %8669 = vmatpush2.msra.mxu0 0.0
      %8670 = vmatprep.subr.mxu0 0.0
      %8671 = vmatpush2.msra.mxu0 0.0
      %8672 = vmatprep.mubr.f32.mxu0 0.0
      %8673 = vmatmul.mubr.f32.gmra.mxu0 %v8513
      %v8674 = vpop.f32.mrf.mxu0
      %v8675 = vadd.f32 0.0, %v8674
      %v8676 = vpop.f32.mrf.mxu0
      %8677 = vmatprep.mubr.f32.mxu0 0.0
      %8678 = vmatmul.mubr.f32.gmra.mxu0 %v8516
      %v8679 = vpop.f32.mrf.mxu0
      %v8680 = vadd.f32 0.0, %v8679
      %v8681 = vpop.f32.mrf.mxu0
      %8682 = vmatprep.mubr.f32.mxu0 0.0
      %8683 = vmatmul.mubr.f32.gmra.mxu0 %v8519
      %v8684 = vpop.f32.mrf.mxu0
      %v8685 = vadd.f32 0.0, %v8684
      %v8686 = vpop.f32.mrf.mxu0
      %8687 = vmatprep.mubr.f32.mxu0 0.0
      %8688 = vmatmul.mubr.f32.gmra.mxu0 %v8522
      %v8689 = vpop.f32.mrf.mxu0
      %v8690 = vadd.f32 0.0, %v8689
      %v8691 = vpop.f32.mrf.mxu0
      %8692 = vmatprep.mubr.f32.mxu0 0.0
      %8693 = vmatmul.mubr.f32.gmra.mxu0 %v8525
      %v8694 = vpop.f32.mrf.mxu0
      %v8695 = vadd.f32 0.0, %v8694
      %v8696 = vpop.f32.mrf.mxu0
      %8697 = vmatprep.mubr.f32.mxu0 0.0
      %8698 = vmatmul.mubr.f32.gmra.mxu0 %v8528
      %v8699 = vpop.f32.mrf.mxu0
      %v8700 = vadd.f32 0.0, %v8699
      %v8701 = vpop.f32.mrf.mxu0
      %8702 = vmatprep.mubr.f32.mxu0 0.0
      %8703 = vmatmul.mubr.f32.gmra.mxu0 %v8531
      %v8704 = vpop.f32.mrf.mxu0
      %v8705 = vadd.f32 0.0, %v8704
      %v8706 = vpop.f32.mrf.mxu0
      %8707 = vmatprep.mubr.f32.mxu0 0.0
      %8708 = vmatmul.mubr.f32.gmra.mxu0 %v8534
      %v8709 = vpop.f32.mrf.mxu0
      %v8710 = vadd.f32 0.0, %v8709
      %v8711 = vpop.f32.mrf.mxu0
      %8712 = vmatprep.mubr.f32.mxu0 0.0
      %8713 = vmatmul.mubr.f32.gmra.mxu0 %v8537
      %v8714 = vpop.f32.mrf.mxu0
      %v8715 = vadd.f32 0.0, %v8714
      %v8716 = vpop.f32.mrf.mxu0
      %8717 = vmatprep.mubr.f32.mxu0 0.0
      %8718 = vmatmul.mubr.f32.gmra.mxu0 %v8540
      %v8719 = vpop.f32.mrf.mxu0
      %v8720 = vadd.f32 0.0, %v8719
      %v8721 = vpop.f32.mrf.mxu0
      %8722 = vmatprep.mubr.f32.mxu0 0.0
      %8723 = vmatmul.mubr.f32.gmra.mxu0 %v8543
      %v8724 = vpop.f32.mrf.mxu0
      %v8725 = vadd.f32 0.0, %v8724
      %v8726 = vpop.f32.mrf.mxu0
      %8727 = vmatprep.mubr.f32.mxu0 0.0
      %8728 = vmatmul.mubr.f32.gmra.mxu0 %v8546
      %v8729 = vpop.f32.mrf.mxu0
      %v8730 = vadd.f32 0.0, %v8729
      %v8731 = vpop.f32.mrf.mxu0
      %8732 = vmatprep.mubr.f32.mxu0 0.0
      %8733 = vmatmul.mubr.f32.gmra.mxu0 %v8549
      %v8734 = vpop.f32.mrf.mxu0
      %v8735 = vadd.f32 0.0, %v8734
      %v8736 = vpop.f32.mrf.mxu0
      %8737 = vmatprep.mubr.f32.mxu0 0.0
      %8738 = vmatmul.mubr.f32.gmra.mxu0 %v8552
      %v8739 = vpop.f32.mrf.mxu0
      %v8740 = vadd.f32 0.0, %v8739
      %v8741 = vpop.f32.mrf.mxu0
      %8742 = vmatprep.mubr.f32.mxu0 0.0
      %8743 = vmatmul.mubr.f32.gmra.mxu0 %v8555
      %v8744 = vpop.f32.mrf.mxu0
      %v8745 = vadd.f32 0.0, %v8744
      %v8746 = vpop.f32.mrf.mxu0
      %8747 = vmatprep.mubr.f32.mxu0 0.0
      %8748 = vmatmul.mubr.f32.gmra.mxu0 %v8558
      %v8749 = vpop.f32.mrf.mxu0
      %v8750 = vadd.f32 0.0, %v8749
      %v8751 = vpop.f32.mrf.mxu0
      %8752 = vmatprep.mubr.f32.mxu0 0.0
      %8753 = vmatmul.mubr.f32.gmra.mxu0 %v8561
      %v8754 = vpop.f32.mrf.mxu0
      %v8755 = vadd.f32 0.0, %v8754
      %v8756 = vpop.f32.mrf.mxu0
      %8757 = vmatprep.mubr.f32.mxu0 0.0
      %8758 = vmatmul.mubr.f32.gmra.mxu0 %v8564
      %v8759 = vpop.f32.mrf.mxu0
      %v8760 = vadd.f32 0.0, %v8759
      %v8761 = vpop.f32.mrf.mxu0
      %8762 = vmatprep.mubr.f32.mxu0 0.0
      %8763 = vmatmul.mubr.f32.gmra.mxu0 %v8567
      %v8764 = vpop.f32.mrf.mxu0
      %v8765 = vadd.f32 0.0, %v8764
      %v8766 = vpop.f32.mrf.mxu0
      %8767 = vmatprep.mubr.f32.mxu0 0.0
      %8768 = vmatmul.mubr.f32.gmra.mxu0 %v8570
      %v8769 = vpop.f32.mrf.mxu0
      %v8770 = vadd.f32 0.0, %v8769
      %v8771 = vpop.f32.mrf.mxu0
      %8772 = vmatprep.mubr.f32.mxu0 0.0
      %8773 = vmatmul.mubr.f32.gmra.mxu0 %v8573
      %v8774 = vpop.f32.mrf.mxu0
      %v8775 = vadd.f32 0.0, %v8774
      %v8776 = vpop.f32.mrf.mxu0
      %8777 = vmatprep.mubr.f32.mxu0 0.0
      %8778 = vmatmul.mubr.f32.gmra.mxu0 %v8576
      %v8779 = vpop.f32.mrf.mxu0
      %v8780 = vadd.f32 0.0, %v8779
      %v8781 = vpop.f32.mrf.mxu0
      %8782 = vmatprep.mubr.f32.mxu0 0.0
      %8783 = vmatmul.mubr.f32.gmra.mxu0 %v8579
      %v8784 = vpop.f32.mrf.mxu0
      %v8785 = vadd.f32 0.0, %v8784
      %v8786 = vpop.f32.mrf.mxu0
      %8787 = vmatprep.mubr.f32.mxu0 0.0
      %8788 = vmatmul.mubr.f32.gmra.mxu0 %v8582
      %v8789 = vpop.f32.mrf.mxu0
      %v8790 = vadd.f32 0.0, %v8789
      %v8791 = vpop.f32.mrf.mxu0
      %8792 = vmatprep.mubr.f32.mxu0 0.0
      %8793 = vmatmul.mubr.f32.gmra.mxu0 %v8585
      %v8794 = vpop.f32.mrf.mxu0
      %v8795 = vadd.f32 0.0, %v8794
      %v8796 = vpop.f32.mrf.mxu0
      %8797 = vmatprep.mubr.f32.mxu0 0.0
      %8798 = vmatmul.mubr.f32.gmra.mxu0 %v8588
      %v8799 = vpop.f32.mrf.mxu0
      %v8800 = vadd.f32 0.0, %v8799
      %v8801 = vpop.f32.mrf.mxu0
      %8802 = vmatprep.mubr.f32.mxu0 0.0
      %8803 = vmatmul.mubr.f32.gmra.mxu0 %v8591
      %v8804 = vpop.f32.mrf.mxu0
      %v8805 = vadd.f32 0.0, %v8804
      %v8806 = vpop.f32.mrf.mxu0
      %8807 = vmatprep.mubr.f32.mxu0 0.0
      %8808 = vmatmul.mubr.f32.gmra.mxu0 %v8594
      %v8809 = vpop.f32.mrf.mxu0
      %v8810 = vadd.f32 0.0, %v8809
      %v8811 = vpop.f32.mrf.mxu0
      %8812 = vmatprep.mubr.f32.mxu0 0.0
      %8813 = vmatmul.mubr.f32.gmra.mxu0 %v8597
      %v8814 = vpop.f32.mrf.mxu0
      %v8815 = vadd.f32 0.0, %v8814
      %v8816 = vpop.f32.mrf.mxu0
      %8817 = vmatprep.mubr.f32.mxu0 0.0
      %8818 = vmatmul.mubr.f32.gmra.mxu0 %v8600
      %v8819 = vpop.f32.mrf.mxu0
      %v8820 = vadd.f32 0.0, %v8819
      %v8821 = vpop.f32.mrf.mxu0
      %8822 = vmatprep.mubr.f32.mxu0 0.0
      %8823 = vmatmul.mubr.f32.gmra.mxu0 %v8603
      %v8824 = vpop.f32.mrf.mxu0
      %v8825 = vadd.f32 0.0, %v8824
      %v8826 = vpop.f32.mrf.mxu0
      %8827 = vmatprep.mubr.f32.mxu0 0.0
      %8828 = vmatmul.mubr.f32.gmra.mxu0 %v8606
      %v8829 = vpop.f32.mrf.mxu0
      %v8830 = vadd.f32 0.0, %v8829
      %v8831 = vpop.f32.mrf.mxu0
      %8832 = vdwg.mxu0
      %v8833 = vadd.f32 %v6838, %v8675
      %v8834 = vadd.f32 %v6839, %v8680
      %v8835 = vadd.f32 %v6840, %v8685
      %v8836 = vadd.f32 %v6841, %v8690
      %v8837 = vadd.f32 %v6842, %v8695
      %v8838 = vadd.f32 %v6843, %v8700
      %v8839 = vadd.f32 %v6844, %v8705
      %v8840 = vadd.f32 %v6845, %v8710
      %v8841 = vadd.f32 %v6846, %v8715
      %v8842 = vadd.f32 %v6847, %v8720
      %v8843 = vadd.f32 %v6848, %v8725
      %v8844 = vadd.f32 %v6849, %v8730
      %v8845 = vadd.f32 %v6850, %v8735
      %v8846 = vadd.f32 %v6851, %v8740
      %v8847 = vadd.f32 %v6852, %v8745
      %v8848 = vadd.f32 %v6853, %v8750
      %v8849 = vadd.f32 %v6854, %v8755
      %v8850 = vadd.f32 %v6855, %v8760
      %v8851 = vadd.f32 %v6856, %v8765
      %v8852 = vadd.f32 %v6857, %v8770
      %v8853 = vadd.f32 %v6858, %v8775
      %v8854 = vadd.f32 %v6859, %v8780
      %v8855 = vadd.f32 %v6860, %v8785
      %v8856 = vadd.f32 %v6861, %v8790
      %v8857 = vadd.f32 %v6862, %v8795
      %v8858 = vadd.f32 %v6863, %v8800
      %v8859 = vadd.f32 %v6864, %v8805
      %v8860 = vadd.f32 %v6865, %v8810
      %v8861 = vadd.f32 %v6866, %v8815
      %v8862 = vadd.f32 %v6867, %v8820
      %v8863 = vadd.f32 %v6868, %v8825
      %v8864 = vadd.f32 %v6869, %v8830
      %v8865 = vld [vmem:[%s5] sm:$0x1]
      %v8867 = vlaneseq
      %v8868 = vshrl.u32 %v8867, 7
      %v8869 = vsub.s32 0, %v8868
      %v8870 = vrot.slane %v8865, %v8869
      %v8872 = vadd.f32 %v8833, %v8870
      %v8873 = vadd.f32 %v8834, %v8870
      %v8874 = vadd.f32 %v8835, %v8870
      %v8875 = vadd.f32 %v8836, %v8870
      %v8876 = vadd.f32 %v8837, %v8870
      %v8877 = vadd.f32 %v8838, %v8870
      %v8878 = vadd.f32 %v8839, %v8870
      %v8879 = vadd.f32 %v8840, %v8870
      %v8880 = vadd.f32 %v8841, %v8870
      %v8881 = vadd.f32 %v8842, %v8870
      %v8882 = vadd.f32 %v8843, %v8870
      %v8883 = vadd.f32 %v8844, %v8870
      %v8884 = vadd.f32 %v8845, %v8870
      %v8885 = vadd.f32 %v8846, %v8870
      %v8886 = vadd.f32 %v8847, %v8870
      %v8887 = vadd.f32 %v8848, %v8870
      %v8888 = vadd.f32 %v8849, %v8870
      %v8889 = vadd.f32 %v8850, %v8870
      %v8890 = vadd.f32 %v8851, %v8870
      %v8891 = vadd.f32 %v8852, %v8870
      %v8892 = vadd.f32 %v8853, %v8870
      %v8893 = vadd.f32 %v8854, %v8870
      %v8894 = vadd.f32 %v8855, %v8870
      %v8895 = vadd.f32 %v8856, %v8870
      %v8896 = vadd.f32 %v8857, %v8870
      %v8897 = vadd.f32 %v8858, %v8870
      %v8898 = vadd.f32 %v8859, %v8870
      %v8899 = vadd.f32 %v8860, %v8870
      %v8900 = vadd.f32 %v8861, %v8870
      %v8901 = vadd.f32 %v8862, %v8870
      %v8902 = vadd.f32 %v8863, %v8870
      %v8903 = vadd.f32 %v8864, %v8870
      %8904 = vst.msk [vmem:[%s258] sm:$0xff] %vm296, %v8872
      %8905 = vst.msk [vmem:[%s258 + $0x8] sm:$0xff] %vm296, %v8873
      %8906 = vst.msk [vmem:[%s258 + $0x10] sm:$0xff] %vm296, %v8874
      %8907 = vst.msk [vmem:[%s258 + $0x18] sm:$0xff] %vm296, %v8875
      %8908 = vst.msk [vmem:[%s258 + $0x20] sm:$0xff] %vm296, %v8876
      %8909 = vst.msk [vmem:[%s258 + $0x28] sm:$0xff] %vm296, %v8877
      %8910 = vst.msk [vmem:[%s258 + $0x30] sm:$0xff] %vm296, %v8878
      %8911 = vst.msk [vmem:[%s258 + $0x38] sm:$0xff] %vm296, %v8879
      %8912 = vst.msk [vmem:[%s258 + $0x40] sm:$0xff] %vm296, %v8880
      %8913 = vst.msk [vmem:[%s258 + $0x48] sm:$0xff] %vm296, %v8881
      %8914 = vst.msk [vmem:[%s258 + $0x50] sm:$0xff] %vm296, %v8882
      %8915 = vst.msk [vmem:[%s258 + $0x58] sm:$0xff] %vm296, %v8883
      %8916 = vst.msk [vmem:[%s258 + $0x60] sm:$0xff] %vm296, %v8884
      %8917 = vst.msk [vmem:[%s258 + $0x68] sm:$0xff] %vm296, %v8885
      %8918 = vst.msk [vmem:[%s258 + $0x70] sm:$0xff] %vm296, %v8886
      %8919 = vst.msk [vmem:[%s258 + $0x78] sm:$0xff] %vm296, %v8887
      %8920 = vst.msk [vmem:[%s258 + $0x80] sm:$0xff] %vm296, %v8888
      %8921 = vst.msk [vmem:[%s258 + $0x88] sm:$0xff] %vm296, %v8889
      %8922 = vst.msk [vmem:[%s258 + $0x90] sm:$0xff] %vm296, %v8890
      %8923 = vst.msk [vmem:[%s258 + $0x98] sm:$0xff] %vm296, %v8891
      %8924 = vst.msk [vmem:[%s258 + $0xa0] sm:$0xff] %vm296, %v8892
      %8925 = vst.msk [vmem:[%s258 + $0xa8] sm:$0xff] %vm296, %v8893
      %8926 = vst.msk [vmem:[%s258 + $0xb0] sm:$0xff] %vm296, %v8894
      %8927 = vst.msk [vmem:[%s258 + $0xb8] sm:$0xff] %vm296, %v8895
      %8928 = vst.msk [vmem:[%s258 + $0xc0] sm:$0xff] %vm296, %v8896
      %8929 = vst.msk [vmem:[%s258 + $0xc8] sm:$0xff] %vm296, %v8897
      %8930 = vst.msk [vmem:[%s258 + $0xd0] sm:$0xff] %vm296, %v8898
      %8931 = vst.msk [vmem:[%s258 + $0xd8] sm:$0xff] %vm296, %v8899
      %8932 = vst.msk [vmem:[%s258 + $0xe0] sm:$0xff] %vm296, %v8900
      %8933 = vst.msk [vmem:[%s258 + $0xe8] sm:$0xff] %vm296, %v8901
      %8934 = vst.msk [vmem:[%s258 + $0xf0] sm:$0xff] %vm296, %v8902
      %8935 = vst.msk [vmem:[%s258 + $0xf8] sm:$0xff] %vm296, %v8903
      %s8936 = smul.u32 4, %s17
      %p8937 = scmp.lt.s32.totalorder %s8936, 7
      %s8938 = scalar_select %p8937, %s8936, 7
      %s8939 = smul.addr %s8938, 8
      %s8940 = smul.addr %s8939, 8
      %s8941 = scalar_lea.vmem %s6, %s8940
      // Predicated region
      $region45: #{tpu_custom_call.1} parent=43 // pred_check
        %p8942 = pneg %p166
      $region46: #{tpu_custom_call.1} parent=43 // pred_check_branch
        %8944 = sbr.rel (%p8942) target = $region48
      $region47: #{tpu_custom_call.1} parent=43 // pred_region
        %s8945 = smul.u32 4, %s17
      $region48: #{tpu_custom_call.1} parent=43 // pred_fallthru
        _
    $region44: #{tpu_custom_call.1} parent=5 // pred_fallthru
      _
    %p8946 = scmp.le.s32.totalorder 2, %s12
    // Predicated region
    $region49: #{tpu_custom_call.1} parent=5 // pred_check
      %p8947 = pneg %p8946
    $region50: #{tpu_custom_call.1} parent=5 // pred_check_branch
      %8949 = sbr.rel (%p8947) target = $region52
    $region51: #{tpu_custom_call.1} parent=5 // pred_region
      %s8950 = ssub.s32 %s12, 2
      // Predicated region
      $region53: #{tpu_custom_call.1} parent=51 // pred_check
        %p8951 = pneg %p172
      $region54: #{tpu_custom_call.1} parent=51 // pred_check_branch
        %8953 = sbr.rel (%p8951) target = $region56
      $region55: #{tpu_custom_call.1} parent=51 // pred_region
        %s8954 = smul.u32 4, %s18
        %p8955 = scmp.lt.s32.totalorder %s8954, 7
        %s8956 = scalar_select %p8955, %s8954, 7
        %s8957 = smul.addr %s8956, 8
        %s8958 = smul.addr %s8957, 8
        %s8959 = scalar_lea.vmem %s6, %s8958
      $region56: #{tpu_custom_call.1} parent=51 // pred_fallthru
        _
    $region52: #{tpu_custom_call.1} parent=5 // pred_fallthru
      _
  $region6: #{tpu_custom_call.1} parent=0 // loop_footer
    %s16 = sadd.s32 1, %s12
  $region7: #{tpu_custom_call.1} parent=0 // loop_footer_branch
    %11 = sbr.rel target = $region3
  $region8: #{tpu_custom_call.1} parent=0 // loop_exit
    _

</llo_original>
